<compile_context>
chip_gen: v6e
topology: v6e:2x2x1
jax: 0.10.0
libtpu: 0.0.40
codegen_flags: <defaults>
</compile_context>

<pallas_src>
import functools

import jax
import jax.numpy as jnp
from jax import lax
from jax.experimental import pallas as pl
from jax.experimental.pallas import tpu as pltpu

ALPHA = 0.5

# LPIPS ScalingLayer constants (fixed buffers in the lpips package).
SHIFT = jnp.array([-0.030, -0.088, -0.188], jnp.float32)
SCALE = jnp.array([0.458, 0.448, 0.450], jnp.float32)

# AlexNet feature config: (in_c, out_c, kernel, stride, pad). Pools (3x3/s2)
# follow conv1 and conv2 taps, matching torchvision AlexNet / lpips slices.
CONV_CFG = [
    (3, 64, 11, 4, 2),
    (64, 192, 5, 1, 2),
    (192, 384, 3, 1, 1),
    (384, 256, 3, 1, 1),
    (256, 256, 3, 1, 1),
]


def _round_up(x, m):
    return (x + m - 1) // m * m


# --------------------------- Pallas kernels ---------------------------------

def _matmul_bias_relu_kernel(x_ref, w_ref, b_ref, o_ref, acc_ref):
    # bf16 operands on the MXU, f32 accumulation; bias + ReLU epilogue in f32.
    @pl.when(pl.program_id(2) == 0)
    def _():
        acc_ref[...] = jnp.zeros_like(acc_ref)

    acc_ref[...] += jnp.dot(x_ref[...], w_ref[...],
                            preferred_element_type=jnp.float32)

    @pl.when(pl.program_id(2) == pl.num_programs(2) - 1)
    def _():
        o_ref[...] = jnp.maximum(acc_ref[...] + b_ref[...], 0.0).astype(o_ref.dtype)


def matmul_bias_relu(x, w, b):
    """relu(x @ w + b). x:[M,K], w:[K,N], b:[1,N]. Tiled/pipelined, bf16 operands."""
    M, K = x.shape
    _, N = w.shape

    Kp = _round_up(K, 128)
    Np = _round_up(N, 128)
    tk = 512 if Kp % 512 == 0 else (256 if Kp % 256 == 0 else 128)
    tn = 256 if Np % 256 == 0 else 128
    tm = min(256, _round_up(M, 8))
    Mp = _round_up(M, tm)

    # Tiles are a few hundred KB -> well under the 32 MiB scoped-VMEM default
    # (safe on v7x's 64 MiB physical VMEM as well).
    xp = jnp.pad(x.astype(jnp.bfloat16), ((0, Mp - M), (0, Kp - K)))
    wp = jnp.pad(w.astype(jnp.bfloat16), ((0, Kp - K), (0, Np - N)))
    bp = jnp.pad(b.astype(jnp.float32), ((0, 0), (0, Np - N)))

    out = pl.pallas_call(
        _matmul_bias_relu_kernel,
        out_shape=jax.ShapeDtypeStruct((Mp, Np), jnp.bfloat16),
        grid_spec=pltpu.PrefetchScalarGridSpec(
            num_scalar_prefetch=0,
            grid=(Mp // tm, Np // tn, Kp // tk),
            in_specs=[
                pl.BlockSpec((tm, tk), lambda i, j, k: (i, k)),
                pl.BlockSpec((tk, tn), lambda i, j, k: (k, j)),
                pl.BlockSpec((1, tn), lambda i, j, k: (0, j)),
            ],
            out_specs=pl.BlockSpec((tm, tn), lambda i, j, k: (i, j)),
            scratch_shapes=[pltpu.VMEM((tm, tn), jnp.float32)],
        ),
        compiler_params=pltpu.CompilerParams(
            dimension_semantics=("parallel", "parallel", "arbitrary")),
    )(xp, wp, bp)
    return out[:M, :N]


def _lpips_layer_kernel(fx_ref, fy_ref, w_ref, o_ref, acc_ref):
    # fx, fy: [tr, C] bf16 feature-tap tile (padded rows are zero -> contribute 0).
    # w: [C, 128] f32, column 0 holds the lin weights (padded channels are zero).
    @pl.when(pl.program_id(0) == 0)
    def _():
        acc_ref[...] = jnp.zeros_like(acc_ref)

    eps = 1e-10
    fx = fx_ref[...].astype(jnp.float32)
    fy = fy_ref[...].astype(jnp.float32)
    # lpips.normalize_tensor: x / (sqrt(sum(x^2, channel)) + eps); divide via EUP reciprocal.
    inv_x = pl.reciprocal(jnp.sqrt(jnp.sum(fx * fx, axis=-1, keepdims=True)) + eps,
                          approx=True)
    inv_y = pl.reciprocal(jnp.sqrt(jnp.sum(fy * fy, axis=-1, keepdims=True)) + eps,
                          approx=True)
    d = fx * inv_x - fy * inv_y
    # 1x1 "lin" weighting as an MXU matmul (column 0 = weighted channel sum).
    part = jnp.dot(d * d, w_ref[...], preferred_element_type=jnp.float32)  # [tr, 128]
    acc_ref[...] += jnp.sum(part, axis=0, keepdims=True)                   # [1, 128]

    @pl.when(pl.program_id(0) == pl.num_programs(0) - 1)
    def _():
        o_ref[...] = acc_ref[...]


def lpips_layer_sum(fx, fy, w_col, *, tr=512):
    """sum over (rows, channels) of w_c * (norm(fx) - norm(fy))^2. fx, fy: [R, C]."""
    R, C = fx.shape
    tr = min(tr, _round_up(R, 8))
    Rp = _round_up(R, tr)
    fxp = jnp.pad(fx, ((0, Rp - R), (0, 0)))
    fyp = jnp.pad(fy, ((0, Rp - R), (0, 0)))
    out = pl.pallas_call(
        _lpips_layer_kernel,
        out_shape=jax.ShapeDtypeStruct((1, 128), jnp.float32),
        grid_spec=pltpu.PrefetchScalarGridSpec(
            num_scalar_prefetch=0,
            grid=(Rp // tr,),
            in_specs=[
                pl.BlockSpec((tr, C), lambda i: (i, 0)),
                pl.BlockSpec((tr, C), lambda i: (i, 0)),
                pl.BlockSpec((C, 128), lambda i: (0, 0)),
            ],
            out_specs=pl.BlockSpec((1, 128), lambda i: (0, 0)),
            scratch_shapes=[pltpu.VMEM((1, 128), jnp.float32)],
        ),
        compiler_params=pltpu.CompilerParams(dimension_semantics=("arbitrary",)),
    )(fxp, fyp, w_col)
    return out[0, 0]


def _l1_mse_kernel(x_ref, y_ref, l1_ref, mse_ref, a1_ref, a2_ref):
    @pl.when(pl.program_id(0) == 0)
    def _():
        a1_ref[...] = jnp.zeros_like(a1_ref)
        a2_ref[...] = jnp.zeros_like(a2_ref)

    d = x_ref[...] - y_ref[...]
    a1_ref[...] += jnp.sum(jnp.abs(d), axis=0, keepdims=True)
    a2_ref[...] += jnp.sum(d * d, axis=0, keepdims=True)

    @pl.when(pl.program_id(0) == pl.num_programs(0) - 1)
    def _():
        l1_ref[...] = a1_ref[...]
        mse_ref[...] = a2_ref[...]


def l1_mse(x, y, *, lane=512, tr=64):
    """Mean |x-y| and mean (x-y)^2 over all elements (lane-dense, tiled)."""
    xf = x.reshape(-1).astype(jnp.float32)
    yf = y.reshape(-1).astype(jnp.float32)
    T = xf.size
    R = -(-T // lane)
    tr = min(tr, _round_up(R, 8))
    Rp = _round_up(R, tr)
    pad_n = Rp * lane - T
    xp = jnp.pad(xf, (0, pad_n)).reshape(Rp, lane)
    yp = jnp.pad(yf, (0, pad_n)).reshape(Rp, lane)
    l1s, mses = pl.pallas_call(
        _l1_mse_kernel,
        out_shape=(jax.ShapeDtypeStruct((1, lane), jnp.float32),
                   jax.ShapeDtypeStruct((1, lane), jnp.float32)),
        grid_spec=pltpu.PrefetchScalarGridSpec(
            num_scalar_prefetch=0,
            grid=(Rp // tr,),
            in_specs=[
                pl.BlockSpec((tr, lane), lambda i: (i, 0)),
                pl.BlockSpec((tr, lane), lambda i: (i, 0)),
            ],
            out_specs=(pl.BlockSpec((1, lane), lambda i: (0, 0)),
                       pl.BlockSpec((1, lane), lambda i: (0, 0))),
            scratch_shapes=[pltpu.VMEM((1, lane), jnp.float32),
                            pltpu.VMEM((1, lane), jnp.float32)],
        ),
        compiler_params=pltpu.CompilerParams(dimension_semantics=("arbitrary",)),
    )(xp, yp)
    inv = 1.0 / T
    return jnp.sum(l1s) * inv, jnp.sum(mses) * inv


# ----------------------------- JAX glue --------------------------------------

def im2col(x, kh, kw, stride, pad, c_real):
    # x: [N, H, W, C>=c_real] -> ([N*OH*OW, KH*KW*c_real], OH, OW)
    # TODO(synk): materialized im2col inflates HBM traffic by kh*kw at production
    # sizes; a direct shifted-window conv kernel (sum over (kh,kw) of [rows,C]x[C,O]
    # matmuls indexed via BlockSpec windows) would remove it entirely.
    x = x[..., :c_real]
    if pad > 0:
        x = jnp.pad(x, ((0, 0), (pad, pad), (pad, pad), (0, 0)))
    n, h, w, c = x.shape
    oh = (h - kh) // stride + 1
    ow = (w - kw) // stride + 1
    cols = []
    for i in range(kh):
        for j in range(kw):
            cols.append(x[:, i:i + stride * (oh - 1) + 1:stride,
                          j:j + stride * (ow - 1) + 1:stride, :])
    p = jnp.stack(cols, axis=3)                          # [N, OH, OW, KH*KW, C]
    return p.reshape(n * oh * ow, kh * kw * c), oh, ow


def conv_relu(x_nhwc, w, b, stride, pad):
    # w: [KH, KW, IC, OC], b: [OC]; matmul + bias + relu run in the Pallas kernel.
    # Output channels are padded to a multiple of 128 (extra channels are exactly 0).
    n = x_nhwc.shape[0]
    kh, kw, ic, oc = w.shape
    oc_p = _round_up(oc, 128)
    w2 = jnp.pad(w, ((0, 0), (0, 0), (0, 0), (0, oc_p - oc))).reshape(kh * kw * ic, oc_p)
    b2 = jnp.pad(b, (0, oc_p - oc)).reshape(1, oc_p)
    patches, oh, ow = im2col(x_nhwc, kh, kw, stride, pad, ic)
    out = matmul_bias_relu(patches, w2, b2)              # [M, oc_p] bf16
    return out.reshape(n, oh, ow, oc_p)


def maxpool_3x3_s2(x_nhwc):
    # TODO(synk): overlapping 3x3/s2 max-pool kept in XLA glue (lax.reduce_window);
    # no clean strided-window expression for a tiled Pallas kernel here.
    return lax.reduce_window(x_nhwc, jnp.array(-jnp.inf, x_nhwc.dtype), lax.max,
                             window_dimensions=(1, 3, 3, 1),
                             window_strides=(1, 2, 2, 1),
                             padding="VALID")


def alexnet_features(x_nhwc, conv_ws, conv_bs):
    feats = []
    h = x_nhwc
    for i, (_, _, _, stride, pad) in enumerate(CONV_CFG):
        h = conv_relu(h, conv_ws[i], conv_bs[i], stride, pad)
        feats.append(h)                                   # relu1 .. relu5 taps
        if i < 2:
            h = maxpool_3x3_s2(h)
    return feats


def hybrid_loss(x_nchw, y_nchw, conv_ws, conv_bs, lin_ws, alpha=ALPHA):
    x = jnp.transpose(x_nchw, (0, 2, 3, 1)).astype(jnp.float32)   # -> NHWC
    y = jnp.transpose(y_nchw, (0, 2, 3, 1)).astype(jnp.float32)
    b = x.shape[0]

    # One feature pass over [x; y] instead of two.
    xy = jnp.concatenate([x, y], axis=0)
    s = (xy - SHIFT) * (1.0 / SCALE)                      # LPIPS ScalingLayer
    feats = alexnet_features(s, conv_ws, conv_bs)
    # TODO(synk): fusing the LPIPS distance into the conv epilogue would remove the
    # feature-map HBM round trip; kept as a separate tiled kernel here.

    l_lpips = jnp.float32(0.0)
    for f, w_lin, cfg in zip(feats, lin_ws, CONV_CFG):
        oc = cfg[1]
        _, oh, ow, cp = f.shape
        fx = f[:b].reshape(b * oh * ow, cp)
        fy = f[b:].reshape(b * oh * ow, cp)
        w_col = jnp.zeros((cp, 128), jnp.float32).at[:oc, 0].set(w_lin[0])
        # spatial_average then batch-mean == sum / (B*OH*OW)
        l_lpips = l_lpips + lpips_layer_sum(fx, fy, w_col) / (b * oh * ow)

    l1, mse = l1_mse(x_nchw, y_nchw)                      # on raw inputs, f32
    losses = l_lpips + (1.0 - alpha) * l1 + alpha * mse
    return losses * 10.0


def init_params(key):
    conv_ws, conv_bs, lin_ws = [], [], []
    for (ic, oc, k, _, _) in CONV_CFG:
        key, wk, bk = jax.random.split(key, 3)
        fan_in = ic * k * k
        conv_ws.append(jax.random.normal(wk, (k, k, ic, oc), jnp.float32)
                       * (2.0 / fan_in) ** 0.5)
        conv_bs.append(jax.random.normal(bk, (oc,), jnp.float32) * 0.01)
    for (_, oc, _, _, _) in CONV_CFG:
        key, lk = jax.random.split(key)
        lin_ws.append(jnp.abs(jax.random.normal(lk, (1, oc), jnp.float32)) * 0.1)
    return conv_ws, conv_bs, lin_ws


if __name__ == "__main__":
    key = jax.random.PRNGKey(0)
    kx, ky, kp = jax.random.split(key, 3)
    # NCHW like the PyTorch module; 64x64 is the smallest spatial size that
    # survives the 5-layer AlexNet feature stack used by LPIPS.
    x = jax.random.uniform(kx, (2, 3, 64, 64), jnp.float32, -1.0, 1.0)
    y = jax.random.uniform(ky, (2, 3, 64, 64), jnp.float32, -1.0, 1.0)
    conv_ws, conv_bs, lin_ws = init_params(kp)

    loss_fn = jax.jit(functools.partial(hybrid_loss, alpha=ALPHA))
    loss = loss_fn(x, y, conv_ws, conv_bs, lin_ws)
    jax.block_until_ready(loss)
    assert loss.shape == () and bool(jnp.isfinite(loss))
    print("KERNEL_OK")
</pallas_src>

<mosaic_0001>
module attributes {stable_mosaic.version = 11 : i64} {
  func.func @_matmul_bias_relu_kernel(%arg0: i32, %arg1: i32, %arg2: i32, %arg3: memref<256x128xbf16, #tpu.memory_space<vmem>>, %arg4: memref<128x128xbf16, #tpu.memory_space<vmem>>, %arg5: memref<1x128xf32, #tpu.memory_space<vmem>>, %arg6: memref<256x128xbf16, #tpu.memory_space<vmem>>, %arg7: memref<256x128xf32, #tpu.memory_space<vmem>>) attributes {dimension_semantics = [#tpu.dimension_semantics<parallel>, #tpu.dimension_semantics<parallel>, #tpu.dimension_semantics<arbitrary>], iteration_bounds = array<i64: 4, 1, 3>, scalar_prefetch = 0 : i64, scratch_operands = 1 : i64, tpu.core_type = #tpu.core_type<tc>, window_params = [{transform_indices = @transform_0, window_bounds = array<i64: 256, 128>}, {transform_indices = @transform_1, window_bounds = array<i64: 128, 128>}, {transform_indices = @transform_2, window_bounds = array<i64: 1, 128>}, {transform_indices = @transform_3, window_bounds = array<i64: 256, 128>}]} {
    %c0_i32 = arith.constant 0 : i32
    %0 = arith.cmpi eq, %arg2, %c0_i32 : i32
    %1 = arith.extui %0 : i1 to i32
    %c0_i32_0 = arith.constant 0 : i32
    %2 = arith.cmpi ne, %1, %c0_i32_0 : i32
    scf.if %2 {
      %cst_9 = arith.constant 0.000000e+00 : f32
      %12 = vector.broadcast %cst_9 : f32 to vector<256x128xf32>
      %c0_10 = arith.constant 0 : index
      %c0_11 = arith.constant 0 : index
      %13 = vector.load %arg7[%c0_10, %c0_11] : memref<256x128xf32, #tpu.memory_space<vmem>>, vector<256x128xf32>
      tpu.vector_store %arg7[%c0_10, %c0_11], %12 {strides = array<i32>} : memref<256x128xf32, #tpu.memory_space<vmem>>, vector<256x128xf32>,
    } else {
    }
    %c0 = arith.constant 0 : index
    %c0_1 = arith.constant 0 : index
    %3 = vector.load %arg7[%c0, %c0_1] : memref<256x128xf32, #tpu.memory_space<vmem>>, vector<256x128xf32>
    %c0_2 = arith.constant 0 : index
    %c0_3 = arith.constant 0 : index
    %4 = vector.load %arg3[%c0_2, %c0_3] : memref<256x128xbf16, #tpu.memory_space<vmem>>, vector<256x128xbf16>
    %c0_4 = arith.constant 0 : index
    %c0_5 = arith.constant 0 : index
    %5 = vector.load %arg4[%c0_4, %c0_5] : memref<128x128xbf16, #tpu.memory_space<vmem>>, vector<128x128xbf16>
    %cst = arith.constant dense<0.000000e+00> : vector<256x128xf32>
    %6 = tpu.matmul %4, %5, %cst {dimension_numbers = #tpu.dot_dimension_numbers<[1], [0], [0], [1], [0, 0, 1, 1], [], []>} : vector<256x128xbf16>, vector<128x128xbf16>, vector<256x128xf32> -> vector<256x128xf32>
    %7 = arith.addf %3, %6 : vector<256x128xf32>
    %c0_6 = arith.constant 0 : index
    %c0_7 = arith.constant 0 : index
    %8 = vector.load %arg7[%c0_6, %c0_7] : memref<256x128xf32, #tpu.memory_space<vmem>>, vector<256x128xf32>
    tpu.vector_store %arg7[%c0_6, %c0_7], %7 {strides = array<i32>} : memref<256x128xf32, #tpu.memory_space<vmem>>, vector<256x128xf32>,
    %c2_i32 = arith.constant 2 : i32
    %9 = arith.cmpi eq, %arg2, %c2_i32 : i32
    %10 = arith.extui %9 : i1 to i32
    %c0_i32_8 = arith.constant 0 : i32
    %11 = arith.cmpi ne, %10, %c0_i32_8 : i32
    scf.if %11 {
      %c0_9 = arith.constant 0 : index
      %c0_10 = arith.constant 0 : index
      %12 = vector.load %arg7[%c0_9, %c0_10] : memref<256x128xf32, #tpu.memory_space<vmem>>, vector<256x128xf32>
      %c0_11 = arith.constant 0 : index
      %c0_12 = arith.constant 0 : index
      %13 = vector.load %arg5[%c0_11, %c0_12] : memref<1x128xf32, #tpu.memory_space<vmem>>, vector<1x128xf32>
      %14 = vector.broadcast %13 : vector<1x128xf32> to vector<256x128xf32>
      %15 = arith.addf %12, %14 : vector<256x128xf32>
      %cst_13 = arith.constant 0.000000e+00 : f32
      %16 = vector.broadcast %cst_13 : f32 to vector<256x128xf32>
      %17 = arith.maximumf %15, %16 : vector<256x128xf32>
      %18 = arith.truncf %17 : vector<256x128xf32> to vector<256x128xbf16>
      %c0_14 = arith.constant 0 : index
      %c0_15 = arith.constant 0 : index
      %19 = vector.load %arg6[%c0_14, %c0_15] : memref<256x128xbf16, #tpu.memory_space<vmem>>, vector<256x128xbf16>
      tpu.vector_store %arg6[%c0_14, %c0_15], %18 {strides = array<i32>} : memref<256x128xbf16, #tpu.memory_space<vmem>>, vector<256x128xbf16>,
    } else {
    }
    return
  }
  func.func @transform_0(%arg0: i32, %arg1: i32, %arg2: i32) -> (i32, i32) {
    %c0_i32 = arith.constant 0 : i32
    return %arg0, %arg2 : i32, i32
  }
  func.func @transform_1(%arg0: i32, %arg1: i32, %arg2: i32) -> (i32, i32) {
    %c0_i32 = arith.constant 0 : i32
    return %arg2, %arg1 : i32, i32
  }
  func.func @transform_2(%arg0: i32, %arg1: i32, %arg2: i32) -> (i32, i32) {
    %c0_i32 = arith.constant 0 : i32
    %c0_i32_0 = arith.constant 0 : i32
    return %c0_i32, %arg1 : i32, i32
  }
  func.func @transform_3(%arg0: i32, %arg1: i32, %arg2: i32) -> (i32, i32) {
    %c0_i32 = arith.constant 0 : i32
    return %arg0, %arg1 : i32, i32
  }
}

module attributes {stable_mosaic.version = 11 : i64} {
  func.func @_matmul_bias_relu_kernel(%arg0: i32, %arg1: i32, %arg2: i32, %arg3: memref<200x128xbf16, #tpu.memory_space<vmem>>, %arg4: memref<128x256xbf16, #tpu.memory_space<vmem>>, %arg5: memref<1x256xf32, #tpu.memory_space<vmem>>, %arg6: memref<200x256xbf16, #tpu.memory_space<vmem>>, %arg7: memref<200x256xf32, #tpu.memory_space<vmem>>) attributes {dimension_semantics = [#tpu.dimension_semantics<parallel>, #tpu.dimension_semantics<parallel>, #tpu.dimension_semantics<arbitrary>], iteration_bounds = array<i64: 1, 1, 13>, scalar_prefetch = 0 : i64, scratch_operands = 1 : i64, tpu.core_type = #tpu.core_type<tc>, window_params = [{transform_indices = @transform_0, window_bounds = array<i64: 200, 128>}, {transform_indices = @transform_1, window_bounds = array<i64: 128, 256>}, {transform_indices = @transform_2, window_bounds = array<i64: 1, 256>}, {transform_indices = @transform_3, window_bounds = array<i64: 200, 256>}]} {
    %c0_i32 = arith.constant 0 : i32
    %0 = arith.cmpi eq, %arg2, %c0_i32 : i32
    %1 = arith.extui %0 : i1 to i32
    %c0_i32_0 = arith.constant 0 : i32
    %2 = arith.cmpi ne, %1, %c0_i32_0 : i32
    scf.if %2 {
      %cst_9 = arith.constant 0.000000e+00 : f32
      %12 = vector.broadcast %cst_9 : f32 to vector<200x256xf32>
      %c0_10 = arith.constant 0 : index
      %c0_11 = arith.constant 0 : index
      %13 = vector.load %arg7[%c0_10, %c0_11] : memref<200x256xf32, #tpu.memory_space<vmem>>, vector<200x256xf32>
      tpu.vector_store %arg7[%c0_10, %c0_11], %12 {strides = array<i32>} : memref<200x256xf32, #tpu.memory_space<vmem>>, vector<200x256xf32>,
    } else {
    }
    %c0 = arith.constant 0 : index
    %c0_1 = arith.constant 0 : index
    %3 = vector.load %arg7[%c0, %c0_1] : memref<200x256xf32, #tpu.memory_space<vmem>>, vector<200x256xf32>
    %c0_2 = arith.constant 0 : index
    %c0_3 = arith.constant 0 : index
    %4 = vector.load %arg3[%c0_2, %c0_3] : memref<200x128xbf16, #tpu.memory_space<vmem>>, vector<200x128xbf16>
    %c0_4 = arith.constant 0 : index
    %c0_5 = arith.constant 0 : index
    %5 = vector.load %arg4[%c0_4, %c0_5] : memref<128x256xbf16, #tpu.memory_space<vmem>>, vector<128x256xbf16>
    %cst = arith.constant dense<0.000000e+00> : vector<200x256xf32>
    %6 = tpu.matmul %4, %5, %cst {dimension_numbers = #tpu.dot_dimension_numbers<[1], [0], [0], [1], [0, 0, 1, 1], [], []>} : vector<200x128xbf16>, vector<128x256xbf16>, vector<200x256xf32> -> vector<200x256xf32>
    %7 = arith.addf %3, %6 : vector<200x256xf32>
    %c0_6 = arith.constant 0 : index
    %c0_7 = arith.constant 0 : index
    %8 = vector.load %arg7[%c0_6, %c0_7] : memref<200x256xf32, #tpu.memory_space<vmem>>, vector<200x256xf32>
    tpu.vector_store %arg7[%c0_6, %c0_7], %7 {strides = array<i32>} : memref<200x256xf32, #tpu.memory_space<vmem>>, vector<200x256xf32>,
    %c12_i32 = arith.constant 12 : i32
    %9 = arith.cmpi eq, %arg2, %c12_i32 : i32
    %10 = arith.extui %9 : i1 to i32
    %c0_i32_8 = arith.constant 0 : i32
    %11 = arith.cmpi ne, %10, %c0_i32_8 : i32
    scf.if %11 {
      %c0_9 = arith.constant 0 : index
      %c0_10 = arith.constant 0 : index
      %12 = vector.load %arg7[%c0_9, %c0_10] : memref<200x256xf32, #tpu.memory_space<vmem>>, vector<200x256xf32>
      %c0_11 = arith.constant 0 : index
      %c0_12 = arith.constant 0 : index
      %13 = vector.load %arg5[%c0_11, %c0_12] : memref<1x256xf32, #tpu.memory_space<vmem>>, vector<1x256xf32>
      %14 = vector.broadcast %13 : vector<1x256xf32> to vector<200x256xf32>
      %15 = arith.addf %12, %14 : vector<200x256xf32>
      %cst_13 = arith.constant 0.000000e+00 : f32
      %16 = vector.broadcast %cst_13 : f32 to vector<200x256xf32>
      %17 = arith.maximumf %15, %16 : vector<200x256xf32>
      %18 = arith.truncf %17 : vector<200x256xf32> to vector<200x256xbf16>
      %c0_14 = arith.constant 0 : index
      %c0_15 = arith.constant 0 : index
      %19 = vector.load %arg6[%c0_14, %c0_15] : memref<200x256xbf16, #tpu.memory_space<vmem>>, vector<200x256xbf16>
      tpu.vector_store %arg6[%c0_14, %c0_15], %18 {strides = array<i32>} : memref<200x256xbf16, #tpu.memory_space<vmem>>, vector<200x256xbf16>,
    } else {
    }
    return
  }
  func.func @transform_0(%arg0: i32, %arg1: i32, %arg2: i32) -> (i32, i32) {
    %c0_i32 = arith.constant 0 : i32
    return %arg0, %arg2 : i32, i32
  }
  func.func @transform_1(%arg0: i32, %arg1: i32, %arg2: i32) -> (i32, i32) {
    %c0_i32 = arith.constant 0 : i32
    return %arg2, %arg1 : i32, i32
  }
  func.func @transform_2(%arg0: i32, %arg1: i32, %arg2: i32) -> (i32, i32) {
    %c0_i32 = arith.constant 0 : i32
    %c0_i32_0 = arith.constant 0 : i32
    return %c0_i32, %arg1 : i32, i32
  }
  func.func @transform_3(%arg0: i32, %arg1: i32, %arg2: i32) -> (i32, i32) {
    %c0_i32 = arith.constant 0 : i32
    return %arg0, %arg1 : i32, i32
  }
}

module attributes {stable_mosaic.version = 11 : i64} {
  func.func @_matmul_bias_relu_kernel(%arg0: i32, %arg1: i32, %arg2: i32, %arg3: memref<40x256xbf16, #tpu.memory_space<vmem>>, %arg4: memref<256x128xbf16, #tpu.memory_space<vmem>>, %arg5: memref<1x128xf32, #tpu.memory_space<vmem>>, %arg6: memref<40x128xbf16, #tpu.memory_space<vmem>>, %arg7: memref<40x128xf32, #tpu.memory_space<vmem>>) attributes {dimension_semantics = [#tpu.dimension_semantics<parallel>, #tpu.dimension_semantics<parallel>, #tpu.dimension_semantics<arbitrary>], iteration_bounds = array<i64: 1, 3, 7>, scalar_prefetch = 0 : i64, scratch_operands = 1 : i64, tpu.core_type = #tpu.core_type<tc>, window_params = [{transform_indices = @transform_0, window_bounds = array<i64: 40, 256>}, {transform_indices = @transform_1, window_bounds = array<i64: 256, 128>}, {transform_indices = @transform_2, window_bounds = array<i64: 1, 128>}, {transform_indices = @transform_3, window_bounds = array<i64: 40, 128>}]} {
    %c0_i32 = arith.constant 0 : i32
    %0 = arith.cmpi eq, %arg2, %c0_i32 : i32
    %1 = arith.extui %0 : i1 to i32
    %c0_i32_0 = arith.constant 0 : i32
    %2 = arith.cmpi ne, %1, %c0_i32_0 : i32
    scf.if %2 {
      %cst_9 = arith.constant 0.000000e+00 : f32
      %12 = vector.broadcast %cst_9 : f32 to vector<40x128xf32>
      %c0_10 = arith.constant 0 : index
      %c0_11 = arith.constant 0 : index
      %13 = vector.load %arg7[%c0_10, %c0_11] : memref<40x128xf32, #tpu.memory_space<vmem>>, vector<40x128xf32>
      tpu.vector_store %arg7[%c0_10, %c0_11], %12 {strides = array<i32>} : memref<40x128xf32, #tpu.memory_space<vmem>>, vector<40x128xf32>,
    } else {
    }
    %c0 = arith.constant 0 : index
    %c0_1 = arith.constant 0 : index
    %3 = vector.load %arg7[%c0, %c0_1] : memref<40x128xf32, #tpu.memory_space<vmem>>, vector<40x128xf32>
    %c0_2 = arith.constant 0 : index
    %c0_3 = arith.constant 0 : index
    %4 = vector.load %arg3[%c0_2, %c0_3] : memref<40x256xbf16, #tpu.memory_space<vmem>>, vector<40x256xbf16>
    %c0_4 = arith.constant 0 : index
    %c0_5 = arith.constant 0 : index
    %5 = vector.load %arg4[%c0_4, %c0_5] : memref<256x128xbf16, #tpu.memory_space<vmem>>, vector<256x128xbf16>
    %cst = arith.constant dense<0.000000e+00> : vector<40x128xf32>
    %6 = tpu.matmul %4, %5, %cst {dimension_numbers = #tpu.dot_dimension_numbers<[1], [0], [0], [1], [0, 0, 1, 1], [], []>} : vector<40x256xbf16>, vector<256x128xbf16>, vector<40x128xf32> -> vector<40x128xf32>
    %7 = arith.addf %3, %6 : vector<40x128xf32>
    %c0_6 = arith.constant 0 : index
    %c0_7 = arith.constant 0 : index
    %8 = vector.load %arg7[%c0_6, %c0_7] : memref<40x128xf32, #tpu.memory_space<vmem>>, vector<40x128xf32>
    tpu.vector_store %arg7[%c0_6, %c0_7], %7 {strides = array<i32>} : memref<40x128xf32, #tpu.memory_space<vmem>>, vector<40x128xf32>,
    %c6_i32 = arith.constant 6 : i32
    %9 = arith.cmpi eq, %arg2, %c6_i32 : i32
    %10 = arith.extui %9 : i1 to i32
    %c0_i32_8 = arith.constant 0 : i32
    %11 = arith.cmpi ne, %10, %c0_i32_8 : i32
    scf.if %11 {
      %c0_9 = arith.constant 0 : index
      %c0_10 = arith.constant 0 : index
      %12 = vector.load %arg7[%c0_9, %c0_10] : memref<40x128xf32, #tpu.memory_space<vmem>>, vector<40x128xf32>
      %c0_11 = arith.constant 0 : index
      %c0_12 = arith.constant 0 : index
      %13 = vector.load %arg5[%c0_11, %c0_12] : memref<1x128xf32, #tpu.memory_space<vmem>>, vector<1x128xf32>
      %14 = vector.broadcast %13 : vector<1x128xf32> to vector<40x128xf32>
      %15 = arith.addf %12, %14 : vector<40x128xf32>
      %cst_13 = arith.constant 0.000000e+00 : f32
      %16 = vector.broadcast %cst_13 : f32 to vector<40x128xf32>
      %17 = arith.maximumf %15, %16 : vector<40x128xf32>
      %18 = arith.truncf %17 : vector<40x128xf32> to vector<40x128xbf16>
      %c0_14 = arith.constant 0 : index
      %c0_15 = arith.constant 0 : index
      %19 = vector.load %arg6[%c0_14, %c0_15] : memref<40x128xbf16, #tpu.memory_space<vmem>>, vector<40x128xbf16>
      tpu.vector_store %arg6[%c0_14, %c0_15], %18 {strides = array<i32>} : memref<40x128xbf16, #tpu.memory_space<vmem>>, vector<40x128xbf16>,
    } else {
    }
    return
  }
  func.func @transform_0(%arg0: i32, %arg1: i32, %arg2: i32) -> (i32, i32) {
    %c0_i32 = arith.constant 0 : i32
    return %arg0, %arg2 : i32, i32
  }
  func.func @transform_1(%arg0: i32, %arg1: i32, %arg2: i32) -> (i32, i32) {
    %c0_i32 = arith.constant 0 : i32
    return %arg2, %arg1 : i32, i32
  }
  func.func @transform_2(%arg0: i32, %arg1: i32, %arg2: i32) -> (i32, i32) {
    %c0_i32 = arith.constant 0 : i32
    %c0_i32_0 = arith.constant 0 : i32
    return %c0_i32, %arg1 : i32, i32
  }
  func.func @transform_3(%arg0: i32, %arg1: i32, %arg2: i32) -> (i32, i32) {
    %c0_i32 = arith.constant 0 : i32
    return %arg0, %arg1 : i32, i32
  }
}

module attributes {stable_mosaic.version = 11 : i64} {
  func.func @_matmul_bias_relu_kernel(%arg0: i32, %arg1: i32, %arg2: i32, %arg3: memref<40x128xbf16, #tpu.memory_space<vmem>>, %arg4: memref<128x256xbf16, #tpu.memory_space<vmem>>, %arg5: memref<1x256xf32, #tpu.memory_space<vmem>>, %arg6: memref<40x256xbf16, #tpu.memory_space<vmem>>, %arg7: memref<40x256xf32, #tpu.memory_space<vmem>>) attributes {dimension_semantics = [#tpu.dimension_semantics<parallel>, #tpu.dimension_semantics<parallel>, #tpu.dimension_semantics<arbitrary>], iteration_bounds = array<i64: 1, 1, 27>, scalar_prefetch = 0 : i64, scratch_operands = 1 : i64, tpu.core_type = #tpu.core_type<tc>, window_params = [{transform_indices = @transform_0, window_bounds = array<i64: 40, 128>}, {transform_indices = @transform_1, window_bounds = array<i64: 128, 256>}, {transform_indices = @transform_2, window_bounds = array<i64: 1, 256>}, {transform_indices = @transform_3, window_bounds = array<i64: 40, 256>}]} {
    %c0_i32 = arith.constant 0 : i32
    %0 = arith.cmpi eq, %arg2, %c0_i32 : i32
    %1 = arith.extui %0 : i1 to i32
    %c0_i32_0 = arith.constant 0 : i32
    %2 = arith.cmpi ne, %1, %c0_i32_0 : i32
    scf.if %2 {
      %cst_9 = arith.constant 0.000000e+00 : f32
      %12 = vector.broadcast %cst_9 : f32 to vector<40x256xf32>
      %c0_10 = arith.constant 0 : index
      %c0_11 = arith.constant 0 : index
      %13 = vector.load %arg7[%c0_10, %c0_11] : memref<40x256xf32, #tpu.memory_space<vmem>>, vector<40x256xf32>
      tpu.vector_store %arg7[%c0_10, %c0_11], %12 {strides = array<i32>} : memref<40x256xf32, #tpu.memory_space<vmem>>, vector<40x256xf32>,
    } else {
    }
    %c0 = arith.constant 0 : index
    %c0_1 = arith.constant 0 : index
    %3 = vector.load %arg7[%c0, %c0_1] : memref<40x256xf32, #tpu.memory_space<vmem>>, vector<40x256xf32>
    %c0_2 = arith.constant 0 : index
    %c0_3 = arith.constant 0 : index
    %4 = vector.load %arg3[%c0_2, %c0_3] : memref<40x128xbf16, #tpu.memory_space<vmem>>, vector<40x128xbf16>
    %c0_4 = arith.constant 0 : index
    %c0_5 = arith.constant 0 : index
    %5 = vector.load %arg4[%c0_4, %c0_5] : memref<128x256xbf16, #tpu.memory_space<vmem>>, vector<128x256xbf16>
    %cst = arith.constant dense<0.000000e+00> : vector<40x256xf32>
    %6 = tpu.matmul %4, %5, %cst {dimension_numbers = #tpu.dot_dimension_numbers<[1], [0], [0], [1], [0, 0, 1, 1], [], []>} : vector<40x128xbf16>, vector<128x256xbf16>, vector<40x256xf32> -> vector<40x256xf32>
    %7 = arith.addf %3, %6 : vector<40x256xf32>
    %c0_6 = arith.constant 0 : index
    %c0_7 = arith.constant 0 : index
    %8 = vector.load %arg7[%c0_6, %c0_7] : memref<40x256xf32, #tpu.memory_space<vmem>>, vector<40x256xf32>
    tpu.vector_store %arg7[%c0_6, %c0_7], %7 {strides = array<i32>} : memref<40x256xf32, #tpu.memory_space<vmem>>, vector<40x256xf32>,
    %c26_i32 = arith.constant 26 : i32
    %9 = arith.cmpi eq, %arg2, %c26_i32 : i32
    %10 = arith.extui %9 : i1 to i32
    %c0_i32_8 = arith.constant 0 : i32
    %11 = arith.cmpi ne, %10, %c0_i32_8 : i32
    scf.if %11 {
      %c0_9 = arith.constant 0 : index
      %c0_10 = arith.constant 0 : index
      %12 = vector.load %arg7[%c0_9, %c0_10] : memref<40x256xf32, #tpu.memory_space<vmem>>, vector<40x256xf32>
      %c0_11 = arith.constant 0 : index
      %c0_12 = arith.constant 0 : index
      %13 = vector.load %arg5[%c0_11, %c0_12] : memref<1x256xf32, #tpu.memory_space<vmem>>, vector<1x256xf32>
      %14 = vector.broadcast %13 : vector<1x256xf32> to vector<40x256xf32>
      %15 = arith.addf %12, %14 : vector<40x256xf32>
      %cst_13 = arith.constant 0.000000e+00 : f32
      %16 = vector.broadcast %cst_13 : f32 to vector<40x256xf32>
      %17 = arith.maximumf %15, %16 : vector<40x256xf32>
      %18 = arith.truncf %17 : vector<40x256xf32> to vector<40x256xbf16>
      %c0_14 = arith.constant 0 : index
      %c0_15 = arith.constant 0 : index
      %19 = vector.load %arg6[%c0_14, %c0_15] : memref<40x256xbf16, #tpu.memory_space<vmem>>, vector<40x256xbf16>
      tpu.vector_store %arg6[%c0_14, %c0_15], %18 {strides = array<i32>} : memref<40x256xbf16, #tpu.memory_space<vmem>>, vector<40x256xbf16>,
    } else {
    }
    return
  }
  func.func @transform_0(%arg0: i32, %arg1: i32, %arg2: i32) -> (i32, i32) {
    %c0_i32 = arith.constant 0 : i32
    return %arg0, %arg2 : i32, i32
  }
  func.func @transform_1(%arg0: i32, %arg1: i32, %arg2: i32) -> (i32, i32) {
    %c0_i32 = arith.constant 0 : i32
    return %arg2, %arg1 : i32, i32
  }
  func.func @transform_2(%arg0: i32, %arg1: i32, %arg2: i32) -> (i32, i32) {
    %c0_i32 = arith.constant 0 : i32
    %c0_i32_0 = arith.constant 0 : i32
    return %c0_i32, %arg1 : i32, i32
  }
  func.func @transform_3(%arg0: i32, %arg1: i32, %arg2: i32) -> (i32, i32) {
    %c0_i32 = arith.constant 0 : i32
    return %arg0, %arg1 : i32, i32
  }
}

module attributes {stable_mosaic.version = 11 : i64} {
  func.func @_matmul_bias_relu_kernel(%arg0: i32, %arg1: i32, %arg2: i32, %arg3: memref<40x256xbf16, #tpu.memory_space<vmem>>, %arg4: memref<256x256xbf16, #tpu.memory_space<vmem>>, %arg5: memref<1x256xf32, #tpu.memory_space<vmem>>, %arg6: memref<40x256xbf16, #tpu.memory_space<vmem>>, %arg7: memref<40x256xf32, #tpu.memory_space<vmem>>) attributes {dimension_semantics = [#tpu.dimension_semantics<parallel>, #tpu.dimension_semantics<parallel>, #tpu.dimension_semantics<arbitrary>], iteration_bounds = array<i64: 1, 1, 9>, scalar_prefetch = 0 : i64, scratch_operands = 1 : i64, tpu.core_type = #tpu.core_type<tc>, window_params = [{transform_indices = @transform_0, window_bounds = array<i64: 40, 256>}, {transform_indices = @transform_1, window_bounds = array<i64: 256, 256>}, {transform_indices = @transform_2, window_bounds = array<i64: 1, 256>}, {transform_indices = @transform_3, window_bounds = array<i64: 40, 256>}]} {
    %c0_i32 = arith.constant 0 : i32
    %0 = arith.cmpi eq, %arg2, %c0_i32 : i32
    %1 = arith.extui %0 : i1 to i32
    %c0_i32_0 = arith.constant 0 : i32
    %2 = arith.cmpi ne, %1, %c0_i32_0 : i32
    scf.if %2 {
      %cst_9 = arith.constant 0.000000e+00 : f32
      %12 = vector.broadcast %cst_9 : f32 to vector<40x256xf32>
      %c0_10 = arith.constant 0 : index
      %c0_11 = arith.constant 0 : index
      %13 = vector.load %arg7[%c0_10, %c0_11] : memref<40x256xf32, #tpu.memory_space<vmem>>, vector<40x256xf32>
      tpu.vector_store %arg7[%c0_10, %c0_11], %12 {strides = array<i32>} : memref<40x256xf32, #tpu.memory_space<vmem>>, vector<40x256xf32>,
    } else {
    }
    %c0 = arith.constant 0 : index
    %c0_1 = arith.constant 0 : index
    %3 = vector.load %arg7[%c0, %c0_1] : memref<40x256xf32, #tpu.memory_space<vmem>>, vector<40x256xf32>
    %c0_2 = arith.constant 0 : index
    %c0_3 = arith.constant 0 : index
    %4 = vector.load %arg3[%c0_2, %c0_3] : memref<40x256xbf16, #tpu.memory_space<vmem>>, vector<40x256xbf16>
    %c0_4 = arith.constant 0 : index
    %c0_5 = arith.constant 0 : index
    %5 = vector.load %arg4[%c0_4, %c0_5] : memref<256x256xbf16, #tpu.memory_space<vmem>>, vector<256x256xbf16>
    %cst = arith.constant dense<0.000000e+00> : vector<40x256xf32>
    %6 = tpu.matmul %4, %5, %cst {dimension_numbers = #tpu.dot_dimension_numbers<[1], [0], [0], [1], [0, 0, 1, 1], [], []>} : vector<40x256xbf16>, vector<256x256xbf16>, vector<40x256xf32> -> vector<40x256xf32>
    %7 = arith.addf %3, %6 : vector<40x256xf32>
    %c0_6 = arith.constant 0 : index
    %c0_7 = arith.constant 0 : index
    %8 = vector.load %arg7[%c0_6, %c0_7] : memref<40x256xf32, #tpu.memory_space<vmem>>, vector<40x256xf32>
    tpu.vector_store %arg7[%c0_6, %c0_7], %7 {strides = array<i32>} : memref<40x256xf32, #tpu.memory_space<vmem>>, vector<40x256xf32>,
    %c8_i32 = arith.constant 8 : i32
    %9 = arith.cmpi eq, %arg2, %c8_i32 : i32
    %10 = arith.extui %9 : i1 to i32
    %c0_i32_8 = arith.constant 0 : i32
    %11 = arith.cmpi ne, %10, %c0_i32_8 : i32
    scf.if %11 {
      %c0_9 = arith.constant 0 : index
      %c0_10 = arith.constant 0 : index
      %12 = vector.load %arg7[%c0_9, %c0_10] : memref<40x256xf32, #tpu.memory_space<vmem>>, vector<40x256xf32>
      %c0_11 = arith.constant 0 : index
      %c0_12 = arith.constant 0 : index
      %13 = vector.load %arg5[%c0_11, %c0_12] : memref<1x256xf32, #tpu.memory_space<vmem>>, vector<1x256xf32>
      %14 = vector.broadcast %13 : vector<1x256xf32> to vector<40x256xf32>
      %15 = arith.addf %12, %14 : vector<40x256xf32>
      %cst_13 = arith.constant 0.000000e+00 : f32
      %16 = vector.broadcast %cst_13 : f32 to vector<40x256xf32>
      %17 = arith.maximumf %15, %16 : vector<40x256xf32>
      %18 = arith.truncf %17 : vector<40x256xf32> to vector<40x256xbf16>
      %c0_14 = arith.constant 0 : index
      %c0_15 = arith.constant 0 : index
      %19 = vector.load %arg6[%c0_14, %c0_15] : memref<40x256xbf16, #tpu.memory_space<vmem>>, vector<40x256xbf16>
      tpu.vector_store %arg6[%c0_14, %c0_15], %18 {strides = array<i32>} : memref<40x256xbf16, #tpu.memory_space<vmem>>, vector<40x256xbf16>,
    } else {
    }
    return
  }
  func.func @transform_0(%arg0: i32, %arg1: i32, %arg2: i32) -> (i32, i32) {
    %c0_i32 = arith.constant 0 : i32
    return %arg0, %arg2 : i32, i32
  }
  func.func @transform_1(%arg0: i32, %arg1: i32, %arg2: i32) -> (i32, i32) {
    %c0_i32 = arith.constant 0 : i32
    return %arg2, %arg1 : i32, i32
  }
  func.func @transform_2(%arg0: i32, %arg1: i32, %arg2: i32) -> (i32, i32) {
    %c0_i32 = arith.constant 0 : i32
    %c0_i32_0 = arith.constant 0 : i32
    return %c0_i32, %arg1 : i32, i32
  }
  func.func @transform_3(%arg0: i32, %arg1: i32, %arg2: i32) -> (i32, i32) {
    %c0_i32 = arith.constant 0 : i32
    return %arg0, %arg1 : i32, i32
  }
}

module attributes {stable_mosaic.version = 11 : i64} {
  func.func @_lpips_layer_kernel(%arg0: i32, %arg1: memref<24x256xbf16, #tpu.memory_space<vmem>>, %arg2: memref<24x256xbf16, #tpu.memory_space<vmem>>, %arg3: memref<256x128xf32, #tpu.memory_space<vmem>>, %arg4: memref<1x128xf32, #tpu.memory_space<vmem>>, %arg5: memref<1x128xf32, #tpu.memory_space<vmem>>) attributes {dimension_semantics = [#tpu.dimension_semantics<arbitrary>], iteration_bounds = array<i64: 1>, scalar_prefetch = 0 : i64, scratch_operands = 1 : i64, tpu.core_type = #tpu.core_type<tc>, window_params = [{transform_indices = @transform_0, window_bounds = array<i64: 24, 256>}, {transform_indices = @transform_1, window_bounds = array<i64: 24, 256>}, {pipeline_mode = #tpu.pipeline_mode<synchronous>, transform_indices = @transform_2, window_bounds = array<i64: 256, 128>}, {pipeline_mode = #tpu.pipeline_mode<synchronous>, transform_indices = @transform_3, window_bounds = array<i64: 1, 128>}]} {
    %c0_i32 = arith.constant 0 : i32
    %0 = arith.cmpi eq, %arg0, %c0_i32 : i32
    %1 = arith.extui %0 : i1 to i32
    %c0_i32_0 = arith.constant 0 : i32
    %2 = arith.cmpi ne, %1, %c0_i32_0 : i32
    scf.if %2 {
      %cst_17 = arith.constant 0.000000e+00 : f32
      %37 = vector.broadcast %cst_17 : f32 to vector<1x128xf32>
      %c0_18 = arith.constant 0 : index
      %c0_19 = arith.constant 0 : index
      %38 = vector.load %arg5[%c0_18, %c0_19] : memref<1x128xf32, #tpu.memory_space<vmem>>, vector<1x128xf32>
      tpu.vector_store %arg5[%c0_18, %c0_19], %37 {strides = array<i32>} : memref<1x128xf32, #tpu.memory_space<vmem>>, vector<1x128xf32>,
    } else {
    }
    %c0 = arith.constant 0 : index
    %c0_1 = arith.constant 0 : index
    %3 = vector.load %arg1[%c0, %c0_1] : memref<24x256xbf16, #tpu.memory_space<vmem>>, vector<24x256xbf16>
    %4 = arith.extf %3 : vector<24x256xbf16> to vector<24x256xf32>
    %c0_2 = arith.constant 0 : index
    %c0_3 = arith.constant 0 : index
    %5 = vector.load %arg2[%c0_2, %c0_3] : memref<24x256xbf16, #tpu.memory_space<vmem>>, vector<24x256xbf16>
    %6 = arith.extf %5 : vector<24x256xbf16> to vector<24x256xf32>
    %7 = arith.mulf %4, %4 : vector<24x256xf32>
    %cst = arith.constant dense<0.000000e+00> : vector<24xf32>
    %8 = vector.multi_reduction <add>, %7, %cst [1] : vector<24x256xf32> to vector<24xf32>
    %9 = vector.shape_cast %8 : vector<24xf32> to vector<24x1xf32>
    %10 = math.sqrt %9 : vector<24x1xf32>
    %cst_4 = arith.constant 1.000000e-10 : f32
    %11 = vector.broadcast %cst_4 : f32 to vector<24x1xf32>
    %12 = arith.addf %10, %11 : vector<24x1xf32>
    %13 = tpu.reciprocal %12 {approx = true} : vector<24x1xf32> -> vector<24x1xf32>
    %14 = arith.mulf %6, %6 : vector<24x256xf32>
    %cst_5 = arith.constant dense<0.000000e+00> : vector<24xf32>
    %15 = vector.multi_reduction <add>, %14, %cst_5 [1] : vector<24x256xf32> to vector<24xf32>
    %16 = vector.shape_cast %15 : vector<24xf32> to vector<24x1xf32>
    %17 = math.sqrt %16 : vector<24x1xf32>
    %cst_6 = arith.constant 1.000000e-10 : f32
    %18 = vector.broadcast %cst_6 : f32 to vector<24x1xf32>
    %19 = arith.addf %17, %18 : vector<24x1xf32>
    %20 = tpu.reciprocal %19 {approx = true} : vector<24x1xf32> -> vector<24x1xf32>
    %21 = vector.broadcast %13 : vector<24x1xf32> to vector<24x256xf32>
    %22 = arith.mulf %4, %21 : vector<24x256xf32>
    %23 = vector.broadcast %20 : vector<24x1xf32> to vector<24x256xf32>
    %24 = arith.mulf %6, %23 : vector<24x256xf32>
    %25 = arith.subf %22, %24 : vector<24x256xf32>
    %26 = arith.mulf %25, %25 : vector<24x256xf32>
    %c0_7 = arith.constant 0 : index
    %c0_8 = arith.constant 0 : index
    %27 = vector.load %arg3[%c0_7, %c0_8] : memref<256x128xf32, #tpu.memory_space<vmem>>, vector<256x128xf32>
    %cst_9 = arith.constant dense<0.000000e+00> : vector<24x128xf32>
    %28 = tpu.matmul %26, %27, %cst_9 {dimension_numbers = #tpu.dot_dimension_numbers<[1], [0], [0], [1], [0, 0, 1, 1], [], []>} : vector<24x256xf32>, vector<256x128xf32>, vector<24x128xf32> -> vector<24x128xf32>
    %c0_10 = arith.constant 0 : index
    %c0_11 = arith.constant 0 : index
    %29 = vector.load %arg5[%c0_10, %c0_11] : memref<1x128xf32, #tpu.memory_space<vmem>>, vector<1x128xf32>
    %cst_12 = arith.constant dense<0.000000e+00> : vector<128xf32>
    %30 = vector.multi_reduction <add>, %28, %cst_12 [0] : vector<24x128xf32> to vector<128xf32>
    %31 = vector.shape_cast %30 : vector<128xf32> to vector<1x128xf32>
    %32 = arith.addf %29, %31 : vector<1x128xf32>
    %c0_13 = arith.constant 0 : index
    %c0_14 = arith.constant 0 : index
    %33 = vector.load %arg5[%c0_13, %c0_14] : memref<1x128xf32, #tpu.memory_space<vmem>>, vector<1x128xf32>
    tpu.vector_store %arg5[%c0_13, %c0_14], %32 {strides = array<i32>} : memref<1x128xf32, #tpu.memory_space<vmem>>, vector<1x128xf32>,
    %c0_i32_15 = arith.constant 0 : i32
    %34 = arith.cmpi eq, %arg0, %c0_i32_15 : i32
    %35 = arith.extui %34 : i1 to i32
    %c0_i32_16 = arith.constant 0 : i32
    %36 = arith.cmpi ne, %35, %c0_i32_16 : i32
    scf.if %36 {
      %c0_17 = arith.constant 0 : index
      %c0_18 = arith.constant 0 : index
      %37 = vector.load %arg5[%c0_17, %c0_18] : memref<1x128xf32, #tpu.memory_space<vmem>>, vector<1x128xf32>
      %c0_19 = arith.constant 0 : index
      %c0_20 = arith.constant 0 : index
      %38 = vector.load %arg4[%c0_19, %c0_20] : memref<1x128xf32, #tpu.memory_space<vmem>>, vector<1x128xf32>
      tpu.vector_store %arg4[%c0_19, %c0_20], %37 {strides = array<i32>} : memref<1x128xf32, #tpu.memory_space<vmem>>, vector<1x128xf32>,
    } else {
    }
    return
  }
  func.func @transform_0(%arg0: i32) -> (i32, i32) {
    %c0_i32 = arith.constant 0 : i32
    %c0_i32_0 = arith.constant 0 : i32
    return %arg0, %c0_i32 : i32, i32
  }
  func.func @transform_1(%arg0: i32) -> (i32, i32) {
    %c0_i32 = arith.constant 0 : i32
    %c0_i32_0 = arith.constant 0 : i32
    return %arg0, %c0_i32 : i32, i32
  }
  func.func @transform_2(%arg0: i32) -> (i32, i32) {
    %c0_i32 = arith.constant 0 : i32
    %c0_i32_0 = arith.constant 0 : i32
    %c0_i32_1 = arith.constant 0 : i32
    return %c0_i32, %c0_i32_0 : i32, i32
  }
  func.func @transform_3(%arg0: i32) -> (i32, i32) {
    %c0_i32 = arith.constant 0 : i32
    %c0_i32_0 = arith.constant 0 : i32
    %c0_i32_1 = arith.constant 0 : i32
    return %c0_i32, %c0_i32_0 : i32, i32
  }
}

module attributes {stable_mosaic.version = 11 : i64} {
  func.func @_lpips_layer_kernel(%arg0: i32, %arg1: memref<24x384xbf16, #tpu.memory_space<vmem>>, %arg2: memref<24x384xbf16, #tpu.memory_space<vmem>>, %arg3: memref<384x128xf32, #tpu.memory_space<vmem>>, %arg4: memref<1x128xf32, #tpu.memory_space<vmem>>, %arg5: memref<1x128xf32, #tpu.memory_space<vmem>>) attributes {dimension_semantics = [#tpu.dimension_semantics<arbitrary>], iteration_bounds = array<i64: 1>, scalar_prefetch = 0 : i64, scratch_operands = 1 : i64, tpu.core_type = #tpu.core_type<tc>, window_params = [{transform_indices = @transform_0, window_bounds = array<i64: 24, 384>}, {transform_indices = @transform_1, window_bounds = array<i64: 24, 384>}, {pipeline_mode = #tpu.pipeline_mode<synchronous>, transform_indices = @transform_2, window_bounds = array<i64: 384, 128>}, {pipeline_mode = #tpu.pipeline_mode<synchronous>, transform_indices = @transform_3, window_bounds = array<i64: 1, 128>}]} {
    %c0_i32 = arith.constant 0 : i32
    %0 = arith.cmpi eq, %arg0, %c0_i32 : i32
    %1 = arith.extui %0 : i1 to i32
    %c0_i32_0 = arith.constant 0 : i32
    %2 = arith.cmpi ne, %1, %c0_i32_0 : i32
    scf.if %2 {
      %cst_17 = arith.constant 0.000000e+00 : f32
      %37 = vector.broadcast %cst_17 : f32 to vector<1x128xf32>
      %c0_18 = arith.constant 0 : index
      %c0_19 = arith.constant 0 : index
      %38 = vector.load %arg5[%c0_18, %c0_19] : memref<1x128xf32, #tpu.memory_space<vmem>>, vector<1x128xf32>
      tpu.vector_store %arg5[%c0_18, %c0_19], %37 {strides = array<i32>} : memref<1x128xf32, #tpu.memory_space<vmem>>, vector<1x128xf32>,
    } else {
    }
    %c0 = arith.constant 0 : index
    %c0_1 = arith.constant 0 : index
    %3 = vector.load %arg1[%c0, %c0_1] : memref<24x384xbf16, #tpu.memory_space<vmem>>, vector<24x384xbf16>
    %4 = arith.extf %3 : vector<24x384xbf16> to vector<24x384xf32>
    %c0_2 = arith.constant 0 : index
    %c0_3 = arith.constant 0 : index
    %5 = vector.load %arg2[%c0_2, %c0_3] : memref<24x384xbf16, #tpu.memory_space<vmem>>, vector<24x384xbf16>
    %6 = arith.extf %5 : vector<24x384xbf16> to vector<24x384xf32>
    %7 = arith.mulf %4, %4 : vector<24x384xf32>
    %cst = arith.constant dense<0.000000e+00> : vector<24xf32>
    %8 = vector.multi_reduction <add>, %7, %cst [1] : vector<24x384xf32> to vector<24xf32>
    %9 = vector.shape_cast %8 : vector<24xf32> to vector<24x1xf32>
    %10 = math.sqrt %9 : vector<24x1xf32>
    %cst_4 = arith.constant 1.000000e-10 : f32
    %11 = vector.broadcast %cst_4 : f32 to vector<24x1xf32>
    %12 = arith.addf %10, %11 : vector<24x1xf32>
    %13 = tpu.reciprocal %12 {approx = true} : vector<24x1xf32> -> vector<24x1xf32>
    %14 = arith.mulf %6, %6 : vector<24x384xf32>
    %cst_5 = arith.constant dense<0.000000e+00> : vector<24xf32>
    %15 = vector.multi_reduction <add>, %14, %cst_5 [1] : vector<24x384xf32> to vector<24xf32>
    %16 = vector.shape_cast %15 : vector<24xf32> to vector<24x1xf32>
    %17 = math.sqrt %16 : vector<24x1xf32>
    %cst_6 = arith.constant 1.000000e-10 : f32
    %18 = vector.broadcast %cst_6 : f32 to vector<24x1xf32>
    %19 = arith.addf %17, %18 : vector<24x1xf32>
    %20 = tpu.reciprocal %19 {approx = true} : vector<24x1xf32> -> vector<24x1xf32>
    %21 = vector.broadcast %13 : vector<24x1xf32> to vector<24x384xf32>
    %22 = arith.mulf %4, %21 : vector<24x384xf32>
    %23 = vector.broadcast %20 : vector<24x1xf32> to vector<24x384xf32>
    %24 = arith.mulf %6, %23 : vector<24x384xf32>
    %25 = arith.subf %22, %24 : vector<24x384xf32>
    %26 = arith.mulf %25, %25 : vector<24x384xf32>
    %c0_7 = arith.constant 0 : index
    %c0_8 = arith.constant 0 : index
    %27 = vector.load %arg3[%c0_7, %c0_8] : memref<384x128xf32, #tpu.memory_space<vmem>>, vector<384x128xf32>
    %cst_9 = arith.constant dense<0.000000e+00> : vector<24x128xf32>
    %28 = tpu.matmul %26, %27, %cst_9 {dimension_numbers = #tpu.dot_dimension_numbers<[1], [0], [0], [1], [0, 0, 1, 1], [], []>} : vector<24x384xf32>, vector<384x128xf32>, vector<24x128xf32> -> vector<24x128xf32>
    %c0_10 = arith.constant 0 : index
    %c0_11 = arith.constant 0 : index
    %29 = vector.load %arg5[%c0_10, %c0_11] : memref<1x128xf32, #tpu.memory_space<vmem>>, vector<1x128xf32>
    %cst_12 = arith.constant dense<0.000000e+00> : vector<128xf32>
    %30 = vector.multi_reduction <add>, %28, %cst_12 [0] : vector<24x128xf32> to vector<128xf32>
    %31 = vector.shape_cast %30 : vector<128xf32> to vector<1x128xf32>
    %32 = arith.addf %29, %31 : vector<1x128xf32>
    %c0_13 = arith.constant 0 : index
    %c0_14 = arith.constant 0 : index
    %33 = vector.load %arg5[%c0_13, %c0_14] : memref<1x128xf32, #tpu.memory_space<vmem>>, vector<1x128xf32>
    tpu.vector_store %arg5[%c0_13, %c0_14], %32 {strides = array<i32>} : memref<1x128xf32, #tpu.memory_space<vmem>>, vector<1x128xf32>,
    %c0_i32_15 = arith.constant 0 : i32
    %34 = arith.cmpi eq, %arg0, %c0_i32_15 : i32
    %35 = arith.extui %34 : i1 to i32
    %c0_i32_16 = arith.constant 0 : i32
    %36 = arith.cmpi ne, %35, %c0_i32_16 : i32
    scf.if %36 {
      %c0_17 = arith.constant 0 : index
      %c0_18 = arith.constant 0 : index
      %37 = vector.load %arg5[%c0_17, %c0_18] : memref<1x128xf32, #tpu.memory_space<vmem>>, vector<1x128xf32>
      %c0_19 = arith.constant 0 : index
      %c0_20 = arith.constant 0 : index
      %38 = vector.load %arg4[%c0_19, %c0_20] : memref<1x128xf32, #tpu.memory_space<vmem>>, vector<1x128xf32>
      tpu.vector_store %arg4[%c0_19, %c0_20], %37 {strides = array<i32>} : memref<1x128xf32, #tpu.memory_space<vmem>>, vector<1x128xf32>,
    } else {
    }
    return
  }
  func.func @transform_0(%arg0: i32) -> (i32, i32) {
    %c0_i32 = arith.constant 0 : i32
    %c0_i32_0 = arith.constant 0 : i32
    return %arg0, %c0_i32 : i32, i32
  }
  func.func @transform_1(%arg0: i32) -> (i32, i32) {
    %c0_i32 = arith.constant 0 : i32
    %c0_i32_0 = arith.constant 0 : i32
    return %arg0, %c0_i32 : i32, i32
  }
  func.func @transform_2(%arg0: i32) -> (i32, i32) {
    %c0_i32 = arith.constant 0 : i32
    %c0_i32_0 = arith.constant 0 : i32
    %c0_i32_1 = arith.constant 0 : i32
    return %c0_i32, %c0_i32_0 : i32, i32
  }
  func.func @transform_3(%arg0: i32) -> (i32, i32) {
    %c0_i32 = arith.constant 0 : i32
    %c0_i32_0 = arith.constant 0 : i32
    %c0_i32_1 = arith.constant 0 : i32
    return %c0_i32, %c0_i32_0 : i32, i32
  }
}

module attributes {stable_mosaic.version = 11 : i64} {
  func.func @_lpips_layer_kernel(%arg0: i32, %arg1: memref<104x256xbf16, #tpu.memory_space<vmem>>, %arg2: memref<104x256xbf16, #tpu.memory_space<vmem>>, %arg3: memref<256x128xf32, #tpu.memory_space<vmem>>, %arg4: memref<1x128xf32, #tpu.memory_space<vmem>>, %arg5: memref<1x128xf32, #tpu.memory_space<vmem>>) attributes {dimension_semantics = [#tpu.dimension_semantics<arbitrary>], iteration_bounds = array<i64: 1>, scalar_prefetch = 0 : i64, scratch_operands = 1 : i64, tpu.core_type = #tpu.core_type<tc>, window_params = [{transform_indices = @transform_0, window_bounds = array<i64: 104, 256>}, {transform_indices = @transform_1, window_bounds = array<i64: 104, 256>}, {pipeline_mode = #tpu.pipeline_mode<synchronous>, transform_indices = @transform_2, window_bounds = array<i64: 256, 128>}, {pipeline_mode = #tpu.pipeline_mode<synchronous>, transform_indices = @transform_3, window_bounds = array<i64: 1, 128>}]} {
    %c0_i32 = arith.constant 0 : i32
    %0 = arith.cmpi eq, %arg0, %c0_i32 : i32
    %1 = arith.extui %0 : i1 to i32
    %c0_i32_0 = arith.constant 0 : i32
    %2 = arith.cmpi ne, %1, %c0_i32_0 : i32
    scf.if %2 {
      %cst_17 = arith.constant 0.000000e+00 : f32
      %37 = vector.broadcast %cst_17 : f32 to vector<1x128xf32>
      %c0_18 = arith.constant 0 : index
      %c0_19 = arith.constant 0 : index
      %38 = vector.load %arg5[%c0_18, %c0_19] : memref<1x128xf32, #tpu.memory_space<vmem>>, vector<1x128xf32>
      tpu.vector_store %arg5[%c0_18, %c0_19], %37 {strides = array<i32>} : memref<1x128xf32, #tpu.memory_space<vmem>>, vector<1x128xf32>,
    } else {
    }
    %c0 = arith.constant 0 : index
    %c0_1 = arith.constant 0 : index
    %3 = vector.load %arg1[%c0, %c0_1] : memref<104x256xbf16, #tpu.memory_space<vmem>>, vector<104x256xbf16>
    %4 = arith.extf %3 : vector<104x256xbf16> to vector<104x256xf32>
    %c0_2 = arith.constant 0 : index
    %c0_3 = arith.constant 0 : index
    %5 = vector.load %arg2[%c0_2, %c0_3] : memref<104x256xbf16, #tpu.memory_space<vmem>>, vector<104x256xbf16>
    %6 = arith.extf %5 : vector<104x256xbf16> to vector<104x256xf32>
    %7 = arith.mulf %4, %4 : vector<104x256xf32>
    %cst = arith.constant dense<0.000000e+00> : vector<104xf32>
    %8 = vector.multi_reduction <add>, %7, %cst [1] : vector<104x256xf32> to vector<104xf32>
    %9 = vector.shape_cast %8 : vector<104xf32> to vector<104x1xf32>
    %10 = math.sqrt %9 : vector<104x1xf32>
    %cst_4 = arith.constant 1.000000e-10 : f32
    %11 = vector.broadcast %cst_4 : f32 to vector<104x1xf32>
    %12 = arith.addf %10, %11 : vector<104x1xf32>
    %13 = tpu.reciprocal %12 {approx = true} : vector<104x1xf32> -> vector<104x1xf32>
    %14 = arith.mulf %6, %6 : vector<104x256xf32>
    %cst_5 = arith.constant dense<0.000000e+00> : vector<104xf32>
    %15 = vector.multi_reduction <add>, %14, %cst_5 [1] : vector<104x256xf32> to vector<104xf32>
    %16 = vector.shape_cast %15 : vector<104xf32> to vector<104x1xf32>
    %17 = math.sqrt %16 : vector<104x1xf32>
    %cst_6 = arith.constant 1.000000e-10 : f32
    %18 = vector.broadcast %cst_6 : f32 to vector<104x1xf32>
    %19 = arith.addf %17, %18 : vector<104x1xf32>
    %20 = tpu.reciprocal %19 {approx = true} : vector<104x1xf32> -> vector<104x1xf32>
    %21 = vector.broadcast %13 : vector<104x1xf32> to vector<104x256xf32>
    %22 = arith.mulf %4, %21 : vector<104x256xf32>
    %23 = vector.broadcast %20 : vector<104x1xf32> to vector<104x256xf32>
    %24 = arith.mulf %6, %23 : vector<104x256xf32>
    %25 = arith.subf %22, %24 : vector<104x256xf32>
    %26 = arith.mulf %25, %25 : vector<104x256xf32>
    %c0_7 = arith.constant 0 : index
    %c0_8 = arith.constant 0 : index
    %27 = vector.load %arg3[%c0_7, %c0_8] : memref<256x128xf32, #tpu.memory_space<vmem>>, vector<256x128xf32>
    %cst_9 = arith.constant dense<0.000000e+00> : vector<104x128xf32>
    %28 = tpu.matmul %26, %27, %cst_9 {dimension_numbers = #tpu.dot_dimension_numbers<[1], [0], [0], [1], [0, 0, 1, 1], [], []>} : vector<104x256xf32>, vector<256x128xf32>, vector<104x128xf32> -> vector<104x128xf32>
    %c0_10 = arith.constant 0 : index
    %c0_11 = arith.constant 0 : index
    %29 = vector.load %arg5[%c0_10, %c0_11] : memref<1x128xf32, #tpu.memory_space<vmem>>, vector<1x128xf32>
    %cst_12 = arith.constant dense<0.000000e+00> : vector<128xf32>
    %30 = vector.multi_reduction <add>, %28, %cst_12 [0] : vector<104x128xf32> to vector<128xf32>
    %31 = vector.shape_cast %30 : vector<128xf32> to vector<1x128xf32>
    %32 = arith.addf %29, %31 : vector<1x128xf32>
    %c0_13 = arith.constant 0 : index
    %c0_14 = arith.constant 0 : index
    %33 = vector.load %arg5[%c0_13, %c0_14] : memref<1x128xf32, #tpu.memory_space<vmem>>, vector<1x128xf32>
    tpu.vector_store %arg5[%c0_13, %c0_14], %32 {strides = array<i32>} : memref<1x128xf32, #tpu.memory_space<vmem>>, vector<1x128xf32>,
    %c0_i32_15 = arith.constant 0 : i32
    %34 = arith.cmpi eq, %arg0, %c0_i32_15 : i32
    %35 = arith.extui %34 : i1 to i32
    %c0_i32_16 = arith.constant 0 : i32
    %36 = arith.cmpi ne, %35, %c0_i32_16 : i32
    scf.if %36 {
      %c0_17 = arith.constant 0 : index
      %c0_18 = arith.constant 0 : index
      %37 = vector.load %arg5[%c0_17, %c0_18] : memref<1x128xf32, #tpu.memory_space<vmem>>, vector<1x128xf32>
      %c0_19 = arith.constant 0 : index
      %c0_20 = arith.constant 0 : index
      %38 = vector.load %arg4[%c0_19, %c0_20] : memref<1x128xf32, #tpu.memory_space<vmem>>, vector<1x128xf32>
      tpu.vector_store %arg4[%c0_19, %c0_20], %37 {strides = array<i32>} : memref<1x128xf32, #tpu.memory_space<vmem>>, vector<1x128xf32>,
    } else {
    }
    return
  }
  func.func @transform_0(%arg0: i32) -> (i32, i32) {
    %c0_i32 = arith.constant 0 : i32
    %c0_i32_0 = arith.constant 0 : i32
    return %arg0, %c0_i32 : i32, i32
  }
  func.func @transform_1(%arg0: i32) -> (i32, i32) {
    %c0_i32 = arith.constant 0 : i32
    %c0_i32_0 = arith.constant 0 : i32
    return %arg0, %c0_i32 : i32, i32
  }
  func.func @transform_2(%arg0: i32) -> (i32, i32) {
    %c0_i32 = arith.constant 0 : i32
    %c0_i32_0 = arith.constant 0 : i32
    %c0_i32_1 = arith.constant 0 : i32
    return %c0_i32, %c0_i32_0 : i32, i32
  }
  func.func @transform_3(%arg0: i32) -> (i32, i32) {
    %c0_i32 = arith.constant 0 : i32
    %c0_i32_0 = arith.constant 0 : i32
    %c0_i32_1 = arith.constant 0 : i32
    return %c0_i32, %c0_i32_0 : i32, i32
  }
}

module attributes {stable_mosaic.version = 11 : i64} {
  func.func @_lpips_layer_kernel(%arg0: i32, %arg1: memref<456x128xbf16, #tpu.memory_space<vmem>>, %arg2: memref<456x128xbf16, #tpu.memory_space<vmem>>, %arg3: memref<128x128xf32, #tpu.memory_space<vmem>>, %arg4: memref<1x128xf32, #tpu.memory_space<vmem>>, %arg5: memref<1x128xf32, #tpu.memory_space<vmem>>) attributes {dimension_semantics = [#tpu.dimension_semantics<arbitrary>], iteration_bounds = array<i64: 1>, scalar_prefetch = 0 : i64, scratch_operands = 1 : i64, tpu.core_type = #tpu.core_type<tc>, window_params = [{transform_indices = @transform_0, window_bounds = array<i64: 456, 128>}, {transform_indices = @transform_1, window_bounds = array<i64: 456, 128>}, {pipeline_mode = #tpu.pipeline_mode<synchronous>, transform_indices = @transform_2, window_bounds = array<i64: 128, 128>}, {pipeline_mode = #tpu.pipeline_mode<synchronous>, transform_indices = @transform_3, window_bounds = array<i64: 1, 128>}]} {
    %c0_i32 = arith.constant 0 : i32
    %0 = arith.cmpi eq, %arg0, %c0_i32 : i32
    %1 = arith.extui %0 : i1 to i32
    %c0_i32_0 = arith.constant 0 : i32
    %2 = arith.cmpi ne, %1, %c0_i32_0 : i32
    scf.if %2 {
      %cst_17 = arith.constant 0.000000e+00 : f32
      %37 = vector.broadcast %cst_17 : f32 to vector<1x128xf32>
      %c0_18 = arith.constant 0 : index
      %c0_19 = arith.constant 0 : index
      %38 = vector.load %arg5[%c0_18, %c0_19] : memref<1x128xf32, #tpu.memory_space<vmem>>, vector<1x128xf32>
      tpu.vector_store %arg5[%c0_18, %c0_19], %37 {strides = array<i32>} : memref<1x128xf32, #tpu.memory_space<vmem>>, vector<1x128xf32>,
    } else {
    }
    %c0 = arith.constant 0 : index
    %c0_1 = arith.constant 0 : index
    %3 = vector.load %arg1[%c0, %c0_1] : memref<456x128xbf16, #tpu.memory_space<vmem>>, vector<456x128xbf16>
    %4 = arith.extf %3 : vector<456x128xbf16> to vector<456x128xf32>
    %c0_2 = arith.constant 0 : index
    %c0_3 = arith.constant 0 : index
    %5 = vector.load %arg2[%c0_2, %c0_3] : memref<456x128xbf16, #tpu.memory_space<vmem>>, vector<456x128xbf16>
    %6 = arith.extf %5 : vector<456x128xbf16> to vector<456x128xf32>
    %7 = arith.mulf %4, %4 : vector<456x128xf32>
    %cst = arith.constant dense<0.000000e+00> : vector<456xf32>
    %8 = vector.multi_reduction <add>, %7, %cst [1] : vector<456x128xf32> to vector<456xf32>
    %9 = vector.shape_cast %8 : vector<456xf32> to vector<456x1xf32>
    %10 = math.sqrt %9 : vector<456x1xf32>
    %cst_4 = arith.constant 1.000000e-10 : f32
    %11 = vector.broadcast %cst_4 : f32 to vector<456x1xf32>
    %12 = arith.addf %10, %11 : vector<456x1xf32>
    %13 = tpu.reciprocal %12 {approx = true} : vector<456x1xf32> -> vector<456x1xf32>
    %14 = arith.mulf %6, %6 : vector<456x128xf32>
    %cst_5 = arith.constant dense<0.000000e+00> : vector<456xf32>
    %15 = vector.multi_reduction <add>, %14, %cst_5 [1] : vector<456x128xf32> to vector<456xf32>
    %16 = vector.shape_cast %15 : vector<456xf32> to vector<456x1xf32>
    %17 = math.sqrt %16 : vector<456x1xf32>
    %cst_6 = arith.constant 1.000000e-10 : f32
    %18 = vector.broadcast %cst_6 : f32 to vector<456x1xf32>
    %19 = arith.addf %17, %18 : vector<456x1xf32>
    %20 = tpu.reciprocal %19 {approx = true} : vector<456x1xf32> -> vector<456x1xf32>
    %21 = vector.broadcast %13 : vector<456x1xf32> to vector<456x128xf32>
    %22 = arith.mulf %4, %21 : vector<456x128xf32>
    %23 = vector.broadcast %20 : vector<456x1xf32> to vector<456x128xf32>
    %24 = arith.mulf %6, %23 : vector<456x128xf32>
    %25 = arith.subf %22, %24 : vector<456x128xf32>
    %26 = arith.mulf %25, %25 : vector<456x128xf32>
    %c0_7 = arith.constant 0 : index
    %c0_8 = arith.constant 0 : index
    %27 = vector.load %arg3[%c0_7, %c0_8] : memref<128x128xf32, #tpu.memory_space<vmem>>, vector<128x128xf32>
    %cst_9 = arith.constant dense<0.000000e+00> : vector<456x128xf32>
    %28 = tpu.matmul %26, %27, %cst_9 {dimension_numbers = #tpu.dot_dimension_numbers<[1], [0], [0], [1], [0, 0, 1, 1], [], []>} : vector<456x128xf32>, vector<128x128xf32>, vector<456x128xf32> -> vector<456x128xf32>
    %c0_10 = arith.constant 0 : index
    %c0_11 = arith.constant 0 : index
    %29 = vector.load %arg5[%c0_10, %c0_11] : memref<1x128xf32, #tpu.memory_space<vmem>>, vector<1x128xf32>
    %cst_12 = arith.constant dense<0.000000e+00> : vector<128xf32>
    %30 = vector.multi_reduction <add>, %28, %cst_12 [0] : vector<456x128xf32> to vector<128xf32>
    %31 = vector.shape_cast %30 : vector<128xf32> to vector<1x128xf32>
    %32 = arith.addf %29, %31 : vector<1x128xf32>
    %c0_13 = arith.constant 0 : index
    %c0_14 = arith.constant 0 : index
    %33 = vector.load %arg5[%c0_13, %c0_14] : memref<1x128xf32, #tpu.memory_space<vmem>>, vector<1x128xf32>
    tpu.vector_store %arg5[%c0_13, %c0_14], %32 {strides = array<i32>} : memref<1x128xf32, #tpu.memory_space<vmem>>, vector<1x128xf32>,
    %c0_i32_15 = arith.constant 0 : i32
    %34 = arith.cmpi eq, %arg0, %c0_i32_15 : i32
    %35 = arith.extui %34 : i1 to i32
    %c0_i32_16 = arith.constant 0 : i32
    %36 = arith.cmpi ne, %35, %c0_i32_16 : i32
    scf.if %36 {
      %c0_17 = arith.constant 0 : index
      %c0_18 = arith.constant 0 : index
      %37 = vector.load %arg5[%c0_17, %c0_18] : memref<1x128xf32, #tpu.memory_space<vmem>>, vector<1x128xf32>
      %c0_19 = arith.constant 0 : index
      %c0_20 = arith.constant 0 : index
      %38 = vector.load %arg4[%c0_19, %c0_20] : memref<1x128xf32, #tpu.memory_space<vmem>>, vector<1x128xf32>
      tpu.vector_store %arg4[%c0_19, %c0_20], %37 {strides = array<i32>} : memref<1x128xf32, #tpu.memory_space<vmem>>, vector<1x128xf32>,
    } else {
    }
    return
  }
  func.func @transform_0(%arg0: i32) -> (i32, i32) {
    %c0_i32 = arith.constant 0 : i32
    %c0_i32_0 = arith.constant 0 : i32
    return %arg0, %c0_i32 : i32, i32
  }
  func.func @transform_1(%arg0: i32) -> (i32, i32) {
    %c0_i32 = arith.constant 0 : i32
    %c0_i32_0 = arith.constant 0 : i32
    return %arg0, %c0_i32 : i32, i32
  }
  func.func @transform_2(%arg0: i32) -> (i32, i32) {
    %c0_i32 = arith.constant 0 : i32
    %c0_i32_0 = arith.constant 0 : i32
    %c0_i32_1 = arith.constant 0 : i32
    return %c0_i32, %c0_i32_0 : i32, i32
  }
  func.func @transform_3(%arg0: i32) -> (i32, i32) {
    %c0_i32 = arith.constant 0 : i32
    %c0_i32_0 = arith.constant 0 : i32
    %c0_i32_1 = arith.constant 0 : i32
    return %c0_i32, %c0_i32_0 : i32, i32
  }
}

module attributes {stable_mosaic.version = 11 : i64} {
  func.func @_l1_mse_kernel(%arg0: i32, %arg1: memref<48x512xf32, #tpu.memory_space<vmem>>, %arg2: memref<48x512xf32, #tpu.memory_space<vmem>>, %arg3: memref<1x512xf32, #tpu.memory_space<vmem>>, %arg4: memref<1x512xf32, #tpu.memory_space<vmem>>, %arg5: memref<1x512xf32, #tpu.memory_space<vmem>>, %arg6: memref<1x512xf32, #tpu.memory_space<vmem>>) attributes {dimension_semantics = [#tpu.dimension_semantics<arbitrary>], iteration_bounds = array<i64: 1>, scalar_prefetch = 0 : i64, scratch_operands = 2 : i64, tpu.core_type = #tpu.core_type<tc>, window_params = [{transform_indices = @transform_0, window_bounds = array<i64: 48, 512>}, {transform_indices = @transform_1, window_bounds = array<i64: 48, 512>}, {pipeline_mode = #tpu.pipeline_mode<synchronous>, transform_indices = @transform_2, window_bounds = array<i64: 1, 512>}, {pipeline_mode = #tpu.pipeline_mode<synchronous>, transform_indices = @transform_3, window_bounds = array<i64: 1, 512>}]} {
    %c0_i32 = arith.constant 0 : i32
    %0 = arith.cmpi eq, %arg0, %c0_i32 : i32
    %1 = arith.extui %0 : i1 to i32
    %c0_i32_0 = arith.constant 0 : i32
    %2 = arith.cmpi ne, %1, %c0_i32_0 : i32
    scf.if %2 {
      %cst_15 = arith.constant 0.000000e+00 : f32
      %21 = vector.broadcast %cst_15 : f32 to vector<1x512xf32>
      %c0_16 = arith.constant 0 : index
      %c0_17 = arith.constant 0 : index
      %22 = vector.load %arg5[%c0_16, %c0_17] : memref<1x512xf32, #tpu.memory_space<vmem>>, vector<1x512xf32>
      tpu.vector_store %arg5[%c0_16, %c0_17], %21 {strides = array<i32>} : memref<1x512xf32, #tpu.memory_space<vmem>>, vector<1x512xf32>,
      %cst_18 = arith.constant 0.000000e+00 : f32
      %23 = vector.broadcast %cst_18 : f32 to vector<1x512xf32>
      %c0_19 = arith.constant 0 : index
      %c0_20 = arith.constant 0 : index
      %24 = vector.load %arg6[%c0_19, %c0_20] : memref<1x512xf32, #tpu.memory_space<vmem>>, vector<1x512xf32>
      tpu.vector_store %arg6[%c0_19, %c0_20], %23 {strides = array<i32>} : memref<1x512xf32, #tpu.memory_space<vmem>>, vector<1x512xf32>,
    } else {
    }
    %c0 = arith.constant 0 : index
    %c0_1 = arith.constant 0 : index
    %3 = vector.load %arg1[%c0, %c0_1] : memref<48x512xf32, #tpu.memory_space<vmem>>, vector<48x512xf32>
    %c0_2 = arith.constant 0 : index
    %c0_3 = arith.constant 0 : index
    %4 = vector.load %arg2[%c0_2, %c0_3] : memref<48x512xf32, #tpu.memory_space<vmem>>, vector<48x512xf32>
    %5 = arith.subf %3, %4 : vector<48x512xf32>
    %c0_4 = arith.constant 0 : index
    %c0_5 = arith.constant 0 : index
    %6 = vector.load %arg5[%c0_4, %c0_5] : memref<1x512xf32, #tpu.memory_space<vmem>>, vector<1x512xf32>
    %7 = math.absf %5 : vector<48x512xf32>
    %cst = arith.constant dense<0.000000e+00> : vector<512xf32>
    %8 = vector.multi_reduction <add>, %7, %cst [0] : vector<48x512xf32> to vector<512xf32>
    %9 = vector.shape_cast %8 : vector<512xf32> to vector<1x512xf32>
    %10 = arith.addf %6, %9 : vector<1x512xf32>
    %c0_6 = arith.constant 0 : index
    %c0_7 = arith.constant 0 : index
    %11 = vector.load %arg5[%c0_6, %c0_7] : memref<1x512xf32, #tpu.memory_space<vmem>>, vector<1x512xf32>
    tpu.vector_store %arg5[%c0_6, %c0_7], %10 {strides = array<i32>} : memref<1x512xf32, #tpu.memory_space<vmem>>, vector<1x512xf32>,
    %c0_8 = arith.constant 0 : index
    %c0_9 = arith.constant 0 : index
    %12 = vector.load %arg6[%c0_8, %c0_9] : memref<1x512xf32, #tpu.memory_space<vmem>>, vector<1x512xf32>
    %13 = arith.mulf %5, %5 : vector<48x512xf32>
    %cst_10 = arith.constant dense<0.000000e+00> : vector<512xf32>
    %14 = vector.multi_reduction <add>, %13, %cst_10 [0] : vector<48x512xf32> to vector<512xf32>
    %15 = vector.shape_cast %14 : vector<512xf32> to vector<1x512xf32>
    %16 = arith.addf %12, %15 : vector<1x512xf32>
    %c0_11 = arith.constant 0 : index
    %c0_12 = arith.constant 0 : index
    %17 = vector.load %arg6[%c0_11, %c0_12] : memref<1x512xf32, #tpu.memory_space<vmem>>, vector<1x512xf32>
    tpu.vector_store %arg6[%c0_11, %c0_12], %16 {strides = array<i32>} : memref<1x512xf32, #tpu.memory_space<vmem>>, vector<1x512xf32>,
    %c0_i32_13 = arith.constant 0 : i32
    %18 = arith.cmpi eq, %arg0, %c0_i32_13 : i32
    %19 = arith.extui %18 : i1 to i32
    %c0_i32_14 = arith.constant 0 : i32
    %20 = arith.cmpi ne, %19, %c0_i32_14 : i32
    scf.if %20 {
      %c0_15 = arith.constant 0 : index
      %c0_16 = arith.constant 0 : index
      %21 = vector.load %arg5[%c0_15, %c0_16] : memref<1x512xf32, #tpu.memory_space<vmem>>, vector<1x512xf32>
      %c0_17 = arith.constant 0 : index
      %c0_18 = arith.constant 0 : index
      %22 = vector.load %arg3[%c0_17, %c0_18] : memref<1x512xf32, #tpu.memory_space<vmem>>, vector<1x512xf32>
      tpu.vector_store %arg3[%c0_17, %c0_18], %21 {strides = array<i32>} : memref<1x512xf32, #tpu.memory_space<vmem>>, vector<1x512xf32>,
      %c0_19 = arith.constant 0 : index
      %c0_20 = arith.constant 0 : index
      %23 = vector.load %arg6[%c0_19, %c0_20] : memref<1x512xf32, #tpu.memory_space<vmem>>, vector<1x512xf32>
      %c0_21 = arith.constant 0 : index
      %c0_22 = arith.constant 0 : index
      %24 = vector.load %arg4[%c0_21, %c0_22] : memref<1x512xf32, #tpu.memory_space<vmem>>, vector<1x512xf32>
      tpu.vector_store %arg4[%c0_21, %c0_22], %23 {strides = array<i32>} : memref<1x512xf32, #tpu.memory_space<vmem>>, vector<1x512xf32>,
    } else {
    }
    return
  }
  func.func @transform_0(%arg0: i32) -> (i32, i32) {
    %c0_i32 = arith.constant 0 : i32
    %c0_i32_0 = arith.constant 0 : i32
    return %arg0, %c0_i32 : i32, i32
  }
  func.func @transform_1(%arg0: i32) -> (i32, i32) {
    %c0_i32 = arith.constant 0 : i32
    %c0_i32_0 = arith.constant 0 : i32
    return %arg0, %c0_i32 : i32, i32
  }
  func.func @transform_2(%arg0: i32) -> (i32, i32) {
    %c0_i32 = arith.constant 0 : i32
    %c0_i32_0 = arith.constant 0 : i32
    %c0_i32_1 = arith.constant 0 : i32
    return %c0_i32, %c0_i32_0 : i32, i32
  }
  func.func @transform_3(%arg0: i32) -> (i32, i32) {
    %c0_i32 = arith.constant 0 : i32
    %c0_i32_0 = arith.constant 0 : i32
    %c0_i32_1 = arith.constant 0 : i32
    return %c0_i32, %c0_i32_0 : i32, i32
  }
}

</mosaic_0001>

<llo_original>
// kernel: hybrid_loss.11
$region0: #{hybrid_loss.11}
  #allocation0 [shape = 'u32[]', space=smem, size = 0x4, offset = 0x4, fixed_abs, tag = 'smem constant byte address 0x4 - core index']
  #allocation1 [shape = 'u32[144,128]{1,0:T(1,128)}', space=vmem, size = 0x12000, scoped, tag = 'internal scratch']
  #allocation2 [shape = 'f32[256,128]{1,0:T(8,128)}', space=vmem, size = 0x20000, scoped, tag = 'scratch operand']
  %s0 = inlined_call_operand.vmem [shape: bf16[1024,384], index: 0, kind: input, shape index: {}]
  %s1 = inlined_call_operand.vmem [shape: bf16[384,128], index: 1, kind: input, shape index: {}]
  %s2 = inlined_call_operand.vmem [shape: f32[1,128], index: 2, kind: input, shape index: {}]
  %s3 = inlined_call_operand.vmem [shape: bf16[1024,128], index: 3, kind: output, shape index: {}]
  %s4 = sld [smem:[#allocation0]]
  $region94: #{hybrid_loss.11} parent=0
    _
  %s6 = ssub.s32 1, %s4
  %s7 = scalar_select 0, %s6, %s4
  $region1: #{hybrid_loss.11} parent=0
    #allocation3 [shape = 'u8[131072]{0}', space=vmem, size = 0x20000, scoped, tag = 'input window, operand 0']
    loop: start=0, step=1, limit=14
    $region2: #{hybrid_loss.11} parent=1 // loop_pre_header
      _
    $region3: #{hybrid_loss.11} parent=1 // loop_header
      %s9 = sphi 0, %s13
      %p10 = scmp.ge.s32.totalorder %s9, 14
      %s16 = sphi 0, %s35
      %s17 = sphi 0, %s31
      %s18 = sphi 0, %s27
      %s19 = sphi 0, %s16
      %s20 = sphi 0, %s17
      %s21 = sphi 0, %s18
      %s22 = sphi 0, %s19
      %s23 = sphi 0, %s20
      %s24 = sphi 0, %s21
      %s40 = sphi 0, %s42
      %s43 = sphi 0, %s40
      %s44 = sphi 0, %s43
      %s60 = sphi 0, %s44
      %s68 = sphi 0, %s70
      %s71 = sphi 0, %s68
      %s72 = sphi 0, %s71
      %s88 = sphi 0, %s72
      %s94 = sphi 0, %s96
      %s97 = sphi 0, %s94
      %s98 = sphi 0, %s97
      %s114 = sphi 0, %s98
      %s122 = sphi 0, %s124
      %s125 = sphi 0, %s122
      %s126 = sphi 0, %s125
      %s142 = sphi 0, %s126
    $region4: #{hybrid_loss.11} parent=1 // loop_header_branch
      %12 = sbr.rel (%p10) target = $region8
    $region5: #{hybrid_loss.11} parent=1 // loop_body
      %s14 = ssub.s32 %s9, 1
      %s15 = ssub.s32 %s9, 2
      %s25 = sadd.s32 1, %s18
      %p26 = scmp.ge.s32.totalorder %s25, 3
      %s27 = scalar_select %p26, 0, %s25
      %s28 = sadd.s32 1, %s17
      %s29 = scalar_select %p26, %s28, %s17
      %p30 = scmp.ge.s32.totalorder %s29, 1
      %s31 = scalar_select %p30, 0, %s29
      %s32 = sadd.s32 1, %s16
      %s33 = scalar_select %p30, %s32, %s16
      %p34 = scmp.ge.s32.totalorder %s33, 4
      %s35 = scalar_select %p34, 0, %s33
      %s36 = ssub.s32 %s16, %s35
      %s37 = ssub.s32 %s18, %s27
      %s38 = sor.u32 %s36, %s37
      %p39 = scmp.eq.s32.totalorder %s38, 0
      %s41 = sadd.s32 %s40, 1
      %s42 = scalar_select %p39, %s40, %s41
      %p45 = pneg %p39
      %p46 = scmp.eq.s32.totalorder %s9, 11
      %p47 = por %p45, %p46
      %p48 = scmp.ne.s32.totalorder %s40, %s43
      %p49 = scmp.eq.s32.totalorder %s9, 0
      %p50 = por %p48, %p49
      %p51 = scmp.ne.s32.totalorder %s40, %s43
      %p52 = scmp.eq.s32.totalorder %s14, 11
      %p53 = por %p51, %p52
      %p54 = scmp.ne.s32.totalorder %s43, %s44
      %p55 = scmp.eq.s32.totalorder %s14, 0
      %p56 = por %p54, %p55
      %p57 = scmp.ne.s32.totalorder %s43, %s44
      %p58 = scmp.eq.s32.totalorder %s15, 11
      %p59 = por %p57, %p58
      %p61 = scmp.ne.s32.totalorder %s44, %s60
      %p62 = scmp.eq.s32.totalorder %s15, 0
      %p63 = por %p61, %p62
      %s64 = ssub.s32 %s18, %s27
      %s65 = ssub.s32 %s17, %s31
      %s66 = sor.u32 %s64, %s65
      %p67 = scmp.eq.s32.totalorder %s66, 0
      %s69 = sadd.s32 %s68, 1
      %s70 = scalar_select %p67, %s68, %s69
      %p73 = pneg %p67
      %p74 = scmp.eq.s32.totalorder %s9, 11
      %p75 = por %p73, %p74
      %p76 = scmp.ne.s32.totalorder %s68, %s71
      %p77 = scmp.eq.s32.totalorder %s9, 0
      %p78 = por %p76, %p77
      %p79 = scmp.ne.s32.totalorder %s68, %s71
      %p80 = scmp.eq.s32.totalorder %s14, 11
      %p81 = por %p79, %p80
      %p82 = scmp.ne.s32.totalorder %s71, %s72
      %p83 = scmp.eq.s32.totalorder %s14, 0
      %p84 = por %p82, %p83
      %p85 = scmp.ne.s32.totalorder %s71, %s72
      %p86 = scmp.eq.s32.totalorder %s15, 11
      %p87 = por %p85, %p86
      %p89 = scmp.ne.s32.totalorder %s72, %s88
      %p90 = scmp.eq.s32.totalorder %s15, 0
      %p91 = por %p89, %p90
      %s92 = ssub.s32 %s17, %s31
      %p93 = scmp.eq.s32.totalorder %s92, 0
      %s95 = sadd.s32 %s94, 1
      %s96 = scalar_select %p93, %s94, %s95
      %p99 = pneg %p93
      %p100 = scmp.eq.s32.totalorder %s9, 11
      %p101 = por %p99, %p100
      %p102 = scmp.ne.s32.totalorder %s94, %s97
      %p103 = scmp.eq.s32.totalorder %s9, 0
      %p104 = por %p102, %p103
      %p105 = scmp.ne.s32.totalorder %s94, %s97
      %p106 = scmp.eq.s32.totalorder %s14, 11
      %p107 = por %p105, %p106
      %p108 = scmp.ne.s32.totalorder %s97, %s98
      %p109 = scmp.eq.s32.totalorder %s14, 0
      %p110 = por %p108, %p109
      %p111 = scmp.ne.s32.totalorder %s97, %s98
      %p112 = scmp.eq.s32.totalorder %s15, 11
      %p113 = por %p111, %p112
      %p115 = scmp.ne.s32.totalorder %s98, %s114
      %p116 = scmp.eq.s32.totalorder %s15, 0
      %p117 = por %p115, %p116
      %s118 = ssub.s32 %s16, %s35
      %s119 = ssub.s32 %s17, %s31
      %s120 = sor.u32 %s118, %s119
      %p121 = scmp.eq.s32.totalorder %s120, 0
      %s123 = sadd.s32 %s122, 1
      %s124 = scalar_select %p121, %s122, %s123
      %p127 = pneg %p121
      %p128 = scmp.eq.s32.totalorder %s9, 11
      %p129 = por %p127, %p128
      %p130 = scmp.ne.s32.totalorder %s122, %s125
      %p131 = scmp.eq.s32.totalorder %s9, 0
      %p132 = por %p130, %p131
      %p133 = scmp.ne.s32.totalorder %s122, %s125
      %p134 = scmp.eq.s32.totalorder %s14, 11
      %p135 = por %p133, %p134
      %p136 = scmp.ne.s32.totalorder %s125, %s126
      %p137 = scmp.eq.s32.totalorder %s14, 0
      %p138 = por %p136, %p137
      %p139 = scmp.ne.s32.totalorder %s125, %s126
      %p140 = scmp.eq.s32.totalorder %s15, 11
      %p141 = por %p139, %p140
      %p143 = scmp.ne.s32.totalorder %s126, %s142
      %p144 = scmp.eq.s32.totalorder %s15, 0
      %p145 = por %p143, %p144
      %p146 = scmp.le.s32.totalorder 1, %s9
      %p147 = scmp.lt.s32.totalorder %s9, 13
      %p148 = pnand %p146, %p147
      %p149 = pneg %p148
      // Predicated region
      $region9: #{hybrid_loss.11} parent=5 // pred_check
        _
      $region10: #{hybrid_loss.11} parent=5 // pred_check_branch
        %151 = sbr.rel (%p148) target = $region12
      $region11: #{hybrid_loss.11} parent=5 // pred_region
        %s152 = ssub.s32 %s9, 1
        // Predicated region
        $region13: #{hybrid_loss.11} parent=11 // pred_check
          %p153 = pneg %p110
        $region14: #{hybrid_loss.11} parent=11 // pred_check_branch
          %155 = sbr.rel (%p153) target = $region16
        $region15: #{hybrid_loss.11} parent=11 // pred_region
          %p156 = scmp.lt.s32.totalorder %s20, 0
          %s157 = scalar_select %p156, %s20, 0
          %s158 = scalar_lea.vmem %s2, %s157
        $region16: #{hybrid_loss.11} parent=11 // pred_fallthru
          _
      $region12: #{hybrid_loss.11} parent=5 // pred_fallthru
        _
      %p159 = scmp.lt.s32.totalorder %s9, 12
      // Predicated region
      $region17: #{hybrid_loss.11} parent=5 // pred_check
        %p160 = pneg %p159
      $region18: #{hybrid_loss.11} parent=5 // pred_check_branch
        %162 = sbr.rel (%p160) target = $region20
      $region19: #{hybrid_loss.11} parent=5 // pred_region
        // Predicated region
        $region21: #{hybrid_loss.11} parent=19 // pred_check
          %p163 = pneg %p50
        $region22: #{hybrid_loss.11} parent=19 // pred_check_branch
          %165 = sbr.rel (%p163) target = $region24
        $region23: #{hybrid_loss.11} parent=19 // pred_region
          %s166 = sand.u32 %s40, 1
          %s167 = sand.u32 %s40, 1
          %s168 = smul.addr %s167, 128
          %s169 = scalar_lea.vmem [#allocation3], %s168
          %s170 = smul.u32 32, %s16
          %s171 = smul.addr %s170, 3
          %s172 = sadd.s32 %s18, %s171
          %s173 = smul.addr %s172, 4
          %s174 = scalar_lea.vmem %s0, %s173
          // Predicated region
          $region25: #{hybrid_loss.11} parent=23 // pred_check
            _
          $region26: #{hybrid_loss.11} parent=23 // pred_check_branch
            %176 = sbr.rel (0) target = $region28
          $region27: #{hybrid_loss.11} parent=23 // pred_region
            // Predicated region
            $region29: #{hybrid_loss.11} parent=27 // pred_check
              _
            $region30: #{hybrid_loss.11} parent=27 // pred_check_branch
              %178 = sbr.rel target = $region32
            $region31: #{hybrid_loss.11} parent=27 // pred_region
              // Predicated region
              $region44: #{hybrid_loss.11} parent=31 // pred_check
                _
              $region45: #{hybrid_loss.11} parent=31 // pred_check_branch
                %256 = sbr.rel (0) target = $region47
              $region46: #{hybrid_loss.11} parent=31 // pred_region
                loop: start=0, step=1, limit=1
                $region48: #{hybrid_loss.11} parent=46 // loop_pre_header
                  _
                $region49: #{hybrid_loss.11} parent=46 // loop_header
                  %s258 = sphi 0, %s262
                  %p259 = scmp.ge.s32.totalorder %s258, 1
                  %s263 = sphi %s174, %s174
                  %s264 = sphi %s169, %s169
                $region50: #{hybrid_loss.11} parent=46 // loop_header_branch
                  %261 = sbr.rel (%p259) target = $region54
                $region51: #{hybrid_loss.11} parent=46 // loop_body
                  _
                $region52: #{hybrid_loss.11} parent=46 // loop_footer
                  %s262 = sadd.s32 1, %s258
                $region53: #{hybrid_loss.11} parent=46 // loop_footer_branch
                  %257 = sbr.rel target = $region49
                $region54: #{hybrid_loss.11} parent=46 // loop_exit
                  _
                %s266 = ssub.s32 16, 1
                loop: start=0, step=1, limit=1
                $region55: #{hybrid_loss.11} parent=46 // loop_pre_header
                  _
                $region56: #{hybrid_loss.11} parent=46 // loop_header
                  %s268 = sphi 0, %s272
                  %p269 = scmp.ge.s32.totalorder %s268, 1
                  %s273 = sphi %s174, %s174
                  %s274 = sphi %s169, %s169
                $region57: #{hybrid_loss.11} parent=46 // loop_header_branch
                  %271 = sbr.rel (%p269) target = $region61
                $region58: #{hybrid_loss.11} parent=46 // loop_body
                  %v275 = vld [vmem:[%s273] sm:%s266]
                  %276 = vst [vmem:[%s274] sm:%s266] %v275
                  %v277 = vld [vmem:[%s273 + $0xc] sm:%s266]
                  %278 = vst [vmem:[%s274 + $0x4] sm:%s266] %v277
                  %v279 = vld [vmem:[%s273 + $0x18] sm:%s266]
                  %280 = vst [vmem:[%s274 + $0x8] sm:%s266] %v279
                  %v281 = vld [vmem:[%s273 + $0x24] sm:%s266]
                  %282 = vst [vmem:[%s274 + $0xc] sm:%s266] %v281
                  %v283 = vld [vmem:[%s273 + $0x30] sm:%s266]
                  %284 = vst [vmem:[%s274 + $0x10] sm:%s266] %v283
                  %v285 = vld [vmem:[%s273 + $0x3c] sm:%s266]
                  %286 = vst [vmem:[%s274 + $0x14] sm:%s266] %v285
                  %v287 = vld [vmem:[%s273 + $0x48] sm:%s266]
                  %288 = vst [vmem:[%s274 + $0x18] sm:%s266] %v287
                  %v289 = vld [vmem:[%s273 + $0x54] sm:%s266]
                  %290 = vst [vmem:[%s274 + $0x1c] sm:%s266] %v289
                  %v291 = vld [vmem:[%s273 + $0x60] sm:%s266]
                  %292 = vst [vmem:[%s274 + $0x20] sm:%s266] %v291
                  %v293 = vld [vmem:[%s273 + $0x6c] sm:%s266]
                  %294 = vst [vmem:[%s274 + $0x24] sm:%s266] %v293
                  %v295 = vld [vmem:[%s273 + $0x78] sm:%s266]
                  %296 = vst [vmem:[%s274 + $0x28] sm:%s266] %v295
                  %v297 = vld [vmem:[%s273 + $0x84] sm:%s266]
                  %298 = vst [vmem:[%s274 + $0x2c] sm:%s266] %v297
                  %v299 = vld [vmem:[%s273 + $0x90] sm:%s266]
                  %300 = vst [vmem:[%s274 + $0x30] sm:%s266] %v299
                  %v301 = vld [vmem:[%s273 + $0x9c] sm:%s266]
                  %302 = vst [vmem:[%s274 + $0x34] sm:%s266] %v301
                  %v303 = vld [vmem:[%s273 + $0xa8] sm:%s266]
                  %304 = vst [vmem:[%s274 + $0x38] sm:%s266] %v303
                  %v305 = vld [vmem:[%s273 + $0xb4] sm:%s266]
                  %306 = vst [vmem:[%s274 + $0x3c] sm:%s266] %v305
                  %v307 = vld [vmem:[%s273 + $0xc0] sm:%s266]
                  %308 = vst [vmem:[%s274 + $0x40] sm:%s266] %v307
                  %v309 = vld [vmem:[%s273 + $0xcc] sm:%s266]
                  %310 = vst [vmem:[%s274 + $0x44] sm:%s266] %v309
                  %v311 = vld [vmem:[%s273 + $0xd8] sm:%s266]
                  %312 = vst [vmem:[%s274 + $0x48] sm:%s266] %v311
                  %v313 = vld [vmem:[%s273 + $0xe4] sm:%s266]
                  %314 = vst [vmem:[%s274 + $0x4c] sm:%s266] %v313
                  %v315 = vld [vmem:[%s273 + $0xf0] sm:%s266]
                  %316 = vst [vmem:[%s274 + $0x50] sm:%s266] %v315
                  %v317 = vld [vmem:[%s273 + $0xfc] sm:%s266]
                  %318 = vst [vmem:[%s274 + $0x54] sm:%s266] %v317
                  %v319 = vld [vmem:[%s273 + $0x108] sm:%s266]
                  %320 = vst [vmem:[%s274 + $0x58] sm:%s266] %v319
                  %v321 = vld [vmem:[%s273 + $0x114] sm:%s266]
                  %322 = vst [vmem:[%s274 + $0x5c] sm:%s266] %v321
                  %v323 = vld [vmem:[%s273 + $0x120] sm:%s266]
                  %324 = vst [vmem:[%s274 + $0x60] sm:%s266] %v323
                  %v325 = vld [vmem:[%s273 + $0x12c] sm:%s266]
                  %326 = vst [vmem:[%s274 + $0x64] sm:%s266] %v325
                  %v327 = vld [vmem:[%s273 + $0x138] sm:%s266]
                  %328 = vst [vmem:[%s274 + $0x68] sm:%s266] %v327
                  %v329 = vld [vmem:[%s273 + $0x144] sm:%s266]
                  %330 = vst [vmem:[%s274 + $0x6c] sm:%s266] %v329
                  %v331 = vld [vmem:[%s273 + $0x150] sm:%s266]
                  %332 = vst [vmem:[%s274 + $0x70] sm:%s266] %v331
                  %v333 = vld [vmem:[%s273 + $0x15c] sm:%s266]
                  %334 = vst [vmem:[%s274 + $0x74] sm:%s266] %v333
                  %v335 = vld [vmem:[%s273 + $0x168] sm:%s266]
                  %336 = vst [vmem:[%s274 + $0x78] sm:%s266] %v335
                  %v337 = vld [vmem:[%s273 + $0x174] sm:%s266]
                  %338 = vst [vmem:[%s274 + $0x7c] sm:%s266] %v337
                $region59: #{hybrid_loss.11} parent=46 // loop_footer
                  %s272 = sadd.s32 1, %s268
                $region60: #{hybrid_loss.11} parent=46 // loop_footer_branch
                  %267 = sbr.rel target = $region56
                $region61: #{hybrid_loss.11} parent=46 // loop_exit
                  _
              $region47: #{hybrid_loss.11} parent=31 // pred_fallthru
                _
            $region32: #{hybrid_loss.11} parent=27 // pred_fallthru
              _
            // Predicated region
            $region33: #{hybrid_loss.11} parent=27 // pred_check
              _
            $region34: #{hybrid_loss.11} parent=27 // pred_check_branch
              %180 = sbr.rel (0) target = $region36
            $region35: #{hybrid_loss.11} parent=27 // pred_region
              %s182 = ssub.s32 16, 1
              loop: start=0, step=1, limit=1
              $region37: #{hybrid_loss.11} parent=35 // loop_pre_header
                _
              $region38: #{hybrid_loss.11} parent=35 // loop_header
                %s184 = sphi 0, %s188
                %p185 = scmp.ge.s32.totalorder %s184, 1
                %s189 = sphi %s174, %s174
                %s190 = sphi %s169, %s169
              $region39: #{hybrid_loss.11} parent=35 // loop_header_branch
                %187 = sbr.rel (%p185) target = $region43
              $region40: #{hybrid_loss.11} parent=35 // loop_body
                %v191 = vld [vmem:[%s189] sm:%s182]
                %192 = vst [vmem:[%s190] sm:%s182] %v191
                %v193 = vld [vmem:[%s189 + $0xc] sm:%s182]
                %194 = vst [vmem:[%s190 + $0x4] sm:%s182] %v193
                %v195 = vld [vmem:[%s189 + $0x18] sm:%s182]
                %196 = vst [vmem:[%s190 + $0x8] sm:%s182] %v195
                %v197 = vld [vmem:[%s189 + $0x24] sm:%s182]
                %198 = vst [vmem:[%s190 + $0xc] sm:%s182] %v197
                %v199 = vld [vmem:[%s189 + $0x30] sm:%s182]
                %200 = vst [vmem:[%s190 + $0x10] sm:%s182] %v199
                %v201 = vld [vmem:[%s189 + $0x3c] sm:%s182]
                %202 = vst [vmem:[%s190 + $0x14] sm:%s182] %v201
                %v203 = vld [vmem:[%s189 + $0x48] sm:%s182]
                %204 = vst [vmem:[%s190 + $0x18] sm:%s182] %v203
                %v205 = vld [vmem:[%s189 + $0x54] sm:%s182]
                %206 = vst [vmem:[%s190 + $0x1c] sm:%s182] %v205
                %v207 = vld [vmem:[%s189 + $0x60] sm:%s182]
                %208 = vst [vmem:[%s190 + $0x20] sm:%s182] %v207
                %v209 = vld [vmem:[%s189 + $0x6c] sm:%s182]
                %210 = vst [vmem:[%s190 + $0x24] sm:%s182] %v209
                %v211 = vld [vmem:[%s189 + $0x78] sm:%s182]
                %212 = vst [vmem:[%s190 + $0x28] sm:%s182] %v211
                %v213 = vld [vmem:[%s189 + $0x84] sm:%s182]
                %214 = vst [vmem:[%s190 + $0x2c] sm:%s182] %v213
                %v215 = vld [vmem:[%s189 + $0x90] sm:%s182]
                %216 = vst [vmem:[%s190 + $0x30] sm:%s182] %v215
                %v217 = vld [vmem:[%s189 + $0x9c] sm:%s182]
                %218 = vst [vmem:[%s190 + $0x34] sm:%s182] %v217
                %v219 = vld [vmem:[%s189 + $0xa8] sm:%s182]
                %220 = vst [vmem:[%s190 + $0x38] sm:%s182] %v219
                %v221 = vld [vmem:[%s189 + $0xb4] sm:%s182]
                %222 = vst [vmem:[%s190 + $0x3c] sm:%s182] %v221
                %v223 = vld [vmem:[%s189 + $0xc0] sm:%s182]
                %224 = vst [vmem:[%s190 + $0x40] sm:%s182] %v223
                %v225 = vld [vmem:[%s189 + $0xcc] sm:%s182]
                %226 = vst [vmem:[%s190 + $0x44] sm:%s182] %v225
                %v227 = vld [vmem:[%s189 + $0xd8] sm:%s182]
                %228 = vst [vmem:[%s190 + $0x48] sm:%s182] %v227
                %v229 = vld [vmem:[%s189 + $0xe4] sm:%s182]
                %230 = vst [vmem:[%s190 + $0x4c] sm:%s182] %v229
                %v231 = vld [vmem:[%s189 + $0xf0] sm:%s182]
                %232 = vst [vmem:[%s190 + $0x50] sm:%s182] %v231
                %v233 = vld [vmem:[%s189 + $0xfc] sm:%s182]
                %234 = vst [vmem:[%s190 + $0x54] sm:%s182] %v233
                %v235 = vld [vmem:[%s189 + $0x108] sm:%s182]
                %236 = vst [vmem:[%s190 + $0x58] sm:%s182] %v235
                %v237 = vld [vmem:[%s189 + $0x114] sm:%s182]
                %238 = vst [vmem:[%s190 + $0x5c] sm:%s182] %v237
                %v239 = vld [vmem:[%s189 + $0x120] sm:%s182]
                %240 = vst [vmem:[%s190 + $0x60] sm:%s182] %v239
                %v241 = vld [vmem:[%s189 + $0x12c] sm:%s182]
                %242 = vst [vmem:[%s190 + $0x64] sm:%s182] %v241
                %v243 = vld [vmem:[%s189 + $0x138] sm:%s182]
                %244 = vst [vmem:[%s190 + $0x68] sm:%s182] %v243
                %v245 = vld [vmem:[%s189 + $0x144] sm:%s182]
                %246 = vst [vmem:[%s190 + $0x6c] sm:%s182] %v245
                %v247 = vld [vmem:[%s189 + $0x150] sm:%s182]
                %248 = vst [vmem:[%s190 + $0x70] sm:%s182] %v247
                %v249 = vld [vmem:[%s189 + $0x15c] sm:%s182]
                %250 = vst [vmem:[%s190 + $0x74] sm:%s182] %v249
                %v251 = vld [vmem:[%s189 + $0x168] sm:%s182]
                %252 = vst [vmem:[%s190 + $0x78] sm:%s182] %v251
                %v253 = vld [vmem:[%s189 + $0x174] sm:%s182]
                %254 = vst [vmem:[%s190 + $0x7c] sm:%s182] %v253
              $region41: #{hybrid_loss.11} parent=35 // loop_footer
                %s188 = sadd.s32 1, %s184
              $region42: #{hybrid_loss.11} parent=35 // loop_footer_branch
                %183 = sbr.rel target = $region38
              $region43: #{hybrid_loss.11} parent=35 // loop_exit
                _
            $region36: #{hybrid_loss.11} parent=27 // pred_fallthru
              _
          $region28: #{hybrid_loss.11} parent=23 // pred_fallthru
            _
          %339 = vnop
        $region24: #{hybrid_loss.11} parent=19 // pred_fallthru
          _
        // Predicated region
        $region62: #{hybrid_loss.11} parent=19 // pred_check
          %p340 = pneg %p78
        $region63: #{hybrid_loss.11} parent=19 // pred_check_branch
          %342 = sbr.rel (%p340) target = $region65
        $region64: #{hybrid_loss.11} parent=19 // pred_region
          %s343 = smul.u32 16, %s18
          %p344 = scmp.lt.s32.totalorder %s343, 47
          %s345 = scalar_select %p344, %s343, 47
          %p346 = scmp.lt.s32.totalorder %s17, 0
          %s347 = scalar_select %p346, %s17, 0
          %s348 = sadd.s32 %s347, %s345
          %s349 = smul.addr %s348, 4
          %s350 = scalar_lea.vmem %s1, %s349
          %s351 = smul.u32 16, %s18
        $region65: #{hybrid_loss.11} parent=19 // pred_fallthru
          _
      $region20: #{hybrid_loss.11} parent=5 // pred_fallthru
        _
      %p352 = scmp.le.s32.totalorder 1, %s9
      %p353 = scmp.lt.s32.totalorder %s9, 13
      %p354 = pnand %p352, %p353
      %p355 = pneg %p354
      // Predicated region
      $region66: #{hybrid_loss.11} parent=5 // pred_check
        _
      $region67: #{hybrid_loss.11} parent=5 // pred_check_branch
        %357 = sbr.rel (%p354) target = $region69
      $region68: #{hybrid_loss.11} parent=5 // pred_region
        %s358 = ssub.s32 %s9, 1
        %s359 = sand.u32 %s43, 1
        %s360 = sand.u32 %s43, 1
        %s361 = smul.addr %s360, 128
        %s362 = scalar_lea.vmem [#allocation3], %s361
        // Predicated region
        $region70: #{hybrid_loss.11} parent=68 // pred_check
          %p363 = pneg %p56
        $region71: #{hybrid_loss.11} parent=68 // pred_check_branch
          %365 = sbr.rel (%p363) target = $region73
        $region72: #{hybrid_loss.11} parent=68 // pred_region
          _
        $region73: #{hybrid_loss.11} parent=68 // pred_fallthru
          _
        %s366 = sand.u32 %s43, 1
        %s367 = sand.u32 %s43, 1
        %s368 = smul.addr %s367, 128
        %s369 = scalar_lea.vmem [#allocation3], %s368
        %p370 = pneg %p56
        %p371 = pneg %p53
        %s372 = smul.u32 16, %s21
        %p373 = scmp.lt.s32.totalorder %s372, 47
        %s374 = scalar_select %p373, %s372, 47
        %p375 = scmp.lt.s32.totalorder %s20, 0
        %s376 = scalar_select %p375, %s20, 0
        %s377 = sadd.s32 %s376, %s374
        %s378 = smul.addr %s377, 4
        %s379 = scalar_lea.vmem %s1, %s378
        %p380 = pneg %p84
        %p381 = pneg %p81
        %p382 = scmp.lt.s32.totalorder %s20, 0
        %s383 = scalar_select %p382, %s20, 0
        %s384 = scalar_lea.vmem %s2, %s383
        %p385 = pneg %p110
        %p386 = pneg %p107
        %p387 = pneg %p138
        %p388 = pneg %p135
        %s389 = smul.u32 32, %s19
        %p390 = scmp.lt.s32.totalorder %s389, 127
        %s391 = scalar_select %p390, %s389, 127
        %p392 = scmp.lt.s32.totalorder %s20, 0
        %s393 = scalar_select %p392, %s20, 0
        %s394 = sadd.s32 %s393, %s391
        %s395 = smul.addr %s394, 4
        %s396 = scalar_lea.vmem %s3, %s395
        %s397 = smul.u32 32, %s19
        %s398 = smul.u32 16, %s21
        %p399 = scmp.lt.s32.totalorder %s398, 47
        %s400 = scalar_select %p399, %s398, 47
        %p401 = scmp.lt.s32.totalorder %s20, 0
        %s402 = scalar_select %p401, %s20, 0
        %s403 = sadd.s32 %s402, %s400
        %s404 = smul.addr %s403, 4
        %s405 = scalar_lea.vmem %s1, %s404
        %s406 = smul.u32 16, %s21
        %p407 = scmp.lt.s32.totalorder %s20, 0
        %s408 = scalar_select %p407, %s20, 0
        %s409 = scalar_lea.vmem %s2, %s408
        %s410 = smul.u32 32, %s19
        %p411 = scmp.lt.s32.totalorder %s410, 127
        %s412 = scalar_select %p411, %s410, 127
        %p413 = scmp.lt.s32.totalorder %s20, 0
        %s414 = scalar_select %p413, %s20, 0
        %s415 = sadd.s32 %s414, %s412
        %s416 = smul.addr %s415, 4
        %s417 = scalar_lea.vmem %s3, %s416
        %s418 = smul.u32 32, %s19
        %p420 = scmp.eq.s32.totalorder %s21, 0
        // Predicated region
        $region74: #{hybrid_loss.11} parent=68 // pred_check
          %p421 = pneg %p420
        $region75: #{hybrid_loss.11} parent=68 // pred_check_branch
          %423 = sbr.rel (%p421) target = $region77
        $region76: #{hybrid_loss.11} parent=68 // pred_region
          %424 = vst [vmem:[#allocation2] sm:$0xff] 0.0
          %425 = vst [vmem:[#allocation2 + $0x8] sm:$0xff] 0.0
          %426 = vst [vmem:[#allocation2 + $0x10] sm:$0xff] 0.0
          %427 = vst [vmem:[#allocation2 + $0x18] sm:$0xff] 0.0
          %428 = vst [vmem:[#allocation2 + $0x20] sm:$0xff] 0.0
          %429 = vst [vmem:[#allocation2 + $0x28] sm:$0xff] 0.0
          %430 = vst [vmem:[#allocation2 + $0x30] sm:$0xff] 0.0
          %431 = vst [vmem:[#allocation2 + $0x38] sm:$0xff] 0.0
          %432 = vst [vmem:[#allocation2 + $0x40] sm:$0xff] 0.0
          %433 = vst [vmem:[#allocation2 + $0x48] sm:$0xff] 0.0
          %434 = vst [vmem:[#allocation2 + $0x50] sm:$0xff] 0.0
          %435 = vst [vmem:[#allocation2 + $0x58] sm:$0xff] 0.0
          %436 = vst [vmem:[#allocation2 + $0x60] sm:$0xff] 0.0
          %437 = vst [vmem:[#allocation2 + $0x68] sm:$0xff] 0.0
          %438 = vst [vmem:[#allocation2 + $0x70] sm:$0xff] 0.0
          %439 = vst [vmem:[#allocation2 + $0x78] sm:$0xff] 0.0
          %440 = vst [vmem:[#allocation2 + $0x80] sm:$0xff] 0.0
          %441 = vst [vmem:[#allocation2 + $0x88] sm:$0xff] 0.0
          %442 = vst [vmem:[#allocation2 + $0x90] sm:$0xff] 0.0
          %443 = vst [vmem:[#allocation2 + $0x98] sm:$0xff] 0.0
          %444 = vst [vmem:[#allocation2 + $0xa0] sm:$0xff] 0.0
          %445 = vst [vmem:[#allocation2 + $0xa8] sm:$0xff] 0.0
          %446 = vst [vmem:[#allocation2 + $0xb0] sm:$0xff] 0.0
          %447 = vst [vmem:[#allocation2 + $0xb8] sm:$0xff] 0.0
          %448 = vst [vmem:[#allocation2 + $0xc0] sm:$0xff] 0.0
          %449 = vst [vmem:[#allocation2 + $0xc8] sm:$0xff] 0.0
          %450 = vst [vmem:[#allocation2 + $0xd0] sm:$0xff] 0.0
          %451 = vst [vmem:[#allocation2 + $0xd8] sm:$0xff] 0.0
          %452 = vst [vmem:[#allocation2 + $0xe0] sm:$0xff] 0.0
          %453 = vst [vmem:[#allocation2 + $0xe8] sm:$0xff] 0.0
          %454 = vst [vmem:[#allocation2 + $0xf0] sm:$0xff] 0.0
          %455 = vst [vmem:[#allocation2 + $0xf8] sm:$0xff] 0.0
        $region77: #{hybrid_loss.11} parent=68 // pred_fallthru
          _
        %v456 = vld [vmem:[#allocation2] sm:$0xff]
        %v457 = vld [vmem:[#allocation2 + $0x8] sm:$0xff]
        %v458 = vld [vmem:[#allocation2 + $0x10] sm:$0xff]
        %v459 = vld [vmem:[#allocation2 + $0x18] sm:$0xff]
        %v460 = vld [vmem:[#allocation2 + $0x20] sm:$0xff]
        %v461 = vld [vmem:[#allocation2 + $0x28] sm:$0xff]
        %v462 = vld [vmem:[#allocation2 + $0x30] sm:$0xff]
        %v463 = vld [vmem:[#allocation2 + $0x38] sm:$0xff]
        %v464 = vld [vmem:[#allocation2 + $0x40] sm:$0xff]
        %v465 = vld [vmem:[#allocation2 + $0x48] sm:$0xff]
        %v466 = vld [vmem:[#allocation2 + $0x50] sm:$0xff]
        %v467 = vld [vmem:[#allocation2 + $0x58] sm:$0xff]
        %v468 = vld [vmem:[#allocation2 + $0x60] sm:$0xff]
        %v469 = vld [vmem:[#allocation2 + $0x68] sm:$0xff]
        %v470 = vld [vmem:[#allocation2 + $0x70] sm:$0xff]
        %v471 = vld [vmem:[#allocation2 + $0x78] sm:$0xff]
        %v472 = vld [vmem:[#allocation2 + $0x80] sm:$0xff]
        %v473 = vld [vmem:[#allocation2 + $0x88] sm:$0xff]
        %v474 = vld [vmem:[#allocation2 + $0x90] sm:$0xff]
        %v475 = vld [vmem:[#allocation2 + $0x98] sm:$0xff]
        %v476 = vld [vmem:[#allocation2 + $0xa0] sm:$0xff]
        %v477 = vld [vmem:[#allocation2 + $0xa8] sm:$0xff]
        %v478 = vld [vmem:[#allocation2 + $0xb0] sm:$0xff]
        %v479 = vld [vmem:[#allocation2 + $0xb8] sm:$0xff]
        %v480 = vld [vmem:[#allocation2 + $0xc0] sm:$0xff]
        %v481 = vld [vmem:[#allocation2 + $0xc8] sm:$0xff]
        %v482 = vld [vmem:[#allocation2 + $0xd0] sm:$0xff]
        %v483 = vld [vmem:[#allocation2 + $0xd8] sm:$0xff]
        %v484 = vld [vmem:[#allocation2 + $0xe0] sm:$0xff]
        %v485 = vld [vmem:[#allocation2 + $0xe8] sm:$0xff]
        %v486 = vld [vmem:[#allocation2 + $0xf0] sm:$0xff]
        %v487 = vld [vmem:[#allocation2 + $0xf8] sm:$0xff]
        %v488 = vld [vmem:[%s362] sm:$0xf]
        %v489 = vld [vmem:[%s362 + $0x4] sm:$0xf]
        %v490 = vld [vmem:[%s362 + $0x8] sm:$0xf]
        %v491 = vld [vmem:[%s362 + $0xc] sm:$0xf]
        %v492 = vld [vmem:[%s362 + $0x10] sm:$0xf]
        %v493 = vld [vmem:[%s362 + $0x14] sm:$0xf]
        %v494 = vld [vmem:[%s362 + $0x18] sm:$0xf]
        %v495 = vld [vmem:[%s362 + $0x1c] sm:$0xf]
        %v496 = vld [vmem:[%s362 + $0x20] sm:$0xf]
        %v497 = vld [vmem:[%s362 + $0x24] sm:$0xf]
        %v498 = vld [vmem:[%s362 + $0x28] sm:$0xf]
        %v499 = vld [vmem:[%s362 + $0x2c] sm:$0xf]
        %v500 = vld [vmem:[%s362 + $0x30] sm:$0xf]
        %v501 = vld [vmem:[%s362 + $0x34] sm:$0xf]
        %v502 = vld [vmem:[%s362 + $0x38] sm:$0xf]
        %v503 = vld [vmem:[%s362 + $0x3c] sm:$0xf]
        %v504 = vld [vmem:[%s362 + $0x40] sm:$0xf]
        %v505 = vld [vmem:[%s362 + $0x44] sm:$0xf]
        %v506 = vld [vmem:[%s362 + $0x48] sm:$0xf]
        %v507 = vld [vmem:[%s362 + $0x4c] sm:$0xf]
        %v508 = vld [vmem:[%s362 + $0x50] sm:$0xf]
        %v509 = vld [vmem:[%s362 + $0x54] sm:$0xf]
        %v510 = vld [vmem:[%s362 + $0x58] sm:$0xf]
        %v511 = vld [vmem:[%s362 + $0x5c] sm:$0xf]
        %v512 = vld [vmem:[%s362 + $0x60] sm:$0xf]
        %v513 = vld [vmem:[%s362 + $0x64] sm:$0xf]
        %v514 = vld [vmem:[%s362 + $0x68] sm:$0xf]
        %v515 = vld [vmem:[%s362 + $0x6c] sm:$0xf]
        %v516 = vld [vmem:[%s362 + $0x70] sm:$0xf]
        %v517 = vld [vmem:[%s362 + $0x74] sm:$0xf]
        %v518 = vld [vmem:[%s362 + $0x78] sm:$0xf]
        %v519 = vld [vmem:[%s362 + $0x7c] sm:$0xf]
        %v520 = vld [vmem:[%s405] sm:$0xf]
        %v521 = vld [vmem:[%s405 + $0x4] sm:$0xf]
        %v522 = vld [vmem:[%s405 + $0x8] sm:$0xf]
        %v523 = vld [vmem:[%s405 + $0xc] sm:$0xf]
        %v524 = vld [vmem:[%s405 + $0x10] sm:$0xf]
        %v525 = vld [vmem:[%s405 + $0x14] sm:$0xf]
        %v526 = vld [vmem:[%s405 + $0x18] sm:$0xf]
        %v527 = vld [vmem:[%s405 + $0x1c] sm:$0xf]
        %v528 = vld [vmem:[%s405 + $0x20] sm:$0xf]
        %v529 = vld [vmem:[%s405 + $0x24] sm:$0xf]
        %v530 = vld [vmem:[%s405 + $0x28] sm:$0xf]
        %v531 = vld [vmem:[%s405 + $0x2c] sm:$0xf]
        %v532 = vld [vmem:[%s405 + $0x30] sm:$0xf]
        %v533 = vld [vmem:[%s405 + $0x34] sm:$0xf]
        %v534 = vld [vmem:[%s405 + $0x38] sm:$0xf]
        %v535 = vld [vmem:[%s405 + $0x3c] sm:$0xf]
        %v568 = vunpack.c.l.b16 %v488
        %v569 = vunpack.c.l.b16 %v489
        %v570 = vunpack.c.l.b16 %v490
        %v571 = vunpack.c.l.b16 %v491
        %v572 = vunpack.c.l.b16 %v492
        %v573 = vunpack.c.l.b16 %v493
        %v574 = vunpack.c.l.b16 %v494
        %v575 = vunpack.c.l.b16 %v495
        %v576 = vunpack.c.l.b16 %v496
        %v577 = vunpack.c.l.b16 %v497
        %v578 = vunpack.c.l.b16 %v498
        %v579 = vunpack.c.l.b16 %v499
        %v580 = vunpack.c.l.b16 %v500
        %v581 = vunpack.c.l.b16 %v501
        %v582 = vunpack.c.l.b16 %v502
        %v583 = vunpack.c.l.b16 %v503
        %v584 = vunpack.c.l.b16 %v504
        %v585 = vunpack.c.l.b16 %v505
        %v586 = vunpack.c.l.b16 %v506
        %v587 = vunpack.c.l.b16 %v507
        %v588 = vunpack.c.l.b16 %v508
        %v589 = vunpack.c.l.b16 %v509
        %v590 = vunpack.c.l.b16 %v510
        %v591 = vunpack.c.l.b16 %v511
        %v592 = vunpack.c.l.b16 %v512
        %v593 = vunpack.c.l.b16 %v513
        %v594 = vunpack.c.l.b16 %v514
        %v595 = vunpack.c.l.b16 %v515
        %v596 = vunpack.c.l.b16 %v516
        %v597 = vunpack.c.l.b16 %v517
        %v598 = vunpack.c.l.b16 %v518
        %v599 = vunpack.c.l.b16 %v519
        %v600 = vpack.c.b16 %v569, %v568
        %v601 = vpack.c.b16 %v571, %v570
        %v602 = vpack.c.b16 %v573, %v572
        %v603 = vpack.c.b16 %v575, %v574
        %v604 = vpack.c.b16 %v577, %v576
        %v605 = vpack.c.b16 %v579, %v578
        %v606 = vpack.c.b16 %v581, %v580
        %v607 = vpack.c.b16 %v583, %v582
        %v608 = vpack.c.b16 %v585, %v584
        %v609 = vpack.c.b16 %v587, %v586
        %v610 = vpack.c.b16 %v589, %v588
        %v611 = vpack.c.b16 %v591, %v590
        %v612 = vpack.c.b16 %v593, %v592
        %v613 = vpack.c.b16 %v595, %v594
        %v614 = vpack.c.b16 %v597, %v596
        %v615 = vpack.c.b16 %v599, %v598
        %v648 = vunpack.c.l.b16 %v520
        %v649 = vunpack.c.l.b16 %v521
        %v650 = vunpack.c.l.b16 %v522
        %v651 = vunpack.c.l.b16 %v523
        %v652 = vunpack.c.l.b16 %v524
        %v653 = vunpack.c.l.b16 %v525
        %v654 = vunpack.c.l.b16 %v526
        %v655 = vunpack.c.l.b16 %v527
        %v656 = vunpack.c.l.b16 %v528
        %v657 = vunpack.c.l.b16 %v529
        %v658 = vunpack.c.l.b16 %v530
        %v659 = vunpack.c.l.b16 %v531
        %v660 = vunpack.c.l.b16 %v532
        %v661 = vunpack.c.l.b16 %v533
        %v662 = vunpack.c.l.b16 %v534
        %v663 = vunpack.c.l.b16 %v535
        %v664 = vpack.c.b16 %v649, %v648
        %v665 = vpack.c.b16 %v651, %v650
        %v666 = vpack.c.b16 %v653, %v652
        %v667 = vpack.c.b16 %v655, %v654
        %v668 = vpack.c.b16 %v657, %v656
        %v669 = vpack.c.b16 %v659, %v658
        %v670 = vpack.c.b16 %v661, %v660
        %v671 = vpack.c.b16 %v663, %v662
        %680 = vmatprep.subr.bf16.mxu0 0
        %681 = vmatpush1.bf16.msra.mxu0 %v671
        %682 = vmatprep.subr.bf16.mxu0 0
        %683 = vmatpush1.bf16.msra.mxu0 %v670
        %684 = vmatprep.subr.bf16.mxu0 0
        %685 = vmatpush1.bf16.msra.mxu0 %v669
        %686 = vmatprep.subr.bf16.mxu0 0
        %687 = vmatpush1.bf16.msra.mxu0 %v668
        %688 = vmatprep.subr.bf16.mxu0 0
        %689 = vmatpush1.bf16.msra.mxu0 %v667
        %690 = vmatprep.subr.bf16.mxu0 0
        %691 = vmatpush1.bf16.msra.mxu0 %v666
        %692 = vmatprep.subr.bf16.mxu0 0
        %693 = vmatpush1.bf16.msra.mxu0 %v665
        %694 = vmatprep.subr.bf16.mxu0 0
        %695 = vmatpush1.bf16.msra.mxu0 %v664
        %696 = vmatprep.subr.bf16.mxu0 0
        %697 = vmatpush2.bf16.msra.mxu0 0
        %698 = vmatprep.subr.bf16.mxu0 0
        %699 = vmatpush2.bf16.msra.mxu0 0
        %700 = vmatprep.subr.bf16.mxu0 0
        %701 = vmatpush2.bf16.msra.mxu0 0
        %702 = vmatprep.subr.bf16.mxu0 0
        %703 = vmatpush2.bf16.msra.mxu0 0
        %704 = vmatprep.subr.bf16.mxu0 0
        %705 = vmatpush2.bf16.msra.mxu0 0
        %706 = vmatprep.subr.bf16.mxu0 0
        %707 = vmatpush2.bf16.msra.mxu0 0
        %708 = vmatprep.subr.bf16.mxu0 0
        %709 = vmatpush2.bf16.msra.mxu0 0
        %710 = vmatprep.subr.bf16.mxu0 0
        %711 = vmatpush2.bf16.msra.mxu0 0
        %712 = vmatprep.mubr.bf16.mxu0 0
        %713 = vmatmul.mubr.bf16.gmra.mxu0 %v600
        %v714 = vpop.f32.mrf.mxu0
        %v715 = vadd.f32 0.0, %v714
        %v716 = vpop.f32.mrf.mxu0
        %v717 = vpop.f32.mrf.mxu0
        %v718 = vadd.f32 0.0, %v717
        %v719 = vpop.f32.mrf.mxu0
        %720 = vmatprep.mubr.bf16.mxu0 0
        %721 = vmatmul.mubr.bf16.gmra.mxu0 %v601
        %v722 = vpop.f32.mrf.mxu0
        %v723 = vadd.f32 0.0, %v722
        %v724 = vpop.f32.mrf.mxu0
        %v725 = vpop.f32.mrf.mxu0
        %v726 = vadd.f32 0.0, %v725
        %v727 = vpop.f32.mrf.mxu0
        %728 = vmatprep.mubr.bf16.mxu0 0
        %729 = vmatmul.mubr.bf16.gmra.mxu0 %v602
        %v730 = vpop.f32.mrf.mxu0
        %v731 = vadd.f32 0.0, %v730
        %v732 = vpop.f32.mrf.mxu0
        %v733 = vpop.f32.mrf.mxu0
        %v734 = vadd.f32 0.0, %v733
        %v735 = vpop.f32.mrf.mxu0
        %736 = vmatprep.mubr.bf16.mxu0 0
        %737 = vmatmul.mubr.bf16.gmra.mxu0 %v603
        %v738 = vpop.f32.mrf.mxu0
        %v739 = vadd.f32 0.0, %v738
        %v740 = vpop.f32.mrf.mxu0
        %v741 = vpop.f32.mrf.mxu0
        %v742 = vadd.f32 0.0, %v741
        %v743 = vpop.f32.mrf.mxu0
        %744 = vmatprep.mubr.bf16.mxu0 0
        %745 = vmatmul.mubr.bf16.gmra.mxu0 %v604
        %v746 = vpop.f32.mrf.mxu0
        %v747 = vadd.f32 0.0, %v746
        %v748 = vpop.f32.mrf.mxu0
        %v749 = vpop.f32.mrf.mxu0
        %v750 = vadd.f32 0.0, %v749
        %v751 = vpop.f32.mrf.mxu0
        %752 = vmatprep.mubr.bf16.mxu0 0
        %753 = vmatmul.mubr.bf16.gmra.mxu0 %v605
        %v754 = vpop.f32.mrf.mxu0
        %v755 = vadd.f32 0.0, %v754
        %v756 = vpop.f32.mrf.mxu0
        %v757 = vpop.f32.mrf.mxu0
        %v758 = vadd.f32 0.0, %v757
        %v759 = vpop.f32.mrf.mxu0
        %760 = vmatprep.mubr.bf16.mxu0 0
        %761 = vmatmul.mubr.bf16.gmra.mxu0 %v606
        %v762 = vpop.f32.mrf.mxu0
        %v763 = vadd.f32 0.0, %v762
        %v764 = vpop.f32.mrf.mxu0
        %v765 = vpop.f32.mrf.mxu0
        %v766 = vadd.f32 0.0, %v765
        %v767 = vpop.f32.mrf.mxu0
        %768 = vmatprep.mubr.bf16.mxu0 0
        %769 = vmatmul.mubr.bf16.gmra.mxu0 %v607
        %v770 = vpop.f32.mrf.mxu0
        %v771 = vadd.f32 0.0, %v770
        %v772 = vpop.f32.mrf.mxu0
        %v773 = vpop.f32.mrf.mxu0
        %v774 = vadd.f32 0.0, %v773
        %v775 = vpop.f32.mrf.mxu0
        %776 = vmatprep.mubr.bf16.mxu0 0
        %777 = vmatmul.mubr.bf16.gmra.mxu0 %v608
        %v778 = vpop.f32.mrf.mxu0
        %v779 = vadd.f32 0.0, %v778
        %v780 = vpop.f32.mrf.mxu0
        %v781 = vpop.f32.mrf.mxu0
        %v782 = vadd.f32 0.0, %v781
        %v783 = vpop.f32.mrf.mxu0
        %784 = vmatprep.mubr.bf16.mxu0 0
        %785 = vmatmul.mubr.bf16.gmra.mxu0 %v609
        %v786 = vpop.f32.mrf.mxu0
        %v787 = vadd.f32 0.0, %v786
        %v788 = vpop.f32.mrf.mxu0
        %v789 = vpop.f32.mrf.mxu0
        %v790 = vadd.f32 0.0, %v789
        %v791 = vpop.f32.mrf.mxu0
        %792 = vmatprep.mubr.bf16.mxu0 0
        %793 = vmatmul.mubr.bf16.gmra.mxu0 %v610
        %v794 = vpop.f32.mrf.mxu0
        %v795 = vadd.f32 0.0, %v794
        %v796 = vpop.f32.mrf.mxu0
        %v797 = vpop.f32.mrf.mxu0
        %v798 = vadd.f32 0.0, %v797
        %v799 = vpop.f32.mrf.mxu0
        %800 = vmatprep.mubr.bf16.mxu0 0
        %801 = vmatmul.mubr.bf16.gmra.mxu0 %v611
        %v802 = vpop.f32.mrf.mxu0
        %v803 = vadd.f32 0.0, %v802
        %v804 = vpop.f32.mrf.mxu0
        %v805 = vpop.f32.mrf.mxu0
        %v806 = vadd.f32 0.0, %v805
        %v807 = vpop.f32.mrf.mxu0
        %808 = vmatprep.mubr.bf16.mxu0 0
        %809 = vmatmul.mubr.bf16.gmra.mxu0 %v612
        %v810 = vpop.f32.mrf.mxu0
        %v811 = vadd.f32 0.0, %v810
        %v812 = vpop.f32.mrf.mxu0
        %v813 = vpop.f32.mrf.mxu0
        %v814 = vadd.f32 0.0, %v813
        %v815 = vpop.f32.mrf.mxu0
        %816 = vmatprep.mubr.bf16.mxu0 0
        %817 = vmatmul.mubr.bf16.gmra.mxu0 %v613
        %v818 = vpop.f32.mrf.mxu0
        %v819 = vadd.f32 0.0, %v818
        %v820 = vpop.f32.mrf.mxu0
        %v821 = vpop.f32.mrf.mxu0
        %v822 = vadd.f32 0.0, %v821
        %v823 = vpop.f32.mrf.mxu0
        %824 = vmatprep.mubr.bf16.mxu0 0
        %825 = vmatmul.mubr.bf16.gmra.mxu0 %v614
        %v826 = vpop.f32.mrf.mxu0
        %v827 = vadd.f32 0.0, %v826
        %v828 = vpop.f32.mrf.mxu0
        %v829 = vpop.f32.mrf.mxu0
        %v830 = vadd.f32 0.0, %v829
        %v831 = vpop.f32.mrf.mxu0
        %832 = vmatprep.mubr.bf16.mxu0 0
        %833 = vmatmul.mubr.bf16.gmra.mxu0 %v615
        %v834 = vpop.f32.mrf.mxu0
        %v835 = vadd.f32 0.0, %v834
        %v836 = vpop.f32.mrf.mxu0
        %v837 = vpop.f32.mrf.mxu0
        %v838 = vadd.f32 0.0, %v837
        %v839 = vpop.f32.mrf.mxu0
        %840 = vdwg.mxu0
        %v841 = vadd.f32 %v456, %v715
        %v842 = vadd.f32 %v457, %v718
        %v843 = vadd.f32 %v458, %v723
        %v844 = vadd.f32 %v459, %v726
        %v845 = vadd.f32 %v460, %v731
        %v846 = vadd.f32 %v461, %v734
        %v847 = vadd.f32 %v462, %v739
        %v848 = vadd.f32 %v463, %v742
        %v849 = vadd.f32 %v464, %v747
        %v850 = vadd.f32 %v465, %v750
        %v851 = vadd.f32 %v466, %v755
        %v852 = vadd.f32 %v467, %v758
        %v853 = vadd.f32 %v468, %v763
        %v854 = vadd.f32 %v469, %v766
        %v855 = vadd.f32 %v470, %v771
        %v856 = vadd.f32 %v471, %v774
        %v857 = vadd.f32 %v472, %v779
        %v858 = vadd.f32 %v473, %v782
        %v859 = vadd.f32 %v474, %v787
        %v860 = vadd.f32 %v475, %v790
        %v861 = vadd.f32 %v476, %v795
        %v862 = vadd.f32 %v477, %v798
        %v863 = vadd.f32 %v478, %v803
        %v864 = vadd.f32 %v479, %v806
        %v865 = vadd.f32 %v480, %v811
        %v866 = vadd.f32 %v481, %v814
        %v867 = vadd.f32 %v482, %v819
        %v868 = vadd.f32 %v483, %v822
        %v869 = vadd.f32 %v484, %v827
        %v870 = vadd.f32 %v485, %v830
        %v871 = vadd.f32 %v486, %v835
        %v872 = vadd.f32 %v487, %v838
        %873 = vst [vmem:[#allocation2] sm:$0xff] %v841
        %874 = vst [vmem:[#allocation2 + $0x8] sm:$0xff] %v842
        %875 = vst [vmem:[#allocation2 + $0x10] sm:$0xff] %v843
        %876 = vst [vmem:[#allocation2 + $0x18] sm:$0xff] %v844
        %877 = vst [vmem:[#allocation2 + $0x20] sm:$0xff] %v845
        %878 = vst [vmem:[#allocation2 + $0x28] sm:$0xff] %v846
        %879 = vst [vmem:[#allocation2 + $0x30] sm:$0xff] %v847
        %880 = vst [vmem:[#allocation2 + $0x38] sm:$0xff] %v848
        %881 = vst [vmem:[#allocation2 + $0x40] sm:$0xff] %v849
        %882 = vst [vmem:[#allocation2 + $0x48] sm:$0xff] %v850
        %883 = vst [vmem:[#allocation2 + $0x50] sm:$0xff] %v851
        %884 = vst [vmem:[#allocation2 + $0x58] sm:$0xff] %v852
        %885 = vst [vmem:[#allocation2 + $0x60] sm:$0xff] %v853
        %886 = vst [vmem:[#allocation2 + $0x68] sm:$0xff] %v854
        %887 = vst [vmem:[#allocation2 + $0x70] sm:$0xff] %v855
        %888 = vst [vmem:[#allocation2 + $0x78] sm:$0xff] %v856
        %889 = vst [vmem:[#allocation2 + $0x80] sm:$0xff] %v857
        %890 = vst [vmem:[#allocation2 + $0x88] sm:$0xff] %v858
        %891 = vst [vmem:[#allocation2 + $0x90] sm:$0xff] %v859
        %892 = vst [vmem:[#allocation2 + $0x98] sm:$0xff] %v860
        %893 = vst [vmem:[#allocation2 + $0xa0] sm:$0xff] %v861
        %894 = vst [vmem:[#allocation2 + $0xa8] sm:$0xff] %v862
        %895 = vst [vmem:[#allocation2 + $0xb0] sm:$0xff] %v863
        %896 = vst [vmem:[#allocation2 + $0xb8] sm:$0xff] %v864
        %897 = vst [vmem:[#allocation2 + $0xc0] sm:$0xff] %v865
        %898 = vst [vmem:[#allocation2 + $0xc8] sm:$0xff] %v866
        %899 = vst [vmem:[#allocation2 + $0xd0] sm:$0xff] %v867
        %900 = vst [vmem:[#allocation2 + $0xd8] sm:$0xff] %v868
        %901 = vst [vmem:[#allocation2 + $0xe0] sm:$0xff] %v869
        %902 = vst [vmem:[#allocation2 + $0xe8] sm:$0xff] %v870
        %903 = vst [vmem:[#allocation2 + $0xf0] sm:$0xff] %v871
        %904 = vst [vmem:[#allocation2 + $0xf8] sm:$0xff] %v872
        %p905 = scmp.eq.s32.totalorder %s21, 2
        // Predicated region
        $region78: #{hybrid_loss.11} parent=68 // pred_check
          %p906 = pneg %p905
        $region79: #{hybrid_loss.11} parent=68 // pred_check_branch
          %908 = sbr.rel (%p906) target = $region81
        $region80: #{hybrid_loss.11} parent=68 // pred_region
          %v909 = vld [vmem:[#allocation2] sm:$0xff]
          %v910 = vld [vmem:[#allocation2 + $0x8] sm:$0xff]
          %v911 = vld [vmem:[#allocation2 + $0x10] sm:$0xff]
          %v912 = vld [vmem:[#allocation2 + $0x18] sm:$0xff]
          %v913 = vld [vmem:[#allocation2 + $0x20] sm:$0xff]
          %v914 = vld [vmem:[#allocation2 + $0x28] sm:$0xff]
          %v915 = vld [vmem:[#allocation2 + $0x30] sm:$0xff]
          %v916 = vld [vmem:[#allocation2 + $0x38] sm:$0xff]
          %v917 = vld [vmem:[#allocation2 + $0x40] sm:$0xff]
          %v918 = vld [vmem:[#allocation2 + $0x48] sm:$0xff]
          %v919 = vld [vmem:[#allocation2 + $0x50] sm:$0xff]
          %v920 = vld [vmem:[#allocation2 + $0x58] sm:$0xff]
          %v921 = vld [vmem:[#allocation2 + $0x60] sm:$0xff]
          %v922 = vld [vmem:[#allocation2 + $0x68] sm:$0xff]
          %v923 = vld [vmem:[#allocation2 + $0x70] sm:$0xff]
          %v924 = vld [vmem:[#allocation2 + $0x78] sm:$0xff]
          %v925 = vld [vmem:[#allocation2 + $0x80] sm:$0xff]
          %v926 = vld [vmem:[#allocation2 + $0x88] sm:$0xff]
          %v927 = vld [vmem:[#allocation2 + $0x90] sm:$0xff]
          %v928 = vld [vmem:[#allocation2 + $0x98] sm:$0xff]
          %v929 = vld [vmem:[#allocation2 + $0xa0] sm:$0xff]
          %v930 = vld [vmem:[#allocation2 + $0xa8] sm:$0xff]
          %v931 = vld [vmem:[#allocation2 + $0xb0] sm:$0xff]
          %v932 = vld [vmem:[#allocation2 + $0xb8] sm:$0xff]
          %v933 = vld [vmem:[#allocation2 + $0xc0] sm:$0xff]
          %v934 = vld [vmem:[#allocation2 + $0xc8] sm:$0xff]
          %v935 = vld [vmem:[#allocation2 + $0xd0] sm:$0xff]
          %v936 = vld [vmem:[#allocation2 + $0xd8] sm:$0xff]
          %v937 = vld [vmem:[#allocation2 + $0xe0] sm:$0xff]
          %v938 = vld [vmem:[#allocation2 + $0xe8] sm:$0xff]
          %v939 = vld [vmem:[#allocation2 + $0xf0] sm:$0xff]
          %v940 = vld [vmem:[#allocation2 + $0xf8] sm:$0xff]
          %v941 = vld [vmem:[%s409] sm:$0x1]
          %v943 = vlaneseq
          %v944 = vshrl.u32 %v943, 7
          %v945 = vsub.s32 0, %v944
          %v946 = vrot.slane %v941, %v945
          %v948 = vadd.f32 %v909, %v946
          %v949 = vadd.f32 %v910, %v946
          %v950 = vadd.f32 %v911, %v946
          %v951 = vadd.f32 %v912, %v946
          %v952 = vadd.f32 %v913, %v946
          %v953 = vadd.f32 %v914, %v946
          %v954 = vadd.f32 %v915, %v946
          %v955 = vadd.f32 %v916, %v946
          %v956 = vadd.f32 %v917, %v946
          %v957 = vadd.f32 %v918, %v946
          %v958 = vadd.f32 %v919, %v946
          %v959 = vadd.f32 %v920, %v946
          %v960 = vadd.f32 %v921, %v946
          %v961 = vadd.f32 %v922, %v946
          %v962 = vadd.f32 %v923, %v946
          %v963 = vadd.f32 %v924, %v946
          %v964 = vadd.f32 %v925, %v946
          %v965 = vadd.f32 %v926, %v946
          %v966 = vadd.f32 %v927, %v946
          %v967 = vadd.f32 %v928, %v946
          %v968 = vadd.f32 %v929, %v946
          %v969 = vadd.f32 %v930, %v946
          %v970 = vadd.f32 %v931, %v946
          %v971 = vadd.f32 %v932, %v946
          %v972 = vadd.f32 %v933, %v946
          %v973 = vadd.f32 %v934, %v946
          %v974 = vadd.f32 %v935, %v946
          %v975 = vadd.f32 %v936, %v946
          %v976 = vadd.f32 %v937, %v946
          %v977 = vadd.f32 %v938, %v946
          %v978 = vadd.f32 %v939, %v946
          %v979 = vadd.f32 %v940, %v946
          %v980 = vmax.f32 %v948, 0.0
          %v981 = vmax.f32 %v949, 0.0
          %v982 = vmax.f32 %v950, 0.0
          %v983 = vmax.f32 %v951, 0.0
          %v984 = vmax.f32 %v952, 0.0
          %v985 = vmax.f32 %v953, 0.0
          %v986 = vmax.f32 %v954, 0.0
          %v987 = vmax.f32 %v955, 0.0
          %v988 = vmax.f32 %v956, 0.0
          %v989 = vmax.f32 %v957, 0.0
          %v990 = vmax.f32 %v958, 0.0
          %v991 = vmax.f32 %v959, 0.0
          %v992 = vmax.f32 %v960, 0.0
          %v993 = vmax.f32 %v961, 0.0
          %v994 = vmax.f32 %v962, 0.0
          %v995 = vmax.f32 %v963, 0.0
          %v996 = vmax.f32 %v964, 0.0
          %v997 = vmax.f32 %v965, 0.0
          %v998 = vmax.f32 %v966, 0.0
          %v999 = vmax.f32 %v967, 0.0
          %v1000 = vmax.f32 %v968, 0.0
          %v1001 = vmax.f32 %v969, 0.0
          %v1002 = vmax.f32 %v970, 0.0
          %v1003 = vmax.f32 %v971, 0.0
          %v1004 = vmax.f32 %v972, 0.0
          %v1005 = vmax.f32 %v973, 0.0
          %v1006 = vmax.f32 %v974, 0.0
          %v1007 = vmax.f32 %v975, 0.0
          %v1008 = vmax.f32 %v976, 0.0
          %v1009 = vmax.f32 %v977, 0.0
          %v1010 = vmax.f32 %v978, 0.0
          %v1011 = vmax.f32 %v979, 0.0
          %v1012 = vpack.c.bf16 %v981, %v980
          %v1013 = vpack.c.bf16 %v983, %v982
          %v1014 = vpack.c.bf16 %v985, %v984
          %v1015 = vpack.c.bf16 %v987, %v986
          %v1016 = vpack.c.bf16 %v989, %v988
          %v1017 = vpack.c.bf16 %v991, %v990
          %v1018 = vpack.c.bf16 %v993, %v992
          %v1019 = vpack.c.bf16 %v995, %v994
          %v1020 = vpack.c.bf16 %v997, %v996
          %v1021 = vpack.c.bf16 %v999, %v998
          %v1022 = vpack.c.bf16 %v1001, %v1000
          %v1023 = vpack.c.bf16 %v1003, %v1002
          %v1024 = vpack.c.bf16 %v1005, %v1004
          %v1025 = vpack.c.bf16 %v1007, %v1006
          %v1026 = vpack.c.bf16 %v1009, %v1008
          %v1027 = vpack.c.bf16 %v1011, %v1010
          %v1044 = vunpack.c.l.b16 %v1012
          %v1045 = vunpack.c.h.b16 %v1012
          %v1046 = vunpack.c.l.b16 %v1013
          %v1047 = vunpack.c.h.b16 %v1013
          %v1048 = vunpack.c.l.b16 %v1014
          %v1049 = vunpack.c.h.b16 %v1014
          %v1050 = vunpack.c.l.b16 %v1015
          %v1051 = vunpack.c.h.b16 %v1015
          %v1052 = vunpack.c.l.b16 %v1016
          %v1053 = vunpack.c.h.b16 %v1016
          %v1054 = vunpack.c.l.b16 %v1017
          %v1055 = vunpack.c.h.b16 %v1017
          %v1056 = vunpack.c.l.b16 %v1018
          %v1057 = vunpack.c.h.b16 %v1018
          %v1058 = vunpack.c.l.b16 %v1019
          %v1059 = vunpack.c.h.b16 %v1019
          %v1060 = vunpack.c.l.b16 %v1020
          %v1061 = vunpack.c.h.b16 %v1020
          %v1062 = vunpack.c.l.b16 %v1021
          %v1063 = vunpack.c.h.b16 %v1021
          %v1064 = vunpack.c.l.b16 %v1022
          %v1065 = vunpack.c.h.b16 %v1022
          %v1066 = vunpack.c.l.b16 %v1023
          %v1067 = vunpack.c.h.b16 %v1023
          %v1068 = vunpack.c.l.b16 %v1024
          %v1069 = vunpack.c.h.b16 %v1024
          %v1070 = vunpack.c.l.b16 %v1025
          %v1071 = vunpack.c.h.b16 %v1025
          %v1072 = vunpack.c.l.b16 %v1026
          %v1073 = vunpack.c.h.b16 %v1026
          %v1074 = vunpack.c.l.b16 %v1027
          %v1075 = vunpack.c.h.b16 %v1027
          %v1076 = vpack.c.b16 %v1044, %v1044
          %v1077 = vpack.c.b16 %v1045, %v1045
          %v1078 = vpack.c.b16 %v1046, %v1046
          %v1079 = vpack.c.b16 %v1047, %v1047
          %v1080 = vpack.c.b16 %v1048, %v1048
          %v1081 = vpack.c.b16 %v1049, %v1049
          %v1082 = vpack.c.b16 %v1050, %v1050
          %v1083 = vpack.c.b16 %v1051, %v1051
          %v1084 = vpack.c.b16 %v1052, %v1052
          %v1085 = vpack.c.b16 %v1053, %v1053
          %v1086 = vpack.c.b16 %v1054, %v1054
          %v1087 = vpack.c.b16 %v1055, %v1055
          %v1088 = vpack.c.b16 %v1056, %v1056
          %v1089 = vpack.c.b16 %v1057, %v1057
          %v1090 = vpack.c.b16 %v1058, %v1058
          %v1091 = vpack.c.b16 %v1059, %v1059
          %v1092 = vpack.c.b16 %v1060, %v1060
          %v1093 = vpack.c.b16 %v1061, %v1061
          %v1094 = vpack.c.b16 %v1062, %v1062
          %v1095 = vpack.c.b16 %v1063, %v1063
          %v1096 = vpack.c.b16 %v1064, %v1064
          %v1097 = vpack.c.b16 %v1065, %v1065
          %v1098 = vpack.c.b16 %v1066, %v1066
          %v1099 = vpack.c.b16 %v1067, %v1067
          %v1100 = vpack.c.b16 %v1068, %v1068
          %v1101 = vpack.c.b16 %v1069, %v1069
          %v1102 = vpack.c.b16 %v1070, %v1070
          %v1103 = vpack.c.b16 %v1071, %v1071
          %v1104 = vpack.c.b16 %v1072, %v1072
          %v1105 = vpack.c.b16 %v1073, %v1073
          %v1106 = vpack.c.b16 %v1074, %v1074
          %v1107 = vpack.c.b16 %v1075, %v1075
          %1140 = vst [vmem:[%s417] sm:$0xf] %v1076
          %1141 = vst [vmem:[%s417 + $0x4] sm:$0xf] %v1077
          %1142 = vst [vmem:[%s417 + $0x8] sm:$0xf] %v1078
          %1143 = vst [vmem:[%s417 + $0xc] sm:$0xf] %v1079
          %1144 = vst [vmem:[%s417 + $0x10] sm:$0xf] %v1080
          %1145 = vst [vmem:[%s417 + $0x14] sm:$0xf] %v1081
          %1146 = vst [vmem:[%s417 + $0x18] sm:$0xf] %v1082
          %1147 = vst [vmem:[%s417 + $0x1c] sm:$0xf] %v1083
          %1148 = vst [vmem:[%s417 + $0x20] sm:$0xf] %v1084
          %1149 = vst [vmem:[%s417 + $0x24] sm:$0xf] %v1085
          %1150 = vst [vmem:[%s417 + $0x28] sm:$0xf] %v1086
          %1151 = vst [vmem:[%s417 + $0x2c] sm:$0xf] %v1087
          %1152 = vst [vmem:[%s417 + $0x30] sm:$0xf] %v1088
          %1153 = vst [vmem:[%s417 + $0x34] sm:$0xf] %v1089
          %1154 = vst [vmem:[%s417 + $0x38] sm:$0xf] %v1090
          %1155 = vst [vmem:[%s417 + $0x3c] sm:$0xf] %v1091
          %1156 = vst [vmem:[%s417 + $0x40] sm:$0xf] %v1092
          %1157 = vst [vmem:[%s417 + $0x44] sm:$0xf] %v1093
          %1158 = vst [vmem:[%s417 + $0x48] sm:$0xf] %v1094
          %1159 = vst [vmem:[%s417 + $0x4c] sm:$0xf] %v1095
          %1160 = vst [vmem:[%s417 + $0x50] sm:$0xf] %v1096
          %1161 = vst [vmem:[%s417 + $0x54] sm:$0xf] %v1097
          %1162 = vst [vmem:[%s417 + $0x58] sm:$0xf] %v1098
          %1163 = vst [vmem:[%s417 + $0x5c] sm:$0xf] %v1099
          %1164 = vst [vmem:[%s417 + $0x60] sm:$0xf] %v1100
          %1165 = vst [vmem:[%s417 + $0x64] sm:$0xf] %v1101
          %1166 = vst [vmem:[%s417 + $0x68] sm:$0xf] %v1102
          %1167 = vst [vmem:[%s417 + $0x6c] sm:$0xf] %v1103
          %1168 = vst [vmem:[%s417 + $0x70] sm:$0xf] %v1104
          %1169 = vst [vmem:[%s417 + $0x74] sm:$0xf] %v1105
          %1170 = vst [vmem:[%s417 + $0x78] sm:$0xf] %v1106
          %1171 = vst [vmem:[%s417 + $0x7c] sm:$0xf] %v1107
        $region81: #{hybrid_loss.11} parent=68 // pred_fallthru
          _
        %s1172 = smul.u32 32, %s19
        %p1173 = scmp.lt.s32.totalorder %s1172, 127
        %s1174 = scalar_select %p1173, %s1172, 127
        %p1175 = scmp.lt.s32.totalorder %s20, 0
        %s1176 = scalar_select %p1175, %s20, 0
        %s1177 = sadd.s32 %s1176, %s1174
        %s1178 = smul.addr %s1177, 4
        %s1179 = scalar_lea.vmem %s3, %s1178
        // Predicated region
        $region82: #{hybrid_loss.11} parent=68 // pred_check
          %p1180 = pneg %p135
        $region83: #{hybrid_loss.11} parent=68 // pred_check_branch
          %1182 = sbr.rel (%p1180) target = $region85
        $region84: #{hybrid_loss.11} parent=68 // pred_region
          %s1183 = smul.u32 32, %s19
        $region85: #{hybrid_loss.11} parent=68 // pred_fallthru
          _
      $region69: #{hybrid_loss.11} parent=5 // pred_fallthru
        _
      %p1184 = scmp.le.s32.totalorder 2, %s9
      // Predicated region
      $region86: #{hybrid_loss.11} parent=5 // pred_check
        %p1185 = pneg %p1184
      $region87: #{hybrid_loss.11} parent=5 // pred_check_branch
        %1187 = sbr.rel (%p1185) target = $region89
      $region88: #{hybrid_loss.11} parent=5 // pred_region
        %s1188 = ssub.s32 %s9, 2
        // Predicated region
        $region90: #{hybrid_loss.11} parent=88 // pred_check
          %p1189 = pneg %p141
        $region91: #{hybrid_loss.11} parent=88 // pred_check_branch
          %1191 = sbr.rel (%p1189) target = $region93
        $region92: #{hybrid_loss.11} parent=88 // pred_region
          %s1192 = smul.u32 32, %s22
          %p1193 = scmp.lt.s32.totalorder %s1192, 127
          %s1194 = scalar_select %p1193, %s1192, 127
          %p1195 = scmp.lt.s32.totalorder %s23, 0
          %s1196 = scalar_select %p1195, %s23, 0
          %s1197 = sadd.s32 %s1196, %s1194
          %s1198 = smul.addr %s1197, 4
          %s1199 = scalar_lea.vmem %s3, %s1198
        $region93: #{hybrid_loss.11} parent=88 // pred_fallthru
          _
      $region89: #{hybrid_loss.11} parent=5 // pred_fallthru
        _
    $region6: #{hybrid_loss.11} parent=1 // loop_footer
      %s13 = sadd.s32 1, %s9
    $region7: #{hybrid_loss.11} parent=1 // loop_footer_branch
      %8 = sbr.rel target = $region3
    $region8: #{hybrid_loss.11} parent=1 // loop_exit
      _

// kernel: hybrid_loss.12
$region0: #{hybrid_loss.12}
  #allocation0 [shape = 'u32[]', space=smem, size = 0x4, offset = 0x4, fixed_abs, tag = 'smem constant byte address 0x4 - core index']
  #allocation1 [shape = 'u32[144,128]{1,0:T(1,128)}', space=vmem, size = 0x12000, scoped, tag = 'internal scratch']
  #allocation2 [shape = 'f32[200,256]{1,0:T(8,128)}', space=vmem, size = 0x32000, scoped, tag = 'scratch operand']
  %s0 = inlined_call_operand.vmem [shape: bf16[200,1664], index: 0, kind: input, shape index: {}]
  %s1 = inlined_call_operand.vmem [shape: bf16[1664,256], index: 1, kind: input, shape index: {}]
  %s2 = inlined_call_operand.vmem [shape: f32[1,256], index: 2, kind: input, shape index: {}]
  %s3 = inlined_call_operand.vmem [shape: bf16[200,256], index: 3, kind: output, shape index: {}]
  %s4 = sld [smem:[#allocation0]]
  $region94: #{hybrid_loss.12} parent=0
    _
  %s6 = ssub.s32 1, %s4
  %s7 = scalar_select 0, %s6, %s4
  $region1: #{hybrid_loss.12} parent=0
    #allocation3 [shape = 'u8[102400]{0}', space=vmem, size = 0x19000, scoped, tag = 'input window, operand 0']
    loop: start=0, step=1, limit=15
    $region2: #{hybrid_loss.12} parent=1 // loop_pre_header
      _
    $region3: #{hybrid_loss.12} parent=1 // loop_header
      %s9 = sphi 0, %s13
      %p10 = scmp.ge.s32.totalorder %s9, 15
      %s16 = sphi 0, %s35
      %s17 = sphi 0, %s31
      %s18 = sphi 0, %s27
      %s19 = sphi 0, %s16
      %s20 = sphi 0, %s17
      %s21 = sphi 0, %s18
      %s22 = sphi 0, %s19
      %s23 = sphi 0, %s20
      %s24 = sphi 0, %s21
      %s40 = sphi 0, %s42
      %s43 = sphi 0, %s40
      %s44 = sphi 0, %s43
      %s60 = sphi 0, %s44
      %s68 = sphi 0, %s70
      %s71 = sphi 0, %s68
      %s72 = sphi 0, %s71
      %s88 = sphi 0, %s72
      %s94 = sphi 0, %s96
      %s97 = sphi 0, %s94
      %s98 = sphi 0, %s97
      %s114 = sphi 0, %s98
      %s122 = sphi 0, %s124
      %s125 = sphi 0, %s122
      %s126 = sphi 0, %s125
      %s142 = sphi 0, %s126
    $region4: #{hybrid_loss.12} parent=1 // loop_header_branch
      %12 = sbr.rel (%p10) target = $region8
    $region5: #{hybrid_loss.12} parent=1 // loop_body
      %s14 = ssub.s32 %s9, 1
      %s15 = ssub.s32 %s9, 2
      %s25 = sadd.s32 1, %s18
      %p26 = scmp.ge.s32.totalorder %s25, 13
      %s27 = scalar_select %p26, 0, %s25
      %s28 = sadd.s32 1, %s17
      %s29 = scalar_select %p26, %s28, %s17
      %p30 = scmp.ge.s32.totalorder %s29, 1
      %s31 = scalar_select %p30, 0, %s29
      %s32 = sadd.s32 1, %s16
      %s33 = scalar_select %p30, %s32, %s16
      %p34 = scmp.ge.s32.totalorder %s33, 1
      %s35 = scalar_select %p34, 0, %s33
      %s36 = ssub.s32 %s16, %s35
      %s37 = ssub.s32 %s18, %s27
      %s38 = sor.u32 %s36, %s37
      %p39 = scmp.eq.s32.totalorder %s38, 0
      %s41 = sadd.s32 %s40, 1
      %s42 = scalar_select %p39, %s40, %s41
      %p45 = pneg %p39
      %p46 = scmp.eq.s32.totalorder %s9, 12
      %p47 = por %p45, %p46
      %p48 = scmp.ne.s32.totalorder %s40, %s43
      %p49 = scmp.eq.s32.totalorder %s9, 0
      %p50 = por %p48, %p49
      %p51 = scmp.ne.s32.totalorder %s40, %s43
      %p52 = scmp.eq.s32.totalorder %s14, 12
      %p53 = por %p51, %p52
      %p54 = scmp.ne.s32.totalorder %s43, %s44
      %p55 = scmp.eq.s32.totalorder %s14, 0
      %p56 = por %p54, %p55
      %p57 = scmp.ne.s32.totalorder %s43, %s44
      %p58 = scmp.eq.s32.totalorder %s15, 12
      %p59 = por %p57, %p58
      %p61 = scmp.ne.s32.totalorder %s44, %s60
      %p62 = scmp.eq.s32.totalorder %s15, 0
      %p63 = por %p61, %p62
      %s64 = ssub.s32 %s18, %s27
      %s65 = ssub.s32 %s17, %s31
      %s66 = sor.u32 %s64, %s65
      %p67 = scmp.eq.s32.totalorder %s66, 0
      %s69 = sadd.s32 %s68, 1
      %s70 = scalar_select %p67, %s68, %s69
      %p73 = pneg %p67
      %p74 = scmp.eq.s32.totalorder %s9, 12
      %p75 = por %p73, %p74
      %p76 = scmp.ne.s32.totalorder %s68, %s71
      %p77 = scmp.eq.s32.totalorder %s9, 0
      %p78 = por %p76, %p77
      %p79 = scmp.ne.s32.totalorder %s68, %s71
      %p80 = scmp.eq.s32.totalorder %s14, 12
      %p81 = por %p79, %p80
      %p82 = scmp.ne.s32.totalorder %s71, %s72
      %p83 = scmp.eq.s32.totalorder %s14, 0
      %p84 = por %p82, %p83
      %p85 = scmp.ne.s32.totalorder %s71, %s72
      %p86 = scmp.eq.s32.totalorder %s15, 12
      %p87 = por %p85, %p86
      %p89 = scmp.ne.s32.totalorder %s72, %s88
      %p90 = scmp.eq.s32.totalorder %s15, 0
      %p91 = por %p89, %p90
      %s92 = ssub.s32 %s17, %s31
      %p93 = scmp.eq.s32.totalorder %s92, 0
      %s95 = sadd.s32 %s94, 1
      %s96 = scalar_select %p93, %s94, %s95
      %p99 = pneg %p93
      %p100 = scmp.eq.s32.totalorder %s9, 12
      %p101 = por %p99, %p100
      %p102 = scmp.ne.s32.totalorder %s94, %s97
      %p103 = scmp.eq.s32.totalorder %s9, 0
      %p104 = por %p102, %p103
      %p105 = scmp.ne.s32.totalorder %s94, %s97
      %p106 = scmp.eq.s32.totalorder %s14, 12
      %p107 = por %p105, %p106
      %p108 = scmp.ne.s32.totalorder %s97, %s98
      %p109 = scmp.eq.s32.totalorder %s14, 0
      %p110 = por %p108, %p109
      %p111 = scmp.ne.s32.totalorder %s97, %s98
      %p112 = scmp.eq.s32.totalorder %s15, 12
      %p113 = por %p111, %p112
      %p115 = scmp.ne.s32.totalorder %s98, %s114
      %p116 = scmp.eq.s32.totalorder %s15, 0
      %p117 = por %p115, %p116
      %s118 = ssub.s32 %s16, %s35
      %s119 = ssub.s32 %s17, %s31
      %s120 = sor.u32 %s118, %s119
      %p121 = scmp.eq.s32.totalorder %s120, 0
      %s123 = sadd.s32 %s122, 1
      %s124 = scalar_select %p121, %s122, %s123
      %p127 = pneg %p121
      %p128 = scmp.eq.s32.totalorder %s9, 12
      %p129 = por %p127, %p128
      %p130 = scmp.ne.s32.totalorder %s122, %s125
      %p131 = scmp.eq.s32.totalorder %s9, 0
      %p132 = por %p130, %p131
      %p133 = scmp.ne.s32.totalorder %s122, %s125
      %p134 = scmp.eq.s32.totalorder %s14, 12
      %p135 = por %p133, %p134
      %p136 = scmp.ne.s32.totalorder %s125, %s126
      %p137 = scmp.eq.s32.totalorder %s14, 0
      %p138 = por %p136, %p137
      %p139 = scmp.ne.s32.totalorder %s125, %s126
      %p140 = scmp.eq.s32.totalorder %s15, 12
      %p141 = por %p139, %p140
      %p143 = scmp.ne.s32.totalorder %s126, %s142
      %p144 = scmp.eq.s32.totalorder %s15, 0
      %p145 = por %p143, %p144
      %p146 = scmp.le.s32.totalorder 1, %s9
      %p147 = scmp.lt.s32.totalorder %s9, 14
      %p148 = pnand %p146, %p147
      %p149 = pneg %p148
      // Predicated region
      $region9: #{hybrid_loss.12} parent=5 // pred_check
        _
      $region10: #{hybrid_loss.12} parent=5 // pred_check_branch
        %151 = sbr.rel (%p148) target = $region12
      $region11: #{hybrid_loss.12} parent=5 // pred_region
        %s152 = ssub.s32 %s9, 1
        // Predicated region
        $region13: #{hybrid_loss.12} parent=11 // pred_check
          %p153 = pneg %p110
        $region14: #{hybrid_loss.12} parent=11 // pred_check_branch
          %155 = sbr.rel (%p153) target = $region16
        $region15: #{hybrid_loss.12} parent=11 // pred_region
          %s156 = smul.u32 2, %s20
          %p157 = scmp.lt.s32.totalorder %s156, 1
          %s158 = scalar_select %p157, %s156, 1
          %s159 = scalar_lea.vmem %s2, %s158
          %s160 = smul.u32 2, %s20
        $region16: #{hybrid_loss.12} parent=11 // pred_fallthru
          _
      $region12: #{hybrid_loss.12} parent=5 // pred_fallthru
        _
      %p161 = scmp.lt.s32.totalorder %s9, 13
      // Predicated region
      $region17: #{hybrid_loss.12} parent=5 // pred_check
        %p162 = pneg %p161
      $region18: #{hybrid_loss.12} parent=5 // pred_check_branch
        %164 = sbr.rel (%p162) target = $region20
      $region19: #{hybrid_loss.12} parent=5 // pred_region
        // Predicated region
        $region21: #{hybrid_loss.12} parent=19 // pred_check
          %p165 = pneg %p50
        $region22: #{hybrid_loss.12} parent=19 // pred_check_branch
          %167 = sbr.rel (%p165) target = $region24
        $region23: #{hybrid_loss.12} parent=19 // pred_region
          %s168 = sand.u32 %s40, 1
          %s169 = sand.u32 %s40, 1
          %s170 = smul.addr %s169, 100
          %s171 = scalar_lea.vmem [#allocation3], %s170
          %s172 = smul.u32 25, %s16
          %s173 = smul.addr %s172, 13
          %s174 = sadd.s32 %s18, %s173
          %s175 = smul.addr %s174, 4
          %s176 = scalar_lea.vmem %s0, %s175
          // Predicated region
          $region25: #{hybrid_loss.12} parent=23 // pred_check
            _
          $region26: #{hybrid_loss.12} parent=23 // pred_check_branch
            %178 = sbr.rel (0) target = $region28
          $region27: #{hybrid_loss.12} parent=23 // pred_region
            // Predicated region
            $region29: #{hybrid_loss.12} parent=27 // pred_check
              _
            $region30: #{hybrid_loss.12} parent=27 // pred_check_branch
              %180 = sbr.rel target = $region32
            $region31: #{hybrid_loss.12} parent=27 // pred_region
              // Predicated region
              $region44: #{hybrid_loss.12} parent=31 // pred_check
                _
              $region45: #{hybrid_loss.12} parent=31 // pred_check_branch
                %244 = sbr.rel (0) target = $region47
              $region46: #{hybrid_loss.12} parent=31 // pred_region
                loop: start=0, step=1, limit=1
                $region48: #{hybrid_loss.12} parent=46 // loop_pre_header
                  _
                $region49: #{hybrid_loss.12} parent=46 // loop_header
                  %s246 = sphi 0, %s250
                  %p247 = scmp.ge.s32.totalorder %s246, 1
                  %s251 = sphi %s176, %s176
                  %s252 = sphi %s171, %s171
                $region50: #{hybrid_loss.12} parent=46 // loop_header_branch
                  %249 = sbr.rel (%p247) target = $region54
                $region51: #{hybrid_loss.12} parent=46 // loop_body
                  _
                $region52: #{hybrid_loss.12} parent=46 // loop_footer
                  %s250 = sadd.s32 1, %s246
                $region53: #{hybrid_loss.12} parent=46 // loop_footer_branch
                  %245 = sbr.rel target = $region49
                $region54: #{hybrid_loss.12} parent=46 // loop_exit
                  _
                %s254 = ssub.s32 16, 1
                loop: start=0, step=1, limit=1
                $region55: #{hybrid_loss.12} parent=46 // loop_pre_header
                  _
                $region56: #{hybrid_loss.12} parent=46 // loop_header
                  %s256 = sphi 0, %s260
                  %p257 = scmp.ge.s32.totalorder %s256, 1
                  %s261 = sphi %s176, %s176
                  %s262 = sphi %s171, %s171
                $region57: #{hybrid_loss.12} parent=46 // loop_header_branch
                  %259 = sbr.rel (%p257) target = $region61
                $region58: #{hybrid_loss.12} parent=46 // loop_body
                  %v263 = vld [vmem:[%s261] sm:%s254]
                  %264 = vst [vmem:[%s262] sm:%s254] %v263
                  %v265 = vld [vmem:[%s261 + $0x34] sm:%s254]
                  %266 = vst [vmem:[%s262 + $0x4] sm:%s254] %v265
                  %v267 = vld [vmem:[%s261 + $0x68] sm:%s254]
                  %268 = vst [vmem:[%s262 + $0x8] sm:%s254] %v267
                  %v269 = vld [vmem:[%s261 + $0x9c] sm:%s254]
                  %270 = vst [vmem:[%s262 + $0xc] sm:%s254] %v269
                  %v271 = vld [vmem:[%s261 + $0xd0] sm:%s254]
                  %272 = vst [vmem:[%s262 + $0x10] sm:%s254] %v271
                  %v273 = vld [vmem:[%s261 + $0x104] sm:%s254]
                  %274 = vst [vmem:[%s262 + $0x14] sm:%s254] %v273
                  %v275 = vld [vmem:[%s261 + $0x138] sm:%s254]
                  %276 = vst [vmem:[%s262 + $0x18] sm:%s254] %v275
                  %v277 = vld [vmem:[%s261 + $0x16c] sm:%s254]
                  %278 = vst [vmem:[%s262 + $0x1c] sm:%s254] %v277
                  %v279 = vld [vmem:[%s261 + $0x1a0] sm:%s254]
                  %280 = vst [vmem:[%s262 + $0x20] sm:%s254] %v279
                  %v281 = vld [vmem:[%s261 + $0x1d4] sm:%s254]
                  %282 = vst [vmem:[%s262 + $0x24] sm:%s254] %v281
                  %v283 = vld [vmem:[%s261 + $0x208] sm:%s254]
                  %284 = vst [vmem:[%s262 + $0x28] sm:%s254] %v283
                  %v285 = vld [vmem:[%s261 + $0x23c] sm:%s254]
                  %286 = vst [vmem:[%s262 + $0x2c] sm:%s254] %v285
                  %v287 = vld [vmem:[%s261 + $0x270] sm:%s254]
                  %288 = vst [vmem:[%s262 + $0x30] sm:%s254] %v287
                  %v289 = vld [vmem:[%s261 + $0x2a4] sm:%s254]
                  %290 = vst [vmem:[%s262 + $0x34] sm:%s254] %v289
                  %v291 = vld [vmem:[%s261 + $0x2d8] sm:%s254]
                  %292 = vst [vmem:[%s262 + $0x38] sm:%s254] %v291
                  %v293 = vld [vmem:[%s261 + $0x30c] sm:%s254]
                  %294 = vst [vmem:[%s262 + $0x3c] sm:%s254] %v293
                  %v295 = vld [vmem:[%s261 + $0x340] sm:%s254]
                  %296 = vst [vmem:[%s262 + $0x40] sm:%s254] %v295
                  %v297 = vld [vmem:[%s261 + $0x374] sm:%s254]
                  %298 = vst [vmem:[%s262 + $0x44] sm:%s254] %v297
                  %v299 = vld [vmem:[%s261 + $0x3a8] sm:%s254]
                  %300 = vst [vmem:[%s262 + $0x48] sm:%s254] %v299
                  %v301 = vld [vmem:[%s261 + $0x3dc] sm:%s254]
                  %302 = vst [vmem:[%s262 + $0x4c] sm:%s254] %v301
                  %v303 = vld [vmem:[%s261 + $0x410] sm:%s254]
                  %304 = vst [vmem:[%s262 + $0x50] sm:%s254] %v303
                  %v305 = vld [vmem:[%s261 + $0x444] sm:%s254]
                  %306 = vst [vmem:[%s262 + $0x54] sm:%s254] %v305
                  %v307 = vld [vmem:[%s261 + $0x478] sm:%s254]
                  %308 = vst [vmem:[%s262 + $0x58] sm:%s254] %v307
                  %v309 = vld [vmem:[%s261 + $0x4ac] sm:%s254]
                  %310 = vst [vmem:[%s262 + $0x5c] sm:%s254] %v309
                  %v311 = vld [vmem:[%s261 + $0x4e0] sm:%s254]
                  %312 = vst [vmem:[%s262 + $0x60] sm:%s254] %v311
                $region59: #{hybrid_loss.12} parent=46 // loop_footer
                  %s260 = sadd.s32 1, %s256
                $region60: #{hybrid_loss.12} parent=46 // loop_footer_branch
                  %255 = sbr.rel target = $region56
                $region61: #{hybrid_loss.12} parent=46 // loop_exit
                  _
              $region47: #{hybrid_loss.12} parent=31 // pred_fallthru
                _
            $region32: #{hybrid_loss.12} parent=27 // pred_fallthru
              _
            // Predicated region
            $region33: #{hybrid_loss.12} parent=27 // pred_check
              _
            $region34: #{hybrid_loss.12} parent=27 // pred_check_branch
              %182 = sbr.rel (0) target = $region36
            $region35: #{hybrid_loss.12} parent=27 // pred_region
              %s184 = ssub.s32 16, 1
              loop: start=0, step=1, limit=1
              $region37: #{hybrid_loss.12} parent=35 // loop_pre_header
                _
              $region38: #{hybrid_loss.12} parent=35 // loop_header
                %s186 = sphi 0, %s190
                %p187 = scmp.ge.s32.totalorder %s186, 1
                %s191 = sphi %s176, %s176
                %s192 = sphi %s171, %s171
              $region39: #{hybrid_loss.12} parent=35 // loop_header_branch
                %189 = sbr.rel (%p187) target = $region43
              $region40: #{hybrid_loss.12} parent=35 // loop_body
                %v193 = vld [vmem:[%s191] sm:%s184]
                %194 = vst [vmem:[%s192] sm:%s184] %v193
                %v195 = vld [vmem:[%s191 + $0x34] sm:%s184]
                %196 = vst [vmem:[%s192 + $0x4] sm:%s184] %v195
                %v197 = vld [vmem:[%s191 + $0x68] sm:%s184]
                %198 = vst [vmem:[%s192 + $0x8] sm:%s184] %v197
                %v199 = vld [vmem:[%s191 + $0x9c] sm:%s184]
                %200 = vst [vmem:[%s192 + $0xc] sm:%s184] %v199
                %v201 = vld [vmem:[%s191 + $0xd0] sm:%s184]
                %202 = vst [vmem:[%s192 + $0x10] sm:%s184] %v201
                %v203 = vld [vmem:[%s191 + $0x104] sm:%s184]
                %204 = vst [vmem:[%s192 + $0x14] sm:%s184] %v203
                %v205 = vld [vmem:[%s191 + $0x138] sm:%s184]
                %206 = vst [vmem:[%s192 + $0x18] sm:%s184] %v205
                %v207 = vld [vmem:[%s191 + $0x16c] sm:%s184]
                %208 = vst [vmem:[%s192 + $0x1c] sm:%s184] %v207
                %v209 = vld [vmem:[%s191 + $0x1a0] sm:%s184]
                %210 = vst [vmem:[%s192 + $0x20] sm:%s184] %v209
                %v211 = vld [vmem:[%s191 + $0x1d4] sm:%s184]
                %212 = vst [vmem:[%s192 + $0x24] sm:%s184] %v211
                %v213 = vld [vmem:[%s191 + $0x208] sm:%s184]
                %214 = vst [vmem:[%s192 + $0x28] sm:%s184] %v213
                %v215 = vld [vmem:[%s191 + $0x23c] sm:%s184]
                %216 = vst [vmem:[%s192 + $0x2c] sm:%s184] %v215
                %v217 = vld [vmem:[%s191 + $0x270] sm:%s184]
                %218 = vst [vmem:[%s192 + $0x30] sm:%s184] %v217
                %v219 = vld [vmem:[%s191 + $0x2a4] sm:%s184]
                %220 = vst [vmem:[%s192 + $0x34] sm:%s184] %v219
                %v221 = vld [vmem:[%s191 + $0x2d8] sm:%s184]
                %222 = vst [vmem:[%s192 + $0x38] sm:%s184] %v221
                %v223 = vld [vmem:[%s191 + $0x30c] sm:%s184]
                %224 = vst [vmem:[%s192 + $0x3c] sm:%s184] %v223
                %v225 = vld [vmem:[%s191 + $0x340] sm:%s184]
                %226 = vst [vmem:[%s192 + $0x40] sm:%s184] %v225
                %v227 = vld [vmem:[%s191 + $0x374] sm:%s184]
                %228 = vst [vmem:[%s192 + $0x44] sm:%s184] %v227
                %v229 = vld [vmem:[%s191 + $0x3a8] sm:%s184]
                %230 = vst [vmem:[%s192 + $0x48] sm:%s184] %v229
                %v231 = vld [vmem:[%s191 + $0x3dc] sm:%s184]
                %232 = vst [vmem:[%s192 + $0x4c] sm:%s184] %v231
                %v233 = vld [vmem:[%s191 + $0x410] sm:%s184]
                %234 = vst [vmem:[%s192 + $0x50] sm:%s184] %v233
                %v235 = vld [vmem:[%s191 + $0x444] sm:%s184]
                %236 = vst [vmem:[%s192 + $0x54] sm:%s184] %v235
                %v237 = vld [vmem:[%s191 + $0x478] sm:%s184]
                %238 = vst [vmem:[%s192 + $0x58] sm:%s184] %v237
                %v239 = vld [vmem:[%s191 + $0x4ac] sm:%s184]
                %240 = vst [vmem:[%s192 + $0x5c] sm:%s184] %v239
                %v241 = vld [vmem:[%s191 + $0x4e0] sm:%s184]
                %242 = vst [vmem:[%s192 + $0x60] sm:%s184] %v241
              $region41: #{hybrid_loss.12} parent=35 // loop_footer
                %s190 = sadd.s32 1, %s186
              $region42: #{hybrid_loss.12} parent=35 // loop_footer_branch
                %185 = sbr.rel target = $region38
              $region43: #{hybrid_loss.12} parent=35 // loop_exit
                _
            $region36: #{hybrid_loss.12} parent=27 // pred_fallthru
              _
          $region28: #{hybrid_loss.12} parent=23 // pred_fallthru
            _
          %313 = vnop
        $region24: #{hybrid_loss.12} parent=19 // pred_fallthru
          _
        // Predicated region
        $region62: #{hybrid_loss.12} parent=19 // pred_check
          %p314 = pneg %p78
        $region63: #{hybrid_loss.12} parent=19 // pred_check_branch
          %316 = sbr.rel (%p314) target = $region65
        $region64: #{hybrid_loss.12} parent=19 // pred_region
          %s317 = smul.u32 16, %s18
          %s318 = smul.u32 2, %s17
          %p319 = scmp.lt.s32.totalorder %s317, 207
          %s320 = scalar_select %p319, %s317, 207
          %p321 = scmp.lt.s32.totalorder %s318, 1
          %s322 = scalar_select %p321, %s318, 1
          %s323 = smul.addr %s320, 2
          %s324 = sadd.s32 %s322, %s323
          %s325 = smul.addr %s324, 4
          %s326 = scalar_lea.vmem %s1, %s325
          %s327 = smul.u32 16, %s18
          %s328 = smul.u32 2, %s17
        $region65: #{hybrid_loss.12} parent=19 // pred_fallthru
          _
      $region20: #{hybrid_loss.12} parent=5 // pred_fallthru
        _
      %p329 = scmp.le.s32.totalorder 1, %s9
      %p330 = scmp.lt.s32.totalorder %s9, 14
      %p331 = pnand %p329, %p330
      %p332 = pneg %p331
      // Predicated region
      $region66: #{hybrid_loss.12} parent=5 // pred_check
        _
      $region67: #{hybrid_loss.12} parent=5 // pred_check_branch
        %334 = sbr.rel (%p331) target = $region69
      $region68: #{hybrid_loss.12} parent=5 // pred_region
        %s335 = ssub.s32 %s9, 1
        %s336 = sand.u32 %s43, 1
        %s337 = sand.u32 %s43, 1
        %s338 = smul.addr %s337, 100
        %s339 = scalar_lea.vmem [#allocation3], %s338
        // Predicated region
        $region70: #{hybrid_loss.12} parent=68 // pred_check
          %p340 = pneg %p56
        $region71: #{hybrid_loss.12} parent=68 // pred_check_branch
          %342 = sbr.rel (%p340) target = $region73
        $region72: #{hybrid_loss.12} parent=68 // pred_region
          _
        $region73: #{hybrid_loss.12} parent=68 // pred_fallthru
          _
        %s343 = sand.u32 %s43, 1
        %s344 = sand.u32 %s43, 1
        %s345 = smul.addr %s344, 100
        %s346 = scalar_lea.vmem [#allocation3], %s345
        %p347 = pneg %p56
        %p348 = pneg %p53
        %s349 = smul.u32 16, %s21
        %s350 = smul.u32 2, %s20
        %p351 = scmp.lt.s32.totalorder %s349, 207
        %s352 = scalar_select %p351, %s349, 207
        %p353 = scmp.lt.s32.totalorder %s350, 1
        %s354 = scalar_select %p353, %s350, 1
        %s355 = smul.addr %s352, 2
        %s356 = sadd.s32 %s354, %s355
        %s357 = smul.addr %s356, 4
        %s358 = scalar_lea.vmem %s1, %s357
        %p359 = pneg %p84
        %p360 = pneg %p81
        %s361 = smul.u32 2, %s20
        %p362 = scmp.lt.s32.totalorder %s361, 1
        %s363 = scalar_select %p362, %s361, 1
        %s364 = scalar_lea.vmem %s2, %s363
        %p365 = pneg %p110
        %p366 = pneg %p107
        %p367 = pneg %p138
        %p368 = pneg %p135
        %s369 = smul.u32 25, %s19
        %s370 = smul.u32 2, %s20
        %p371 = scmp.lt.s32.totalorder %s369, 24
        %s372 = scalar_select %p371, %s369, 24
        %p373 = scmp.lt.s32.totalorder %s370, 1
        %s374 = scalar_select %p373, %s370, 1
        %s375 = smul.addr %s372, 2
        %s376 = sadd.s32 %s374, %s375
        %s377 = smul.addr %s376, 4
        %s378 = scalar_lea.vmem %s3, %s377
        %s379 = smul.u32 25, %s19
        %s380 = smul.u32 16, %s21
        %s381 = smul.u32 2, %s20
        %p382 = scmp.lt.s32.totalorder %s380, 207
        %s383 = scalar_select %p382, %s380, 207
        %p384 = scmp.lt.s32.totalorder %s381, 1
        %s385 = scalar_select %p384, %s381, 1
        %s386 = smul.addr %s383, 2
        %s387 = sadd.s32 %s385, %s386
        %s388 = smul.addr %s387, 4
        %s389 = scalar_lea.vmem %s1, %s388
        %s390 = smul.u32 16, %s21
        %s391 = smul.u32 2, %s20
        %s392 = smul.u32 2, %s20
        %p393 = scmp.lt.s32.totalorder %s392, 1
        %s394 = scalar_select %p393, %s392, 1
        %s395 = scalar_lea.vmem %s2, %s394
        %s396 = smul.u32 2, %s20
        %s397 = smul.u32 25, %s19
        %s398 = smul.u32 2, %s20
        %p399 = scmp.lt.s32.totalorder %s397, 24
        %s400 = scalar_select %p399, %s397, 24
        %p401 = scmp.lt.s32.totalorder %s398, 1
        %s402 = scalar_select %p401, %s398, 1
        %s403 = smul.addr %s400, 2
        %s404 = sadd.s32 %s402, %s403
        %s405 = smul.addr %s404, 4
        %s406 = scalar_lea.vmem %s3, %s405
        %s407 = smul.u32 25, %s19
        %s408 = smul.u32 2, %s20
        %p410 = scmp.eq.s32.totalorder %s21, 0
        // Predicated region
        $region74: #{hybrid_loss.12} parent=68 // pred_check
          %p411 = pneg %p410
        $region75: #{hybrid_loss.12} parent=68 // pred_check_branch
          %413 = sbr.rel (%p411) target = $region77
        $region76: #{hybrid_loss.12} parent=68 // pred_region
          %414 = vst [vmem:[#allocation2] sm:$0xff] 0.0
          %415 = vst [vmem:[#allocation2 + $0x8] sm:$0xff] 0.0
          %416 = vst [vmem:[#allocation2 + $0x10] sm:$0xff] 0.0
          %417 = vst [vmem:[#allocation2 + $0x18] sm:$0xff] 0.0
          %418 = vst [vmem:[#allocation2 + $0x20] sm:$0xff] 0.0
          %419 = vst [vmem:[#allocation2 + $0x28] sm:$0xff] 0.0
          %420 = vst [vmem:[#allocation2 + $0x30] sm:$0xff] 0.0
          %421 = vst [vmem:[#allocation2 + $0x38] sm:$0xff] 0.0
          %422 = vst [vmem:[#allocation2 + $0x40] sm:$0xff] 0.0
          %423 = vst [vmem:[#allocation2 + $0x48] sm:$0xff] 0.0
          %424 = vst [vmem:[#allocation2 + $0x50] sm:$0xff] 0.0
          %425 = vst [vmem:[#allocation2 + $0x58] sm:$0xff] 0.0
          %426 = vst [vmem:[#allocation2 + $0x60] sm:$0xff] 0.0
          %427 = vst [vmem:[#allocation2 + $0x68] sm:$0xff] 0.0
          %428 = vst [vmem:[#allocation2 + $0x70] sm:$0xff] 0.0
          %429 = vst [vmem:[#allocation2 + $0x78] sm:$0xff] 0.0
          %430 = vst [vmem:[#allocation2 + $0x80] sm:$0xff] 0.0
          %431 = vst [vmem:[#allocation2 + $0x88] sm:$0xff] 0.0
          %432 = vst [vmem:[#allocation2 + $0x90] sm:$0xff] 0.0
          %433 = vst [vmem:[#allocation2 + $0x98] sm:$0xff] 0.0
          %434 = vst [vmem:[#allocation2 + $0xa0] sm:$0xff] 0.0
          %435 = vst [vmem:[#allocation2 + $0xa8] sm:$0xff] 0.0
          %436 = vst [vmem:[#allocation2 + $0xb0] sm:$0xff] 0.0
          %437 = vst [vmem:[#allocation2 + $0xb8] sm:$0xff] 0.0
          %438 = vst [vmem:[#allocation2 + $0xc0] sm:$0xff] 0.0
          %439 = vst [vmem:[#allocation2 + $0xc8] sm:$0xff] 0.0
          %440 = vst [vmem:[#allocation2 + $0xd0] sm:$0xff] 0.0
          %441 = vst [vmem:[#allocation2 + $0xd8] sm:$0xff] 0.0
          %442 = vst [vmem:[#allocation2 + $0xe0] sm:$0xff] 0.0
          %443 = vst [vmem:[#allocation2 + $0xe8] sm:$0xff] 0.0
          %444 = vst [vmem:[#allocation2 + $0xf0] sm:$0xff] 0.0
          %445 = vst [vmem:[#allocation2 + $0xf8] sm:$0xff] 0.0
          %446 = vst [vmem:[#allocation2 + $0x100] sm:$0xff] 0.0
          %447 = vst [vmem:[#allocation2 + $0x108] sm:$0xff] 0.0
          %448 = vst [vmem:[#allocation2 + $0x110] sm:$0xff] 0.0
          %449 = vst [vmem:[#allocation2 + $0x118] sm:$0xff] 0.0
          %450 = vst [vmem:[#allocation2 + $0x120] sm:$0xff] 0.0
          %451 = vst [vmem:[#allocation2 + $0x128] sm:$0xff] 0.0
          %452 = vst [vmem:[#allocation2 + $0x130] sm:$0xff] 0.0
          %453 = vst [vmem:[#allocation2 + $0x138] sm:$0xff] 0.0
          %454 = vst [vmem:[#allocation2 + $0x140] sm:$0xff] 0.0
          %455 = vst [vmem:[#allocation2 + $0x148] sm:$0xff] 0.0
          %456 = vst [vmem:[#allocation2 + $0x150] sm:$0xff] 0.0
          %457 = vst [vmem:[#allocation2 + $0x158] sm:$0xff] 0.0
          %458 = vst [vmem:[#allocation2 + $0x160] sm:$0xff] 0.0
          %459 = vst [vmem:[#allocation2 + $0x168] sm:$0xff] 0.0
          %460 = vst [vmem:[#allocation2 + $0x170] sm:$0xff] 0.0
          %461 = vst [vmem:[#allocation2 + $0x178] sm:$0xff] 0.0
          %462 = vst [vmem:[#allocation2 + $0x180] sm:$0xff] 0.0
          %463 = vst [vmem:[#allocation2 + $0x188] sm:$0xff] 0.0
        $region77: #{hybrid_loss.12} parent=68 // pred_fallthru
          _
        %v464 = vld [vmem:[#allocation2] sm:$0xff]
        %v465 = vld [vmem:[#allocation2 + $0x8] sm:$0xff]
        %v466 = vld [vmem:[#allocation2 + $0x10] sm:$0xff]
        %v467 = vld [vmem:[#allocation2 + $0x18] sm:$0xff]
        %v468 = vld [vmem:[#allocation2 + $0x20] sm:$0xff]
        %v469 = vld [vmem:[#allocation2 + $0x28] sm:$0xff]
        %v470 = vld [vmem:[#allocation2 + $0x30] sm:$0xff]
        %v471 = vld [vmem:[#allocation2 + $0x38] sm:$0xff]
        %v472 = vld [vmem:[#allocation2 + $0x40] sm:$0xff]
        %v473 = vld [vmem:[#allocation2 + $0x48] sm:$0xff]
        %v474 = vld [vmem:[#allocation2 + $0x50] sm:$0xff]
        %v475 = vld [vmem:[#allocation2 + $0x58] sm:$0xff]
        %v476 = vld [vmem:[#allocation2 + $0x60] sm:$0xff]
        %v477 = vld [vmem:[#allocation2 + $0x68] sm:$0xff]
        %v478 = vld [vmem:[#allocation2 + $0x70] sm:$0xff]
        %v479 = vld [vmem:[#allocation2 + $0x78] sm:$0xff]
        %v480 = vld [vmem:[#allocation2 + $0x80] sm:$0xff]
        %v481 = vld [vmem:[#allocation2 + $0x88] sm:$0xff]
        %v482 = vld [vmem:[#allocation2 + $0x90] sm:$0xff]
        %v483 = vld [vmem:[#allocation2 + $0x98] sm:$0xff]
        %v484 = vld [vmem:[#allocation2 + $0xa0] sm:$0xff]
        %v485 = vld [vmem:[#allocation2 + $0xa8] sm:$0xff]
        %v486 = vld [vmem:[#allocation2 + $0xb0] sm:$0xff]
        %v487 = vld [vmem:[#allocation2 + $0xb8] sm:$0xff]
        %v488 = vld [vmem:[#allocation2 + $0xc0] sm:$0xff]
        %v489 = vld [vmem:[#allocation2 + $0xc8] sm:$0xff]
        %v490 = vld [vmem:[#allocation2 + $0xd0] sm:$0xff]
        %v491 = vld [vmem:[#allocation2 + $0xd8] sm:$0xff]
        %v492 = vld [vmem:[#allocation2 + $0xe0] sm:$0xff]
        %v493 = vld [vmem:[#allocation2 + $0xe8] sm:$0xff]
        %v494 = vld [vmem:[#allocation2 + $0xf0] sm:$0xff]
        %v495 = vld [vmem:[#allocation2 + $0xf8] sm:$0xff]
        %v496 = vld [vmem:[#allocation2 + $0x100] sm:$0xff]
        %v497 = vld [vmem:[#allocation2 + $0x108] sm:$0xff]
        %v498 = vld [vmem:[#allocation2 + $0x110] sm:$0xff]
        %v499 = vld [vmem:[#allocation2 + $0x118] sm:$0xff]
        %v500 = vld [vmem:[#allocation2 + $0x120] sm:$0xff]
        %v501 = vld [vmem:[#allocation2 + $0x128] sm:$0xff]
        %v502 = vld [vmem:[#allocation2 + $0x130] sm:$0xff]
        %v503 = vld [vmem:[#allocation2 + $0x138] sm:$0xff]
        %v504 = vld [vmem:[#allocation2 + $0x140] sm:$0xff]
        %v505 = vld [vmem:[#allocation2 + $0x148] sm:$0xff]
        %v506 = vld [vmem:[#allocation2 + $0x150] sm:$0xff]
        %v507 = vld [vmem:[#allocation2 + $0x158] sm:$0xff]
        %v508 = vld [vmem:[#allocation2 + $0x160] sm:$0xff]
        %v509 = vld [vmem:[#allocation2 + $0x168] sm:$0xff]
        %v510 = vld [vmem:[#allocation2 + $0x170] sm:$0xff]
        %v511 = vld [vmem:[#allocation2 + $0x178] sm:$0xff]
        %v512 = vld [vmem:[#allocation2 + $0x180] sm:$0xff]
        %v513 = vld [vmem:[#allocation2 + $0x188] sm:$0xff]
        %v514 = vld [vmem:[%s339] sm:$0xf]
        %v515 = vld [vmem:[%s339 + $0x4] sm:$0xf]
        %v516 = vld [vmem:[%s339 + $0x8] sm:$0xf]
        %v517 = vld [vmem:[%s339 + $0xc] sm:$0xf]
        %v518 = vld [vmem:[%s339 + $0x10] sm:$0xf]
        %v519 = vld [vmem:[%s339 + $0x14] sm:$0xf]
        %v520 = vld [vmem:[%s339 + $0x18] sm:$0xf]
        %v521 = vld [vmem:[%s339 + $0x1c] sm:$0xf]
        %v522 = vld [vmem:[%s339 + $0x20] sm:$0xf]
        %v523 = vld [vmem:[%s339 + $0x24] sm:$0xf]
        %v524 = vld [vmem:[%s339 + $0x28] sm:$0xf]
        %v525 = vld [vmem:[%s339 + $0x2c] sm:$0xf]
        %v526 = vld [vmem:[%s339 + $0x30] sm:$0xf]
        %v527 = vld [vmem:[%s339 + $0x34] sm:$0xf]
        %v528 = vld [vmem:[%s339 + $0x38] sm:$0xf]
        %v529 = vld [vmem:[%s339 + $0x3c] sm:$0xf]
        %v530 = vld [vmem:[%s339 + $0x40] sm:$0xf]
        %v531 = vld [vmem:[%s339 + $0x44] sm:$0xf]
        %v532 = vld [vmem:[%s339 + $0x48] sm:$0xf]
        %v533 = vld [vmem:[%s339 + $0x4c] sm:$0xf]
        %v534 = vld [vmem:[%s339 + $0x50] sm:$0xf]
        %v535 = vld [vmem:[%s339 + $0x54] sm:$0xf]
        %v536 = vld [vmem:[%s339 + $0x58] sm:$0xf]
        %v537 = vld [vmem:[%s339 + $0x5c] sm:$0xf]
        %v538 = vld [vmem:[%s339 + $0x60] sm:$0xf]
        %v539 = vld [vmem:[%s389] sm:$0xff]
        %v540 = vld [vmem:[%s389 + $0x8] sm:$0xff]
        %v541 = vld [vmem:[%s389 + $0x10] sm:$0xff]
        %v542 = vld [vmem:[%s389 + $0x18] sm:$0xff]
        %v543 = vld [vmem:[%s389 + $0x20] sm:$0xff]
        %v544 = vld [vmem:[%s389 + $0x28] sm:$0xff]
        %v545 = vld [vmem:[%s389 + $0x30] sm:$0xff]
        %v546 = vld [vmem:[%s389 + $0x38] sm:$0xff]
        %v547 = vld [vmem:[%s389 + $0x40] sm:$0xff]
        %v548 = vld [vmem:[%s389 + $0x48] sm:$0xff]
        %v549 = vld [vmem:[%s389 + $0x50] sm:$0xff]
        %v550 = vld [vmem:[%s389 + $0x58] sm:$0xff]
        %v551 = vld [vmem:[%s389 + $0x60] sm:$0xff]
        %v552 = vld [vmem:[%s389 + $0x68] sm:$0xff]
        %v553 = vld [vmem:[%s389 + $0x70] sm:$0xff]
        %v554 = vld [vmem:[%s389 + $0x78] sm:$0xff]
        %v580 = vunpack.c.l.b16 %v514
        %v581 = vunpack.c.l.b16 %v515
        %v582 = vunpack.c.l.b16 %v516
        %v583 = vunpack.c.l.b16 %v517
        %v584 = vunpack.c.l.b16 %v518
        %v585 = vunpack.c.l.b16 %v519
        %v586 = vunpack.c.l.b16 %v520
        %v587 = vunpack.c.l.b16 %v521
        %v588 = vunpack.c.l.b16 %v522
        %v589 = vunpack.c.l.b16 %v523
        %v590 = vunpack.c.l.b16 %v524
        %v591 = vunpack.c.l.b16 %v525
        %v592 = vunpack.c.l.b16 %v526
        %v593 = vunpack.c.l.b16 %v527
        %v594 = vunpack.c.l.b16 %v528
        %v595 = vunpack.c.l.b16 %v529
        %v596 = vunpack.c.l.b16 %v530
        %v597 = vunpack.c.l.b16 %v531
        %v598 = vunpack.c.l.b16 %v532
        %v599 = vunpack.c.l.b16 %v533
        %v600 = vunpack.c.l.b16 %v534
        %v601 = vunpack.c.l.b16 %v535
        %v602 = vunpack.c.l.b16 %v536
        %v603 = vunpack.c.l.b16 %v537
        %v604 = vunpack.c.l.b16 %v538
        %v605 = vpack.c.b16 %v581, %v580
        %v606 = vpack.c.b16 %v583, %v582
        %v607 = vpack.c.b16 %v585, %v584
        %v608 = vpack.c.b16 %v587, %v586
        %v609 = vpack.c.b16 %v589, %v588
        %v610 = vpack.c.b16 %v591, %v590
        %v611 = vpack.c.b16 %v593, %v592
        %v612 = vpack.c.b16 %v595, %v594
        %v613 = vpack.c.b16 %v597, %v596
        %v614 = vpack.c.b16 %v599, %v598
        %v615 = vpack.c.b16 %v601, %v600
        %v616 = vpack.c.b16 %v603, %v602
        %v617 = vpack.c.b16 %v604, %v604
        %v647 = vunpack.c.l.b16 %v539
        %v648 = vunpack.c.h.b16 %v539
        %v649 = vunpack.c.l.b16 %v540
        %v650 = vunpack.c.h.b16 %v540
        %v651 = vunpack.c.l.b16 %v541
        %v652 = vunpack.c.h.b16 %v541
        %v653 = vunpack.c.l.b16 %v542
        %v654 = vunpack.c.h.b16 %v542
        %v655 = vunpack.c.l.b16 %v543
        %v656 = vunpack.c.h.b16 %v543
        %v657 = vunpack.c.l.b16 %v544
        %v658 = vunpack.c.h.b16 %v544
        %v659 = vunpack.c.l.b16 %v545
        %v660 = vunpack.c.h.b16 %v545
        %v661 = vunpack.c.l.b16 %v546
        %v662 = vunpack.c.h.b16 %v546
        %v663 = vunpack.c.l.b16 %v547
        %v664 = vunpack.c.h.b16 %v547
        %v665 = vunpack.c.l.b16 %v548
        %v666 = vunpack.c.h.b16 %v548
        %v667 = vunpack.c.l.b16 %v549
        %v668 = vunpack.c.h.b16 %v549
        %v669 = vunpack.c.l.b16 %v550
        %v670 = vunpack.c.h.b16 %v550
        %v671 = vunpack.c.l.b16 %v551
        %v672 = vunpack.c.h.b16 %v551
        %v673 = vunpack.c.l.b16 %v552
        %v674 = vunpack.c.h.b16 %v552
        %v675 = vunpack.c.l.b16 %v553
        %v676 = vunpack.c.h.b16 %v553
        %v677 = vunpack.c.l.b16 %v554
        %v678 = vunpack.c.h.b16 %v554
        %v679 = vpack.c.b16 %v649, %v647
        %v680 = vpack.c.b16 %v650, %v648
        %v681 = vpack.c.b16 %v653, %v651
        %v682 = vpack.c.b16 %v654, %v652
        %v683 = vpack.c.b16 %v657, %v655
        %v684 = vpack.c.b16 %v658, %v656
        %v685 = vpack.c.b16 %v661, %v659
        %v686 = vpack.c.b16 %v662, %v660
        %v687 = vpack.c.b16 %v665, %v663
        %v688 = vpack.c.b16 %v666, %v664
        %v689 = vpack.c.b16 %v669, %v667
        %v690 = vpack.c.b16 %v670, %v668
        %v691 = vpack.c.b16 %v673, %v671
        %v692 = vpack.c.b16 %v674, %v672
        %v693 = vpack.c.b16 %v677, %v675
        %v694 = vpack.c.b16 %v678, %v676
        %711 = vmatprep.subr.bf16.mxu0 %v694
        %712 = vmatpush1.bf16.msra.mxu0 %v693
        %713 = vmatprep.subr.bf16.mxu0 %v692
        %714 = vmatpush1.bf16.msra.mxu0 %v691
        %715 = vmatprep.subr.bf16.mxu0 %v690
        %716 = vmatpush1.bf16.msra.mxu0 %v689
        %717 = vmatprep.subr.bf16.mxu0 %v688
        %718 = vmatpush1.bf16.msra.mxu0 %v687
        %719 = vmatprep.subr.bf16.mxu0 %v686
        %720 = vmatpush1.bf16.msra.mxu0 %v685
        %721 = vmatprep.subr.bf16.mxu0 %v684
        %722 = vmatpush1.bf16.msra.mxu0 %v683
        %723 = vmatprep.subr.bf16.mxu0 %v682
        %724 = vmatpush1.bf16.msra.mxu0 %v681
        %725 = vmatprep.subr.bf16.mxu0 %v680
        %726 = vmatpush1.bf16.msra.mxu0 %v679
        %727 = vmatprep.subr.bf16.mxu0 0
        %728 = vmatpush2.bf16.msra.mxu0 0
        %729 = vmatprep.subr.bf16.mxu0 0
        %730 = vmatpush2.bf16.msra.mxu0 0
        %731 = vmatprep.subr.bf16.mxu0 0
        %732 = vmatpush2.bf16.msra.mxu0 0
        %733 = vmatprep.subr.bf16.mxu0 0
        %734 = vmatpush2.bf16.msra.mxu0 0
        %735 = vmatprep.subr.bf16.mxu0 0
        %736 = vmatpush2.bf16.msra.mxu0 0
        %737 = vmatprep.subr.bf16.mxu0 0
        %738 = vmatpush2.bf16.msra.mxu0 0
        %739 = vmatprep.subr.bf16.mxu0 0
        %740 = vmatpush2.bf16.msra.mxu0 0
        %741 = vmatprep.subr.bf16.mxu0 0
        %742 = vmatpush2.bf16.msra.mxu0 0
        %743 = vmatprep.mubr.bf16.mxu0 0
        %744 = vmatmul.mubr.bf16.gmra.mxu0 %v605
        %v745 = vpop.f32.mrf.mxu0
        %v746 = vadd.f32 0.0, %v745
        %v747 = vpop.f32.mrf.mxu0
        %v748 = vadd.f32 0.0, %v747
        %v749 = vpop.f32.mrf.mxu0
        %v750 = vadd.f32 0.0, %v749
        %v751 = vpop.f32.mrf.mxu0
        %v752 = vadd.f32 0.0, %v751
        %753 = vmatprep.mubr.bf16.mxu0 0
        %754 = vmatmul.mubr.bf16.gmra.mxu0 %v606
        %v755 = vpop.f32.mrf.mxu0
        %v756 = vadd.f32 0.0, %v755
        %v757 = vpop.f32.mrf.mxu0
        %v758 = vadd.f32 0.0, %v757
        %v759 = vpop.f32.mrf.mxu0
        %v760 = vadd.f32 0.0, %v759
        %v761 = vpop.f32.mrf.mxu0
        %v762 = vadd.f32 0.0, %v761
        %763 = vmatprep.mubr.bf16.mxu0 0
        %764 = vmatmul.mubr.bf16.gmra.mxu0 %v607
        %v765 = vpop.f32.mrf.mxu0
        %v766 = vadd.f32 0.0, %v765
        %v767 = vpop.f32.mrf.mxu0
        %v768 = vadd.f32 0.0, %v767
        %v769 = vpop.f32.mrf.mxu0
        %v770 = vadd.f32 0.0, %v769
        %v771 = vpop.f32.mrf.mxu0
        %v772 = vadd.f32 0.0, %v771
        %773 = vmatprep.mubr.bf16.mxu0 0
        %774 = vmatmul.mubr.bf16.gmra.mxu0 %v608
        %v775 = vpop.f32.mrf.mxu0
        %v776 = vadd.f32 0.0, %v775
        %v777 = vpop.f32.mrf.mxu0
        %v778 = vadd.f32 0.0, %v777
        %v779 = vpop.f32.mrf.mxu0
        %v780 = vadd.f32 0.0, %v779
        %v781 = vpop.f32.mrf.mxu0
        %v782 = vadd.f32 0.0, %v781
        %783 = vmatprep.mubr.bf16.mxu0 0
        %784 = vmatmul.mubr.bf16.gmra.mxu0 %v609
        %v785 = vpop.f32.mrf.mxu0
        %v786 = vadd.f32 0.0, %v785
        %v787 = vpop.f32.mrf.mxu0
        %v788 = vadd.f32 0.0, %v787
        %v789 = vpop.f32.mrf.mxu0
        %v790 = vadd.f32 0.0, %v789
        %v791 = vpop.f32.mrf.mxu0
        %v792 = vadd.f32 0.0, %v791
        %793 = vmatprep.mubr.bf16.mxu0 0
        %794 = vmatmul.mubr.bf16.gmra.mxu0 %v610
        %v795 = vpop.f32.mrf.mxu0
        %v796 = vadd.f32 0.0, %v795
        %v797 = vpop.f32.mrf.mxu0
        %v798 = vadd.f32 0.0, %v797
        %v799 = vpop.f32.mrf.mxu0
        %v800 = vadd.f32 0.0, %v799
        %v801 = vpop.f32.mrf.mxu0
        %v802 = vadd.f32 0.0, %v801
        %803 = vmatprep.mubr.bf16.mxu0 0
        %804 = vmatmul.mubr.bf16.gmra.mxu0 %v611
        %v805 = vpop.f32.mrf.mxu0
        %v806 = vadd.f32 0.0, %v805
        %v807 = vpop.f32.mrf.mxu0
        %v808 = vadd.f32 0.0, %v807
        %v809 = vpop.f32.mrf.mxu0
        %v810 = vadd.f32 0.0, %v809
        %v811 = vpop.f32.mrf.mxu0
        %v812 = vadd.f32 0.0, %v811
        %813 = vmatprep.mubr.bf16.mxu0 0
        %814 = vmatmul.mubr.bf16.gmra.mxu0 %v612
        %v815 = vpop.f32.mrf.mxu0
        %v816 = vadd.f32 0.0, %v815
        %v817 = vpop.f32.mrf.mxu0
        %v818 = vadd.f32 0.0, %v817
        %v819 = vpop.f32.mrf.mxu0
        %v820 = vadd.f32 0.0, %v819
        %v821 = vpop.f32.mrf.mxu0
        %v822 = vadd.f32 0.0, %v821
        %823 = vmatprep.mubr.bf16.mxu0 0
        %824 = vmatmul.mubr.bf16.gmra.mxu0 %v613
        %v825 = vpop.f32.mrf.mxu0
        %v826 = vadd.f32 0.0, %v825
        %v827 = vpop.f32.mrf.mxu0
        %v828 = vadd.f32 0.0, %v827
        %v829 = vpop.f32.mrf.mxu0
        %v830 = vadd.f32 0.0, %v829
        %v831 = vpop.f32.mrf.mxu0
        %v832 = vadd.f32 0.0, %v831
        %833 = vmatprep.mubr.bf16.mxu0 0
        %834 = vmatmul.mubr.bf16.gmra.mxu0 %v614
        %v835 = vpop.f32.mrf.mxu0
        %v836 = vadd.f32 0.0, %v835
        %v837 = vpop.f32.mrf.mxu0
        %v838 = vadd.f32 0.0, %v837
        %v839 = vpop.f32.mrf.mxu0
        %v840 = vadd.f32 0.0, %v839
        %v841 = vpop.f32.mrf.mxu0
        %v842 = vadd.f32 0.0, %v841
        %843 = vmatprep.mubr.bf16.mxu0 0
        %844 = vmatmul.mubr.bf16.gmra.mxu0 %v615
        %v845 = vpop.f32.mrf.mxu0
        %v846 = vadd.f32 0.0, %v845
        %v847 = vpop.f32.mrf.mxu0
        %v848 = vadd.f32 0.0, %v847
        %v849 = vpop.f32.mrf.mxu0
        %v850 = vadd.f32 0.0, %v849
        %v851 = vpop.f32.mrf.mxu0
        %v852 = vadd.f32 0.0, %v851
        %853 = vmatprep.mubr.bf16.mxu0 0
        %854 = vmatmul.mubr.bf16.gmra.mxu0 %v616
        %v855 = vpop.f32.mrf.mxu0
        %v856 = vadd.f32 0.0, %v855
        %v857 = vpop.f32.mrf.mxu0
        %v858 = vadd.f32 0.0, %v857
        %v859 = vpop.f32.mrf.mxu0
        %v860 = vadd.f32 0.0, %v859
        %v861 = vpop.f32.mrf.mxu0
        %v862 = vadd.f32 0.0, %v861
        %863 = vmatprep.mubr.bf16.mxu0 0
        %864 = vmatmul.mubr.bf16.gmra.mxu0 %v617
        %v865 = vpop.f32.mrf.mxu0
        %v866 = vadd.f32 0.0, %v865
        %v867 = vpop.f32.mrf.mxu0
        %v868 = vadd.f32 0.0, %v867
        %v869 = vpop.f32.mrf.mxu0
        %v870 = vpop.f32.mrf.mxu0
        %871 = vdwg.mxu0
        %v872 = vadd.f32 %v464, %v746
        %v873 = vadd.f32 %v465, %v748
        %v874 = vadd.f32 %v466, %v750
        %v875 = vadd.f32 %v467, %v752
        %v876 = vadd.f32 %v468, %v756
        %v877 = vadd.f32 %v469, %v758
        %v878 = vadd.f32 %v470, %v760
        %v879 = vadd.f32 %v471, %v762
        %v880 = vadd.f32 %v472, %v766
        %v881 = vadd.f32 %v473, %v768
        %v882 = vadd.f32 %v474, %v770
        %v883 = vadd.f32 %v475, %v772
        %v884 = vadd.f32 %v476, %v776
        %v885 = vadd.f32 %v477, %v778
        %v886 = vadd.f32 %v478, %v780
        %v887 = vadd.f32 %v479, %v782
        %v888 = vadd.f32 %v480, %v786
        %v889 = vadd.f32 %v481, %v788
        %v890 = vadd.f32 %v482, %v790
        %v891 = vadd.f32 %v483, %v792
        %v892 = vadd.f32 %v484, %v796
        %v893 = vadd.f32 %v485, %v798
        %v894 = vadd.f32 %v486, %v800
        %v895 = vadd.f32 %v487, %v802
        %v896 = vadd.f32 %v488, %v806
        %v897 = vadd.f32 %v489, %v808
        %v898 = vadd.f32 %v490, %v810
        %v899 = vadd.f32 %v491, %v812
        %v900 = vadd.f32 %v492, %v816
        %v901 = vadd.f32 %v493, %v818
        %v902 = vadd.f32 %v494, %v820
        %v903 = vadd.f32 %v495, %v822
        %v904 = vadd.f32 %v496, %v826
        %v905 = vadd.f32 %v497, %v828
        %v906 = vadd.f32 %v498, %v830
        %v907 = vadd.f32 %v499, %v832
        %v908 = vadd.f32 %v500, %v836
        %v909 = vadd.f32 %v501, %v838
        %v910 = vadd.f32 %v502, %v840
        %v911 = vadd.f32 %v503, %v842
        %v912 = vadd.f32 %v504, %v846
        %v913 = vadd.f32 %v505, %v848
        %v914 = vadd.f32 %v506, %v850
        %v915 = vadd.f32 %v507, %v852
        %v916 = vadd.f32 %v508, %v856
        %v917 = vadd.f32 %v509, %v858
        %v918 = vadd.f32 %v510, %v860
        %v919 = vadd.f32 %v511, %v862
        %v920 = vadd.f32 %v512, %v866
        %v921 = vadd.f32 %v513, %v868
        %922 = vst [vmem:[#allocation2] sm:$0xff] %v872
        %923 = vst [vmem:[#allocation2 + $0x8] sm:$0xff] %v873
        %924 = vst [vmem:[#allocation2 + $0x10] sm:$0xff] %v874
        %925 = vst [vmem:[#allocation2 + $0x18] sm:$0xff] %v875
        %926 = vst [vmem:[#allocation2 + $0x20] sm:$0xff] %v876
        %927 = vst [vmem:[#allocation2 + $0x28] sm:$0xff] %v877
        %928 = vst [vmem:[#allocation2 + $0x30] sm:$0xff] %v878
        %929 = vst [vmem:[#allocation2 + $0x38] sm:$0xff] %v879
        %930 = vst [vmem:[#allocation2 + $0x40] sm:$0xff] %v880
        %931 = vst [vmem:[#allocation2 + $0x48] sm:$0xff] %v881
        %932 = vst [vmem:[#allocation2 + $0x50] sm:$0xff] %v882
        %933 = vst [vmem:[#allocation2 + $0x58] sm:$0xff] %v883
        %934 = vst [vmem:[#allocation2 + $0x60] sm:$0xff] %v884
        %935 = vst [vmem:[#allocation2 + $0x68] sm:$0xff] %v885
        %936 = vst [vmem:[#allocation2 + $0x70] sm:$0xff] %v886
        %937 = vst [vmem:[#allocation2 + $0x78] sm:$0xff] %v887
        %938 = vst [vmem:[#allocation2 + $0x80] sm:$0xff] %v888
        %939 = vst [vmem:[#allocation2 + $0x88] sm:$0xff] %v889
        %940 = vst [vmem:[#allocation2 + $0x90] sm:$0xff] %v890
        %941 = vst [vmem:[#allocation2 + $0x98] sm:$0xff] %v891
        %942 = vst [vmem:[#allocation2 + $0xa0] sm:$0xff] %v892
        %943 = vst [vmem:[#allocation2 + $0xa8] sm:$0xff] %v893
        %944 = vst [vmem:[#allocation2 + $0xb0] sm:$0xff] %v894
        %945 = vst [vmem:[#allocation2 + $0xb8] sm:$0xff] %v895
        %946 = vst [vmem:[#allocation2 + $0xc0] sm:$0xff] %v896
        %947 = vst [vmem:[#allocation2 + $0xc8] sm:$0xff] %v897
        %948 = vst [vmem:[#allocation2 + $0xd0] sm:$0xff] %v898
        %949 = vst [vmem:[#allocation2 + $0xd8] sm:$0xff] %v899
        %950 = vst [vmem:[#allocation2 + $0xe0] sm:$0xff] %v900
        %951 = vst [vmem:[#allocation2 + $0xe8] sm:$0xff] %v901
        %952 = vst [vmem:[#allocation2 + $0xf0] sm:$0xff] %v902
        %953 = vst [vmem:[#allocation2 + $0xf8] sm:$0xff] %v903
        %954 = vst [vmem:[#allocation2 + $0x100] sm:$0xff] %v904
        %955 = vst [vmem:[#allocation2 + $0x108] sm:$0xff] %v905
        %956 = vst [vmem:[#allocation2 + $0x110] sm:$0xff] %v906
        %957 = vst [vmem:[#allocation2 + $0x118] sm:$0xff] %v907
        %958 = vst [vmem:[#allocation2 + $0x120] sm:$0xff] %v908
        %959 = vst [vmem:[#allocation2 + $0x128] sm:$0xff] %v909
        %960 = vst [vmem:[#allocation2 + $0x130] sm:$0xff] %v910
        %961 = vst [vmem:[#allocation2 + $0x138] sm:$0xff] %v911
        %962 = vst [vmem:[#allocation2 + $0x140] sm:$0xff] %v912
        %963 = vst [vmem:[#allocation2 + $0x148] sm:$0xff] %v913
        %964 = vst [vmem:[#allocation2 + $0x150] sm:$0xff] %v914
        %965 = vst [vmem:[#allocation2 + $0x158] sm:$0xff] %v915
        %966 = vst [vmem:[#allocation2 + $0x160] sm:$0xff] %v916
        %967 = vst [vmem:[#allocation2 + $0x168] sm:$0xff] %v917
        %968 = vst [vmem:[#allocation2 + $0x170] sm:$0xff] %v918
        %969 = vst [vmem:[#allocation2 + $0x178] sm:$0xff] %v919
        %970 = vst [vmem:[#allocation2 + $0x180] sm:$0xff] %v920
        %971 = vst [vmem:[#allocation2 + $0x188] sm:$0xff] %v921
        %p972 = scmp.eq.s32.totalorder %s21, 12
        // Predicated region
        $region78: #{hybrid_loss.12} parent=68 // pred_check
          %p973 = pneg %p972
        $region79: #{hybrid_loss.12} parent=68 // pred_check_branch
          %975 = sbr.rel (%p973) target = $region81
        $region80: #{hybrid_loss.12} parent=68 // pred_region
          %v976 = vld [vmem:[#allocation2] sm:$0xff]
          %v977 = vld [vmem:[#allocation2 + $0x8] sm:$0xff]
          %v978 = vld [vmem:[#allocation2 + $0x10] sm:$0xff]
          %v979 = vld [vmem:[#allocation2 + $0x18] sm:$0xff]
          %v980 = vld [vmem:[#allocation2 + $0x20] sm:$0xff]
          %v981 = vld [vmem:[#allocation2 + $0x28] sm:$0xff]
          %v982 = vld [vmem:[#allocation2 + $0x30] sm:$0xff]
          %v983 = vld [vmem:[#allocation2 + $0x38] sm:$0xff]
          %v984 = vld [vmem:[#allocation2 + $0x40] sm:$0xff]
          %v985 = vld [vmem:[#allocation2 + $0x48] sm:$0xff]
          %v986 = vld [vmem:[#allocation2 + $0x50] sm:$0xff]
          %v987 = vld [vmem:[#allocation2 + $0x58] sm:$0xff]
          %v988 = vld [vmem:[#allocation2 + $0x60] sm:$0xff]
          %v989 = vld [vmem:[#allocation2 + $0x68] sm:$0xff]
          %v990 = vld [vmem:[#allocation2 + $0x70] sm:$0xff]
          %v991 = vld [vmem:[#allocation2 + $0x78] sm:$0xff]
          %v992 = vld [vmem:[#allocation2 + $0x80] sm:$0xff]
          %v993 = vld [vmem:[#allocation2 + $0x88] sm:$0xff]
          %v994 = vld [vmem:[#allocation2 + $0x90] sm:$0xff]
          %v995 = vld [vmem:[#allocation2 + $0x98] sm:$0xff]
          %v996 = vld [vmem:[#allocation2 + $0xa0] sm:$0xff]
          %v997 = vld [vmem:[#allocation2 + $0xa8] sm:$0xff]
          %v998 = vld [vmem:[#allocation2 + $0xb0] sm:$0xff]
          %v999 = vld [vmem:[#allocation2 + $0xb8] sm:$0xff]
          %v1000 = vld [vmem:[#allocation2 + $0xc0] sm:$0xff]
          %v1001 = vld [vmem:[#allocation2 + $0xc8] sm:$0xff]
          %v1002 = vld [vmem:[#allocation2 + $0xd0] sm:$0xff]
          %v1003 = vld [vmem:[#allocation2 + $0xd8] sm:$0xff]
          %v1004 = vld [vmem:[#allocation2 + $0xe0] sm:$0xff]
          %v1005 = vld [vmem:[#allocation2 + $0xe8] sm:$0xff]
          %v1006 = vld [vmem:[#allocation2 + $0xf0] sm:$0xff]
          %v1007 = vld [vmem:[#allocation2 + $0xf8] sm:$0xff]
          %v1008 = vld [vmem:[#allocation2 + $0x100] sm:$0xff]
          %v1009 = vld [vmem:[#allocation2 + $0x108] sm:$0xff]
          %v1010 = vld [vmem:[#allocation2 + $0x110] sm:$0xff]
          %v1011 = vld [vmem:[#allocation2 + $0x118] sm:$0xff]
          %v1012 = vld [vmem:[#allocation2 + $0x120] sm:$0xff]
          %v1013 = vld [vmem:[#allocation2 + $0x128] sm:$0xff]
          %v1014 = vld [vmem:[#allocation2 + $0x130] sm:$0xff]
          %v1015 = vld [vmem:[#allocation2 + $0x138] sm:$0xff]
          %v1016 = vld [vmem:[#allocation2 + $0x140] sm:$0xff]
          %v1017 = vld [vmem:[#allocation2 + $0x148] sm:$0xff]
          %v1018 = vld [vmem:[#allocation2 + $0x150] sm:$0xff]
          %v1019 = vld [vmem:[#allocation2 + $0x158] sm:$0xff]
          %v1020 = vld [vmem:[#allocation2 + $0x160] sm:$0xff]
          %v1021 = vld [vmem:[#allocation2 + $0x168] sm:$0xff]
          %v1022 = vld [vmem:[#allocation2 + $0x170] sm:$0xff]
          %v1023 = vld [vmem:[#allocation2 + $0x178] sm:$0xff]
          %v1024 = vld [vmem:[#allocation2 + $0x180] sm:$0xff]
          %v1025 = vld [vmem:[#allocation2 + $0x188] sm:$0xff]
          %v1026 = vld [vmem:[%s395] sm:$0x3]
          %v1028 = vlaneseq
          %v1029 = vshrl.u32 %v1028, 7
          %v1030 = vsub.s32 0, %v1029
          %v1031 = vrot.slane %v1026, %v1030
          %v1032 = vlaneseq
          %v1033 = vshrl.u32 %v1032, 7
          %v1034 = vsub.s32 1, %v1033
          %v1035 = vrot.slane %v1026, %v1034
          %v1038 = vadd.f32 %v976, %v1031
          %v1039 = vadd.f32 %v977, %v1035
          %v1040 = vadd.f32 %v978, %v1031
          %v1041 = vadd.f32 %v979, %v1035
          %v1042 = vadd.f32 %v980, %v1031
          %v1043 = vadd.f32 %v981, %v1035
          %v1044 = vadd.f32 %v982, %v1031
          %v1045 = vadd.f32 %v983, %v1035
          %v1046 = vadd.f32 %v984, %v1031
          %v1047 = vadd.f32 %v985, %v1035
          %v1048 = vadd.f32 %v986, %v1031
          %v1049 = vadd.f32 %v987, %v1035
          %v1050 = vadd.f32 %v988, %v1031
          %v1051 = vadd.f32 %v989, %v1035
          %v1052 = vadd.f32 %v990, %v1031
          %v1053 = vadd.f32 %v991, %v1035
          %v1054 = vadd.f32 %v992, %v1031
          %v1055 = vadd.f32 %v993, %v1035
          %v1056 = vadd.f32 %v994, %v1031
          %v1057 = vadd.f32 %v995, %v1035
          %v1058 = vadd.f32 %v996, %v1031
          %v1059 = vadd.f32 %v997, %v1035
          %v1060 = vadd.f32 %v998, %v1031
          %v1061 = vadd.f32 %v999, %v1035
          %v1062 = vadd.f32 %v1000, %v1031
          %v1063 = vadd.f32 %v1001, %v1035
          %v1064 = vadd.f32 %v1002, %v1031
          %v1065 = vadd.f32 %v1003, %v1035
          %v1066 = vadd.f32 %v1004, %v1031
          %v1067 = vadd.f32 %v1005, %v1035
          %v1068 = vadd.f32 %v1006, %v1031
          %v1069 = vadd.f32 %v1007, %v1035
          %v1070 = vadd.f32 %v1008, %v1031
          %v1071 = vadd.f32 %v1009, %v1035
          %v1072 = vadd.f32 %v1010, %v1031
          %v1073 = vadd.f32 %v1011, %v1035
          %v1074 = vadd.f32 %v1012, %v1031
          %v1075 = vadd.f32 %v1013, %v1035
          %v1076 = vadd.f32 %v1014, %v1031
          %v1077 = vadd.f32 %v1015, %v1035
          %v1078 = vadd.f32 %v1016, %v1031
          %v1079 = vadd.f32 %v1017, %v1035
          %v1080 = vadd.f32 %v1018, %v1031
          %v1081 = vadd.f32 %v1019, %v1035
          %v1082 = vadd.f32 %v1020, %v1031
          %v1083 = vadd.f32 %v1021, %v1035
          %v1084 = vadd.f32 %v1022, %v1031
          %v1085 = vadd.f32 %v1023, %v1035
          %v1086 = vadd.f32 %v1024, %v1031
          %v1087 = vadd.f32 %v1025, %v1035
          %v1088 = vmax.f32 %v1038, 0.0
          %v1089 = vmax.f32 %v1039, 0.0
          %v1090 = vmax.f32 %v1040, 0.0
          %v1091 = vmax.f32 %v1041, 0.0
          %v1092 = vmax.f32 %v1042, 0.0
          %v1093 = vmax.f32 %v1043, 0.0
          %v1094 = vmax.f32 %v1044, 0.0
          %v1095 = vmax.f32 %v1045, 0.0
          %v1096 = vmax.f32 %v1046, 0.0
          %v1097 = vmax.f32 %v1047, 0.0
          %v1098 = vmax.f32 %v1048, 0.0
          %v1099 = vmax.f32 %v1049, 0.0
          %v1100 = vmax.f32 %v1050, 0.0
          %v1101 = vmax.f32 %v1051, 0.0
          %v1102 = vmax.f32 %v1052, 0.0
          %v1103 = vmax.f32 %v1053, 0.0
          %v1104 = vmax.f32 %v1054, 0.0
          %v1105 = vmax.f32 %v1055, 0.0
          %v1106 = vmax.f32 %v1056, 0.0
          %v1107 = vmax.f32 %v1057, 0.0
          %v1108 = vmax.f32 %v1058, 0.0
          %v1109 = vmax.f32 %v1059, 0.0
          %v1110 = vmax.f32 %v1060, 0.0
          %v1111 = vmax.f32 %v1061, 0.0
          %v1112 = vmax.f32 %v1062, 0.0
          %v1113 = vmax.f32 %v1063, 0.0
          %v1114 = vmax.f32 %v1064, 0.0
          %v1115 = vmax.f32 %v1065, 0.0
          %v1116 = vmax.f32 %v1066, 0.0
          %v1117 = vmax.f32 %v1067, 0.0
          %v1118 = vmax.f32 %v1068, 0.0
          %v1119 = vmax.f32 %v1069, 0.0
          %v1120 = vmax.f32 %v1070, 0.0
          %v1121 = vmax.f32 %v1071, 0.0
          %v1122 = vmax.f32 %v1072, 0.0
          %v1123 = vmax.f32 %v1073, 0.0
          %v1124 = vmax.f32 %v1074, 0.0
          %v1125 = vmax.f32 %v1075, 0.0
          %v1126 = vmax.f32 %v1076, 0.0
          %v1127 = vmax.f32 %v1077, 0.0
          %v1128 = vmax.f32 %v1078, 0.0
          %v1129 = vmax.f32 %v1079, 0.0
          %v1130 = vmax.f32 %v1080, 0.0
          %v1131 = vmax.f32 %v1081, 0.0
          %v1132 = vmax.f32 %v1082, 0.0
          %v1133 = vmax.f32 %v1083, 0.0
          %v1134 = vmax.f32 %v1084, 0.0
          %v1135 = vmax.f32 %v1085, 0.0
          %v1136 = vmax.f32 %v1086, 0.0
          %v1137 = vmax.f32 %v1087, 0.0
          %v1138 = vpack.c.bf16 %v1090, %v1088
          %v1139 = vpack.c.bf16 %v1091, %v1089
          %v1140 = vpack.c.bf16 %v1094, %v1092
          %v1141 = vpack.c.bf16 %v1095, %v1093
          %v1142 = vpack.c.bf16 %v1098, %v1096
          %v1143 = vpack.c.bf16 %v1099, %v1097
          %v1144 = vpack.c.bf16 %v1102, %v1100
          %v1145 = vpack.c.bf16 %v1103, %v1101
          %v1146 = vpack.c.bf16 %v1106, %v1104
          %v1147 = vpack.c.bf16 %v1107, %v1105
          %v1148 = vpack.c.bf16 %v1110, %v1108
          %v1149 = vpack.c.bf16 %v1111, %v1109
          %v1150 = vpack.c.bf16 %v1114, %v1112
          %v1151 = vpack.c.bf16 %v1115, %v1113
          %v1152 = vpack.c.bf16 %v1118, %v1116
          %v1153 = vpack.c.bf16 %v1119, %v1117
          %v1154 = vpack.c.bf16 %v1122, %v1120
          %v1155 = vpack.c.bf16 %v1123, %v1121
          %v1156 = vpack.c.bf16 %v1126, %v1124
          %v1157 = vpack.c.bf16 %v1127, %v1125
          %v1158 = vpack.c.bf16 %v1130, %v1128
          %v1159 = vpack.c.bf16 %v1131, %v1129
          %v1160 = vpack.c.bf16 %v1134, %v1132
          %v1161 = vpack.c.bf16 %v1135, %v1133
          %v1162 = vpack.c.bf16 %v1136, %v1136
          %v1163 = vpack.c.bf16 %v1137, %v1137
          %v1190 = vunpack.c.l.b16 %v1138
          %v1191 = vunpack.c.l.b16 %v1139
          %v1192 = vunpack.c.h.b16 %v1138
          %v1193 = vunpack.c.h.b16 %v1139
          %v1194 = vunpack.c.l.b16 %v1140
          %v1195 = vunpack.c.l.b16 %v1141
          %v1196 = vunpack.c.h.b16 %v1140
          %v1197 = vunpack.c.h.b16 %v1141
          %v1198 = vunpack.c.l.b16 %v1142
          %v1199 = vunpack.c.l.b16 %v1143
          %v1200 = vunpack.c.h.b16 %v1142
          %v1201 = vunpack.c.h.b16 %v1143
          %v1202 = vunpack.c.l.b16 %v1144
          %v1203 = vunpack.c.l.b16 %v1145
          %v1204 = vunpack.c.h.b16 %v1144
          %v1205 = vunpack.c.h.b16 %v1145
          %v1206 = vunpack.c.l.b16 %v1146
          %v1207 = vunpack.c.l.b16 %v1147
          %v1208 = vunpack.c.h.b16 %v1146
          %v1209 = vunpack.c.h.b16 %v1147
          %v1210 = vunpack.c.l.b16 %v1148
          %v1211 = vunpack.c.l.b16 %v1149
          %v1212 = vunpack.c.h.b16 %v1148
          %v1213 = vunpack.c.h.b16 %v1149
          %v1214 = vunpack.c.l.b16 %v1150
          %v1215 = vunpack.c.l.b16 %v1151
          %v1216 = vunpack.c.h.b16 %v1150
          %v1217 = vunpack.c.h.b16 %v1151
          %v1218 = vunpack.c.l.b16 %v1152
          %v1219 = vunpack.c.l.b16 %v1153
          %v1220 = vunpack.c.h.b16 %v1152
          %v1221 = vunpack.c.h.b16 %v1153
          %v1222 = vunpack.c.l.b16 %v1154
          %v1223 = vunpack.c.l.b16 %v1155
          %v1224 = vunpack.c.h.b16 %v1154
          %v1225 = vunpack.c.h.b16 %v1155
          %v1226 = vunpack.c.l.b16 %v1156
          %v1227 = vunpack.c.l.b16 %v1157
          %v1228 = vunpack.c.h.b16 %v1156
          %v1229 = vunpack.c.h.b16 %v1157
          %v1230 = vunpack.c.l.b16 %v1158
          %v1231 = vunpack.c.l.b16 %v1159
          %v1232 = vunpack.c.h.b16 %v1158
          %v1233 = vunpack.c.h.b16 %v1159
          %v1234 = vunpack.c.l.b16 %v1160
          %v1235 = vunpack.c.l.b16 %v1161
          %v1236 = vunpack.c.h.b16 %v1160
          %v1237 = vunpack.c.h.b16 %v1161
          %v1238 = vunpack.c.l.b16 %v1162
          %v1239 = vunpack.c.l.b16 %v1163
          %v1240 = vpack.c.b16 %v1191, %v1190
          %v1241 = vpack.c.b16 %v1193, %v1192
          %v1242 = vpack.c.b16 %v1195, %v1194
          %v1243 = vpack.c.b16 %v1197, %v1196
          %v1244 = vpack.c.b16 %v1199, %v1198
          %v1245 = vpack.c.b16 %v1201, %v1200
          %v1246 = vpack.c.b16 %v1203, %v1202
          %v1247 = vpack.c.b16 %v1205, %v1204
          %v1248 = vpack.c.b16 %v1207, %v1206
          %v1249 = vpack.c.b16 %v1209, %v1208
          %v1250 = vpack.c.b16 %v1211, %v1210
          %v1251 = vpack.c.b16 %v1213, %v1212
          %v1252 = vpack.c.b16 %v1215, %v1214
          %v1253 = vpack.c.b16 %v1217, %v1216
          %v1254 = vpack.c.b16 %v1219, %v1218
          %v1255 = vpack.c.b16 %v1221, %v1220
          %v1256 = vpack.c.b16 %v1223, %v1222
          %v1257 = vpack.c.b16 %v1225, %v1224
          %v1258 = vpack.c.b16 %v1227, %v1226
          %v1259 = vpack.c.b16 %v1229, %v1228
          %v1260 = vpack.c.b16 %v1231, %v1230
          %v1261 = vpack.c.b16 %v1233, %v1232
          %v1262 = vpack.c.b16 %v1235, %v1234
          %v1263 = vpack.c.b16 %v1237, %v1236
          %v1264 = vpack.c.b16 %v1239, %v1238
          %1290 = vst [vmem:[%s406] sm:$0xff] %v1240
          %1291 = vst [vmem:[%s406 + $0x8] sm:$0xff] %v1241
          %1292 = vst [vmem:[%s406 + $0x10] sm:$0xff] %v1242
          %1293 = vst [vmem:[%s406 + $0x18] sm:$0xff] %v1243
          %1294 = vst [vmem:[%s406 + $0x20] sm:$0xff] %v1244
          %1295 = vst [vmem:[%s406 + $0x28] sm:$0xff] %v1245
          %1296 = vst [vmem:[%s406 + $0x30] sm:$0xff] %v1246
          %1297 = vst [vmem:[%s406 + $0x38] sm:$0xff] %v1247
          %1298 = vst [vmem:[%s406 + $0x40] sm:$0xff] %v1248
          %1299 = vst [vmem:[%s406 + $0x48] sm:$0xff] %v1249
          %1300 = vst [vmem:[%s406 + $0x50] sm:$0xff] %v1250
          %1301 = vst [vmem:[%s406 + $0x58] sm:$0xff] %v1251
          %1302 = vst [vmem:[%s406 + $0x60] sm:$0xff] %v1252
          %1303 = vst [vmem:[%s406 + $0x68] sm:$0xff] %v1253
          %1304 = vst [vmem:[%s406 + $0x70] sm:$0xff] %v1254
          %1305 = vst [vmem:[%s406 + $0x78] sm:$0xff] %v1255
          %1306 = vst [vmem:[%s406 + $0x80] sm:$0xff] %v1256
          %1307 = vst [vmem:[%s406 + $0x88] sm:$0xff] %v1257
          %1308 = vst [vmem:[%s406 + $0x90] sm:$0xff] %v1258
          %1309 = vst [vmem:[%s406 + $0x98] sm:$0xff] %v1259
          %1310 = vst [vmem:[%s406 + $0xa0] sm:$0xff] %v1260
          %1311 = vst [vmem:[%s406 + $0xa8] sm:$0xff] %v1261
          %1312 = vst [vmem:[%s406 + $0xb0] sm:$0xff] %v1262
          %1313 = vst [vmem:[%s406 + $0xb8] sm:$0xff] %v1263
          %1314 = vst [vmem:[%s406 + $0xc0] sm:$0xff] %v1264
        $region81: #{hybrid_loss.12} parent=68 // pred_fallthru
          _
        %s1315 = smul.u32 25, %s19
        %s1316 = smul.u32 2, %s20
        %p1317 = scmp.lt.s32.totalorder %s1315, 24
        %s1318 = scalar_select %p1317, %s1315, 24
        %p1319 = scmp.lt.s32.totalorder %s1316, 1
        %s1320 = scalar_select %p1319, %s1316, 1
        %s1321 = smul.addr %s1318, 2
        %s1322 = sadd.s32 %s1320, %s1321
        %s1323 = smul.addr %s1322, 4
        %s1324 = scalar_lea.vmem %s3, %s1323
        // Predicated region
        $region82: #{hybrid_loss.12} parent=68 // pred_check
          %p1325 = pneg %p135
        $region83: #{hybrid_loss.12} parent=68 // pred_check_branch
          %1327 = sbr.rel (%p1325) target = $region85
        $region84: #{hybrid_loss.12} parent=68 // pred_region
          %s1328 = smul.u32 25, %s19
          %s1329 = smul.u32 2, %s20
        $region85: #{hybrid_loss.12} parent=68 // pred_fallthru
          _
        // Predicated region
        $region86: #{hybrid_loss.12} parent=68 // pred_check
          %p1330 = pneg %p135
        $region87: #{hybrid_loss.12} parent=68 // pred_check_branch
          %1332 = sbr.rel (%p1330) target = $region89
        $region88: #{hybrid_loss.12} parent=68 // pred_region
          %s1333 = smul.u32 25, %s19
          %s1334 = smul.u32 2, %s20
          %p1335 = scmp.lt.s32.totalorder %s1333, 24
          %s1336 = scalar_select %p1335, %s1333, 24
          %p1337 = scmp.lt.s32.totalorder %s1334, 1
          %s1338 = scalar_select %p1337, %s1334, 1
          %s1339 = smul.addr %s1336, 2
          %s1340 = sadd.s32 %s1338, %s1339
          %s1341 = smul.addr %s1340, 4
          %s1342 = scalar_lea.vmem %s3, %s1341
        $region89: #{hybrid_loss.12} parent=68 // pred_fallthru
          _
      $region69: #{hybrid_loss.12} parent=5 // pred_fallthru
        _
      %p1343 = scmp.le.s32.totalorder 2, %s9
      // Predicated region
      $region90: #{hybrid_loss.12} parent=5 // pred_check
        %p1344 = pneg %p1343
      $region91: #{hybrid_loss.12} parent=5 // pred_check_branch
        %1346 = sbr.rel (%p1344) target = $region93
      $region92: #{hybrid_loss.12} parent=5 // pred_region
        %s1347 = ssub.s32 %s9, 2
      $region93: #{hybrid_loss.12} parent=5 // pred_fallthru
        _
    $region6: #{hybrid_loss.12} parent=1 // loop_footer
      %s13 = sadd.s32 1, %s9
    $region7: #{hybrid_loss.12} parent=1 // loop_footer_branch
      %8 = sbr.rel target = $region3
    $region8: #{hybrid_loss.12} parent=1 // loop_exit
      _

// kernel: hybrid_loss.13
$region0: #{hybrid_loss.13}
  #allocation0 [shape = 'u32[]', space=smem, size = 0x4, offset = 0x4, fixed_abs, tag = 'smem constant byte address 0x4 - core index']
  #allocation1 [shape = 'u32[144,128]{1,0:T(1,128)}', space=vmem, size = 0x12000, scoped, tag = 'internal scratch']
  #allocation2 [shape = 'f32[40,128]{1,0:T(8,128)}', space=vmem, size = 0x5000, scoped, tag = 'scratch operand']
  %s0 = inlined_call_operand.vmem [shape: bf16[40,1792], index: 0, kind: input, shape index: {}]
  %s1 = inlined_call_operand.vmem [shape: bf16[1792,384], index: 1, kind: input, shape index: {}]
  %s2 = inlined_call_operand.vmem [shape: f32[1,384], index: 2, kind: input, shape index: {}]
  %s3 = inlined_call_operand.vmem [shape: bf16[40,384], index: 3, kind: output, shape index: {}]
  %s4 = sld [smem:[#allocation0]]
  $region169: #{hybrid_loss.13} parent=0
    _
  %s6 = ssub.s32 1, %s4
  %s7 = scalar_select 0, %s6, %s4
  $region1: #{hybrid_loss.13} parent=0
    #allocation3 [shape = 'u8[40960]{0}', space=vmem, size = 0xa000, scoped, tag = 'input window, operand 0']
    #allocation4 [shape = 'u8[131072]{0}', space=vmem, size = 0x20000, scoped, tag = 'input window, operand 1']
    #allocation5 [shape = 'u8[20480]{0}', space=vmem, size = 0x5000, scoped, tag = 'output window, operand 0']
    loop: start=0, step=1, limit=23
    $region2: #{hybrid_loss.13} parent=1 // loop_pre_header
      _
    $region3: #{hybrid_loss.13} parent=1 // loop_header
      %s9 = sphi 0, %s13
      %p10 = scmp.ge.s32.totalorder %s9, 23
      %s16 = sphi 0, %s35
      %s17 = sphi 0, %s31
      %s18 = sphi 0, %s27
      %s19 = sphi 0, %s16
      %s20 = sphi 0, %s17
      %s21 = sphi 0, %s18
      %s22 = sphi 0, %s19
      %s23 = sphi 0, %s20
      %s24 = sphi 0, %s21
      %s40 = sphi 0, %s42
      %s43 = sphi 0, %s40
      %s44 = sphi 0, %s43
      %s60 = sphi 0, %s44
      %s68 = sphi 0, %s70
      %s71 = sphi 0, %s68
      %s72 = sphi 0, %s71
      %s88 = sphi 0, %s72
      %s94 = sphi 0, %s96
      %s97 = sphi 0, %s94
      %s98 = sphi 0, %s97
      %s114 = sphi 0, %s98
      %s122 = sphi 0, %s124
      %s125 = sphi 0, %s122
      %s126 = sphi 0, %s125
      %s142 = sphi 0, %s126
    $region4: #{hybrid_loss.13} parent=1 // loop_header_branch
      %12 = sbr.rel (%p10) target = $region8
    $region5: #{hybrid_loss.13} parent=1 // loop_body
      %s14 = ssub.s32 %s9, 1
      %s15 = ssub.s32 %s9, 2
      %s25 = sadd.s32 1, %s18
      %p26 = scmp.ge.s32.totalorder %s25, 7
      %s27 = scalar_select %p26, 0, %s25
      %s28 = sadd.s32 1, %s17
      %s29 = scalar_select %p26, %s28, %s17
      %p30 = scmp.ge.s32.totalorder %s29, 3
      %s31 = scalar_select %p30, 0, %s29
      %s32 = sadd.s32 1, %s16
      %s33 = scalar_select %p30, %s32, %s16
      %p34 = scmp.ge.s32.totalorder %s33, 1
      %s35 = scalar_select %p34, 0, %s33
      %s36 = ssub.s32 %s16, %s35
      %s37 = ssub.s32 %s18, %s27
      %s38 = sor.u32 %s36, %s37
      %p39 = scmp.eq.s32.totalorder %s38, 0
      %s41 = sadd.s32 %s40, 1
      %s42 = scalar_select %p39, %s40, %s41
      %p45 = pneg %p39
      %p46 = scmp.eq.s32.totalorder %s9, 20
      %p47 = por %p45, %p46
      %p48 = scmp.ne.s32.totalorder %s40, %s43
      %p49 = scmp.eq.s32.totalorder %s9, 0
      %p50 = por %p48, %p49
      %p51 = scmp.ne.s32.totalorder %s40, %s43
      %p52 = scmp.eq.s32.totalorder %s14, 20
      %p53 = por %p51, %p52
      %p54 = scmp.ne.s32.totalorder %s43, %s44
      %p55 = scmp.eq.s32.totalorder %s14, 0
      %p56 = por %p54, %p55
      %p57 = scmp.ne.s32.totalorder %s43, %s44
      %p58 = scmp.eq.s32.totalorder %s15, 20
      %p59 = por %p57, %p58
      %p61 = scmp.ne.s32.totalorder %s44, %s60
      %p62 = scmp.eq.s32.totalorder %s15, 0
      %p63 = por %p61, %p62
      %s64 = ssub.s32 %s18, %s27
      %s65 = ssub.s32 %s17, %s31
      %s66 = sor.u32 %s64, %s65
      %p67 = scmp.eq.s32.totalorder %s66, 0
      %s69 = sadd.s32 %s68, 1
      %s70 = scalar_select %p67, %s68, %s69
      %p73 = pneg %p67
      %p74 = scmp.eq.s32.totalorder %s9, 20
      %p75 = por %p73, %p74
      %p76 = scmp.ne.s32.totalorder %s68, %s71
      %p77 = scmp.eq.s32.totalorder %s9, 0
      %p78 = por %p76, %p77
      %p79 = scmp.ne.s32.totalorder %s68, %s71
      %p80 = scmp.eq.s32.totalorder %s14, 20
      %p81 = por %p79, %p80
      %p82 = scmp.ne.s32.totalorder %s71, %s72
      %p83 = scmp.eq.s32.totalorder %s14, 0
      %p84 = por %p82, %p83
      %p85 = scmp.ne.s32.totalorder %s71, %s72
      %p86 = scmp.eq.s32.totalorder %s15, 20
      %p87 = por %p85, %p86
      %p89 = scmp.ne.s32.totalorder %s72, %s88
      %p90 = scmp.eq.s32.totalorder %s15, 0
      %p91 = por %p89, %p90
      %s92 = ssub.s32 %s17, %s31
      %p93 = scmp.eq.s32.totalorder %s92, 0
      %s95 = sadd.s32 %s94, 1
      %s96 = scalar_select %p93, %s94, %s95
      %p99 = pneg %p93
      %p100 = scmp.eq.s32.totalorder %s9, 20
      %p101 = por %p99, %p100
      %p102 = scmp.ne.s32.totalorder %s94, %s97
      %p103 = scmp.eq.s32.totalorder %s9, 0
      %p104 = por %p102, %p103
      %p105 = scmp.ne.s32.totalorder %s94, %s97
      %p106 = scmp.eq.s32.totalorder %s14, 20
      %p107 = por %p105, %p106
      %p108 = scmp.ne.s32.totalorder %s97, %s98
      %p109 = scmp.eq.s32.totalorder %s14, 0
      %p110 = por %p108, %p109
      %p111 = scmp.ne.s32.totalorder %s97, %s98
      %p112 = scmp.eq.s32.totalorder %s15, 20
      %p113 = por %p111, %p112
      %p115 = scmp.ne.s32.totalorder %s98, %s114
      %p116 = scmp.eq.s32.totalorder %s15, 0
      %p117 = por %p115, %p116
      %s118 = ssub.s32 %s16, %s35
      %s119 = ssub.s32 %s17, %s31
      %s120 = sor.u32 %s118, %s119
      %p121 = scmp.eq.s32.totalorder %s120, 0
      %s123 = sadd.s32 %s122, 1
      %s124 = scalar_select %p121, %s122, %s123
      %p127 = pneg %p121
      %p128 = scmp.eq.s32.totalorder %s9, 20
      %p129 = por %p127, %p128
      %p130 = scmp.ne.s32.totalorder %s122, %s125
      %p131 = scmp.eq.s32.totalorder %s9, 0
      %p132 = por %p130, %p131
      %p133 = scmp.ne.s32.totalorder %s122, %s125
      %p134 = scmp.eq.s32.totalorder %s14, 20
      %p135 = por %p133, %p134
      %p136 = scmp.ne.s32.totalorder %s125, %s126
      %p137 = scmp.eq.s32.totalorder %s14, 0
      %p138 = por %p136, %p137
      %p139 = scmp.ne.s32.totalorder %s125, %s126
      %p140 = scmp.eq.s32.totalorder %s15, 20
      %p141 = por %p139, %p140
      %p143 = scmp.ne.s32.totalorder %s126, %s142
      %p144 = scmp.eq.s32.totalorder %s15, 0
      %p145 = por %p143, %p144
      %p146 = scmp.le.s32.totalorder 1, %s9
      %p147 = scmp.lt.s32.totalorder %s9, 22
      %p148 = pnand %p146, %p147
      %p149 = pneg %p148
      // Predicated region
      $region9: #{hybrid_loss.13} parent=5 // pred_check
        _
      $region10: #{hybrid_loss.13} parent=5 // pred_check_branch
        %151 = sbr.rel (%p148) target = $region12
      $region11: #{hybrid_loss.13} parent=5 // pred_region
        %s152 = ssub.s32 %s9, 1
      $region12: #{hybrid_loss.13} parent=5 // pred_fallthru
        _
      %p153 = scmp.lt.s32.totalorder %s9, 21
      // Predicated region
      $region13: #{hybrid_loss.13} parent=5 // pred_check
        %p154 = pneg %p153
      $region14: #{hybrid_loss.13} parent=5 // pred_check_branch
        %156 = sbr.rel (%p154) target = $region16
      $region15: #{hybrid_loss.13} parent=5 // pred_region
        // Predicated region
        $region17: #{hybrid_loss.13} parent=15 // pred_check
          %p157 = pneg %p50
        $region18: #{hybrid_loss.13} parent=15 // pred_check_branch
          %159 = sbr.rel (%p157) target = $region20
        $region19: #{hybrid_loss.13} parent=15 // pred_region
          %s160 = sand.u32 %s40, 1
          %s161 = sand.u32 %s40, 1
          %s162 = smul.addr %s161, 40
          %s163 = scalar_lea.vmem [#allocation3], %s162
          %s164 = smul.u32 5, %s16
          %s165 = smul.u32 2, %s18
          %s166 = smul.addr %s164, 14
          %s167 = sadd.s32 %s165, %s166
          %s168 = smul.addr %s167, 4
          %s169 = scalar_lea.vmem %s0, %s168
          // Predicated region
          $region21: #{hybrid_loss.13} parent=19 // pred_check
            _
          $region22: #{hybrid_loss.13} parent=19 // pred_check_branch
            %171 = sbr.rel (0) target = $region24
          $region23: #{hybrid_loss.13} parent=19 // pred_region
            // Predicated region
            $region25: #{hybrid_loss.13} parent=23 // pred_check
              _
            $region26: #{hybrid_loss.13} parent=23 // pred_check_branch
              %173 = sbr.rel (0) target = $region28
            $region27: #{hybrid_loss.13} parent=23 // pred_region
              // Predicated region
              $region40: #{hybrid_loss.13} parent=27 // pred_check
                _
              $region41: #{hybrid_loss.13} parent=27 // pred_check_branch
                %197 = sbr.rel (0) target = $region43
              $region42: #{hybrid_loss.13} parent=27 // pred_region
                loop: start=0, step=1, limit=1
                $region44: #{hybrid_loss.13} parent=42 // loop_pre_header
                  _
                $region45: #{hybrid_loss.13} parent=42 // loop_header
                  %s199 = sphi 0, %s203
                  %p200 = scmp.ge.s32.totalorder %s199, 1
                  %s204 = sphi %s169, %s169
                  %s205 = sphi %s163, %s163
                $region46: #{hybrid_loss.13} parent=42 // loop_header_branch
                  %202 = sbr.rel (%p200) target = $region50
                $region47: #{hybrid_loss.13} parent=42 // loop_body
                  %v206 = vld [vmem:[%s204] sm:$0xff]
                  %207 = vst [vmem:[%s205] sm:$0xff] %v206
                  %v208 = vld [vmem:[%s204 + $0x38] sm:$0xff]
                  %209 = vst [vmem:[%s205 + $0x8] sm:$0xff] %v208
                  %v210 = vld [vmem:[%s204 + $0x70] sm:$0xff]
                  %211 = vst [vmem:[%s205 + $0x10] sm:$0xff] %v210
                  %v212 = vld [vmem:[%s204 + $0xa8] sm:$0xff]
                  %213 = vst [vmem:[%s205 + $0x18] sm:$0xff] %v212
                  %v214 = vld [vmem:[%s204 + $0xe0] sm:$0xff]
                  %215 = vst [vmem:[%s205 + $0x20] sm:$0xff] %v214
                $region48: #{hybrid_loss.13} parent=42 // loop_footer
                  %s203 = sadd.s32 1, %s199
                $region49: #{hybrid_loss.13} parent=42 // loop_footer_branch
                  %198 = sbr.rel target = $region45
                $region50: #{hybrid_loss.13} parent=42 // loop_exit
                  _
              $region43: #{hybrid_loss.13} parent=27 // pred_fallthru
                _
              // Predicated region
              $region51: #{hybrid_loss.13} parent=27 // pred_check
                _
              $region52: #{hybrid_loss.13} parent=27 // pred_check_branch
                %217 = sbr.rel target = $region54
              $region53: #{hybrid_loss.13} parent=27 // pred_region
                _
              $region54: #{hybrid_loss.13} parent=27 // pred_fallthru
                _
            $region28: #{hybrid_loss.13} parent=23 // pred_fallthru
              _
            // Predicated region
            $region29: #{hybrid_loss.13} parent=23 // pred_check
              _
            $region30: #{hybrid_loss.13} parent=23 // pred_check_branch
              %175 = sbr.rel target = $region32
            $region31: #{hybrid_loss.13} parent=23 // pred_region
              %s177 = ssub.s32 256, 1
              loop: start=0, step=1, limit=1
              $region33: #{hybrid_loss.13} parent=31 // loop_pre_header
                _
              $region34: #{hybrid_loss.13} parent=31 // loop_header
                %s179 = sphi 0, %s183
                %p180 = scmp.ge.s32.totalorder %s179, 1
                %s184 = sphi %s169, %s169
                %s185 = sphi %s163, %s163
              $region35: #{hybrid_loss.13} parent=31 // loop_header_branch
                %182 = sbr.rel (%p180) target = $region39
              $region36: #{hybrid_loss.13} parent=31 // loop_body
                %v186 = vld [vmem:[%s184] sm:%s177]
                %187 = vst [vmem:[%s185] sm:%s177] %v186
                %v188 = vld [vmem:[%s184 + $0x38] sm:%s177]
                %189 = vst [vmem:[%s185 + $0x8] sm:%s177] %v188
                %v190 = vld [vmem:[%s184 + $0x70] sm:%s177]
                %191 = vst [vmem:[%s185 + $0x10] sm:%s177] %v190
                %v192 = vld [vmem:[%s184 + $0xa8] sm:%s177]
                %193 = vst [vmem:[%s185 + $0x18] sm:%s177] %v192
                %v194 = vld [vmem:[%s184 + $0xe0] sm:%s177]
                %195 = vst [vmem:[%s185 + $0x20] sm:%s177] %v194
              $region37: #{hybrid_loss.13} parent=31 // loop_footer
                %s183 = sadd.s32 1, %s179
              $region38: #{hybrid_loss.13} parent=31 // loop_footer_branch
                %178 = sbr.rel target = $region34
              $region39: #{hybrid_loss.13} parent=31 // loop_exit
                _
            $region32: #{hybrid_loss.13} parent=23 // pred_fallthru
              _
          $region24: #{hybrid_loss.13} parent=19 // pred_fallthru
            _
          %218 = vnop
        $region20: #{hybrid_loss.13} parent=15 // pred_fallthru
          _
        // Predicated region
        $region55: #{hybrid_loss.13} parent=15 // pred_check
          %p219 = pneg %p78
        $region56: #{hybrid_loss.13} parent=15 // pred_check_branch
          %221 = sbr.rel (%p219) target = $region58
        $region57: #{hybrid_loss.13} parent=15 // pred_region
          %s222 = sand.u32 %s68, 1
          %s223 = sand.u32 %s68, 1
          %s224 = smul.addr %s223, 128
          %s225 = scalar_lea.vmem [#allocation4], %s224
          %s226 = smul.u32 32, %s18
          %s227 = smul.addr %s226, 3
          %s228 = sadd.s32 %s17, %s227
          %s229 = smul.addr %s228, 4
          %s230 = scalar_lea.vmem %s1, %s229
          // Predicated region
          $region59: #{hybrid_loss.13} parent=57 // pred_check
            _
          $region60: #{hybrid_loss.13} parent=57 // pred_check_branch
            %232 = sbr.rel (0) target = $region62
          $region61: #{hybrid_loss.13} parent=57 // pred_region
            // Predicated region
            $region63: #{hybrid_loss.13} parent=61 // pred_check
              _
            $region64: #{hybrid_loss.13} parent=61 // pred_check_branch
              %234 = sbr.rel target = $region66
            $region65: #{hybrid_loss.13} parent=61 // pred_region
              // Predicated region
              $region78: #{hybrid_loss.13} parent=65 // pred_check
                _
              $region79: #{hybrid_loss.13} parent=65 // pred_check_branch
                %312 = sbr.rel (0) target = $region81
              $region80: #{hybrid_loss.13} parent=65 // pred_region
                loop: start=0, step=1, limit=1
                $region82: #{hybrid_loss.13} parent=80 // loop_pre_header
                  _
                $region83: #{hybrid_loss.13} parent=80 // loop_header
                  %s314 = sphi 0, %s318
                  %p315 = scmp.ge.s32.totalorder %s314, 1
                  %s319 = sphi %s230, %s230
                  %s320 = sphi %s225, %s225
                $region84: #{hybrid_loss.13} parent=80 // loop_header_branch
                  %317 = sbr.rel (%p315) target = $region88
                $region85: #{hybrid_loss.13} parent=80 // loop_body
                  _
                $region86: #{hybrid_loss.13} parent=80 // loop_footer
                  %s318 = sadd.s32 1, %s314
                $region87: #{hybrid_loss.13} parent=80 // loop_footer_branch
                  %313 = sbr.rel target = $region83
                $region88: #{hybrid_loss.13} parent=80 // loop_exit
                  _
                %s322 = ssub.s32 16, 1
                loop: start=0, step=1, limit=1
                $region89: #{hybrid_loss.13} parent=80 // loop_pre_header
                  _
                $region90: #{hybrid_loss.13} parent=80 // loop_header
                  %s324 = sphi 0, %s328
                  %p325 = scmp.ge.s32.totalorder %s324, 1
                  %s329 = sphi %s230, %s230
                  %s330 = sphi %s225, %s225
                $region91: #{hybrid_loss.13} parent=80 // loop_header_branch
                  %327 = sbr.rel (%p325) target = $region95
                $region92: #{hybrid_loss.13} parent=80 // loop_body
                  %v331 = vld [vmem:[%s329] sm:%s322]
                  %332 = vst [vmem:[%s330] sm:%s322] %v331
                  %v333 = vld [vmem:[%s329 + $0xc] sm:%s322]
                  %334 = vst [vmem:[%s330 + $0x4] sm:%s322] %v333
                  %v335 = vld [vmem:[%s329 + $0x18] sm:%s322]
                  %336 = vst [vmem:[%s330 + $0x8] sm:%s322] %v335
                  %v337 = vld [vmem:[%s329 + $0x24] sm:%s322]
                  %338 = vst [vmem:[%s330 + $0xc] sm:%s322] %v337
                  %v339 = vld [vmem:[%s329 + $0x30] sm:%s322]
                  %340 = vst [vmem:[%s330 + $0x10] sm:%s322] %v339
                  %v341 = vld [vmem:[%s329 + $0x3c] sm:%s322]
                  %342 = vst [vmem:[%s330 + $0x14] sm:%s322] %v341
                  %v343 = vld [vmem:[%s329 + $0x48] sm:%s322]
                  %344 = vst [vmem:[%s330 + $0x18] sm:%s322] %v343
                  %v345 = vld [vmem:[%s329 + $0x54] sm:%s322]
                  %346 = vst [vmem:[%s330 + $0x1c] sm:%s322] %v345
                  %v347 = vld [vmem:[%s329 + $0x60] sm:%s322]
                  %348 = vst [vmem:[%s330 + $0x20] sm:%s322] %v347
                  %v349 = vld [vmem:[%s329 + $0x6c] sm:%s322]
                  %350 = vst [vmem:[%s330 + $0x24] sm:%s322] %v349
                  %v351 = vld [vmem:[%s329 + $0x78] sm:%s322]
                  %352 = vst [vmem:[%s330 + $0x28] sm:%s322] %v351
                  %v353 = vld [vmem:[%s329 + $0x84] sm:%s322]
                  %354 = vst [vmem:[%s330 + $0x2c] sm:%s322] %v353
                  %v355 = vld [vmem:[%s329 + $0x90] sm:%s322]
                  %356 = vst [vmem:[%s330 + $0x30] sm:%s322] %v355
                  %v357 = vld [vmem:[%s329 + $0x9c] sm:%s322]
                  %358 = vst [vmem:[%s330 + $0x34] sm:%s322] %v357
                  %v359 = vld [vmem:[%s329 + $0xa8] sm:%s322]
                  %360 = vst [vmem:[%s330 + $0x38] sm:%s322] %v359
                  %v361 = vld [vmem:[%s329 + $0xb4] sm:%s322]
                  %362 = vst [vmem:[%s330 + $0x3c] sm:%s322] %v361
                  %v363 = vld [vmem:[%s329 + $0xc0] sm:%s322]
                  %364 = vst [vmem:[%s330 + $0x40] sm:%s322] %v363
                  %v365 = vld [vmem:[%s329 + $0xcc] sm:%s322]
                  %366 = vst [vmem:[%s330 + $0x44] sm:%s322] %v365
                  %v367 = vld [vmem:[%s329 + $0xd8] sm:%s322]
                  %368 = vst [vmem:[%s330 + $0x48] sm:%s322] %v367
                  %v369 = vld [vmem:[%s329 + $0xe4] sm:%s322]
                  %370 = vst [vmem:[%s330 + $0x4c] sm:%s322] %v369
                  %v371 = vld [vmem:[%s329 + $0xf0] sm:%s322]
                  %372 = vst [vmem:[%s330 + $0x50] sm:%s322] %v371
                  %v373 = vld [vmem:[%s329 + $0xfc] sm:%s322]
                  %374 = vst [vmem:[%s330 + $0x54] sm:%s322] %v373
                  %v375 = vld [vmem:[%s329 + $0x108] sm:%s322]
                  %376 = vst [vmem:[%s330 + $0x58] sm:%s322] %v375
                  %v377 = vld [vmem:[%s329 + $0x114] sm:%s322]
                  %378 = vst [vmem:[%s330 + $0x5c] sm:%s322] %v377
                  %v379 = vld [vmem:[%s329 + $0x120] sm:%s322]
                  %380 = vst [vmem:[%s330 + $0x60] sm:%s322] %v379
                  %v381 = vld [vmem:[%s329 + $0x12c] sm:%s322]
                  %382 = vst [vmem:[%s330 + $0x64] sm:%s322] %v381
                  %v383 = vld [vmem:[%s329 + $0x138] sm:%s322]
                  %384 = vst [vmem:[%s330 + $0x68] sm:%s322] %v383
                  %v385 = vld [vmem:[%s329 + $0x144] sm:%s322]
                  %386 = vst [vmem:[%s330 + $0x6c] sm:%s322] %v385
                  %v387 = vld [vmem:[%s329 + $0x150] sm:%s322]
                  %388 = vst [vmem:[%s330 + $0x70] sm:%s322] %v387
                  %v389 = vld [vmem:[%s329 + $0x15c] sm:%s322]
                  %390 = vst [vmem:[%s330 + $0x74] sm:%s322] %v389
                  %v391 = vld [vmem:[%s329 + $0x168] sm:%s322]
                  %392 = vst [vmem:[%s330 + $0x78] sm:%s322] %v391
                  %v393 = vld [vmem:[%s329 + $0x174] sm:%s322]
                  %394 = vst [vmem:[%s330 + $0x7c] sm:%s322] %v393
                $region93: #{hybrid_loss.13} parent=80 // loop_footer
                  %s328 = sadd.s32 1, %s324
                $region94: #{hybrid_loss.13} parent=80 // loop_footer_branch
                  %323 = sbr.rel target = $region90
                $region95: #{hybrid_loss.13} parent=80 // loop_exit
                  _
              $region81: #{hybrid_loss.13} parent=65 // pred_fallthru
                _
            $region66: #{hybrid_loss.13} parent=61 // pred_fallthru
              _
            // Predicated region
            $region67: #{hybrid_loss.13} parent=61 // pred_check
              _
            $region68: #{hybrid_loss.13} parent=61 // pred_check_branch
              %236 = sbr.rel (0) target = $region70
            $region69: #{hybrid_loss.13} parent=61 // pred_region
              %s238 = ssub.s32 16, 1
              loop: start=0, step=1, limit=1
              $region71: #{hybrid_loss.13} parent=69 // loop_pre_header
                _
              $region72: #{hybrid_loss.13} parent=69 // loop_header
                %s240 = sphi 0, %s244
                %p241 = scmp.ge.s32.totalorder %s240, 1
                %s245 = sphi %s230, %s230
                %s246 = sphi %s225, %s225
              $region73: #{hybrid_loss.13} parent=69 // loop_header_branch
                %243 = sbr.rel (%p241) target = $region77
              $region74: #{hybrid_loss.13} parent=69 // loop_body
                %v247 = vld [vmem:[%s245] sm:%s238]
                %248 = vst [vmem:[%s246] sm:%s238] %v247
                %v249 = vld [vmem:[%s245 + $0xc] sm:%s238]
                %250 = vst [vmem:[%s246 + $0x4] sm:%s238] %v249
                %v251 = vld [vmem:[%s245 + $0x18] sm:%s238]
                %252 = vst [vmem:[%s246 + $0x8] sm:%s238] %v251
                %v253 = vld [vmem:[%s245 + $0x24] sm:%s238]
                %254 = vst [vmem:[%s246 + $0xc] sm:%s238] %v253
                %v255 = vld [vmem:[%s245 + $0x30] sm:%s238]
                %256 = vst [vmem:[%s246 + $0x10] sm:%s238] %v255
                %v257 = vld [vmem:[%s245 + $0x3c] sm:%s238]
                %258 = vst [vmem:[%s246 + $0x14] sm:%s238] %v257
                %v259 = vld [vmem:[%s245 + $0x48] sm:%s238]
                %260 = vst [vmem:[%s246 + $0x18] sm:%s238] %v259
                %v261 = vld [vmem:[%s245 + $0x54] sm:%s238]
                %262 = vst [vmem:[%s246 + $0x1c] sm:%s238] %v261
                %v263 = vld [vmem:[%s245 + $0x60] sm:%s238]
                %264 = vst [vmem:[%s246 + $0x20] sm:%s238] %v263
                %v265 = vld [vmem:[%s245 + $0x6c] sm:%s238]
                %266 = vst [vmem:[%s246 + $0x24] sm:%s238] %v265
                %v267 = vld [vmem:[%s245 + $0x78] sm:%s238]
                %268 = vst [vmem:[%s246 + $0x28] sm:%s238] %v267
                %v269 = vld [vmem:[%s245 + $0x84] sm:%s238]
                %270 = vst [vmem:[%s246 + $0x2c] sm:%s238] %v269
                %v271 = vld [vmem:[%s245 + $0x90] sm:%s238]
                %272 = vst [vmem:[%s246 + $0x30] sm:%s238] %v271
                %v273 = vld [vmem:[%s245 + $0x9c] sm:%s238]
                %274 = vst [vmem:[%s246 + $0x34] sm:%s238] %v273
                %v275 = vld [vmem:[%s245 + $0xa8] sm:%s238]
                %276 = vst [vmem:[%s246 + $0x38] sm:%s238] %v275
                %v277 = vld [vmem:[%s245 + $0xb4] sm:%s238]
                %278 = vst [vmem:[%s246 + $0x3c] sm:%s238] %v277
                %v279 = vld [vmem:[%s245 + $0xc0] sm:%s238]
                %280 = vst [vmem:[%s246 + $0x40] sm:%s238] %v279
                %v281 = vld [vmem:[%s245 + $0xcc] sm:%s238]
                %282 = vst [vmem:[%s246 + $0x44] sm:%s238] %v281
                %v283 = vld [vmem:[%s245 + $0xd8] sm:%s238]
                %284 = vst [vmem:[%s246 + $0x48] sm:%s238] %v283
                %v285 = vld [vmem:[%s245 + $0xe4] sm:%s238]
                %286 = vst [vmem:[%s246 + $0x4c] sm:%s238] %v285
                %v287 = vld [vmem:[%s245 + $0xf0] sm:%s238]
                %288 = vst [vmem:[%s246 + $0x50] sm:%s238] %v287
                %v289 = vld [vmem:[%s245 + $0xfc] sm:%s238]
                %290 = vst [vmem:[%s246 + $0x54] sm:%s238] %v289
                %v291 = vld [vmem:[%s245 + $0x108] sm:%s238]
                %292 = vst [vmem:[%s246 + $0x58] sm:%s238] %v291
                %v293 = vld [vmem:[%s245 + $0x114] sm:%s238]
                %294 = vst [vmem:[%s246 + $0x5c] sm:%s238] %v293
                %v295 = vld [vmem:[%s245 + $0x120] sm:%s238]
                %296 = vst [vmem:[%s246 + $0x60] sm:%s238] %v295
                %v297 = vld [vmem:[%s245 + $0x12c] sm:%s238]
                %298 = vst [vmem:[%s246 + $0x64] sm:%s238] %v297
                %v299 = vld [vmem:[%s245 + $0x138] sm:%s238]
                %300 = vst [vmem:[%s246 + $0x68] sm:%s238] %v299
                %v301 = vld [vmem:[%s245 + $0x144] sm:%s238]
                %302 = vst [vmem:[%s246 + $0x6c] sm:%s238] %v301
                %v303 = vld [vmem:[%s245 + $0x150] sm:%s238]
                %304 = vst [vmem:[%s246 + $0x70] sm:%s238] %v303
                %v305 = vld [vmem:[%s245 + $0x15c] sm:%s238]
                %306 = vst [vmem:[%s246 + $0x74] sm:%s238] %v305
                %v307 = vld [vmem:[%s245 + $0x168] sm:%s238]
                %308 = vst [vmem:[%s246 + $0x78] sm:%s238] %v307
                %v309 = vld [vmem:[%s245 + $0x174] sm:%s238]
                %310 = vst [vmem:[%s246 + $0x7c] sm:%s238] %v309
              $region75: #{hybrid_loss.13} parent=69 // loop_footer
                %s244 = sadd.s32 1, %s240
              $region76: #{hybrid_loss.13} parent=69 // loop_footer_branch
                %239 = sbr.rel target = $region72
              $region77: #{hybrid_loss.13} parent=69 // loop_exit
                _
            $region70: #{hybrid_loss.13} parent=61 // pred_fallthru
              _
          $region62: #{hybrid_loss.13} parent=57 // pred_fallthru
            _
          %395 = vnop
        $region58: #{hybrid_loss.13} parent=15 // pred_fallthru
          _
        // Predicated region
        $region96: #{hybrid_loss.13} parent=15 // pred_check
          %p396 = pneg %p104
        $region97: #{hybrid_loss.13} parent=15 // pred_check_branch
          %398 = sbr.rel (%p396) target = $region99
        $region98: #{hybrid_loss.13} parent=15 // pred_region
          %p399 = scmp.lt.s32.totalorder %s17, 2
          %s400 = scalar_select %p399, %s17, 2
          %s401 = scalar_lea.vmem %s2, %s400
        $region99: #{hybrid_loss.13} parent=15 // pred_fallthru
          _
      $region16: #{hybrid_loss.13} parent=5 // pred_fallthru
        _
      %p402 = scmp.le.s32.totalorder 1, %s9
      %p403 = scmp.lt.s32.totalorder %s9, 22
      %p404 = pnand %p402, %p403
      %p405 = pneg %p404
      // Predicated region
      $region100: #{hybrid_loss.13} parent=5 // pred_check
        _
      $region101: #{hybrid_loss.13} parent=5 // pred_check_branch
        %407 = sbr.rel (%p404) target = $region103
      $region102: #{hybrid_loss.13} parent=5 // pred_region
        %s408 = ssub.s32 %s9, 1
        %s409 = sand.u32 %s43, 1
        %s410 = sand.u32 %s43, 1
        %s411 = smul.addr %s410, 40
        %s412 = scalar_lea.vmem [#allocation3], %s411
        // Predicated region
        $region104: #{hybrid_loss.13} parent=102 // pred_check
          %p413 = pneg %p56
        $region105: #{hybrid_loss.13} parent=102 // pred_check_branch
          %415 = sbr.rel (%p413) target = $region107
        $region106: #{hybrid_loss.13} parent=102 // pred_region
          _
        $region107: #{hybrid_loss.13} parent=102 // pred_fallthru
          _
        %s416 = sand.u32 %s71, 1
        %s417 = sand.u32 %s71, 1
        %s418 = smul.addr %s417, 128
        %s419 = scalar_lea.vmem [#allocation4], %s418
        // Predicated region
        $region108: #{hybrid_loss.13} parent=102 // pred_check
          %p420 = pneg %p84
        $region109: #{hybrid_loss.13} parent=102 // pred_check_branch
          %422 = sbr.rel (%p420) target = $region111
        $region110: #{hybrid_loss.13} parent=102 // pred_region
          _
        $region111: #{hybrid_loss.13} parent=102 // pred_fallthru
          _
        %s423 = sand.u32 %s43, 1
        %s424 = sand.u32 %s43, 1
        %s425 = smul.addr %s424, 40
        %s426 = scalar_lea.vmem [#allocation3], %s425
        %p427 = pneg %p56
        %p428 = pneg %p53
        %s429 = sand.u32 %s71, 1
        %s430 = sand.u32 %s71, 1
        %s431 = smul.addr %s430, 128
        %s432 = scalar_lea.vmem [#allocation4], %s431
        %p433 = pneg %p84
        %p434 = pneg %p81
        %p435 = scmp.lt.s32.totalorder %s20, 2
        %s436 = scalar_select %p435, %s20, 2
        %s437 = scalar_lea.vmem %s2, %s436
        %p438 = pneg %p110
        %p439 = pneg %p107
        %p440 = pneg %p138
        %p441 = pneg %p135
        %s442 = sand.u32 %s125, 1
        %s443 = sand.u32 %s125, 1
        %s444 = smul.addr %s443, 20
        %s445 = scalar_lea.vmem [#allocation5], %s444
        %s446 = smul.u32 5, %s19
        %s447 = smul.u32 2, %s21
        %s448 = smul.u32 32, %s21
        %p449 = scmp.lt.s32.totalorder %s20, 2
        %s450 = scalar_select %p449, %s20, 2
        %s451 = scalar_lea.vmem %s2, %s450
        %s452 = smul.u32 5, %s19
        %p454 = scmp.eq.s32.totalorder %s21, 0
        // Predicated region
        $region112: #{hybrid_loss.13} parent=102 // pred_check
          %p455 = pneg %p454
        $region113: #{hybrid_loss.13} parent=102 // pred_check_branch
          %457 = sbr.rel (%p455) target = $region115
        $region114: #{hybrid_loss.13} parent=102 // pred_region
          %458 = vst [vmem:[#allocation2] sm:$0xff] 0.0
          %459 = vst [vmem:[#allocation2 + $0x8] sm:$0xff] 0.0
          %460 = vst [vmem:[#allocation2 + $0x10] sm:$0xff] 0.0
          %461 = vst [vmem:[#allocation2 + $0x18] sm:$0xff] 0.0
          %462 = vst [vmem:[#allocation2 + $0x20] sm:$0xff] 0.0
        $region115: #{hybrid_loss.13} parent=102 // pred_fallthru
          _
        %v463 = vld [vmem:[#allocation2] sm:$0xff]
        %v464 = vld [vmem:[#allocation2 + $0x8] sm:$0xff]
        %v465 = vld [vmem:[#allocation2 + $0x10] sm:$0xff]
        %v466 = vld [vmem:[#allocation2 + $0x18] sm:$0xff]
        %v467 = vld [vmem:[#allocation2 + $0x20] sm:$0xff]
        %v468 = vld [vmem:[%s412] sm:$0xff]
        %v469 = vld [vmem:[%s412 + $0x8] sm:$0xff]
        %v470 = vld [vmem:[%s412 + $0x10] sm:$0xff]
        %v471 = vld [vmem:[%s412 + $0x18] sm:$0xff]
        %v472 = vld [vmem:[%s412 + $0x20] sm:$0xff]
        %v473 = vld [vmem:[%s419] sm:$0xf]
        %v474 = vld [vmem:[%s419 + $0x4] sm:$0xf]
        %v475 = vld [vmem:[%s419 + $0x8] sm:$0xf]
        %v476 = vld [vmem:[%s419 + $0xc] sm:$0xf]
        %v477 = vld [vmem:[%s419 + $0x10] sm:$0xf]
        %v478 = vld [vmem:[%s419 + $0x14] sm:$0xf]
        %v479 = vld [vmem:[%s419 + $0x18] sm:$0xf]
        %v480 = vld [vmem:[%s419 + $0x1c] sm:$0xf]
        %v481 = vld [vmem:[%s419 + $0x20] sm:$0xf]
        %v482 = vld [vmem:[%s419 + $0x24] sm:$0xf]
        %v483 = vld [vmem:[%s419 + $0x28] sm:$0xf]
        %v484 = vld [vmem:[%s419 + $0x2c] sm:$0xf]
        %v485 = vld [vmem:[%s419 + $0x30] sm:$0xf]
        %v486 = vld [vmem:[%s419 + $0x34] sm:$0xf]
        %v487 = vld [vmem:[%s419 + $0x38] sm:$0xf]
        %v488 = vld [vmem:[%s419 + $0x3c] sm:$0xf]
        %v489 = vld [vmem:[%s419 + $0x40] sm:$0xf]
        %v490 = vld [vmem:[%s419 + $0x44] sm:$0xf]
        %v491 = vld [vmem:[%s419 + $0x48] sm:$0xf]
        %v492 = vld [vmem:[%s419 + $0x4c] sm:$0xf]
        %v493 = vld [vmem:[%s419 + $0x50] sm:$0xf]
        %v494 = vld [vmem:[%s419 + $0x54] sm:$0xf]
        %v495 = vld [vmem:[%s419 + $0x58] sm:$0xf]
        %v496 = vld [vmem:[%s419 + $0x5c] sm:$0xf]
        %v497 = vld [vmem:[%s419 + $0x60] sm:$0xf]
        %v498 = vld [vmem:[%s419 + $0x64] sm:$0xf]
        %v499 = vld [vmem:[%s419 + $0x68] sm:$0xf]
        %v500 = vld [vmem:[%s419 + $0x6c] sm:$0xf]
        %v501 = vld [vmem:[%s419 + $0x70] sm:$0xf]
        %v502 = vld [vmem:[%s419 + $0x74] sm:$0xf]
        %v503 = vld [vmem:[%s419 + $0x78] sm:$0xf]
        %v504 = vld [vmem:[%s419 + $0x7c] sm:$0xf]
        %v510 = vunpack.c.l.b16 %v468
        %v511 = vunpack.c.h.b16 %v468
        %v512 = vunpack.c.l.b16 %v469
        %v513 = vunpack.c.h.b16 %v469
        %v514 = vunpack.c.l.b16 %v470
        %v515 = vunpack.c.h.b16 %v470
        %v516 = vunpack.c.l.b16 %v471
        %v517 = vunpack.c.h.b16 %v471
        %v518 = vunpack.c.l.b16 %v472
        %v519 = vunpack.c.h.b16 %v472
        %v520 = vpack.c.b16 %v512, %v510
        %v521 = vpack.c.b16 %v513, %v511
        %v522 = vpack.c.b16 %v516, %v514
        %v523 = vpack.c.b16 %v517, %v515
        %v524 = vpack.c.b16 %v518, %v518
        %v525 = vpack.c.b16 %v519, %v519
        %v564 = vunpack.c.l.b16 %v473
        %v565 = vunpack.c.l.b16 %v474
        %v566 = vunpack.c.l.b16 %v475
        %v567 = vunpack.c.l.b16 %v476
        %v568 = vunpack.c.l.b16 %v477
        %v569 = vunpack.c.l.b16 %v478
        %v570 = vunpack.c.l.b16 %v479
        %v571 = vunpack.c.l.b16 %v480
        %v572 = vunpack.c.l.b16 %v481
        %v573 = vunpack.c.l.b16 %v482
        %v574 = vunpack.c.l.b16 %v483
        %v575 = vunpack.c.l.b16 %v484
        %v576 = vunpack.c.l.b16 %v485
        %v577 = vunpack.c.l.b16 %v486
        %v578 = vunpack.c.l.b16 %v487
        %v579 = vunpack.c.l.b16 %v488
        %v580 = vunpack.c.l.b16 %v489
        %v581 = vunpack.c.l.b16 %v490
        %v582 = vunpack.c.l.b16 %v491
        %v583 = vunpack.c.l.b16 %v492
        %v584 = vunpack.c.l.b16 %v493
        %v585 = vunpack.c.l.b16 %v494
        %v586 = vunpack.c.l.b16 %v495
        %v587 = vunpack.c.l.b16 %v496
        %v588 = vunpack.c.l.b16 %v497
        %v589 = vunpack.c.l.b16 %v498
        %v590 = vunpack.c.l.b16 %v499
        %v591 = vunpack.c.l.b16 %v500
        %v592 = vunpack.c.l.b16 %v501
        %v593 = vunpack.c.l.b16 %v502
        %v594 = vunpack.c.l.b16 %v503
        %v595 = vunpack.c.l.b16 %v504
        %v596 = vpack.c.b16 %v565, %v564
        %v597 = vpack.c.b16 %v567, %v566
        %v598 = vpack.c.b16 %v569, %v568
        %v599 = vpack.c.b16 %v571, %v570
        %v600 = vpack.c.b16 %v573, %v572
        %v601 = vpack.c.b16 %v575, %v574
        %v602 = vpack.c.b16 %v577, %v576
        %v603 = vpack.c.b16 %v579, %v578
        %v604 = vpack.c.b16 %v581, %v580
        %v605 = vpack.c.b16 %v583, %v582
        %v606 = vpack.c.b16 %v585, %v584
        %v607 = vpack.c.b16 %v587, %v586
        %v608 = vpack.c.b16 %v589, %v588
        %v609 = vpack.c.b16 %v591, %v590
        %v610 = vpack.c.b16 %v593, %v592
        %v611 = vpack.c.b16 %v595, %v594
        %628 = vmatprep.subr.bf16.mxu0 0
        %629 = vmatpush1.bf16.msra.mxu0 %v603
        %630 = vmatprep.subr.bf16.mxu0 0
        %631 = vmatpush1.bf16.msra.mxu0 %v602
        %632 = vmatprep.subr.bf16.mxu0 0
        %633 = vmatpush1.bf16.msra.mxu0 %v601
        %634 = vmatprep.subr.bf16.mxu0 0
        %635 = vmatpush1.bf16.msra.mxu0 %v600
        %636 = vmatprep.subr.bf16.mxu0 0
        %637 = vmatpush1.bf16.msra.mxu0 %v599
        %638 = vmatprep.subr.bf16.mxu0 0
        %639 = vmatpush1.bf16.msra.mxu0 %v598
        %640 = vmatprep.subr.bf16.mxu0 0
        %641 = vmatpush1.bf16.msra.mxu0 %v597
        %642 = vmatprep.subr.bf16.mxu0 0
        %643 = vmatpush1.bf16.msra.mxu0 %v596
        %644 = vmatprep.subr.bf16.mxu0 0
        %645 = vmatpush2.bf16.msra.mxu0 %v611
        %646 = vmatprep.subr.bf16.mxu0 0
        %647 = vmatpush2.bf16.msra.mxu0 %v610
        %648 = vmatprep.subr.bf16.mxu0 0
        %649 = vmatpush2.bf16.msra.mxu0 %v609
        %650 = vmatprep.subr.bf16.mxu0 0
        %651 = vmatpush2.bf16.msra.mxu0 %v608
        %652 = vmatprep.subr.bf16.mxu0 0
        %653 = vmatpush2.bf16.msra.mxu0 %v607
        %654 = vmatprep.subr.bf16.mxu0 0
        %655 = vmatpush2.bf16.msra.mxu0 %v606
        %656 = vmatprep.subr.bf16.mxu0 0
        %657 = vmatpush2.bf16.msra.mxu0 %v605
        %658 = vmatprep.subr.bf16.mxu0 0
        %659 = vmatpush2.bf16.msra.mxu0 %v604
        %660 = vmatprep.mubr.bf16.mxu0 %v521
        %661 = vmatmul.mubr.bf16.gmra.mxu0 %v520
        %v662 = vpop.f32.mrf.mxu0
        %v663 = vadd.f32 0.0, %v662
        %v664 = vpop.f32.mrf.mxu0
        %v665 = vpop.f32.mrf.mxu0
        %v666 = vadd.f32 0.0, %v665
        %v667 = vpop.f32.mrf.mxu0
        %668 = vmatprep.mubr.bf16.mxu0 %v523
        %669 = vmatmul.mubr.bf16.gmra.mxu0 %v522
        %v670 = vpop.f32.mrf.mxu0
        %v671 = vadd.f32 0.0, %v670
        %v672 = vpop.f32.mrf.mxu0
        %v673 = vpop.f32.mrf.mxu0
        %v674 = vadd.f32 0.0, %v673
        %v675 = vpop.f32.mrf.mxu0
        %676 = vmatprep.mubr.bf16.mxu0 %v525
        %677 = vmatmul.mubr.bf16.gmra.mxu0 %v524
        %v678 = vpop.f32.mrf.mxu0
        %v679 = vadd.f32 0.0, %v678
        %v680 = vpop.f32.mrf.mxu0
        %v681 = vpop.f32.mrf.mxu0
        %v682 = vpop.f32.mrf.mxu0
        %683 = vdwg.mxu0
        %v684 = vadd.f32 %v463, %v663
        %v685 = vadd.f32 %v464, %v666
        %v686 = vadd.f32 %v465, %v671
        %v687 = vadd.f32 %v466, %v674
        %v688 = vadd.f32 %v467, %v679
        %689 = vst [vmem:[#allocation2] sm:$0xff] %v684
        %690 = vst [vmem:[#allocation2 + $0x8] sm:$0xff] %v685
        %691 = vst [vmem:[#allocation2 + $0x10] sm:$0xff] %v686
        %692 = vst [vmem:[#allocation2 + $0x18] sm:$0xff] %v687
        %693 = vst [vmem:[#allocation2 + $0x20] sm:$0xff] %v688
        %p694 = scmp.eq.s32.totalorder %s21, 6
        // Predicated region
        $region116: #{hybrid_loss.13} parent=102 // pred_check
          %p695 = pneg %p694
        $region117: #{hybrid_loss.13} parent=102 // pred_check_branch
          %697 = sbr.rel (%p695) target = $region119
        $region118: #{hybrid_loss.13} parent=102 // pred_region
          %v698 = vld [vmem:[#allocation2] sm:$0xff]
          %v699 = vld [vmem:[#allocation2 + $0x8] sm:$0xff]
          %v700 = vld [vmem:[#allocation2 + $0x10] sm:$0xff]
          %v701 = vld [vmem:[#allocation2 + $0x18] sm:$0xff]
          %v702 = vld [vmem:[#allocation2 + $0x20] sm:$0xff]
          %v703 = vld [vmem:[%s451] sm:$0x1]
          %v705 = vlaneseq
          %v706 = vshrl.u32 %v705, 7
          %v707 = vsub.s32 0, %v706
          %v708 = vrot.slane %v703, %v707
          %v710 = vadd.f32 %v698, %v708
          %v711 = vadd.f32 %v699, %v708
          %v712 = vadd.f32 %v700, %v708
          %v713 = vadd.f32 %v701, %v708
          %v714 = vadd.f32 %v702, %v708
          %v715 = vmax.f32 %v710, 0.0
          %v716 = vmax.f32 %v711, 0.0
          %v717 = vmax.f32 %v712, 0.0
          %v718 = vmax.f32 %v713, 0.0
          %v719 = vmax.f32 %v714, 0.0
          %v720 = vpack.c.bf16 %v716, %v715
          %v721 = vpack.c.bf16 %v718, %v717
          %v722 = vpack.c.bf16 %v719, %v719
          %v726 = vunpack.c.l.b16 %v720
          %v727 = vunpack.c.h.b16 %v720
          %v728 = vunpack.c.l.b16 %v721
          %v729 = vunpack.c.h.b16 %v721
          %v730 = vunpack.c.l.b16 %v722
          %v731 = vpack.c.b16 %v726, %v726
          %v732 = vpack.c.b16 %v727, %v727
          %v733 = vpack.c.b16 %v728, %v728
          %v734 = vpack.c.b16 %v729, %v729
          %v735 = vpack.c.b16 %v730, %v730
          %741 = vst [vmem:[%s445] sm:$0xf] %v731
          %742 = vst [vmem:[%s445 + $0x4] sm:$0xf] %v732
          %743 = vst [vmem:[%s445 + $0x8] sm:$0xf] %v733
          %744 = vst [vmem:[%s445 + $0xc] sm:$0xf] %v734
          %745 = vst [vmem:[%s445 + $0x10] sm:$0xf] %v735
        $region119: #{hybrid_loss.13} parent=102 // pred_fallthru
          _
        %s746 = sand.u32 %s125, 1
        %s747 = sand.u32 %s125, 1
        %s748 = smul.addr %s747, 20
        %s749 = scalar_lea.vmem [#allocation5], %s748
        // Predicated region
        $region120: #{hybrid_loss.13} parent=102 // pred_check
          %p750 = pneg %p135
        $region121: #{hybrid_loss.13} parent=102 // pred_check_branch
          %752 = sbr.rel (%p750) target = $region123
        $region122: #{hybrid_loss.13} parent=102 // pred_region
          %s753 = smul.u32 5, %s19
          %s754 = smul.addr %s753, 3
          %s755 = sadd.s32 %s20, %s754
          %s756 = smul.addr %s755, 4
          %s757 = scalar_lea.vmem %s3, %s756
          // Predicated region
          $region124: #{hybrid_loss.13} parent=122 // pred_check
            _
          $region125: #{hybrid_loss.13} parent=122 // pred_check_branch
            %759 = sbr.rel (0) target = $region127
          $region126: #{hybrid_loss.13} parent=122 // pred_region
            // Predicated region
            $region128: #{hybrid_loss.13} parent=126 // pred_check
              _
            $region129: #{hybrid_loss.13} parent=126 // pred_check_branch
              %761 = sbr.rel target = $region131
            $region130: #{hybrid_loss.13} parent=126 // pred_region
              // Predicated region
              $region143: #{hybrid_loss.13} parent=130 // pred_check
                _
              $region144: #{hybrid_loss.13} parent=130 // pred_check_branch
                %785 = sbr.rel (0) target = $region146
              $region145: #{hybrid_loss.13} parent=130 // pred_region
                loop: start=0, step=1, limit=1
                $region147: #{hybrid_loss.13} parent=145 // loop_pre_header
                  _
                $region148: #{hybrid_loss.13} parent=145 // loop_header
                  %s787 = sphi 0, %s791
                  %p788 = scmp.ge.s32.totalorder %s787, 1
                  %s792 = sphi %s749, %s749
                  %s793 = sphi %s757, %s757
                $region149: #{hybrid_loss.13} parent=145 // loop_header_branch
                  %790 = sbr.rel (%p788) target = $region153
                $region150: #{hybrid_loss.13} parent=145 // loop_body
                  _
                $region151: #{hybrid_loss.13} parent=145 // loop_footer
                  %s791 = sadd.s32 1, %s787
                $region152: #{hybrid_loss.13} parent=145 // loop_footer_branch
                  %786 = sbr.rel target = $region148
                $region153: #{hybrid_loss.13} parent=145 // loop_exit
                  _
                %s795 = ssub.s32 16, 1
                loop: start=0, step=1, limit=1
                $region154: #{hybrid_loss.13} parent=145 // loop_pre_header
                  _
                $region155: #{hybrid_loss.13} parent=145 // loop_header
                  %s797 = sphi 0, %s801
                  %p798 = scmp.ge.s32.totalorder %s797, 1
                  %s802 = sphi %s749, %s749
                  %s803 = sphi %s757, %s757
                $region156: #{hybrid_loss.13} parent=145 // loop_header_branch
                  %800 = sbr.rel (%p798) target = $region160
                $region157: #{hybrid_loss.13} parent=145 // loop_body
                  %v804 = vld [vmem:[%s802] sm:%s795]
                  %805 = vst [vmem:[%s803] sm:%s795] %v804
                  %v806 = vld [vmem:[%s802 + $0x4] sm:%s795]
                  %807 = vst [vmem:[%s803 + $0xc] sm:%s795] %v806
                  %v808 = vld [vmem:[%s802 + $0x8] sm:%s795]
                  %809 = vst [vmem:[%s803 + $0x18] sm:%s795] %v808
                  %v810 = vld [vmem:[%s802 + $0xc] sm:%s795]
                  %811 = vst [vmem:[%s803 + $0x24] sm:%s795] %v810
                  %v812 = vld [vmem:[%s802 + $0x10] sm:%s795]
                  %813 = vst [vmem:[%s803 + $0x30] sm:%s795] %v812
                $region158: #{hybrid_loss.13} parent=145 // loop_footer
                  %s801 = sadd.s32 1, %s797
                $region159: #{hybrid_loss.13} parent=145 // loop_footer_branch
                  %796 = sbr.rel target = $region155
                $region160: #{hybrid_loss.13} parent=145 // loop_exit
                  _
              $region146: #{hybrid_loss.13} parent=130 // pred_fallthru
                _
            $region131: #{hybrid_loss.13} parent=126 // pred_fallthru
              _
            // Predicated region
            $region132: #{hybrid_loss.13} parent=126 // pred_check
              _
            $region133: #{hybrid_loss.13} parent=126 // pred_check_branch
              %763 = sbr.rel (0) target = $region135
            $region134: #{hybrid_loss.13} parent=126 // pred_region
              %s765 = ssub.s32 16, 1
              loop: start=0, step=1, limit=1
              $region136: #{hybrid_loss.13} parent=134 // loop_pre_header
                _
              $region137: #{hybrid_loss.13} parent=134 // loop_header
                %s767 = sphi 0, %s771
                %p768 = scmp.ge.s32.totalorder %s767, 1
                %s772 = sphi %s749, %s749
                %s773 = sphi %s757, %s757
              $region138: #{hybrid_loss.13} parent=134 // loop_header_branch
                %770 = sbr.rel (%p768) target = $region142
              $region139: #{hybrid_loss.13} parent=134 // loop_body
                %v774 = vld [vmem:[%s772] sm:%s765]
                %775 = vst [vmem:[%s773] sm:%s765] %v774
                %v776 = vld [vmem:[%s772 + $0x4] sm:%s765]
                %777 = vst [vmem:[%s773 + $0xc] sm:%s765] %v776
                %v778 = vld [vmem:[%s772 + $0x8] sm:%s765]
                %779 = vst [vmem:[%s773 + $0x18] sm:%s765] %v778
                %v780 = vld [vmem:[%s772 + $0xc] sm:%s765]
                %781 = vst [vmem:[%s773 + $0x24] sm:%s765] %v780
                %v782 = vld [vmem:[%s772 + $0x10] sm:%s765]
                %783 = vst [vmem:[%s773 + $0x30] sm:%s765] %v782
              $region140: #{hybrid_loss.13} parent=134 // loop_footer
                %s771 = sadd.s32 1, %s767
              $region141: #{hybrid_loss.13} parent=134 // loop_footer_branch
                %766 = sbr.rel target = $region137
              $region142: #{hybrid_loss.13} parent=134 // loop_exit
                _
            $region135: #{hybrid_loss.13} parent=126 // pred_fallthru
              _
          $region127: #{hybrid_loss.13} parent=122 // pred_fallthru
            _
          %814 = vnop
        $region123: #{hybrid_loss.13} parent=102 // pred_fallthru
          _
      $region103: #{hybrid_loss.13} parent=5 // pred_fallthru
        _
      %p815 = scmp.le.s32.totalorder 2, %s9
      // Predicated region
      $region161: #{hybrid_loss.13} parent=5 // pred_check
        %p816 = pneg %p815
      $region162: #{hybrid_loss.13} parent=5 // pred_check_branch
        %818 = sbr.rel (%p816) target = $region164
      $region163: #{hybrid_loss.13} parent=5 // pred_region
        %s819 = ssub.s32 %s9, 2
        // Predicated region
        $region165: #{hybrid_loss.13} parent=163 // pred_check
          %p820 = pneg %p141
        $region166: #{hybrid_loss.13} parent=163 // pred_check_branch
          %822 = sbr.rel (%p820) target = $region168
        $region167: #{hybrid_loss.13} parent=163 // pred_region
          %s823 = sand.u32 %s126, 1
          %s824 = sand.u32 %s126, 1
          %s825 = smul.addr %s824, 20
          %s826 = scalar_lea.vmem [#allocation5], %s825
        $region168: #{hybrid_loss.13} parent=163 // pred_fallthru
          _
      $region164: #{hybrid_loss.13} parent=5 // pred_fallthru
        _
    $region6: #{hybrid_loss.13} parent=1 // loop_footer
      %s13 = sadd.s32 1, %s9
    $region7: #{hybrid_loss.13} parent=1 // loop_footer_branch
      %8 = sbr.rel target = $region3
    $region8: #{hybrid_loss.13} parent=1 // loop_exit
      _

// kernel: hybrid_loss.14
$region0: #{hybrid_loss.14}
  #allocation0 [shape = 'u32[]', space=smem, size = 0x4, offset = 0x4, fixed_abs, tag = 'smem constant byte address 0x4 - core index']
  #allocation1 [shape = 'u32[144,128]{1,0:T(1,128)}', space=vmem, size = 0x12000, scoped, tag = 'internal scratch']
  #allocation2 [shape = 'f32[40,256]{1,0:T(8,128)}', space=vmem, size = 0xa000, scoped, tag = 'scratch operand']
  %s0 = inlined_call_operand.vmem [shape: bf16[40,3456], index: 0, kind: input, shape index: {}]
  %s1 = inlined_call_operand.vmem [shape: bf16[3456,256], index: 1, kind: input, shape index: {}]
  %s2 = inlined_call_operand.vmem [shape: f32[1,256], index: 2, kind: input, shape index: {}]
  %s3 = inlined_call_operand.vmem [shape: bf16[40,256], index: 3, kind: output, shape index: {}]
  %s4 = sld [smem:[#allocation0]]
  $region94: #{hybrid_loss.14} parent=0
    _
  %s6 = ssub.s32 1, %s4
  %s7 = scalar_select 0, %s6, %s4
  $region1: #{hybrid_loss.14} parent=0
    #allocation3 [shape = 'u8[20480]{0}', space=vmem, size = 0x5000, scoped, tag = 'input window, operand 0']
    loop: start=0, step=1, limit=29
    $region2: #{hybrid_loss.14} parent=1 // loop_pre_header
      _
    $region3: #{hybrid_loss.14} parent=1 // loop_header
      %s9 = sphi 0, %s13
      %p10 = scmp.ge.s32.totalorder %s9, 29
      %s16 = sphi 0, %s35
      %s17 = sphi 0, %s31
      %s18 = sphi 0, %s27
      %s19 = sphi 0, %s16
      %s20 = sphi 0, %s17
      %s21 = sphi 0, %s18
      %s22 = sphi 0, %s19
      %s23 = sphi 0, %s20
      %s24 = sphi 0, %s21
      %s40 = sphi 0, %s42
      %s43 = sphi 0, %s40
      %s44 = sphi 0, %s43
      %s60 = sphi 0, %s44
      %s68 = sphi 0, %s70
      %s71 = sphi 0, %s68
      %s72 = sphi 0, %s71
      %s88 = sphi 0, %s72
      %s94 = sphi 0, %s96
      %s97 = sphi 0, %s94
      %s98 = sphi 0, %s97
      %s114 = sphi 0, %s98
      %s122 = sphi 0, %s124
      %s125 = sphi 0, %s122
      %s126 = sphi 0, %s125
      %s142 = sphi 0, %s126
    $region4: #{hybrid_loss.14} parent=1 // loop_header_branch
      %12 = sbr.rel (%p10) target = $region8
    $region5: #{hybrid_loss.14} parent=1 // loop_body
      %s14 = ssub.s32 %s9, 1
      %s15 = ssub.s32 %s9, 2
      %s25 = sadd.s32 1, %s18
      %p26 = scmp.ge.s32.totalorder %s25, 27
      %s27 = scalar_select %p26, 0, %s25
      %s28 = sadd.s32 1, %s17
      %s29 = scalar_select %p26, %s28, %s17
      %p30 = scmp.ge.s32.totalorder %s29, 1
      %s31 = scalar_select %p30, 0, %s29
      %s32 = sadd.s32 1, %s16
      %s33 = scalar_select %p30, %s32, %s16
      %p34 = scmp.ge.s32.totalorder %s33, 1
      %s35 = scalar_select %p34, 0, %s33
      %s36 = ssub.s32 %s16, %s35
      %s37 = ssub.s32 %s18, %s27
      %s38 = sor.u32 %s36, %s37
      %p39 = scmp.eq.s32.totalorder %s38, 0
      %s41 = sadd.s32 %s40, 1
      %s42 = scalar_select %p39, %s40, %s41
      %p45 = pneg %p39
      %p46 = scmp.eq.s32.totalorder %s9, 26
      %p47 = por %p45, %p46
      %p48 = scmp.ne.s32.totalorder %s40, %s43
      %p49 = scmp.eq.s32.totalorder %s9, 0
      %p50 = por %p48, %p49
      %p51 = scmp.ne.s32.totalorder %s40, %s43
      %p52 = scmp.eq.s32.totalorder %s14, 26
      %p53 = por %p51, %p52
      %p54 = scmp.ne.s32.totalorder %s43, %s44
      %p55 = scmp.eq.s32.totalorder %s14, 0
      %p56 = por %p54, %p55
      %p57 = scmp.ne.s32.totalorder %s43, %s44
      %p58 = scmp.eq.s32.totalorder %s15, 26
      %p59 = por %p57, %p58
      %p61 = scmp.ne.s32.totalorder %s44, %s60
      %p62 = scmp.eq.s32.totalorder %s15, 0
      %p63 = por %p61, %p62
      %s64 = ssub.s32 %s18, %s27
      %s65 = ssub.s32 %s17, %s31
      %s66 = sor.u32 %s64, %s65
      %p67 = scmp.eq.s32.totalorder %s66, 0
      %s69 = sadd.s32 %s68, 1
      %s70 = scalar_select %p67, %s68, %s69
      %p73 = pneg %p67
      %p74 = scmp.eq.s32.totalorder %s9, 26
      %p75 = por %p73, %p74
      %p76 = scmp.ne.s32.totalorder %s68, %s71
      %p77 = scmp.eq.s32.totalorder %s9, 0
      %p78 = por %p76, %p77
      %p79 = scmp.ne.s32.totalorder %s68, %s71
      %p80 = scmp.eq.s32.totalorder %s14, 26
      %p81 = por %p79, %p80
      %p82 = scmp.ne.s32.totalorder %s71, %s72
      %p83 = scmp.eq.s32.totalorder %s14, 0
      %p84 = por %p82, %p83
      %p85 = scmp.ne.s32.totalorder %s71, %s72
      %p86 = scmp.eq.s32.totalorder %s15, 26
      %p87 = por %p85, %p86
      %p89 = scmp.ne.s32.totalorder %s72, %s88
      %p90 = scmp.eq.s32.totalorder %s15, 0
      %p91 = por %p89, %p90
      %s92 = ssub.s32 %s17, %s31
      %p93 = scmp.eq.s32.totalorder %s92, 0
      %s95 = sadd.s32 %s94, 1
      %s96 = scalar_select %p93, %s94, %s95
      %p99 = pneg %p93
      %p100 = scmp.eq.s32.totalorder %s9, 26
      %p101 = por %p99, %p100
      %p102 = scmp.ne.s32.totalorder %s94, %s97
      %p103 = scmp.eq.s32.totalorder %s9, 0
      %p104 = por %p102, %p103
      %p105 = scmp.ne.s32.totalorder %s94, %s97
      %p106 = scmp.eq.s32.totalorder %s14, 26
      %p107 = por %p105, %p106
      %p108 = scmp.ne.s32.totalorder %s97, %s98
      %p109 = scmp.eq.s32.totalorder %s14, 0
      %p110 = por %p108, %p109
      %p111 = scmp.ne.s32.totalorder %s97, %s98
      %p112 = scmp.eq.s32.totalorder %s15, 26
      %p113 = por %p111, %p112
      %p115 = scmp.ne.s32.totalorder %s98, %s114
      %p116 = scmp.eq.s32.totalorder %s15, 0
      %p117 = por %p115, %p116
      %s118 = ssub.s32 %s16, %s35
      %s119 = ssub.s32 %s17, %s31
      %s120 = sor.u32 %s118, %s119
      %p121 = scmp.eq.s32.totalorder %s120, 0
      %s123 = sadd.s32 %s122, 1
      %s124 = scalar_select %p121, %s122, %s123
      %p127 = pneg %p121
      %p128 = scmp.eq.s32.totalorder %s9, 26
      %p129 = por %p127, %p128
      %p130 = scmp.ne.s32.totalorder %s122, %s125
      %p131 = scmp.eq.s32.totalorder %s9, 0
      %p132 = por %p130, %p131
      %p133 = scmp.ne.s32.totalorder %s122, %s125
      %p134 = scmp.eq.s32.totalorder %s14, 26
      %p135 = por %p133, %p134
      %p136 = scmp.ne.s32.totalorder %s125, %s126
      %p137 = scmp.eq.s32.totalorder %s14, 0
      %p138 = por %p136, %p137
      %p139 = scmp.ne.s32.totalorder %s125, %s126
      %p140 = scmp.eq.s32.totalorder %s15, 26
      %p141 = por %p139, %p140
      %p143 = scmp.ne.s32.totalorder %s126, %s142
      %p144 = scmp.eq.s32.totalorder %s15, 0
      %p145 = por %p143, %p144
      %p146 = scmp.le.s32.totalorder 1, %s9
      %p147 = scmp.lt.s32.totalorder %s9, 28
      %p148 = pnand %p146, %p147
      %p149 = pneg %p148
      // Predicated region
      $region9: #{hybrid_loss.14} parent=5 // pred_check
        _
      $region10: #{hybrid_loss.14} parent=5 // pred_check_branch
        %151 = sbr.rel (%p148) target = $region12
      $region11: #{hybrid_loss.14} parent=5 // pred_region
        %s152 = ssub.s32 %s9, 1
        // Predicated region
        $region13: #{hybrid_loss.14} parent=11 // pred_check
          %p153 = pneg %p110
        $region14: #{hybrid_loss.14} parent=11 // pred_check_branch
          %155 = sbr.rel (%p153) target = $region16
        $region15: #{hybrid_loss.14} parent=11 // pred_region
          %s156 = smul.u32 2, %s20
          %p157 = scmp.lt.s32.totalorder %s156, 1
          %s158 = scalar_select %p157, %s156, 1
          %s159 = scalar_lea.vmem %s2, %s158
          %s160 = smul.u32 2, %s20
        $region16: #{hybrid_loss.14} parent=11 // pred_fallthru
          _
      $region12: #{hybrid_loss.14} parent=5 // pred_fallthru
        _
      %p161 = scmp.lt.s32.totalorder %s9, 27
      // Predicated region
      $region17: #{hybrid_loss.14} parent=5 // pred_check
        %p162 = pneg %p161
      $region18: #{hybrid_loss.14} parent=5 // pred_check_branch
        %164 = sbr.rel (%p162) target = $region20
      $region19: #{hybrid_loss.14} parent=5 // pred_region
        // Predicated region
        $region21: #{hybrid_loss.14} parent=19 // pred_check
          %p165 = pneg %p50
        $region22: #{hybrid_loss.14} parent=19 // pred_check_branch
          %167 = sbr.rel (%p165) target = $region24
        $region23: #{hybrid_loss.14} parent=19 // pred_region
          %s168 = sand.u32 %s40, 1
          %s169 = sand.u32 %s40, 1
          %s170 = smul.addr %s169, 20
          %s171 = scalar_lea.vmem [#allocation3], %s170
          %s172 = smul.u32 5, %s16
          %s173 = smul.addr %s172, 27
          %s174 = sadd.s32 %s18, %s173
          %s175 = smul.addr %s174, 4
          %s176 = scalar_lea.vmem %s0, %s175
          // Predicated region
          $region25: #{hybrid_loss.14} parent=23 // pred_check
            _
          $region26: #{hybrid_loss.14} parent=23 // pred_check_branch
            %178 = sbr.rel (0) target = $region28
          $region27: #{hybrid_loss.14} parent=23 // pred_region
            // Predicated region
            $region29: #{hybrid_loss.14} parent=27 // pred_check
              _
            $region30: #{hybrid_loss.14} parent=27 // pred_check_branch
              %180 = sbr.rel target = $region32
            $region31: #{hybrid_loss.14} parent=27 // pred_region
              // Predicated region
              $region44: #{hybrid_loss.14} parent=31 // pred_check
                _
              $region45: #{hybrid_loss.14} parent=31 // pred_check_branch
                %204 = sbr.rel (0) target = $region47
              $region46: #{hybrid_loss.14} parent=31 // pred_region
                loop: start=0, step=1, limit=1
                $region48: #{hybrid_loss.14} parent=46 // loop_pre_header
                  _
                $region49: #{hybrid_loss.14} parent=46 // loop_header
                  %s206 = sphi 0, %s210
                  %p207 = scmp.ge.s32.totalorder %s206, 1
                  %s211 = sphi %s176, %s176
                  %s212 = sphi %s171, %s171
                $region50: #{hybrid_loss.14} parent=46 // loop_header_branch
                  %209 = sbr.rel (%p207) target = $region54
                $region51: #{hybrid_loss.14} parent=46 // loop_body
                  _
                $region52: #{hybrid_loss.14} parent=46 // loop_footer
                  %s210 = sadd.s32 1, %s206
                $region53: #{hybrid_loss.14} parent=46 // loop_footer_branch
                  %205 = sbr.rel target = $region49
                $region54: #{hybrid_loss.14} parent=46 // loop_exit
                  _
                %s214 = ssub.s32 16, 1
                loop: start=0, step=1, limit=1
                $region55: #{hybrid_loss.14} parent=46 // loop_pre_header
                  _
                $region56: #{hybrid_loss.14} parent=46 // loop_header
                  %s216 = sphi 0, %s220
                  %p217 = scmp.ge.s32.totalorder %s216, 1
                  %s221 = sphi %s176, %s176
                  %s222 = sphi %s171, %s171
                $region57: #{hybrid_loss.14} parent=46 // loop_header_branch
                  %219 = sbr.rel (%p217) target = $region61
                $region58: #{hybrid_loss.14} parent=46 // loop_body
                  %v223 = vld [vmem:[%s221] sm:%s214]
                  %224 = vst [vmem:[%s222] sm:%s214] %v223
                  %v225 = vld [vmem:[%s221 + $0x6c] sm:%s214]
                  %226 = vst [vmem:[%s222 + $0x4] sm:%s214] %v225
                  %v227 = vld [vmem:[%s221 + $0xd8] sm:%s214]
                  %228 = vst [vmem:[%s222 + $0x8] sm:%s214] %v227
                  %v229 = vld [vmem:[%s221 + $0x144] sm:%s214]
                  %230 = vst [vmem:[%s222 + $0xc] sm:%s214] %v229
                  %v231 = vld [vmem:[%s221 + $0x1b0] sm:%s214]
                  %232 = vst [vmem:[%s222 + $0x10] sm:%s214] %v231
                $region59: #{hybrid_loss.14} parent=46 // loop_footer
                  %s220 = sadd.s32 1, %s216
                $region60: #{hybrid_loss.14} parent=46 // loop_footer_branch
                  %215 = sbr.rel target = $region56
                $region61: #{hybrid_loss.14} parent=46 // loop_exit
                  _
              $region47: #{hybrid_loss.14} parent=31 // pred_fallthru
                _
            $region32: #{hybrid_loss.14} parent=27 // pred_fallthru
              _
            // Predicated region
            $region33: #{hybrid_loss.14} parent=27 // pred_check
              _
            $region34: #{hybrid_loss.14} parent=27 // pred_check_branch
              %182 = sbr.rel (0) target = $region36
            $region35: #{hybrid_loss.14} parent=27 // pred_region
              %s184 = ssub.s32 16, 1
              loop: start=0, step=1, limit=1
              $region37: #{hybrid_loss.14} parent=35 // loop_pre_header
                _
              $region38: #{hybrid_loss.14} parent=35 // loop_header
                %s186 = sphi 0, %s190
                %p187 = scmp.ge.s32.totalorder %s186, 1
                %s191 = sphi %s176, %s176
                %s192 = sphi %s171, %s171
              $region39: #{hybrid_loss.14} parent=35 // loop_header_branch
                %189 = sbr.rel (%p187) target = $region43
              $region40: #{hybrid_loss.14} parent=35 // loop_body
                %v193 = vld [vmem:[%s191] sm:%s184]
                %194 = vst [vmem:[%s192] sm:%s184] %v193
                %v195 = vld [vmem:[%s191 + $0x6c] sm:%s184]
                %196 = vst [vmem:[%s192 + $0x4] sm:%s184] %v195
                %v197 = vld [vmem:[%s191 + $0xd8] sm:%s184]
                %198 = vst [vmem:[%s192 + $0x8] sm:%s184] %v197
                %v199 = vld [vmem:[%s191 + $0x144] sm:%s184]
                %200 = vst [vmem:[%s192 + $0xc] sm:%s184] %v199
                %v201 = vld [vmem:[%s191 + $0x1b0] sm:%s184]
                %202 = vst [vmem:[%s192 + $0x10] sm:%s184] %v201
              $region41: #{hybrid_loss.14} parent=35 // loop_footer
                %s190 = sadd.s32 1, %s186
              $region42: #{hybrid_loss.14} parent=35 // loop_footer_branch
                %185 = sbr.rel target = $region38
              $region43: #{hybrid_loss.14} parent=35 // loop_exit
                _
            $region36: #{hybrid_loss.14} parent=27 // pred_fallthru
              _
          $region28: #{hybrid_loss.14} parent=23 // pred_fallthru
            _
          %233 = vnop
        $region24: #{hybrid_loss.14} parent=19 // pred_fallthru
          _
        // Predicated region
        $region62: #{hybrid_loss.14} parent=19 // pred_check
          %p234 = pneg %p78
        $region63: #{hybrid_loss.14} parent=19 // pred_check_branch
          %236 = sbr.rel (%p234) target = $region65
        $region64: #{hybrid_loss.14} parent=19 // pred_region
          %s237 = smul.u32 16, %s18
          %s238 = smul.u32 2, %s17
          %p239 = scmp.lt.s32.totalorder %s237, 431
          %s240 = scalar_select %p239, %s237, 431
          %p241 = scmp.lt.s32.totalorder %s238, 1
          %s242 = scalar_select %p241, %s238, 1
          %s243 = smul.addr %s240, 2
          %s244 = sadd.s32 %s242, %s243
          %s245 = smul.addr %s244, 4
          %s246 = scalar_lea.vmem %s1, %s245
          %s247 = smul.u32 16, %s18
          %s248 = smul.u32 2, %s17
        $region65: #{hybrid_loss.14} parent=19 // pred_fallthru
          _
      $region20: #{hybrid_loss.14} parent=5 // pred_fallthru
        _
      %p249 = scmp.le.s32.totalorder 1, %s9
      %p250 = scmp.lt.s32.totalorder %s9, 28
      %p251 = pnand %p249, %p250
      %p252 = pneg %p251
      // Predicated region
      $region66: #{hybrid_loss.14} parent=5 // pred_check
        _
      $region67: #{hybrid_loss.14} parent=5 // pred_check_branch
        %254 = sbr.rel (%p251) target = $region69
      $region68: #{hybrid_loss.14} parent=5 // pred_region
        %s255 = ssub.s32 %s9, 1
        %s256 = sand.u32 %s43, 1
        %s257 = sand.u32 %s43, 1
        %s258 = smul.addr %s257, 20
        %s259 = scalar_lea.vmem [#allocation3], %s258
        // Predicated region
        $region70: #{hybrid_loss.14} parent=68 // pred_check
          %p260 = pneg %p56
        $region71: #{hybrid_loss.14} parent=68 // pred_check_branch
          %262 = sbr.rel (%p260) target = $region73
        $region72: #{hybrid_loss.14} parent=68 // pred_region
          _
        $region73: #{hybrid_loss.14} parent=68 // pred_fallthru
          _
        %s263 = sand.u32 %s43, 1
        %s264 = sand.u32 %s43, 1
        %s265 = smul.addr %s264, 20
        %s266 = scalar_lea.vmem [#allocation3], %s265
        %p267 = pneg %p56
        %p268 = pneg %p53
        %s269 = smul.u32 16, %s21
        %s270 = smul.u32 2, %s20
        %p271 = scmp.lt.s32.totalorder %s269, 431
        %s272 = scalar_select %p271, %s269, 431
        %p273 = scmp.lt.s32.totalorder %s270, 1
        %s274 = scalar_select %p273, %s270, 1
        %s275 = smul.addr %s272, 2
        %s276 = sadd.s32 %s274, %s275
        %s277 = smul.addr %s276, 4
        %s278 = scalar_lea.vmem %s1, %s277
        %p279 = pneg %p84
        %p280 = pneg %p81
        %s281 = smul.u32 2, %s20
        %p282 = scmp.lt.s32.totalorder %s281, 1
        %s283 = scalar_select %p282, %s281, 1
        %s284 = scalar_lea.vmem %s2, %s283
        %p285 = pneg %p110
        %p286 = pneg %p107
        %p287 = pneg %p138
        %p288 = pneg %p135
        %s289 = smul.u32 5, %s19
        %s290 = smul.u32 2, %s20
        %p291 = scmp.lt.s32.totalorder %s289, 4
        %s292 = scalar_select %p291, %s289, 4
        %p293 = scmp.lt.s32.totalorder %s290, 1
        %s294 = scalar_select %p293, %s290, 1
        %s295 = smul.addr %s292, 2
        %s296 = sadd.s32 %s294, %s295
        %s297 = smul.addr %s296, 4
        %s298 = scalar_lea.vmem %s3, %s297
        %s299 = smul.u32 5, %s19
        %s300 = smul.u32 16, %s21
        %s301 = smul.u32 2, %s20
        %p302 = scmp.lt.s32.totalorder %s300, 431
        %s303 = scalar_select %p302, %s300, 431
        %p304 = scmp.lt.s32.totalorder %s301, 1
        %s305 = scalar_select %p304, %s301, 1
        %s306 = smul.addr %s303, 2
        %s307 = sadd.s32 %s305, %s306
        %s308 = smul.addr %s307, 4
        %s309 = scalar_lea.vmem %s1, %s308
        %s310 = smul.u32 16, %s21
        %s311 = smul.u32 2, %s20
        %s312 = smul.u32 2, %s20
        %p313 = scmp.lt.s32.totalorder %s312, 1
        %s314 = scalar_select %p313, %s312, 1
        %s315 = scalar_lea.vmem %s2, %s314
        %s316 = smul.u32 2, %s20
        %s317 = smul.u32 5, %s19
        %s318 = smul.u32 2, %s20
        %p319 = scmp.lt.s32.totalorder %s317, 4
        %s320 = scalar_select %p319, %s317, 4
        %p321 = scmp.lt.s32.totalorder %s318, 1
        %s322 = scalar_select %p321, %s318, 1
        %s323 = smul.addr %s320, 2
        %s324 = sadd.s32 %s322, %s323
        %s325 = smul.addr %s324, 4
        %s326 = scalar_lea.vmem %s3, %s325
        %s327 = smul.u32 5, %s19
        %s328 = smul.u32 2, %s20
        %p330 = scmp.eq.s32.totalorder %s21, 0
        // Predicated region
        $region74: #{hybrid_loss.14} parent=68 // pred_check
          %p331 = pneg %p330
        $region75: #{hybrid_loss.14} parent=68 // pred_check_branch
          %333 = sbr.rel (%p331) target = $region77
        $region76: #{hybrid_loss.14} parent=68 // pred_region
          %334 = vst [vmem:[#allocation2] sm:$0xff] 0.0
          %335 = vst [vmem:[#allocation2 + $0x8] sm:$0xff] 0.0
          %336 = vst [vmem:[#allocation2 + $0x10] sm:$0xff] 0.0
          %337 = vst [vmem:[#allocation2 + $0x18] sm:$0xff] 0.0
          %338 = vst [vmem:[#allocation2 + $0x20] sm:$0xff] 0.0
          %339 = vst [vmem:[#allocation2 + $0x28] sm:$0xff] 0.0
          %340 = vst [vmem:[#allocation2 + $0x30] sm:$0xff] 0.0
          %341 = vst [vmem:[#allocation2 + $0x38] sm:$0xff] 0.0
          %342 = vst [vmem:[#allocation2 + $0x40] sm:$0xff] 0.0
          %343 = vst [vmem:[#allocation2 + $0x48] sm:$0xff] 0.0
        $region77: #{hybrid_loss.14} parent=68 // pred_fallthru
          _
        %v344 = vld [vmem:[#allocation2] sm:$0xff]
        %v345 = vld [vmem:[#allocation2 + $0x8] sm:$0xff]
        %v346 = vld [vmem:[#allocation2 + $0x10] sm:$0xff]
        %v347 = vld [vmem:[#allocation2 + $0x18] sm:$0xff]
        %v348 = vld [vmem:[#allocation2 + $0x20] sm:$0xff]
        %v349 = vld [vmem:[#allocation2 + $0x28] sm:$0xff]
        %v350 = vld [vmem:[#allocation2 + $0x30] sm:$0xff]
        %v351 = vld [vmem:[#allocation2 + $0x38] sm:$0xff]
        %v352 = vld [vmem:[#allocation2 + $0x40] sm:$0xff]
        %v353 = vld [vmem:[#allocation2 + $0x48] sm:$0xff]
        %v354 = vld [vmem:[%s259] sm:$0xf]
        %v355 = vld [vmem:[%s259 + $0x4] sm:$0xf]
        %v356 = vld [vmem:[%s259 + $0x8] sm:$0xf]
        %v357 = vld [vmem:[%s259 + $0xc] sm:$0xf]
        %v358 = vld [vmem:[%s259 + $0x10] sm:$0xf]
        %v359 = vld [vmem:[%s309] sm:$0xff]
        %v360 = vld [vmem:[%s309 + $0x8] sm:$0xff]
        %v361 = vld [vmem:[%s309 + $0x10] sm:$0xff]
        %v362 = vld [vmem:[%s309 + $0x18] sm:$0xff]
        %v363 = vld [vmem:[%s309 + $0x20] sm:$0xff]
        %v364 = vld [vmem:[%s309 + $0x28] sm:$0xff]
        %v365 = vld [vmem:[%s309 + $0x30] sm:$0xff]
        %v366 = vld [vmem:[%s309 + $0x38] sm:$0xff]
        %v367 = vld [vmem:[%s309 + $0x40] sm:$0xff]
        %v368 = vld [vmem:[%s309 + $0x48] sm:$0xff]
        %v369 = vld [vmem:[%s309 + $0x50] sm:$0xff]
        %v370 = vld [vmem:[%s309 + $0x58] sm:$0xff]
        %v371 = vld [vmem:[%s309 + $0x60] sm:$0xff]
        %v372 = vld [vmem:[%s309 + $0x68] sm:$0xff]
        %v373 = vld [vmem:[%s309 + $0x70] sm:$0xff]
        %v374 = vld [vmem:[%s309 + $0x78] sm:$0xff]
        %v380 = vunpack.c.l.b16 %v354
        %v381 = vunpack.c.l.b16 %v355
        %v382 = vunpack.c.l.b16 %v356
        %v383 = vunpack.c.l.b16 %v357
        %v384 = vunpack.c.l.b16 %v358
        %v385 = vpack.c.b16 %v381, %v380
        %v386 = vpack.c.b16 %v383, %v382
        %v387 = vpack.c.b16 %v384, %v384
        %v407 = vunpack.c.l.b16 %v359
        %v408 = vunpack.c.h.b16 %v359
        %v409 = vunpack.c.l.b16 %v360
        %v410 = vunpack.c.h.b16 %v360
        %v411 = vunpack.c.l.b16 %v361
        %v412 = vunpack.c.h.b16 %v361
        %v413 = vunpack.c.l.b16 %v362
        %v414 = vunpack.c.h.b16 %v362
        %v415 = vunpack.c.l.b16 %v363
        %v416 = vunpack.c.h.b16 %v363
        %v417 = vunpack.c.l.b16 %v364
        %v418 = vunpack.c.h.b16 %v364
        %v419 = vunpack.c.l.b16 %v365
        %v420 = vunpack.c.h.b16 %v365
        %v421 = vunpack.c.l.b16 %v366
        %v422 = vunpack.c.h.b16 %v366
        %v423 = vunpack.c.l.b16 %v367
        %v424 = vunpack.c.h.b16 %v367
        %v425 = vunpack.c.l.b16 %v368
        %v426 = vunpack.c.h.b16 %v368
        %v427 = vunpack.c.l.b16 %v369
        %v428 = vunpack.c.h.b16 %v369
        %v429 = vunpack.c.l.b16 %v370
        %v430 = vunpack.c.h.b16 %v370
        %v431 = vunpack.c.l.b16 %v371
        %v432 = vunpack.c.h.b16 %v371
        %v433 = vunpack.c.l.b16 %v372
        %v434 = vunpack.c.h.b16 %v372
        %v435 = vunpack.c.l.b16 %v373
        %v436 = vunpack.c.h.b16 %v373
        %v437 = vunpack.c.l.b16 %v374
        %v438 = vunpack.c.h.b16 %v374
        %v439 = vpack.c.b16 %v409, %v407
        %v440 = vpack.c.b16 %v410, %v408
        %v441 = vpack.c.b16 %v413, %v411
        %v442 = vpack.c.b16 %v414, %v412
        %v443 = vpack.c.b16 %v417, %v415
        %v444 = vpack.c.b16 %v418, %v416
        %v445 = vpack.c.b16 %v421, %v419
        %v446 = vpack.c.b16 %v422, %v420
        %v447 = vpack.c.b16 %v425, %v423
        %v448 = vpack.c.b16 %v426, %v424
        %v449 = vpack.c.b16 %v429, %v427
        %v450 = vpack.c.b16 %v430, %v428
        %v451 = vpack.c.b16 %v433, %v431
        %v452 = vpack.c.b16 %v434, %v432
        %v453 = vpack.c.b16 %v437, %v435
        %v454 = vpack.c.b16 %v438, %v436
        %471 = vmatprep.subr.bf16.mxu0 %v454
        %472 = vmatpush1.bf16.msra.mxu0 %v453
        %473 = vmatprep.subr.bf16.mxu0 %v452
        %474 = vmatpush1.bf16.msra.mxu0 %v451
        %475 = vmatprep.subr.bf16.mxu0 %v450
        %476 = vmatpush1.bf16.msra.mxu0 %v449
        %477 = vmatprep.subr.bf16.mxu0 %v448
        %478 = vmatpush1.bf16.msra.mxu0 %v447
        %479 = vmatprep.subr.bf16.mxu0 %v446
        %480 = vmatpush1.bf16.msra.mxu0 %v445
        %481 = vmatprep.subr.bf16.mxu0 %v444
        %482 = vmatpush1.bf16.msra.mxu0 %v443
        %483 = vmatprep.subr.bf16.mxu0 %v442
        %484 = vmatpush1.bf16.msra.mxu0 %v441
        %485 = vmatprep.subr.bf16.mxu0 %v440
        %486 = vmatpush1.bf16.msra.mxu0 %v439
        %487 = vmatprep.subr.bf16.mxu0 0
        %488 = vmatpush2.bf16.msra.mxu0 0
        %489 = vmatprep.subr.bf16.mxu0 0
        %490 = vmatpush2.bf16.msra.mxu0 0
        %491 = vmatprep.subr.bf16.mxu0 0
        %492 = vmatpush2.bf16.msra.mxu0 0
        %493 = vmatprep.subr.bf16.mxu0 0
        %494 = vmatpush2.bf16.msra.mxu0 0
        %495 = vmatprep.subr.bf16.mxu0 0
        %496 = vmatpush2.bf16.msra.mxu0 0
        %497 = vmatprep.subr.bf16.mxu0 0
        %498 = vmatpush2.bf16.msra.mxu0 0
        %499 = vmatprep.subr.bf16.mxu0 0
        %500 = vmatpush2.bf16.msra.mxu0 0
        %501 = vmatprep.subr.bf16.mxu0 0
        %502 = vmatpush2.bf16.msra.mxu0 0
        %503 = vmatprep.mubr.bf16.mxu0 0
        %504 = vmatmul.mubr.bf16.gmra.mxu0 %v385
        %v505 = vpop.f32.mrf.mxu0
        %v506 = vadd.f32 0.0, %v505
        %v507 = vpop.f32.mrf.mxu0
        %v508 = vadd.f32 0.0, %v507
        %v509 = vpop.f32.mrf.mxu0
        %v510 = vadd.f32 0.0, %v509
        %v511 = vpop.f32.mrf.mxu0
        %v512 = vadd.f32 0.0, %v511
        %513 = vmatprep.mubr.bf16.mxu0 0
        %514 = vmatmul.mubr.bf16.gmra.mxu0 %v386
        %v515 = vpop.f32.mrf.mxu0
        %v516 = vadd.f32 0.0, %v515
        %v517 = vpop.f32.mrf.mxu0
        %v518 = vadd.f32 0.0, %v517
        %v519 = vpop.f32.mrf.mxu0
        %v520 = vadd.f32 0.0, %v519
        %v521 = vpop.f32.mrf.mxu0
        %v522 = vadd.f32 0.0, %v521
        %523 = vmatprep.mubr.bf16.mxu0 0
        %524 = vmatmul.mubr.bf16.gmra.mxu0 %v387
        %v525 = vpop.f32.mrf.mxu0
        %v526 = vadd.f32 0.0, %v525
        %v527 = vpop.f32.mrf.mxu0
        %v528 = vadd.f32 0.0, %v527
        %v529 = vpop.f32.mrf.mxu0
        %v530 = vpop.f32.mrf.mxu0
        %531 = vdwg.mxu0
        %v532 = vadd.f32 %v344, %v506
        %v533 = vadd.f32 %v345, %v508
        %v534 = vadd.f32 %v346, %v510
        %v535 = vadd.f32 %v347, %v512
        %v536 = vadd.f32 %v348, %v516
        %v537 = vadd.f32 %v349, %v518
        %v538 = vadd.f32 %v350, %v520
        %v539 = vadd.f32 %v351, %v522
        %v540 = vadd.f32 %v352, %v526
        %v541 = vadd.f32 %v353, %v528
        %542 = vst [vmem:[#allocation2] sm:$0xff] %v532
        %543 = vst [vmem:[#allocation2 + $0x8] sm:$0xff] %v533
        %544 = vst [vmem:[#allocation2 + $0x10] sm:$0xff] %v534
        %545 = vst [vmem:[#allocation2 + $0x18] sm:$0xff] %v535
        %546 = vst [vmem:[#allocation2 + $0x20] sm:$0xff] %v536
        %547 = vst [vmem:[#allocation2 + $0x28] sm:$0xff] %v537
        %548 = vst [vmem:[#allocation2 + $0x30] sm:$0xff] %v538
        %549 = vst [vmem:[#allocation2 + $0x38] sm:$0xff] %v539
        %550 = vst [vmem:[#allocation2 + $0x40] sm:$0xff] %v540
        %551 = vst [vmem:[#allocation2 + $0x48] sm:$0xff] %v541
        %p552 = scmp.eq.s32.totalorder %s21, 26
        // Predicated region
        $region78: #{hybrid_loss.14} parent=68 // pred_check
          %p553 = pneg %p552
        $region79: #{hybrid_loss.14} parent=68 // pred_check_branch
          %555 = sbr.rel (%p553) target = $region81
        $region80: #{hybrid_loss.14} parent=68 // pred_region
          %v556 = vld [vmem:[#allocation2] sm:$0xff]
          %v557 = vld [vmem:[#allocation2 + $0x8] sm:$0xff]
          %v558 = vld [vmem:[#allocation2 + $0x10] sm:$0xff]
          %v559 = vld [vmem:[#allocation2 + $0x18] sm:$0xff]
          %v560 = vld [vmem:[#allocation2 + $0x20] sm:$0xff]
          %v561 = vld [vmem:[#allocation2 + $0x28] sm:$0xff]
          %v562 = vld [vmem:[#allocation2 + $0x30] sm:$0xff]
          %v563 = vld [vmem:[#allocation2 + $0x38] sm:$0xff]
          %v564 = vld [vmem:[#allocation2 + $0x40] sm:$0xff]
          %v565 = vld [vmem:[#allocation2 + $0x48] sm:$0xff]
          %v566 = vld [vmem:[%s315] sm:$0x3]
          %v568 = vlaneseq
          %v569 = vshrl.u32 %v568, 7
          %v570 = vsub.s32 0, %v569
          %v571 = vrot.slane %v566, %v570
          %v572 = vlaneseq
          %v573 = vshrl.u32 %v572, 7
          %v574 = vsub.s32 1, %v573
          %v575 = vrot.slane %v566, %v574
          %v578 = vadd.f32 %v556, %v571
          %v579 = vadd.f32 %v557, %v575
          %v580 = vadd.f32 %v558, %v571
          %v581 = vadd.f32 %v559, %v575
          %v582 = vadd.f32 %v560, %v571
          %v583 = vadd.f32 %v561, %v575
          %v584 = vadd.f32 %v562, %v571
          %v585 = vadd.f32 %v563, %v575
          %v586 = vadd.f32 %v564, %v571
          %v587 = vadd.f32 %v565, %v575
          %v588 = vmax.f32 %v578, 0.0
          %v589 = vmax.f32 %v579, 0.0
          %v590 = vmax.f32 %v580, 0.0
          %v591 = vmax.f32 %v581, 0.0
          %v592 = vmax.f32 %v582, 0.0
          %v593 = vmax.f32 %v583, 0.0
          %v594 = vmax.f32 %v584, 0.0
          %v595 = vmax.f32 %v585, 0.0
          %v596 = vmax.f32 %v586, 0.0
          %v597 = vmax.f32 %v587, 0.0
          %v598 = vpack.c.bf16 %v590, %v588
          %v599 = vpack.c.bf16 %v591, %v589
          %v600 = vpack.c.bf16 %v594, %v592
          %v601 = vpack.c.bf16 %v595, %v593
          %v602 = vpack.c.bf16 %v596, %v596
          %v603 = vpack.c.bf16 %v597, %v597
          %v610 = vunpack.c.l.b16 %v598
          %v611 = vunpack.c.l.b16 %v599
          %v612 = vunpack.c.h.b16 %v598
          %v613 = vunpack.c.h.b16 %v599
          %v614 = vunpack.c.l.b16 %v600
          %v615 = vunpack.c.l.b16 %v601
          %v616 = vunpack.c.h.b16 %v600
          %v617 = vunpack.c.h.b16 %v601
          %v618 = vunpack.c.l.b16 %v602
          %v619 = vunpack.c.l.b16 %v603
          %v620 = vpack.c.b16 %v611, %v610
          %v621 = vpack.c.b16 %v613, %v612
          %v622 = vpack.c.b16 %v615, %v614
          %v623 = vpack.c.b16 %v617, %v616
          %v624 = vpack.c.b16 %v619, %v618
          %630 = vst [vmem:[%s326] sm:$0xff] %v620
          %631 = vst [vmem:[%s326 + $0x8] sm:$0xff] %v621
          %632 = vst [vmem:[%s326 + $0x10] sm:$0xff] %v622
          %633 = vst [vmem:[%s326 + $0x18] sm:$0xff] %v623
          %634 = vst [vmem:[%s326 + $0x20] sm:$0xff] %v624
        $region81: #{hybrid_loss.14} parent=68 // pred_fallthru
          _
        %s635 = smul.u32 5, %s19
        %s636 = smul.u32 2, %s20
        %p637 = scmp.lt.s32.totalorder %s635, 4
        %s638 = scalar_select %p637, %s635, 4
        %p639 = scmp.lt.s32.totalorder %s636, 1
        %s640 = scalar_select %p639, %s636, 1
        %s641 = smul.addr %s638, 2
        %s642 = sadd.s32 %s640, %s641
        %s643 = smul.addr %s642, 4
        %s644 = scalar_lea.vmem %s3, %s643
        // Predicated region
        $region82: #{hybrid_loss.14} parent=68 // pred_check
          %p645 = pneg %p135
        $region83: #{hybrid_loss.14} parent=68 // pred_check_branch
          %647 = sbr.rel (%p645) target = $region85
        $region84: #{hybrid_loss.14} parent=68 // pred_region
          %s648 = smul.u32 5, %s19
          %s649 = smul.u32 2, %s20
        $region85: #{hybrid_loss.14} parent=68 // pred_fallthru
          _
        // Predicated region
        $region86: #{hybrid_loss.14} parent=68 // pred_check
          %p650 = pneg %p135
        $region87: #{hybrid_loss.14} parent=68 // pred_check_branch
          %652 = sbr.rel (%p650) target = $region89
        $region88: #{hybrid_loss.14} parent=68 // pred_region
          %s653 = smul.u32 5, %s19
          %s654 = smul.u32 2, %s20
          %p655 = scmp.lt.s32.totalorder %s653, 4
          %s656 = scalar_select %p655, %s653, 4
          %p657 = scmp.lt.s32.totalorder %s654, 1
          %s658 = scalar_select %p657, %s654, 1
          %s659 = smul.addr %s656, 2
          %s660 = sadd.s32 %s658, %s659
          %s661 = smul.addr %s660, 4
          %s662 = scalar_lea.vmem %s3, %s661
        $region89: #{hybrid_loss.14} parent=68 // pred_fallthru
          _
      $region69: #{hybrid_loss.14} parent=5 // pred_fallthru
        _
      %p663 = scmp.le.s32.totalorder 2, %s9
      // Predicated region
      $region90: #{hybrid_loss.14} parent=5 // pred_check
        %p664 = pneg %p663
      $region91: #{hybrid_loss.14} parent=5 // pred_check_branch
        %666 = sbr.rel (%p664) target = $region93
      $region92: #{hybrid_loss.14} parent=5 // pred_region
        %s667 = ssub.s32 %s9, 2
      $region93: #{hybrid_loss.14} parent=5 // pred_fallthru
        _
    $region6: #{hybrid_loss.14} parent=1 // loop_footer
      %s13 = sadd.s32 1, %s9
    $region7: #{hybrid_loss.14} parent=1 // loop_footer_branch
      %8 = sbr.rel target = $region3
    $region8: #{hybrid_loss.14} parent=1 // loop_exit
      _

// kernel: hybrid_loss.15
$region0: #{hybrid_loss.15}
  #allocation0 [shape = 'u32[]', space=smem, size = 0x4, offset = 0x4, fixed_abs, tag = 'smem constant byte address 0x4 - core index']
  #allocation1 [shape = 'u32[144,128]{1,0:T(1,128)}', space=vmem, size = 0x12000, scoped, tag = 'internal scratch']
  #allocation2 [shape = 'f32[40,256]{1,0:T(8,128)}', space=vmem, size = 0xa000, scoped, tag = 'scratch operand']
  %s0 = inlined_call_operand.vmem [shape: bf16[40,2304], index: 0, kind: input, shape index: {}]
  %s1 = inlined_call_operand.vmem [shape: bf16[2304,256], index: 1, kind: input, shape index: {}]
  %s2 = inlined_call_operand.vmem [shape: f32[1,256], index: 2, kind: input, shape index: {}]
  %s3 = inlined_call_operand.vmem [shape: bf16[40,256], index: 3, kind: output, shape index: {}]
  %s4 = sld [smem:[#allocation0]]
  $region91: #{hybrid_loss.15} parent=0
    _
  %s6 = ssub.s32 1, %s4
  %s7 = scalar_select 0, %s6, %s4
  $region1: #{hybrid_loss.15} parent=0
    #allocation3 [shape = 'u8[40960]{0}', space=vmem, size = 0xa000, scoped, tag = 'input window, operand 0']
    loop: start=0, step=1, limit=11
    $region2: #{hybrid_loss.15} parent=1 // loop_pre_header
      _
    $region3: #{hybrid_loss.15} parent=1 // loop_header
      %s9 = sphi 0, %s13
      %p10 = scmp.ge.s32.totalorder %s9, 11
      %s16 = sphi 0, %s35
      %s17 = sphi 0, %s31
      %s18 = sphi 0, %s27
      %s19 = sphi 0, %s16
      %s20 = sphi 0, %s17
      %s21 = sphi 0, %s18
      %s22 = sphi 0, %s19
      %s23 = sphi 0, %s20
      %s24 = sphi 0, %s21
      %s40 = sphi 0, %s42
      %s43 = sphi 0, %s40
      %s44 = sphi 0, %s43
      %s60 = sphi 0, %s44
      %s68 = sphi 0, %s70
      %s71 = sphi 0, %s68
      %s72 = sphi 0, %s71
      %s88 = sphi 0, %s72
      %s94 = sphi 0, %s96
      %s97 = sphi 0, %s94
      %s98 = sphi 0, %s97
      %s114 = sphi 0, %s98
      %s122 = sphi 0, %s124
      %s125 = sphi 0, %s122
      %s126 = sphi 0, %s125
      %s142 = sphi 0, %s126
    $region4: #{hybrid_loss.15} parent=1 // loop_header_branch
      %12 = sbr.rel (%p10) target = $region8
    $region5: #{hybrid_loss.15} parent=1 // loop_body
      %s14 = ssub.s32 %s9, 1
      %s15 = ssub.s32 %s9, 2
      %s25 = sadd.s32 1, %s18
      %p26 = scmp.ge.s32.totalorder %s25, 9
      %s27 = scalar_select %p26, 0, %s25
      %s28 = sadd.s32 1, %s17
      %s29 = scalar_select %p26, %s28, %s17
      %p30 = scmp.ge.s32.totalorder %s29, 1
      %s31 = scalar_select %p30, 0, %s29
      %s32 = sadd.s32 1, %s16
      %s33 = scalar_select %p30, %s32, %s16
      %p34 = scmp.ge.s32.totalorder %s33, 1
      %s35 = scalar_select %p34, 0, %s33
      %s36 = ssub.s32 %s16, %s35
      %s37 = ssub.s32 %s18, %s27
      %s38 = sor.u32 %s36, %s37
      %p39 = scmp.eq.s32.totalorder %s38, 0
      %s41 = sadd.s32 %s40, 1
      %s42 = scalar_select %p39, %s40, %s41
      %p45 = pneg %p39
      %p46 = scmp.eq.s32.totalorder %s9, 8
      %p47 = por %p45, %p46
      %p48 = scmp.ne.s32.totalorder %s40, %s43
      %p49 = scmp.eq.s32.totalorder %s9, 0
      %p50 = por %p48, %p49
      %p51 = scmp.ne.s32.totalorder %s40, %s43
      %p52 = scmp.eq.s32.totalorder %s14, 8
      %p53 = por %p51, %p52
      %p54 = scmp.ne.s32.totalorder %s43, %s44
      %p55 = scmp.eq.s32.totalorder %s14, 0
      %p56 = por %p54, %p55
      %p57 = scmp.ne.s32.totalorder %s43, %s44
      %p58 = scmp.eq.s32.totalorder %s15, 8
      %p59 = por %p57, %p58
      %p61 = scmp.ne.s32.totalorder %s44, %s60
      %p62 = scmp.eq.s32.totalorder %s15, 0
      %p63 = por %p61, %p62
      %s64 = ssub.s32 %s18, %s27
      %s65 = ssub.s32 %s17, %s31
      %s66 = sor.u32 %s64, %s65
      %p67 = scmp.eq.s32.totalorder %s66, 0
      %s69 = sadd.s32 %s68, 1
      %s70 = scalar_select %p67, %s68, %s69
      %p73 = pneg %p67
      %p74 = scmp.eq.s32.totalorder %s9, 8
      %p75 = por %p73, %p74
      %p76 = scmp.ne.s32.totalorder %s68, %s71
      %p77 = scmp.eq.s32.totalorder %s9, 0
      %p78 = por %p76, %p77
      %p79 = scmp.ne.s32.totalorder %s68, %s71
      %p80 = scmp.eq.s32.totalorder %s14, 8
      %p81 = por %p79, %p80
      %p82 = scmp.ne.s32.totalorder %s71, %s72
      %p83 = scmp.eq.s32.totalorder %s14, 0
      %p84 = por %p82, %p83
      %p85 = scmp.ne.s32.totalorder %s71, %s72
      %p86 = scmp.eq.s32.totalorder %s15, 8
      %p87 = por %p85, %p86
      %p89 = scmp.ne.s32.totalorder %s72, %s88
      %p90 = scmp.eq.s32.totalorder %s15, 0
      %p91 = por %p89, %p90
      %s92 = ssub.s32 %s17, %s31
      %p93 = scmp.eq.s32.totalorder %s92, 0
      %s95 = sadd.s32 %s94, 1
      %s96 = scalar_select %p93, %s94, %s95
      %p99 = pneg %p93
      %p100 = scmp.eq.s32.totalorder %s9, 8
      %p101 = por %p99, %p100
      %p102 = scmp.ne.s32.totalorder %s94, %s97
      %p103 = scmp.eq.s32.totalorder %s9, 0
      %p104 = por %p102, %p103
      %p105 = scmp.ne.s32.totalorder %s94, %s97
      %p106 = scmp.eq.s32.totalorder %s14, 8
      %p107 = por %p105, %p106
      %p108 = scmp.ne.s32.totalorder %s97, %s98
      %p109 = scmp.eq.s32.totalorder %s14, 0
      %p110 = por %p108, %p109
      %p111 = scmp.ne.s32.totalorder %s97, %s98
      %p112 = scmp.eq.s32.totalorder %s15, 8
      %p113 = por %p111, %p112
      %p115 = scmp.ne.s32.totalorder %s98, %s114
      %p116 = scmp.eq.s32.totalorder %s15, 0
      %p117 = por %p115, %p116
      %s118 = ssub.s32 %s16, %s35
      %s119 = ssub.s32 %s17, %s31
      %s120 = sor.u32 %s118, %s119
      %p121 = scmp.eq.s32.totalorder %s120, 0
      %s123 = sadd.s32 %s122, 1
      %s124 = scalar_select %p121, %s122, %s123
      %p127 = pneg %p121
      %p128 = scmp.eq.s32.totalorder %s9, 8
      %p129 = por %p127, %p128
      %p130 = scmp.ne.s32.totalorder %s122, %s125
      %p131 = scmp.eq.s32.totalorder %s9, 0
      %p132 = por %p130, %p131
      %p133 = scmp.ne.s32.totalorder %s122, %s125
      %p134 = scmp.eq.s32.totalorder %s14, 8
      %p135 = por %p133, %p134
      %p136 = scmp.ne.s32.totalorder %s125, %s126
      %p137 = scmp.eq.s32.totalorder %s14, 0
      %p138 = por %p136, %p137
      %p139 = scmp.ne.s32.totalorder %s125, %s126
      %p140 = scmp.eq.s32.totalorder %s15, 8
      %p141 = por %p139, %p140
      %p143 = scmp.ne.s32.totalorder %s126, %s142
      %p144 = scmp.eq.s32.totalorder %s15, 0
      %p145 = por %p143, %p144
      %p146 = scmp.le.s32.totalorder 1, %s9
      %p147 = scmp.lt.s32.totalorder %s9, 10
      %p148 = pnand %p146, %p147
      %p149 = pneg %p148
      // Predicated region
      $region9: #{hybrid_loss.15} parent=5 // pred_check
        _
      $region10: #{hybrid_loss.15} parent=5 // pred_check_branch
        %151 = sbr.rel (%p148) target = $region12
      $region11: #{hybrid_loss.15} parent=5 // pred_region
        %s152 = ssub.s32 %s9, 1
        // Predicated region
        $region13: #{hybrid_loss.15} parent=11 // pred_check
          %p153 = pneg %p110
        $region14: #{hybrid_loss.15} parent=11 // pred_check_branch
          %155 = sbr.rel (%p153) target = $region16
        $region15: #{hybrid_loss.15} parent=11 // pred_region
          %s156 = smul.u32 2, %s20
          %p157 = scmp.lt.s32.totalorder %s156, 1
          %s158 = scalar_select %p157, %s156, 1
          %s159 = scalar_lea.vmem %s2, %s158
          %s160 = smul.u32 2, %s20
        $region16: #{hybrid_loss.15} parent=11 // pred_fallthru
          _
      $region12: #{hybrid_loss.15} parent=5 // pred_fallthru
        _
      %p161 = scmp.lt.s32.totalorder %s9, 9
      // Predicated region
      $region17: #{hybrid_loss.15} parent=5 // pred_check
        %p162 = pneg %p161
      $region18: #{hybrid_loss.15} parent=5 // pred_check_branch
        %164 = sbr.rel (%p162) target = $region20
      $region19: #{hybrid_loss.15} parent=5 // pred_region
        // Predicated region
        $region21: #{hybrid_loss.15} parent=19 // pred_check
          %p165 = pneg %p50
        $region22: #{hybrid_loss.15} parent=19 // pred_check_branch
          %167 = sbr.rel (%p165) target = $region24
        $region23: #{hybrid_loss.15} parent=19 // pred_region
          %s168 = sand.u32 %s40, 1
          %s169 = sand.u32 %s40, 1
          %s170 = smul.addr %s169, 40
          %s171 = scalar_lea.vmem [#allocation3], %s170
          %s172 = smul.u32 5, %s16
          %s173 = smul.u32 2, %s18
          %s174 = smul.addr %s172, 18
          %s175 = sadd.s32 %s173, %s174
          %s176 = smul.addr %s175, 4
          %s177 = scalar_lea.vmem %s0, %s176
          // Predicated region
          $region25: #{hybrid_loss.15} parent=23 // pred_check
            _
          $region26: #{hybrid_loss.15} parent=23 // pred_check_branch
            %179 = sbr.rel (0) target = $region28
          $region27: #{hybrid_loss.15} parent=23 // pred_region
            // Predicated region
            $region29: #{hybrid_loss.15} parent=27 // pred_check
              _
            $region30: #{hybrid_loss.15} parent=27 // pred_check_branch
              %181 = sbr.rel (0) target = $region32
            $region31: #{hybrid_loss.15} parent=27 // pred_region
              // Predicated region
              $region44: #{hybrid_loss.15} parent=31 // pred_check
                _
              $region45: #{hybrid_loss.15} parent=31 // pred_check_branch
                %205 = sbr.rel (0) target = $region47
              $region46: #{hybrid_loss.15} parent=31 // pred_region
                loop: start=0, step=1, limit=1
                $region48: #{hybrid_loss.15} parent=46 // loop_pre_header
                  _
                $region49: #{hybrid_loss.15} parent=46 // loop_header
                  %s207 = sphi 0, %s211
                  %p208 = scmp.ge.s32.totalorder %s207, 1
                  %s212 = sphi %s177, %s177
                  %s213 = sphi %s171, %s171
                $region50: #{hybrid_loss.15} parent=46 // loop_header_branch
                  %210 = sbr.rel (%p208) target = $region54
                $region51: #{hybrid_loss.15} parent=46 // loop_body
                  %v214 = vld [vmem:[%s212] sm:$0xff]
                  %215 = vst [vmem:[%s213] sm:$0xff] %v214
                  %v216 = vld [vmem:[%s212 + $0x48] sm:$0xff]
                  %217 = vst [vmem:[%s213 + $0x8] sm:$0xff] %v216
                  %v218 = vld [vmem:[%s212 + $0x90] sm:$0xff]
                  %219 = vst [vmem:[%s213 + $0x10] sm:$0xff] %v218
                  %v220 = vld [vmem:[%s212 + $0xd8] sm:$0xff]
                  %221 = vst [vmem:[%s213 + $0x18] sm:$0xff] %v220
                  %v222 = vld [vmem:[%s212 + $0x120] sm:$0xff]
                  %223 = vst [vmem:[%s213 + $0x20] sm:$0xff] %v222
                $region52: #{hybrid_loss.15} parent=46 // loop_footer
                  %s211 = sadd.s32 1, %s207
                $region53: #{hybrid_loss.15} parent=46 // loop_footer_branch
                  %206 = sbr.rel target = $region49
                $region54: #{hybrid_loss.15} parent=46 // loop_exit
                  _
              $region47: #{hybrid_loss.15} parent=31 // pred_fallthru
                _
              // Predicated region
              $region55: #{hybrid_loss.15} parent=31 // pred_check
                _
              $region56: #{hybrid_loss.15} parent=31 // pred_check_branch
                %225 = sbr.rel target = $region58
              $region57: #{hybrid_loss.15} parent=31 // pred_region
                _
              $region58: #{hybrid_loss.15} parent=31 // pred_fallthru
                _
            $region32: #{hybrid_loss.15} parent=27 // pred_fallthru
              _
            // Predicated region
            $region33: #{hybrid_loss.15} parent=27 // pred_check
              _
            $region34: #{hybrid_loss.15} parent=27 // pred_check_branch
              %183 = sbr.rel target = $region36
            $region35: #{hybrid_loss.15} parent=27 // pred_region
              %s185 = ssub.s32 256, 1
              loop: start=0, step=1, limit=1
              $region37: #{hybrid_loss.15} parent=35 // loop_pre_header
                _
              $region38: #{hybrid_loss.15} parent=35 // loop_header
                %s187 = sphi 0, %s191
                %p188 = scmp.ge.s32.totalorder %s187, 1
                %s192 = sphi %s177, %s177
                %s193 = sphi %s171, %s171
              $region39: #{hybrid_loss.15} parent=35 // loop_header_branch
                %190 = sbr.rel (%p188) target = $region43
              $region40: #{hybrid_loss.15} parent=35 // loop_body
                %v194 = vld [vmem:[%s192] sm:%s185]
                %195 = vst [vmem:[%s193] sm:%s185] %v194
                %v196 = vld [vmem:[%s192 + $0x48] sm:%s185]
                %197 = vst [vmem:[%s193 + $0x8] sm:%s185] %v196
                %v198 = vld [vmem:[%s192 + $0x90] sm:%s185]
                %199 = vst [vmem:[%s193 + $0x10] sm:%s185] %v198
                %v200 = vld [vmem:[%s192 + $0xd8] sm:%s185]
                %201 = vst [vmem:[%s193 + $0x18] sm:%s185] %v200
                %v202 = vld [vmem:[%s192 + $0x120] sm:%s185]
                %203 = vst [vmem:[%s193 + $0x20] sm:%s185] %v202
              $region41: #{hybrid_loss.15} parent=35 // loop_footer
                %s191 = sadd.s32 1, %s187
              $region42: #{hybrid_loss.15} parent=35 // loop_footer_branch
                %186 = sbr.rel target = $region38
              $region43: #{hybrid_loss.15} parent=35 // loop_exit
                _
            $region36: #{hybrid_loss.15} parent=27 // pred_fallthru
              _
          $region28: #{hybrid_loss.15} parent=23 // pred_fallthru
            _
          %226 = vnop
        $region24: #{hybrid_loss.15} parent=19 // pred_fallthru
          _
        // Predicated region
        $region59: #{hybrid_loss.15} parent=19 // pred_check
          %p227 = pneg %p78
        $region60: #{hybrid_loss.15} parent=19 // pred_check_branch
          %229 = sbr.rel (%p227) target = $region62
        $region61: #{hybrid_loss.15} parent=19 // pred_region
          %s230 = smul.u32 32, %s18
          %s231 = smul.u32 2, %s17
          %p232 = scmp.lt.s32.totalorder %s230, 287
          %s233 = scalar_select %p232, %s230, 287
          %p234 = scmp.lt.s32.totalorder %s231, 1
          %s235 = scalar_select %p234, %s231, 1
          %s236 = smul.addr %s233, 2
          %s237 = sadd.s32 %s235, %s236
          %s238 = smul.addr %s237, 4
          %s239 = scalar_lea.vmem %s1, %s238
          %s240 = smul.u32 32, %s18
          %s241 = smul.u32 2, %s17
        $region62: #{hybrid_loss.15} parent=19 // pred_fallthru
          _
      $region20: #{hybrid_loss.15} parent=5 // pred_fallthru
        _
      %p242 = scmp.le.s32.totalorder 1, %s9
      %p243 = scmp.lt.s32.totalorder %s9, 10
      %p244 = pnand %p242, %p243
      %p245 = pneg %p244
      // Predicated region
      $region63: #{hybrid_loss.15} parent=5 // pred_check
        _
      $region64: #{hybrid_loss.15} parent=5 // pred_check_branch
        %247 = sbr.rel (%p244) target = $region66
      $region65: #{hybrid_loss.15} parent=5 // pred_region
        %s248 = ssub.s32 %s9, 1
        %s249 = sand.u32 %s43, 1
        %s250 = sand.u32 %s43, 1
        %s251 = smul.addr %s250, 40
        %s252 = scalar_lea.vmem [#allocation3], %s251
        // Predicated region
        $region67: #{hybrid_loss.15} parent=65 // pred_check
          %p253 = pneg %p56
        $region68: #{hybrid_loss.15} parent=65 // pred_check_branch
          %255 = sbr.rel (%p253) target = $region70
        $region69: #{hybrid_loss.15} parent=65 // pred_region
          _
        $region70: #{hybrid_loss.15} parent=65 // pred_fallthru
          _
        %s256 = sand.u32 %s43, 1
        %s257 = sand.u32 %s43, 1
        %s258 = smul.addr %s257, 40
        %s259 = scalar_lea.vmem [#allocation3], %s258
        %p260 = pneg %p56
        %p261 = pneg %p53
        %s262 = smul.u32 32, %s21
        %s263 = smul.u32 2, %s20
        %p264 = scmp.lt.s32.totalorder %s262, 287
        %s265 = scalar_select %p264, %s262, 287
        %p266 = scmp.lt.s32.totalorder %s263, 1
        %s267 = scalar_select %p266, %s263, 1
        %s268 = smul.addr %s265, 2
        %s269 = sadd.s32 %s267, %s268
        %s270 = smul.addr %s269, 4
        %s271 = scalar_lea.vmem %s1, %s270
        %p272 = pneg %p84
        %p273 = pneg %p81
        %s274 = smul.u32 2, %s20
        %p275 = scmp.lt.s32.totalorder %s274, 1
        %s276 = scalar_select %p275, %s274, 1
        %s277 = scalar_lea.vmem %s2, %s276
        %p278 = pneg %p110
        %p279 = pneg %p107
        %p280 = pneg %p138
        %p281 = pneg %p135
        %s282 = smul.u32 5, %s19
        %s283 = smul.u32 2, %s20
        %p284 = scmp.lt.s32.totalorder %s282, 4
        %s285 = scalar_select %p284, %s282, 4
        %p286 = scmp.lt.s32.totalorder %s283, 1
        %s287 = scalar_select %p286, %s283, 1
        %s288 = smul.addr %s285, 2
        %s289 = sadd.s32 %s287, %s288
        %s290 = smul.addr %s289, 4
        %s291 = scalar_lea.vmem %s3, %s290
        %s292 = smul.u32 5, %s19
        %s293 = smul.u32 2, %s21
        %s294 = smul.u32 32, %s21
        %s295 = smul.u32 2, %s20
        %p296 = scmp.lt.s32.totalorder %s294, 287
        %s297 = scalar_select %p296, %s294, 287
        %p298 = scmp.lt.s32.totalorder %s295, 1
        %s299 = scalar_select %p298, %s295, 1
        %s300 = smul.addr %s297, 2
        %s301 = sadd.s32 %s299, %s300
        %s302 = smul.addr %s301, 4
        %s303 = scalar_lea.vmem %s1, %s302
        %s304 = smul.u32 32, %s21
        %s305 = smul.u32 2, %s20
        %s306 = smul.u32 2, %s20
        %p307 = scmp.lt.s32.totalorder %s306, 1
        %s308 = scalar_select %p307, %s306, 1
        %s309 = scalar_lea.vmem %s2, %s308
        %s310 = smul.u32 2, %s20
        %s311 = smul.u32 5, %s19
        %s312 = smul.u32 2, %s20
        %p313 = scmp.lt.s32.totalorder %s311, 4
        %s314 = scalar_select %p313, %s311, 4
        %p315 = scmp.lt.s32.totalorder %s312, 1
        %s316 = scalar_select %p315, %s312, 1
        %s317 = smul.addr %s314, 2
        %s318 = sadd.s32 %s316, %s317
        %s319 = smul.addr %s318, 4
        %s320 = scalar_lea.vmem %s3, %s319
        %s321 = smul.u32 5, %s19
        %s322 = smul.u32 2, %s20
        %p323 = scmp.eq.s32.totalorder %s21, 0
        // Predicated region
        $region71: #{hybrid_loss.15} parent=65 // pred_check
          %p324 = pneg %p323
        $region72: #{hybrid_loss.15} parent=65 // pred_check_branch
          %326 = sbr.rel (%p324) target = $region74
        $region73: #{hybrid_loss.15} parent=65 // pred_region
          %327 = vst [vmem:[#allocation2] sm:$0xff] 0.0
          %328 = vst [vmem:[#allocation2 + $0x8] sm:$0xff] 0.0
          %329 = vst [vmem:[#allocation2 + $0x10] sm:$0xff] 0.0
          %330 = vst [vmem:[#allocation2 + $0x18] sm:$0xff] 0.0
          %331 = vst [vmem:[#allocation2 + $0x20] sm:$0xff] 0.0
          %332 = vst [vmem:[#allocation2 + $0x28] sm:$0xff] 0.0
          %333 = vst [vmem:[#allocation2 + $0x30] sm:$0xff] 0.0
          %334 = vst [vmem:[#allocation2 + $0x38] sm:$0xff] 0.0
          %335 = vst [vmem:[#allocation2 + $0x40] sm:$0xff] 0.0
          %336 = vst [vmem:[#allocation2 + $0x48] sm:$0xff] 0.0
        $region74: #{hybrid_loss.15} parent=65 // pred_fallthru
          _
        %v337 = vld [vmem:[#allocation2] sm:$0xff]
        %v338 = vld [vmem:[#allocation2 + $0x8] sm:$0xff]
        %v339 = vld [vmem:[#allocation2 + $0x10] sm:$0xff]
        %v340 = vld [vmem:[#allocation2 + $0x18] sm:$0xff]
        %v341 = vld [vmem:[#allocation2 + $0x20] sm:$0xff]
        %v342 = vld [vmem:[#allocation2 + $0x28] sm:$0xff]
        %v343 = vld [vmem:[#allocation2 + $0x30] sm:$0xff]
        %v344 = vld [vmem:[#allocation2 + $0x38] sm:$0xff]
        %v345 = vld [vmem:[#allocation2 + $0x40] sm:$0xff]
        %v346 = vld [vmem:[#allocation2 + $0x48] sm:$0xff]
        %v347 = vld [vmem:[%s252] sm:$0xff]
        %v348 = vld [vmem:[%s252 + $0x8] sm:$0xff]
        %v349 = vld [vmem:[%s252 + $0x10] sm:$0xff]
        %v350 = vld [vmem:[%s252 + $0x18] sm:$0xff]
        %v351 = vld [vmem:[%s252 + $0x20] sm:$0xff]
        %v352 = vld [vmem:[%s303] sm:$0xff]
        %v353 = vld [vmem:[%s303 + $0x8] sm:$0xff]
        %v354 = vld [vmem:[%s303 + $0x10] sm:$0xff]
        %v355 = vld [vmem:[%s303 + $0x18] sm:$0xff]
        %v356 = vld [vmem:[%s303 + $0x20] sm:$0xff]
        %v357 = vld [vmem:[%s303 + $0x28] sm:$0xff]
        %v358 = vld [vmem:[%s303 + $0x30] sm:$0xff]
        %v359 = vld [vmem:[%s303 + $0x38] sm:$0xff]
        %v360 = vld [vmem:[%s303 + $0x40] sm:$0xff]
        %v361 = vld [vmem:[%s303 + $0x48] sm:$0xff]
        %v362 = vld [vmem:[%s303 + $0x50] sm:$0xff]
        %v363 = vld [vmem:[%s303 + $0x58] sm:$0xff]
        %v364 = vld [vmem:[%s303 + $0x60] sm:$0xff]
        %v365 = vld [vmem:[%s303 + $0x68] sm:$0xff]
        %v366 = vld [vmem:[%s303 + $0x70] sm:$0xff]
        %v367 = vld [vmem:[%s303 + $0x78] sm:$0xff]
        %v368 = vld [vmem:[%s303 + $0x80] sm:$0xff]
        %v369 = vld [vmem:[%s303 + $0x88] sm:$0xff]
        %v370 = vld [vmem:[%s303 + $0x90] sm:$0xff]
        %v371 = vld [vmem:[%s303 + $0x98] sm:$0xff]
        %v372 = vld [vmem:[%s303 + $0xa0] sm:$0xff]
        %v373 = vld [vmem:[%s303 + $0xa8] sm:$0xff]
        %v374 = vld [vmem:[%s303 + $0xb0] sm:$0xff]
        %v375 = vld [vmem:[%s303 + $0xb8] sm:$0xff]
        %v376 = vld [vmem:[%s303 + $0xc0] sm:$0xff]
        %v377 = vld [vmem:[%s303 + $0xc8] sm:$0xff]
        %v378 = vld [vmem:[%s303 + $0xd0] sm:$0xff]
        %v379 = vld [vmem:[%s303 + $0xd8] sm:$0xff]
        %v380 = vld [vmem:[%s303 + $0xe0] sm:$0xff]
        %v381 = vld [vmem:[%s303 + $0xe8] sm:$0xff]
        %v382 = vld [vmem:[%s303 + $0xf0] sm:$0xff]
        %v383 = vld [vmem:[%s303 + $0xf8] sm:$0xff]
        %v389 = vunpack.c.l.b16 %v347
        %v390 = vunpack.c.h.b16 %v347
        %v391 = vunpack.c.l.b16 %v348
        %v392 = vunpack.c.h.b16 %v348
        %v393 = vunpack.c.l.b16 %v349
        %v394 = vunpack.c.h.b16 %v349
        %v395 = vunpack.c.l.b16 %v350
        %v396 = vunpack.c.h.b16 %v350
        %v397 = vunpack.c.l.b16 %v351
        %v398 = vunpack.c.h.b16 %v351
        %v399 = vpack.c.b16 %v391, %v389
        %v400 = vpack.c.b16 %v392, %v390
        %v401 = vpack.c.b16 %v395, %v393
        %v402 = vpack.c.b16 %v396, %v394
        %v403 = vpack.c.b16 %v397, %v397
        %v404 = vpack.c.b16 %v398, %v398
        %v443 = vunpack.c.l.b16 %v352
        %v444 = vunpack.c.h.b16 %v352
        %v445 = vunpack.c.l.b16 %v353
        %v446 = vunpack.c.h.b16 %v353
        %v447 = vunpack.c.l.b16 %v354
        %v448 = vunpack.c.h.b16 %v354
        %v449 = vunpack.c.l.b16 %v355
        %v450 = vunpack.c.h.b16 %v355
        %v451 = vunpack.c.l.b16 %v356
        %v452 = vunpack.c.h.b16 %v356
        %v453 = vunpack.c.l.b16 %v357
        %v454 = vunpack.c.h.b16 %v357
        %v455 = vunpack.c.l.b16 %v358
        %v456 = vunpack.c.h.b16 %v358
        %v457 = vunpack.c.l.b16 %v359
        %v458 = vunpack.c.h.b16 %v359
        %v459 = vunpack.c.l.b16 %v360
        %v460 = vunpack.c.h.b16 %v360
        %v461 = vunpack.c.l.b16 %v361
        %v462 = vunpack.c.h.b16 %v361
        %v463 = vunpack.c.l.b16 %v362
        %v464 = vunpack.c.h.b16 %v362
        %v465 = vunpack.c.l.b16 %v363
        %v466 = vunpack.c.h.b16 %v363
        %v467 = vunpack.c.l.b16 %v364
        %v468 = vunpack.c.h.b16 %v364
        %v469 = vunpack.c.l.b16 %v365
        %v470 = vunpack.c.h.b16 %v365
        %v471 = vunpack.c.l.b16 %v366
        %v472 = vunpack.c.h.b16 %v366
        %v473 = vunpack.c.l.b16 %v367
        %v474 = vunpack.c.h.b16 %v367
        %v475 = vunpack.c.l.b16 %v368
        %v476 = vunpack.c.h.b16 %v368
        %v477 = vunpack.c.l.b16 %v369
        %v478 = vunpack.c.h.b16 %v369
        %v479 = vunpack.c.l.b16 %v370
        %v480 = vunpack.c.h.b16 %v370
        %v481 = vunpack.c.l.b16 %v371
        %v482 = vunpack.c.h.b16 %v371
        %v483 = vunpack.c.l.b16 %v372
        %v484 = vunpack.c.h.b16 %v372
        %v485 = vunpack.c.l.b16 %v373
        %v486 = vunpack.c.h.b16 %v373
        %v487 = vunpack.c.l.b16 %v374
        %v488 = vunpack.c.h.b16 %v374
        %v489 = vunpack.c.l.b16 %v375
        %v490 = vunpack.c.h.b16 %v375
        %v491 = vunpack.c.l.b16 %v376
        %v492 = vunpack.c.h.b16 %v376
        %v493 = vunpack.c.l.b16 %v377
        %v494 = vunpack.c.h.b16 %v377
        %v495 = vunpack.c.l.b16 %v378
        %v496 = vunpack.c.h.b16 %v378
        %v497 = vunpack.c.l.b16 %v379
        %v498 = vunpack.c.h.b16 %v379
        %v499 = vunpack.c.l.b16 %v380
        %v500 = vunpack.c.h.b16 %v380
        %v501 = vunpack.c.l.b16 %v381
        %v502 = vunpack.c.h.b16 %v381
        %v503 = vunpack.c.l.b16 %v382
        %v504 = vunpack.c.h.b16 %v382
        %v505 = vunpack.c.l.b16 %v383
        %v506 = vunpack.c.h.b16 %v383
        %v507 = vpack.c.b16 %v445, %v443
        %v508 = vpack.c.b16 %v446, %v444
        %v509 = vpack.c.b16 %v449, %v447
        %v510 = vpack.c.b16 %v450, %v448
        %v511 = vpack.c.b16 %v453, %v451
        %v512 = vpack.c.b16 %v454, %v452
        %v513 = vpack.c.b16 %v457, %v455
        %v514 = vpack.c.b16 %v458, %v456
        %v515 = vpack.c.b16 %v461, %v459
        %v516 = vpack.c.b16 %v462, %v460
        %v517 = vpack.c.b16 %v465, %v463
        %v518 = vpack.c.b16 %v466, %v464
        %v519 = vpack.c.b16 %v469, %v467
        %v520 = vpack.c.b16 %v470, %v468
        %v521 = vpack.c.b16 %v473, %v471
        %v522 = vpack.c.b16 %v474, %v472
        %v523 = vpack.c.b16 %v477, %v475
        %v524 = vpack.c.b16 %v478, %v476
        %v525 = vpack.c.b16 %v481, %v479
        %v526 = vpack.c.b16 %v482, %v480
        %v527 = vpack.c.b16 %v485, %v483
        %v528 = vpack.c.b16 %v486, %v484
        %v529 = vpack.c.b16 %v489, %v487
        %v530 = vpack.c.b16 %v490, %v488
        %v531 = vpack.c.b16 %v493, %v491
        %v532 = vpack.c.b16 %v494, %v492
        %v533 = vpack.c.b16 %v497, %v495
        %v534 = vpack.c.b16 %v498, %v496
        %v535 = vpack.c.b16 %v501, %v499
        %v536 = vpack.c.b16 %v502, %v500
        %v537 = vpack.c.b16 %v505, %v503
        %v538 = vpack.c.b16 %v506, %v504
        %571 = vmatprep.subr.bf16.mxu0 %v522
        %572 = vmatpush1.bf16.msra.mxu0 %v521
        %573 = vmatprep.subr.bf16.mxu0 %v520
        %574 = vmatpush1.bf16.msra.mxu0 %v519
        %575 = vmatprep.subr.bf16.mxu0 %v518
        %576 = vmatpush1.bf16.msra.mxu0 %v517
        %577 = vmatprep.subr.bf16.mxu0 %v516
        %578 = vmatpush1.bf16.msra.mxu0 %v515
        %579 = vmatprep.subr.bf16.mxu0 %v514
        %580 = vmatpush1.bf16.msra.mxu0 %v513
        %581 = vmatprep.subr.bf16.mxu0 %v512
        %582 = vmatpush1.bf16.msra.mxu0 %v511
        %583 = vmatprep.subr.bf16.mxu0 %v510
        %584 = vmatpush1.bf16.msra.mxu0 %v509
        %585 = vmatprep.subr.bf16.mxu0 %v508
        %586 = vmatpush1.bf16.msra.mxu0 %v507
        %587 = vmatprep.subr.bf16.mxu0 %v538
        %588 = vmatpush2.bf16.msra.mxu0 %v537
        %589 = vmatprep.subr.bf16.mxu0 %v536
        %590 = vmatpush2.bf16.msra.mxu0 %v535
        %591 = vmatprep.subr.bf16.mxu0 %v534
        %592 = vmatpush2.bf16.msra.mxu0 %v533
        %593 = vmatprep.subr.bf16.mxu0 %v532
        %594 = vmatpush2.bf16.msra.mxu0 %v531
        %595 = vmatprep.subr.bf16.mxu0 %v530
        %596 = vmatpush2.bf16.msra.mxu0 %v529
        %597 = vmatprep.subr.bf16.mxu0 %v528
        %598 = vmatpush2.bf16.msra.mxu0 %v527
        %599 = vmatprep.subr.bf16.mxu0 %v526
        %600 = vmatpush2.bf16.msra.mxu0 %v525
        %601 = vmatprep.subr.bf16.mxu0 %v524
        %602 = vmatpush2.bf16.msra.mxu0 %v523
        %603 = vmatprep.mubr.bf16.mxu0 %v400
        %604 = vmatmul.mubr.bf16.gmra.mxu0 %v399
        %v605 = vpop.f32.mrf.mxu0
        %v606 = vadd.f32 0.0, %v605
        %v607 = vpop.f32.mrf.mxu0
        %v608 = vadd.f32 0.0, %v607
        %v609 = vpop.f32.mrf.mxu0
        %v610 = vadd.f32 0.0, %v609
        %v611 = vpop.f32.mrf.mxu0
        %v612 = vadd.f32 0.0, %v611
        %613 = vmatprep.mubr.bf16.mxu0 %v402
        %614 = vmatmul.mubr.bf16.gmra.mxu0 %v401
        %v615 = vpop.f32.mrf.mxu0
        %v616 = vadd.f32 0.0, %v615
        %v617 = vpop.f32.mrf.mxu0
        %v618 = vadd.f32 0.0, %v617
        %v619 = vpop.f32.mrf.mxu0
        %v620 = vadd.f32 0.0, %v619
        %v621 = vpop.f32.mrf.mxu0
        %v622 = vadd.f32 0.0, %v621
        %623 = vmatprep.mubr.bf16.mxu0 %v404
        %624 = vmatmul.mubr.bf16.gmra.mxu0 %v403
        %v625 = vpop.f32.mrf.mxu0
        %v626 = vadd.f32 0.0, %v625
        %v627 = vpop.f32.mrf.mxu0
        %v628 = vadd.f32 0.0, %v627
        %v629 = vpop.f32.mrf.mxu0
        %v630 = vpop.f32.mrf.mxu0
        %631 = vdwg.mxu0
        %v632 = vadd.f32 %v337, %v606
        %v633 = vadd.f32 %v338, %v608
        %v634 = vadd.f32 %v339, %v610
        %v635 = vadd.f32 %v340, %v612
        %v636 = vadd.f32 %v341, %v616
        %v637 = vadd.f32 %v342, %v618
        %v638 = vadd.f32 %v343, %v620
        %v639 = vadd.f32 %v344, %v622
        %v640 = vadd.f32 %v345, %v626
        %v641 = vadd.f32 %v346, %v628
        %642 = vst [vmem:[#allocation2] sm:$0xff] %v632
        %643 = vst [vmem:[#allocation2 + $0x8] sm:$0xff] %v633
        %644 = vst [vmem:[#allocation2 + $0x10] sm:$0xff] %v634
        %645 = vst [vmem:[#allocation2 + $0x18] sm:$0xff] %v635
        %646 = vst [vmem:[#allocation2 + $0x20] sm:$0xff] %v636
        %647 = vst [vmem:[#allocation2 + $0x28] sm:$0xff] %v637
        %648 = vst [vmem:[#allocation2 + $0x30] sm:$0xff] %v638
        %649 = vst [vmem:[#allocation2 + $0x38] sm:$0xff] %v639
        %650 = vst [vmem:[#allocation2 + $0x40] sm:$0xff] %v640
        %651 = vst [vmem:[#allocation2 + $0x48] sm:$0xff] %v641
        %p652 = scmp.eq.s32.totalorder %s21, 8
        // Predicated region
        $region75: #{hybrid_loss.15} parent=65 // pred_check
          %p653 = pneg %p652
        $region76: #{hybrid_loss.15} parent=65 // pred_check_branch
          %655 = sbr.rel (%p653) target = $region78
        $region77: #{hybrid_loss.15} parent=65 // pred_region
          %v656 = vld [vmem:[#allocation2] sm:$0xff]
          %v657 = vld [vmem:[#allocation2 + $0x8] sm:$0xff]
          %v658 = vld [vmem:[#allocation2 + $0x10] sm:$0xff]
          %v659 = vld [vmem:[#allocation2 + $0x18] sm:$0xff]
          %v660 = vld [vmem:[#allocation2 + $0x20] sm:$0xff]
          %v661 = vld [vmem:[#allocation2 + $0x28] sm:$0xff]
          %v662 = vld [vmem:[#allocation2 + $0x30] sm:$0xff]
          %v663 = vld [vmem:[#allocation2 + $0x38] sm:$0xff]
          %v664 = vld [vmem:[#allocation2 + $0x40] sm:$0xff]
          %v665 = vld [vmem:[#allocation2 + $0x48] sm:$0xff]
          %v666 = vld [vmem:[%s309] sm:$0x3]
          %v668 = vlaneseq
          %v669 = vshrl.u32 %v668, 7
          %v670 = vsub.s32 0, %v669
          %v671 = vrot.slane %v666, %v670
          %v672 = vlaneseq
          %v673 = vshrl.u32 %v672, 7
          %v674 = vsub.s32 1, %v673
          %v675 = vrot.slane %v666, %v674
          %v678 = vadd.f32 %v656, %v671
          %v679 = vadd.f32 %v657, %v675
          %v680 = vadd.f32 %v658, %v671
          %v681 = vadd.f32 %v659, %v675
          %v682 = vadd.f32 %v660, %v671
          %v683 = vadd.f32 %v661, %v675
          %v684 = vadd.f32 %v662, %v671
          %v685 = vadd.f32 %v663, %v675
          %v686 = vadd.f32 %v664, %v671
          %v687 = vadd.f32 %v665, %v675
          %v688 = vmax.f32 %v678, 0.0
          %v689 = vmax.f32 %v679, 0.0
          %v690 = vmax.f32 %v680, 0.0
          %v691 = vmax.f32 %v681, 0.0
          %v692 = vmax.f32 %v682, 0.0
          %v693 = vmax.f32 %v683, 0.0
          %v694 = vmax.f32 %v684, 0.0
          %v695 = vmax.f32 %v685, 0.0
          %v696 = vmax.f32 %v686, 0.0
          %v697 = vmax.f32 %v687, 0.0
          %v698 = vpack.c.bf16 %v690, %v688
          %v699 = vpack.c.bf16 %v691, %v689
          %v700 = vpack.c.bf16 %v694, %v692
          %v701 = vpack.c.bf16 %v695, %v693
          %v702 = vpack.c.bf16 %v696, %v696
          %v703 = vpack.c.bf16 %v697, %v697
          %v710 = vunpack.c.l.b16 %v698
          %v711 = vunpack.c.l.b16 %v699
          %v712 = vunpack.c.h.b16 %v698
          %v713 = vunpack.c.h.b16 %v699
          %v714 = vunpack.c.l.b16 %v700
          %v715 = vunpack.c.l.b16 %v701
          %v716 = vunpack.c.h.b16 %v700
          %v717 = vunpack.c.h.b16 %v701
          %v718 = vunpack.c.l.b16 %v702
          %v719 = vunpack.c.l.b16 %v703
          %v720 = vpack.c.b16 %v711, %v710
          %v721 = vpack.c.b16 %v713, %v712
          %v722 = vpack.c.b16 %v715, %v714
          %v723 = vpack.c.b16 %v717, %v716
          %v724 = vpack.c.b16 %v719, %v718
          %730 = vst [vmem:[%s320] sm:$0xff] %v720
          %731 = vst [vmem:[%s320 + $0x8] sm:$0xff] %v721
          %732 = vst [vmem:[%s320 + $0x10] sm:$0xff] %v722
          %733 = vst [vmem:[%s320 + $0x18] sm:$0xff] %v723
          %734 = vst [vmem:[%s320 + $0x20] sm:$0xff] %v724
        $region78: #{hybrid_loss.15} parent=65 // pred_fallthru
          _
        %s735 = smul.u32 5, %s19
        %s736 = smul.u32 2, %s20
        %p737 = scmp.lt.s32.totalorder %s735, 4
        %s738 = scalar_select %p737, %s735, 4
        %p739 = scmp.lt.s32.totalorder %s736, 1
        %s740 = scalar_select %p739, %s736, 1
        %s741 = smul.addr %s738, 2
        %s742 = sadd.s32 %s740, %s741
        %s743 = smul.addr %s742, 4
        %s744 = scalar_lea.vmem %s3, %s743
        // Predicated region
        $region79: #{hybrid_loss.15} parent=65 // pred_check
          %p745 = pneg %p135
        $region80: #{hybrid_loss.15} parent=65 // pred_check_branch
          %747 = sbr.rel (%p745) target = $region82
        $region81: #{hybrid_loss.15} parent=65 // pred_region
          %s748 = smul.u32 5, %s19
          %s749 = smul.u32 2, %s20
        $region82: #{hybrid_loss.15} parent=65 // pred_fallthru
          _
        // Predicated region
        $region83: #{hybrid_loss.15} parent=65 // pred_check
          %p750 = pneg %p135
        $region84: #{hybrid_loss.15} parent=65 // pred_check_branch
          %752 = sbr.rel (%p750) target = $region86
        $region85: #{hybrid_loss.15} parent=65 // pred_region
          %s753 = smul.u32 5, %s19
          %s754 = smul.u32 2, %s20
          %p755 = scmp.lt.s32.totalorder %s753, 4
          %s756 = scalar_select %p755, %s753, 4
          %p757 = scmp.lt.s32.totalorder %s754, 1
          %s758 = scalar_select %p757, %s754, 1
          %s759 = smul.addr %s756, 2
          %s760 = sadd.s32 %s758, %s759
          %s761 = smul.addr %s760, 4
          %s762 = scalar_lea.vmem %s3, %s761
        $region86: #{hybrid_loss.15} parent=65 // pred_fallthru
          _
      $region66: #{hybrid_loss.15} parent=5 // pred_fallthru
        _
      %p763 = scmp.le.s32.totalorder 2, %s9
      // Predicated region
      $region87: #{hybrid_loss.15} parent=5 // pred_check
        %p764 = pneg %p763
      $region88: #{hybrid_loss.15} parent=5 // pred_check_branch
        %766 = sbr.rel (%p764) target = $region90
      $region89: #{hybrid_loss.15} parent=5 // pred_region
        %s767 = ssub.s32 %s9, 2
      $region90: #{hybrid_loss.15} parent=5 // pred_fallthru
        _
    $region6: #{hybrid_loss.15} parent=1 // loop_footer
      %s13 = sadd.s32 1, %s9
    $region7: #{hybrid_loss.15} parent=1 // loop_footer_branch
      %8 = sbr.rel target = $region3
    $region8: #{hybrid_loss.15} parent=1 // loop_exit
      _

// kernel: hybrid_loss.20
$region0: #{hybrid_loss.20}
  #allocation0 [shape = 'u32[]', space=smem, size = 0x4, offset = 0x4, fixed_abs, tag = 'smem constant byte address 0x4 - core index']
  #allocation1 [shape = 'u32[144,128]{1,0:T(1,128)}', space=vmem, size = 0x12000, scoped, tag = 'internal scratch']
  #allocation2 [shape = 'f32[1,128]{1,0:T(1,128)}', space=vmem, size = 0x200, scoped, tag = 'scratch operand']
  %s0 = inlined_call_operand.vmem [shape: bf16[24,256], index: 0, kind: input, shape index: {}]
  %s1 = inlined_call_operand.vmem [shape: bf16[24,256], index: 1, kind: input, shape index: {}]
  %s2 = inlined_call_operand.vmem [shape: f32[256,128], index: 2, kind: input, shape index: {}]
  %s3 = inlined_call_operand.vmem [shape: f32[1,128], index: 3, kind: output, shape index: {}]
  %s4 = sld [smem:[#allocation0]]
  $region30: #{hybrid_loss.20} parent=0
    _
  %s6 = ssub.s32 1, %s4
  %s7 = scalar_select 0, %s6, %s4
  // Predicated region
  $region2: #{hybrid_loss.20} parent=0 // pred_check
    _
  $region3: #{hybrid_loss.20} parent=0 // pred_check_branch
    %9 = sbr.rel (0) target = $region5
  $region4: #{hybrid_loss.20} parent=0 // pred_region
    _
  $region5: #{hybrid_loss.20} parent=0 // pred_fallthru
    _
  // Predicated region
  $region6: #{hybrid_loss.20} parent=0 // pred_check
    _
  $region7: #{hybrid_loss.20} parent=0 // pred_check_branch
    %11 = sbr.rel (0) target = $region9
  $region8: #{hybrid_loss.20} parent=0 // pred_region
    _
  $region9: #{hybrid_loss.20} parent=0 // pred_fallthru
    _
  // Predicated region
  $region10: #{hybrid_loss.20} parent=0 // pred_check
    _
  $region11: #{hybrid_loss.20} parent=0 // pred_check_branch
    %13 = sbr.rel (0) target = $region13
  $region12: #{hybrid_loss.20} parent=0 // pred_region
    _
  $region13: #{hybrid_loss.20} parent=0 // pred_fallthru
    _
  %p14 = scmp.eq.s32.totalorder 0, 0
  // Predicated region
  $region14: #{hybrid_loss.20} parent=0 // pred_check
    %p15 = pneg %p14
  $region15: #{hybrid_loss.20} parent=0 // pred_check_branch
    %17 = sbr.rel (%p15) target = $region17
  $region16: #{hybrid_loss.20} parent=0 // pred_region
    %18 = vst [vmem:[#allocation2] sm:$0x1] 0.0
  $region17: #{hybrid_loss.20} parent=0 // pred_fallthru
    _
  %v19 = vld [vmem:[%s0] sm:$0xff]
  %v20 = vld [vmem:[%s0 + $0x8] sm:$0xff]
  %v21 = vld [vmem:[%s0 + $0x10] sm:$0xff]
  %v22 = vunpack.c.l.bf16 %v19
  %v23 = vunpack.c.h.bf16 %v19
  %v24 = vunpack.c.l.bf16 %v20
  %v25 = vunpack.c.h.bf16 %v20
  %v26 = vunpack.c.l.bf16 %v21
  %v27 = vunpack.c.h.bf16 %v21
  %v28 = vld [vmem:[%s1] sm:$0xff]
  %v29 = vld [vmem:[%s1 + $0x8] sm:$0xff]
  %v30 = vld [vmem:[%s1 + $0x10] sm:$0xff]
  %v31 = vunpack.c.l.bf16 %v28
  %v32 = vunpack.c.h.bf16 %v28
  %v33 = vunpack.c.l.bf16 %v29
  %v34 = vunpack.c.h.bf16 %v29
  %v35 = vunpack.c.l.bf16 %v30
  %v36 = vunpack.c.h.bf16 %v30
  %v37 = vmul.f32 %v22, %v22
  %v38 = vmul.f32 %v23, %v23
  %v39 = vmul.f32 %v24, %v24
  %v40 = vmul.f32 %v25, %v25
  %v41 = vmul.f32 %v26, %v26
  %v42 = vmul.f32 %v27, %v27
  %v43 = vadd.f32 %v37, %v38
  %44 = vadd.xlane.f32.xlu0 %v43
  %v45 = vpop.xlane.xlu0 %44
  %v46 = vadd.f32 %v39, %v40
  %47 = vadd.xlane.f32.xlu0 %v46
  %v48 = vpop.xlane.xlu0 %47
  %v49 = vadd.f32 %v41, %v42
  %50 = vadd.xlane.f32.xlu0 %v49
  %v51 = vpop.xlane.xlu0 %50
  %v52 = vrsqrt.pop %v45
  %v53 = vmul.f32 %v45, %v52
  %vm54 = vcmp.eq.f32.partialorder %v45, inf
  %v55 = vsel %vm54, %v45, %v53
  %vm56 = vcmp.eq.f32.partialorder %v45, 0.0
  %v57 = vand.u32 %v45, 2147483648
  %v58 = vsel %vm56, %v57, %v55
  %v59 = vrsqrt.pop %v48
  %v60 = vmul.f32 %v48, %v59
  %vm61 = vcmp.eq.f32.partialorder %v48, inf
  %v62 = vsel %vm61, %v48, %v60
  %vm63 = vcmp.eq.f32.partialorder %v48, 0.0
  %v64 = vand.u32 %v48, 2147483648
  %v65 = vsel %vm63, %v64, %v62
  %v66 = vrsqrt.pop %v51
  %v67 = vmul.f32 %v51, %v66
  %vm68 = vcmp.eq.f32.partialorder %v51, inf
  %v69 = vsel %vm68, %v51, %v67
  %vm70 = vcmp.eq.f32.partialorder %v51, 0.0
  %v71 = vand.u32 %v51, 2147483648
  %v72 = vsel %vm70, %v71, %v69
  %v73 = vadd.f32 %v58, 1e-10
  %v74 = vadd.f32 %v65, 1e-10
  %v75 = vadd.f32 %v72, 1e-10
  %v76 = vrcp.pop %v73
  %v77 = vrcp.pop %v74
  %v78 = vrcp.pop %v75
  %v79 = vmul.f32 %v31, %v31
  %v80 = vmul.f32 %v32, %v32
  %v81 = vmul.f32 %v33, %v33
  %v82 = vmul.f32 %v34, %v34
  %v83 = vmul.f32 %v35, %v35
  %v84 = vmul.f32 %v36, %v36
  %v85 = vadd.f32 %v79, %v80
  %86 = vadd.xlane.f32.xlu0 %v85
  %v87 = vpop.xlane.xlu0 %86
  %v88 = vadd.f32 %v81, %v82
  %89 = vadd.xlane.f32.xlu0 %v88
  %v90 = vpop.xlane.xlu0 %89
  %v91 = vadd.f32 %v83, %v84
  %92 = vadd.xlane.f32.xlu0 %v91
  %v93 = vpop.xlane.xlu0 %92
  %v94 = vrsqrt.pop %v87
  %v95 = vmul.f32 %v87, %v94
  %vm96 = vcmp.eq.f32.partialorder %v87, inf
  %v97 = vsel %vm96, %v87, %v95
  %vm98 = vcmp.eq.f32.partialorder %v87, 0.0
  %v99 = vand.u32 %v87, 2147483648
  %v100 = vsel %vm98, %v99, %v97
  %v101 = vrsqrt.pop %v90
  %v102 = vmul.f32 %v90, %v101
  %vm103 = vcmp.eq.f32.partialorder %v90, inf
  %v104 = vsel %vm103, %v90, %v102
  %vm105 = vcmp.eq.f32.partialorder %v90, 0.0
  %v106 = vand.u32 %v90, 2147483648
  %v107 = vsel %vm105, %v106, %v104
  %v108 = vrsqrt.pop %v93
  %v109 = vmul.f32 %v93, %v108
  %vm110 = vcmp.eq.f32.partialorder %v93, inf
  %v111 = vsel %vm110, %v93, %v109
  %vm112 = vcmp.eq.f32.partialorder %v93, 0.0
  %v113 = vand.u32 %v93, 2147483648
  %v114 = vsel %vm112, %v113, %v111
  %v115 = vadd.f32 %v100, 1e-10
  %v116 = vadd.f32 %v107, 1e-10
  %v117 = vadd.f32 %v114, 1e-10
  %v118 = vrcp.pop %v115
  %v119 = vrcp.pop %v116
  %v120 = vrcp.pop %v117
  %v121 = vmul.f32 %v22, %v76
  %v122 = vmul.f32 %v23, %v76
  %v123 = vmul.f32 %v24, %v77
  %v124 = vmul.f32 %v25, %v77
  %v125 = vmul.f32 %v26, %v78
  %v126 = vmul.f32 %v27, %v78
  %v127 = vmul.f32 %v31, %v118
  %v128 = vmul.f32 %v32, %v118
  %v129 = vmul.f32 %v33, %v119
  %v130 = vmul.f32 %v34, %v119
  %v131 = vmul.f32 %v35, %v120
  %v132 = vmul.f32 %v36, %v120
  %v133 = vsub.f32 %v121, %v127
  %v134 = vsub.f32 %v122, %v128
  %v135 = vsub.f32 %v123, %v129
  %v136 = vsub.f32 %v124, %v130
  %v137 = vsub.f32 %v125, %v131
  %v138 = vsub.f32 %v126, %v132
  %v139 = vmul.f32 %v133, %v133
  %v140 = vmul.f32 %v134, %v134
  %v141 = vmul.f32 %v135, %v135
  %v142 = vmul.f32 %v136, %v136
  %v143 = vmul.f32 %v137, %v137
  %v144 = vmul.f32 %v138, %v138
  %v145 = vld [vmem:[%s2] sm:$0xff]
  %v146 = vld [vmem:[%s2 + $0x8] sm:$0xff]
  %v147 = vld [vmem:[%s2 + $0x10] sm:$0xff]
  %v148 = vld [vmem:[%s2 + $0x18] sm:$0xff]
  %v149 = vld [vmem:[%s2 + $0x20] sm:$0xff]
  %v150 = vld [vmem:[%s2 + $0x28] sm:$0xff]
  %v151 = vld [vmem:[%s2 + $0x30] sm:$0xff]
  %v152 = vld [vmem:[%s2 + $0x38] sm:$0xff]
  %v153 = vld [vmem:[%s2 + $0x40] sm:$0xff]
  %v154 = vld [vmem:[%s2 + $0x48] sm:$0xff]
  %v155 = vld [vmem:[%s2 + $0x50] sm:$0xff]
  %v156 = vld [vmem:[%s2 + $0x58] sm:$0xff]
  %v157 = vld [vmem:[%s2 + $0x60] sm:$0xff]
  %v158 = vld [vmem:[%s2 + $0x68] sm:$0xff]
  %v159 = vld [vmem:[%s2 + $0x70] sm:$0xff]
  %v160 = vld [vmem:[%s2 + $0x78] sm:$0xff]
  %v161 = vld [vmem:[%s2 + $0x80] sm:$0xff]
  %v162 = vld [vmem:[%s2 + $0x88] sm:$0xff]
  %v163 = vld [vmem:[%s2 + $0x90] sm:$0xff]
  %v164 = vld [vmem:[%s2 + $0x98] sm:$0xff]
  %v165 = vld [vmem:[%s2 + $0xa0] sm:$0xff]
  %v166 = vld [vmem:[%s2 + $0xa8] sm:$0xff]
  %v167 = vld [vmem:[%s2 + $0xb0] sm:$0xff]
  %v168 = vld [vmem:[%s2 + $0xb8] sm:$0xff]
  %v169 = vld [vmem:[%s2 + $0xc0] sm:$0xff]
  %v170 = vld [vmem:[%s2 + $0xc8] sm:$0xff]
  %v171 = vld [vmem:[%s2 + $0xd0] sm:$0xff]
  %v172 = vld [vmem:[%s2 + $0xd8] sm:$0xff]
  %v173 = vld [vmem:[%s2 + $0xe0] sm:$0xff]
  %v174 = vld [vmem:[%s2 + $0xe8] sm:$0xff]
  %v175 = vld [vmem:[%s2 + $0xf0] sm:$0xff]
  %v176 = vld [vmem:[%s2 + $0xf8] sm:$0xff]
  %177 = vmatprep.subr.mxu0 0.0
  %178 = vmatpush1.msra.mxu0 %v160
  %179 = vmatprep.subr.mxu0 0.0
  %180 = vmatpush1.msra.mxu0 %v159
  %181 = vmatprep.subr.mxu0 0.0
  %182 = vmatpush1.msra.mxu0 %v158
  %183 = vmatprep.subr.mxu0 0.0
  %184 = vmatpush1.msra.mxu0 %v157
  %185 = vmatprep.subr.mxu0 0.0
  %186 = vmatpush1.msra.mxu0 %v156
  %187 = vmatprep.subr.mxu0 0.0
  %188 = vmatpush1.msra.mxu0 %v155
  %189 = vmatprep.subr.mxu0 0.0
  %190 = vmatpush1.msra.mxu0 %v154
  %191 = vmatprep.subr.mxu0 0.0
  %192 = vmatpush1.msra.mxu0 %v153
  %193 = vmatprep.subr.mxu0 0.0
  %194 = vmatpush1.msra.mxu0 %v152
  %195 = vmatprep.subr.mxu0 0.0
  %196 = vmatpush1.msra.mxu0 %v151
  %197 = vmatprep.subr.mxu0 0.0
  %198 = vmatpush1.msra.mxu0 %v150
  %199 = vmatprep.subr.mxu0 0.0
  %200 = vmatpush1.msra.mxu0 %v149
  %201 = vmatprep.subr.mxu0 0.0
  %202 = vmatpush1.msra.mxu0 %v148
  %203 = vmatprep.subr.mxu0 0.0
  %204 = vmatpush1.msra.mxu0 %v147
  %205 = vmatprep.subr.mxu0 0.0
  %206 = vmatpush1.msra.mxu0 %v146
  %207 = vmatprep.subr.mxu0 0.0
  %208 = vmatpush1.msra.mxu0 %v145
  %209 = vmatprep.subr.mxu0 0.0
  %210 = vmatpush2.msra.mxu0 %v176
  %211 = vmatprep.subr.mxu0 0.0
  %212 = vmatpush2.msra.mxu0 %v175
  %213 = vmatprep.subr.mxu0 0.0
  %214 = vmatpush2.msra.mxu0 %v174
  %215 = vmatprep.subr.mxu0 0.0
  %216 = vmatpush2.msra.mxu0 %v173
  %217 = vmatprep.subr.mxu0 0.0
  %218 = vmatpush2.msra.mxu0 %v172
  %219 = vmatprep.subr.mxu0 0.0
  %220 = vmatpush2.msra.mxu0 %v171
  %221 = vmatprep.subr.mxu0 0.0
  %222 = vmatpush2.msra.mxu0 %v170
  %223 = vmatprep.subr.mxu0 0.0
  %224 = vmatpush2.msra.mxu0 %v169
  %225 = vmatprep.subr.mxu0 0.0
  %226 = vmatpush2.msra.mxu0 %v168
  %227 = vmatprep.subr.mxu0 0.0
  %228 = vmatpush2.msra.mxu0 %v167
  %229 = vmatprep.subr.mxu0 0.0
  %230 = vmatpush2.msra.mxu0 %v166
  %231 = vmatprep.subr.mxu0 0.0
  %232 = vmatpush2.msra.mxu0 %v165
  %233 = vmatprep.subr.mxu0 0.0
  %234 = vmatpush2.msra.mxu0 %v164
  %235 = vmatprep.subr.mxu0 0.0
  %236 = vmatpush2.msra.mxu0 %v163
  %237 = vmatprep.subr.mxu0 0.0
  %238 = vmatpush2.msra.mxu0 %v162
  %239 = vmatprep.subr.mxu0 0.0
  %240 = vmatpush2.msra.mxu0 %v161
  %241 = vmatprep.mubr.f32.mxu0 %v140
  %242 = vmatmul.mubr.f32.gmra.mxu0 %v139
  %v243 = vpop.f32.mrf.mxu0
  %v244 = vadd.f32 0.0, %v243
  %v245 = vpop.f32.mrf.mxu0
  %246 = vmatprep.mubr.f32.mxu0 %v142
  %247 = vmatmul.mubr.f32.gmra.mxu0 %v141
  %v248 = vpop.f32.mrf.mxu0
  %v249 = vadd.f32 0.0, %v248
  %v250 = vpop.f32.mrf.mxu0
  %251 = vmatprep.mubr.f32.mxu0 %v144
  %252 = vmatmul.mubr.f32.gmra.mxu0 %v143
  %v253 = vpop.f32.mrf.mxu0
  %v254 = vadd.f32 0.0, %v253
  %v255 = vpop.f32.mrf.mxu0
  %256 = vdwg.mxu0
  %v257 = vld [vmem:[#allocation2] sm:$0x1]
  %v258 = vadd.f32 %v244, %v249
  %v259 = vadd.f32 %v258, %v254
  %v260 = vrot.slane %v259, 4
  %v261 = vadd.f32 %v259, %v260
  %v262 = vrot.slane %v261, 2
  %v263 = vadd.f32 %v261, %v262
  %v264 = vrot.slane %v263, 1
  %v265 = vadd.f32 %v263, %v264
  %v266 = vadd.f32 %v257, %v265
  %267 = vst [vmem:[#allocation2] sm:$0x1] %v266
  // Predicated region
  $region18: #{hybrid_loss.20} parent=0 // pred_check
    %p268 = pneg %p14
  $region19: #{hybrid_loss.20} parent=0 // pred_check_branch
    %270 = sbr.rel (%p268) target = $region21
  $region20: #{hybrid_loss.20} parent=0 // pred_region
    %v271 = vld [vmem:[#allocation2] sm:$0x1]
    %272 = vst [vmem:[%s3] sm:$0x1] %v271
  $region21: #{hybrid_loss.20} parent=0 // pred_fallthru
    _
  // Predicated region
  $region22: #{hybrid_loss.20} parent=0 // pred_check
    _
  $region23: #{hybrid_loss.20} parent=0 // pred_check_branch
    %274 = sbr.rel (0) target = $region25
  $region24: #{hybrid_loss.20} parent=0 // pred_region
    _
  $region25: #{hybrid_loss.20} parent=0 // pred_fallthru
    _
  // Predicated region
  $region26: #{hybrid_loss.20} parent=0 // pred_check
    _
  $region27: #{hybrid_loss.20} parent=0 // pred_check_branch
    %276 = sbr.rel (0) target = $region29
  $region28: #{hybrid_loss.20} parent=0 // pred_region
    _
  $region29: #{hybrid_loss.20} parent=0 // pred_fallthru
    _

// kernel: hybrid_loss.18
$region0: #{hybrid_loss.18}
  #allocation0 [shape = 'u32[]', space=smem, size = 0x4, offset = 0x4, fixed_abs, tag = 'smem constant byte address 0x4 - core index']
  #allocation1 [shape = 'u32[144,128]{1,0:T(1,128)}', space=vmem, size = 0x12000, scoped, tag = 'internal scratch']
  #allocation2 [shape = 'f32[1,128]{1,0:T(1,128)}', space=vmem, size = 0x200, scoped, tag = 'scratch operand']
  %s0 = inlined_call_operand.vmem [shape: bf16[24,384], index: 0, kind: input, shape index: {}]
  %s1 = inlined_call_operand.vmem [shape: bf16[24,384], index: 1, kind: input, shape index: {}]
  %s2 = inlined_call_operand.vmem [shape: f32[384,128], index: 2, kind: input, shape index: {}]
  %s3 = inlined_call_operand.vmem [shape: f32[1,128], index: 3, kind: output, shape index: {}]
  %s4 = sld [smem:[#allocation0]]
  $region30: #{hybrid_loss.18} parent=0
    _
  %s6 = ssub.s32 1, %s4
  %s7 = scalar_select 0, %s6, %s4
  // Predicated region
  $region2: #{hybrid_loss.18} parent=0 // pred_check
    _
  $region3: #{hybrid_loss.18} parent=0 // pred_check_branch
    %9 = sbr.rel (0) target = $region5
  $region4: #{hybrid_loss.18} parent=0 // pred_region
    _
  $region5: #{hybrid_loss.18} parent=0 // pred_fallthru
    _
  // Predicated region
  $region6: #{hybrid_loss.18} parent=0 // pred_check
    _
  $region7: #{hybrid_loss.18} parent=0 // pred_check_branch
    %11 = sbr.rel (0) target = $region9
  $region8: #{hybrid_loss.18} parent=0 // pred_region
    _
  $region9: #{hybrid_loss.18} parent=0 // pred_fallthru
    _
  // Predicated region
  $region10: #{hybrid_loss.18} parent=0 // pred_check
    _
  $region11: #{hybrid_loss.18} parent=0 // pred_check_branch
    %13 = sbr.rel (0) target = $region13
  $region12: #{hybrid_loss.18} parent=0 // pred_region
    _
  $region13: #{hybrid_loss.18} parent=0 // pred_fallthru
    _
  %p14 = scmp.eq.s32.totalorder 0, 0
  // Predicated region
  $region14: #{hybrid_loss.18} parent=0 // pred_check
    %p15 = pneg %p14
  $region15: #{hybrid_loss.18} parent=0 // pred_check_branch
    %17 = sbr.rel (%p15) target = $region17
  $region16: #{hybrid_loss.18} parent=0 // pred_region
    %18 = vst [vmem:[#allocation2] sm:$0x1] 0.0
  $region17: #{hybrid_loss.18} parent=0 // pred_fallthru
    _
  %v19 = vld [vmem:[%s0] sm:$0xff]
  %v20 = vld [vmem:[%s0 + $0x8] sm:$0xf]
  %v21 = vld [vmem:[%s0 + $0xc] sm:$0xff]
  %v22 = vld [vmem:[%s0 + $0x14] sm:$0xf]
  %v23 = vld [vmem:[%s0 + $0x18] sm:$0xff]
  %v24 = vld [vmem:[%s0 + $0x20] sm:$0xf]
  %v25 = vunpack.c.l.bf16 %v19
  %v26 = vunpack.c.h.bf16 %v19
  %v27 = vunpack.c.l.bf16 %v20
  %v28 = vunpack.c.l.bf16 %v21
  %v29 = vunpack.c.h.bf16 %v21
  %v30 = vunpack.c.l.bf16 %v22
  %v31 = vunpack.c.l.bf16 %v23
  %v32 = vunpack.c.h.bf16 %v23
  %v33 = vunpack.c.l.bf16 %v24
  %v34 = vld [vmem:[%s1] sm:$0xff]
  %v35 = vld [vmem:[%s1 + $0x8] sm:$0xf]
  %v36 = vld [vmem:[%s1 + $0xc] sm:$0xff]
  %v37 = vld [vmem:[%s1 + $0x14] sm:$0xf]
  %v38 = vld [vmem:[%s1 + $0x18] sm:$0xff]
  %v39 = vld [vmem:[%s1 + $0x20] sm:$0xf]
  %v40 = vunpack.c.l.bf16 %v34
  %v41 = vunpack.c.h.bf16 %v34
  %v42 = vunpack.c.l.bf16 %v35
  %v43 = vunpack.c.l.bf16 %v36
  %v44 = vunpack.c.h.bf16 %v36
  %v45 = vunpack.c.l.bf16 %v37
  %v46 = vunpack.c.l.bf16 %v38
  %v47 = vunpack.c.h.bf16 %v38
  %v48 = vunpack.c.l.bf16 %v39
  %v49 = vmul.f32 %v25, %v25
  %v50 = vmul.f32 %v26, %v26
  %v51 = vmul.f32 %v27, %v27
  %v52 = vmul.f32 %v28, %v28
  %v53 = vmul.f32 %v29, %v29
  %v54 = vmul.f32 %v30, %v30
  %v55 = vmul.f32 %v31, %v31
  %v56 = vmul.f32 %v32, %v32
  %v57 = vmul.f32 %v33, %v33
  %v58 = vadd.f32 %v49, %v50
  %v59 = vadd.f32 %v58, %v51
  %60 = vadd.xlane.f32.xlu0 %v59
  %v61 = vpop.xlane.xlu0 %60
  %v62 = vadd.f32 %v52, %v53
  %v63 = vadd.f32 %v62, %v54
  %64 = vadd.xlane.f32.xlu0 %v63
  %v65 = vpop.xlane.xlu0 %64
  %v66 = vadd.f32 %v55, %v56
  %v67 = vadd.f32 %v66, %v57
  %68 = vadd.xlane.f32.xlu0 %v67
  %v69 = vpop.xlane.xlu0 %68
  %v70 = vrsqrt.pop %v61
  %v71 = vmul.f32 %v61, %v70
  %vm72 = vcmp.eq.f32.partialorder %v61, inf
  %v73 = vsel %vm72, %v61, %v71
  %vm74 = vcmp.eq.f32.partialorder %v61, 0.0
  %v75 = vand.u32 %v61, 2147483648
  %v76 = vsel %vm74, %v75, %v73
  %v77 = vrsqrt.pop %v65
  %v78 = vmul.f32 %v65, %v77
  %vm79 = vcmp.eq.f32.partialorder %v65, inf
  %v80 = vsel %vm79, %v65, %v78
  %vm81 = vcmp.eq.f32.partialorder %v65, 0.0
  %v82 = vand.u32 %v65, 2147483648
  %v83 = vsel %vm81, %v82, %v80
  %v84 = vrsqrt.pop %v69
  %v85 = vmul.f32 %v69, %v84
  %vm86 = vcmp.eq.f32.partialorder %v69, inf
  %v87 = vsel %vm86, %v69, %v85
  %vm88 = vcmp.eq.f32.partialorder %v69, 0.0
  %v89 = vand.u32 %v69, 2147483648
  %v90 = vsel %vm88, %v89, %v87
  %v91 = vadd.f32 %v76, 1e-10
  %v92 = vadd.f32 %v83, 1e-10
  %v93 = vadd.f32 %v90, 1e-10
  %v94 = vrcp.pop %v91
  %v95 = vrcp.pop %v92
  %v96 = vrcp.pop %v93
  %v97 = vmul.f32 %v40, %v40
  %v98 = vmul.f32 %v41, %v41
  %v99 = vmul.f32 %v42, %v42
  %v100 = vmul.f32 %v43, %v43
  %v101 = vmul.f32 %v44, %v44
  %v102 = vmul.f32 %v45, %v45
  %v103 = vmul.f32 %v46, %v46
  %v104 = vmul.f32 %v47, %v47
  %v105 = vmul.f32 %v48, %v48
  %v106 = vadd.f32 %v97, %v98
  %v107 = vadd.f32 %v106, %v99
  %108 = vadd.xlane.f32.xlu0 %v107
  %v109 = vpop.xlane.xlu0 %108
  %v110 = vadd.f32 %v100, %v101
  %v111 = vadd.f32 %v110, %v102
  %112 = vadd.xlane.f32.xlu0 %v111
  %v113 = vpop.xlane.xlu0 %112
  %v114 = vadd.f32 %v103, %v104
  %v115 = vadd.f32 %v114, %v105
  %116 = vadd.xlane.f32.xlu0 %v115
  %v117 = vpop.xlane.xlu0 %116
  %v118 = vrsqrt.pop %v109
  %v119 = vmul.f32 %v109, %v118
  %vm120 = vcmp.eq.f32.partialorder %v109, inf
  %v121 = vsel %vm120, %v109, %v119
  %vm122 = vcmp.eq.f32.partialorder %v109, 0.0
  %v123 = vand.u32 %v109, 2147483648
  %v124 = vsel %vm122, %v123, %v121
  %v125 = vrsqrt.pop %v113
  %v126 = vmul.f32 %v113, %v125
  %vm127 = vcmp.eq.f32.partialorder %v113, inf
  %v128 = vsel %vm127, %v113, %v126
  %vm129 = vcmp.eq.f32.partialorder %v113, 0.0
  %v130 = vand.u32 %v113, 2147483648
  %v131 = vsel %vm129, %v130, %v128
  %v132 = vrsqrt.pop %v117
  %v133 = vmul.f32 %v117, %v132
  %vm134 = vcmp.eq.f32.partialorder %v117, inf
  %v135 = vsel %vm134, %v117, %v133
  %vm136 = vcmp.eq.f32.partialorder %v117, 0.0
  %v137 = vand.u32 %v117, 2147483648
  %v138 = vsel %vm136, %v137, %v135
  %v139 = vadd.f32 %v124, 1e-10
  %v140 = vadd.f32 %v131, 1e-10
  %v141 = vadd.f32 %v138, 1e-10
  %v142 = vrcp.pop %v139
  %v143 = vrcp.pop %v140
  %v144 = vrcp.pop %v141
  %v145 = vmul.f32 %v25, %v94
  %v146 = vmul.f32 %v26, %v94
  %v147 = vmul.f32 %v27, %v94
  %v148 = vmul.f32 %v28, %v95
  %v149 = vmul.f32 %v29, %v95
  %v150 = vmul.f32 %v30, %v95
  %v151 = vmul.f32 %v31, %v96
  %v152 = vmul.f32 %v32, %v96
  %v153 = vmul.f32 %v33, %v96
  %v154 = vmul.f32 %v40, %v142
  %v155 = vmul.f32 %v41, %v142
  %v156 = vmul.f32 %v42, %v142
  %v157 = vmul.f32 %v43, %v143
  %v158 = vmul.f32 %v44, %v143
  %v159 = vmul.f32 %v45, %v143
  %v160 = vmul.f32 %v46, %v144
  %v161 = vmul.f32 %v47, %v144
  %v162 = vmul.f32 %v48, %v144
  %v163 = vsub.f32 %v145, %v154
  %v164 = vsub.f32 %v146, %v155
  %v165 = vsub.f32 %v147, %v156
  %v166 = vsub.f32 %v148, %v157
  %v167 = vsub.f32 %v149, %v158
  %v168 = vsub.f32 %v150, %v159
  %v169 = vsub.f32 %v151, %v160
  %v170 = vsub.f32 %v152, %v161
  %v171 = vsub.f32 %v153, %v162
  %v172 = vmul.f32 %v163, %v163
  %v173 = vmul.f32 %v164, %v164
  %v174 = vmul.f32 %v165, %v165
  %v175 = vmul.f32 %v166, %v166
  %v176 = vmul.f32 %v167, %v167
  %v177 = vmul.f32 %v168, %v168
  %v178 = vmul.f32 %v169, %v169
  %v179 = vmul.f32 %v170, %v170
  %v180 = vmul.f32 %v171, %v171
  %v181 = vld [vmem:[%s2] sm:$0xff]
  %v182 = vld [vmem:[%s2 + $0x8] sm:$0xff]
  %v183 = vld [vmem:[%s2 + $0x10] sm:$0xff]
  %v184 = vld [vmem:[%s2 + $0x18] sm:$0xff]
  %v185 = vld [vmem:[%s2 + $0x20] sm:$0xff]
  %v186 = vld [vmem:[%s2 + $0x28] sm:$0xff]
  %v187 = vld [vmem:[%s2 + $0x30] sm:$0xff]
  %v188 = vld [vmem:[%s2 + $0x38] sm:$0xff]
  %v189 = vld [vmem:[%s2 + $0x40] sm:$0xff]
  %v190 = vld [vmem:[%s2 + $0x48] sm:$0xff]
  %v191 = vld [vmem:[%s2 + $0x50] sm:$0xff]
  %v192 = vld [vmem:[%s2 + $0x58] sm:$0xff]
  %v193 = vld [vmem:[%s2 + $0x60] sm:$0xff]
  %v194 = vld [vmem:[%s2 + $0x68] sm:$0xff]
  %v195 = vld [vmem:[%s2 + $0x70] sm:$0xff]
  %v196 = vld [vmem:[%s2 + $0x78] sm:$0xff]
  %v197 = vld [vmem:[%s2 + $0x80] sm:$0xff]
  %v198 = vld [vmem:[%s2 + $0x88] sm:$0xff]
  %v199 = vld [vmem:[%s2 + $0x90] sm:$0xff]
  %v200 = vld [vmem:[%s2 + $0x98] sm:$0xff]
  %v201 = vld [vmem:[%s2 + $0xa0] sm:$0xff]
  %v202 = vld [vmem:[%s2 + $0xa8] sm:$0xff]
  %v203 = vld [vmem:[%s2 + $0xb0] sm:$0xff]
  %v204 = vld [vmem:[%s2 + $0xb8] sm:$0xff]
  %v205 = vld [vmem:[%s2 + $0xc0] sm:$0xff]
  %v206 = vld [vmem:[%s2 + $0xc8] sm:$0xff]
  %v207 = vld [vmem:[%s2 + $0xd0] sm:$0xff]
  %v208 = vld [vmem:[%s2 + $0xd8] sm:$0xff]
  %v209 = vld [vmem:[%s2 + $0xe0] sm:$0xff]
  %v210 = vld [vmem:[%s2 + $0xe8] sm:$0xff]
  %v211 = vld [vmem:[%s2 + $0xf0] sm:$0xff]
  %v212 = vld [vmem:[%s2 + $0xf8] sm:$0xff]
  %v213 = vld [vmem:[%s2 + $0x100] sm:$0xff]
  %v214 = vld [vmem:[%s2 + $0x108] sm:$0xff]
  %v215 = vld [vmem:[%s2 + $0x110] sm:$0xff]
  %v216 = vld [vmem:[%s2 + $0x118] sm:$0xff]
  %v217 = vld [vmem:[%s2 + $0x120] sm:$0xff]
  %v218 = vld [vmem:[%s2 + $0x128] sm:$0xff]
  %v219 = vld [vmem:[%s2 + $0x130] sm:$0xff]
  %v220 = vld [vmem:[%s2 + $0x138] sm:$0xff]
  %v221 = vld [vmem:[%s2 + $0x140] sm:$0xff]
  %v222 = vld [vmem:[%s2 + $0x148] sm:$0xff]
  %v223 = vld [vmem:[%s2 + $0x150] sm:$0xff]
  %v224 = vld [vmem:[%s2 + $0x158] sm:$0xff]
  %v225 = vld [vmem:[%s2 + $0x160] sm:$0xff]
  %v226 = vld [vmem:[%s2 + $0x168] sm:$0xff]
  %v227 = vld [vmem:[%s2 + $0x170] sm:$0xff]
  %v228 = vld [vmem:[%s2 + $0x178] sm:$0xff]
  %229 = vmatprep.subr.mxu0 0.0
  %230 = vmatpush1.msra.mxu0 %v196
  %231 = vmatprep.subr.mxu0 0.0
  %232 = vmatpush1.msra.mxu0 %v195
  %233 = vmatprep.subr.mxu0 0.0
  %234 = vmatpush1.msra.mxu0 %v194
  %235 = vmatprep.subr.mxu0 0.0
  %236 = vmatpush1.msra.mxu0 %v193
  %237 = vmatprep.subr.mxu0 0.0
  %238 = vmatpush1.msra.mxu0 %v192
  %239 = vmatprep.subr.mxu0 0.0
  %240 = vmatpush1.msra.mxu0 %v191
  %241 = vmatprep.subr.mxu0 0.0
  %242 = vmatpush1.msra.mxu0 %v190
  %243 = vmatprep.subr.mxu0 0.0
  %244 = vmatpush1.msra.mxu0 %v189
  %245 = vmatprep.subr.mxu0 0.0
  %246 = vmatpush1.msra.mxu0 %v188
  %247 = vmatprep.subr.mxu0 0.0
  %248 = vmatpush1.msra.mxu0 %v187
  %249 = vmatprep.subr.mxu0 0.0
  %250 = vmatpush1.msra.mxu0 %v186
  %251 = vmatprep.subr.mxu0 0.0
  %252 = vmatpush1.msra.mxu0 %v185
  %253 = vmatprep.subr.mxu0 0.0
  %254 = vmatpush1.msra.mxu0 %v184
  %255 = vmatprep.subr.mxu0 0.0
  %256 = vmatpush1.msra.mxu0 %v183
  %257 = vmatprep.subr.mxu0 0.0
  %258 = vmatpush1.msra.mxu0 %v182
  %259 = vmatprep.subr.mxu0 0.0
  %260 = vmatpush1.msra.mxu0 %v181
  %261 = vmatprep.subr.mxu0 0.0
  %262 = vmatpush2.msra.mxu0 %v212
  %263 = vmatprep.subr.mxu0 0.0
  %264 = vmatpush2.msra.mxu0 %v211
  %265 = vmatprep.subr.mxu0 0.0
  %266 = vmatpush2.msra.mxu0 %v210
  %267 = vmatprep.subr.mxu0 0.0
  %268 = vmatpush2.msra.mxu0 %v209
  %269 = vmatprep.subr.mxu0 0.0
  %270 = vmatpush2.msra.mxu0 %v208
  %271 = vmatprep.subr.mxu0 0.0
  %272 = vmatpush2.msra.mxu0 %v207
  %273 = vmatprep.subr.mxu0 0.0
  %274 = vmatpush2.msra.mxu0 %v206
  %275 = vmatprep.subr.mxu0 0.0
  %276 = vmatpush2.msra.mxu0 %v205
  %277 = vmatprep.subr.mxu0 0.0
  %278 = vmatpush2.msra.mxu0 %v204
  %279 = vmatprep.subr.mxu0 0.0
  %280 = vmatpush2.msra.mxu0 %v203
  %281 = vmatprep.subr.mxu0 0.0
  %282 = vmatpush2.msra.mxu0 %v202
  %283 = vmatprep.subr.mxu0 0.0
  %284 = vmatpush2.msra.mxu0 %v201
  %285 = vmatprep.subr.mxu0 0.0
  %286 = vmatpush2.msra.mxu0 %v200
  %287 = vmatprep.subr.mxu0 0.0
  %288 = vmatpush2.msra.mxu0 %v199
  %289 = vmatprep.subr.mxu0 0.0
  %290 = vmatpush2.msra.mxu0 %v198
  %291 = vmatprep.subr.mxu0 0.0
  %292 = vmatpush2.msra.mxu0 %v197
  %293 = vmatprep.mubr.f32.mxu0 %v173
  %294 = vmatmul.mubr.f32.gmra.mxu0 %v172
  %v295 = vpop.f32.mrf.mxu0
  %v296 = vadd.f32 0.0, %v295
  %v297 = vpop.f32.mrf.mxu0
  %298 = vmatprep.mubr.f32.mxu0 %v176
  %299 = vmatmul.mubr.f32.gmra.mxu0 %v175
  %v300 = vpop.f32.mrf.mxu0
  %v301 = vadd.f32 0.0, %v300
  %v302 = vpop.f32.mrf.mxu0
  %303 = vmatprep.mubr.f32.mxu0 %v179
  %304 = vmatmul.mubr.f32.gmra.mxu0 %v178
  %v305 = vpop.f32.mrf.mxu0
  %v306 = vadd.f32 0.0, %v305
  %v307 = vpop.f32.mrf.mxu0
  %308 = vdwg.mxu0
  %309 = vmatprep.subr.mxu0 0.0
  %310 = vmatpush1.msra.mxu0 %v228
  %311 = vmatprep.subr.mxu0 0.0
  %312 = vmatpush1.msra.mxu0 %v227
  %313 = vmatprep.subr.mxu0 0.0
  %314 = vmatpush1.msra.mxu0 %v226
  %315 = vmatprep.subr.mxu0 0.0
  %316 = vmatpush1.msra.mxu0 %v225
  %317 = vmatprep.subr.mxu0 0.0
  %318 = vmatpush1.msra.mxu0 %v224
  %319 = vmatprep.subr.mxu0 0.0
  %320 = vmatpush1.msra.mxu0 %v223
  %321 = vmatprep.subr.mxu0 0.0
  %322 = vmatpush1.msra.mxu0 %v222
  %323 = vmatprep.subr.mxu0 0.0
  %324 = vmatpush1.msra.mxu0 %v221
  %325 = vmatprep.subr.mxu0 0.0
  %326 = vmatpush1.msra.mxu0 %v220
  %327 = vmatprep.subr.mxu0 0.0
  %328 = vmatpush1.msra.mxu0 %v219
  %329 = vmatprep.subr.mxu0 0.0
  %330 = vmatpush1.msra.mxu0 %v218
  %331 = vmatprep.subr.mxu0 0.0
  %332 = vmatpush1.msra.mxu0 %v217
  %333 = vmatprep.subr.mxu0 0.0
  %334 = vmatpush1.msra.mxu0 %v216
  %335 = vmatprep.subr.mxu0 0.0
  %336 = vmatpush1.msra.mxu0 %v215
  %337 = vmatprep.subr.mxu0 0.0
  %338 = vmatpush1.msra.mxu0 %v214
  %339 = vmatprep.subr.mxu0 0.0
  %340 = vmatpush1.msra.mxu0 %v213
  %341 = vmatprep.subr.mxu0 0.0
  %342 = vmatpush2.msra.mxu0 0.0
  %343 = vmatprep.subr.mxu0 0.0
  %344 = vmatpush2.msra.mxu0 0.0
  %345 = vmatprep.subr.mxu0 0.0
  %346 = vmatpush2.msra.mxu0 0.0
  %347 = vmatprep.subr.mxu0 0.0
  %348 = vmatpush2.msra.mxu0 0.0
  %349 = vmatprep.subr.mxu0 0.0
  %350 = vmatpush2.msra.mxu0 0.0
  %351 = vmatprep.subr.mxu0 0.0
  %352 = vmatpush2.msra.mxu0 0.0
  %353 = vmatprep.subr.mxu0 0.0
  %354 = vmatpush2.msra.mxu0 0.0
  %355 = vmatprep.subr.mxu0 0.0
  %356 = vmatpush2.msra.mxu0 0.0
  %357 = vmatprep.subr.mxu0 0.0
  %358 = vmatpush2.msra.mxu0 0.0
  %359 = vmatprep.subr.mxu0 0.0
  %360 = vmatpush2.msra.mxu0 0.0
  %361 = vmatprep.subr.mxu0 0.0
  %362 = vmatpush2.msra.mxu0 0.0
  %363 = vmatprep.subr.mxu0 0.0
  %364 = vmatpush2.msra.mxu0 0.0
  %365 = vmatprep.subr.mxu0 0.0
  %366 = vmatpush2.msra.mxu0 0.0
  %367 = vmatprep.subr.mxu0 0.0
  %368 = vmatpush2.msra.mxu0 0.0
  %369 = vmatprep.subr.mxu0 0.0
  %370 = vmatpush2.msra.mxu0 0.0
  %371 = vmatprep.subr.mxu0 0.0
  %372 = vmatpush2.msra.mxu0 0.0
  %373 = vmatprep.mubr.f32.mxu0 0.0
  %374 = vmatmul.mubr.f32.gmra.mxu0 %v174
  %v375 = vpop.f32.mrf.mxu0
  %v376 = vadd.f32 %v296, %v375
  %v377 = vpop.f32.mrf.mxu0
  %378 = vmatprep.mubr.f32.mxu0 0.0
  %379 = vmatmul.mubr.f32.gmra.mxu0 %v177
  %v380 = vpop.f32.mrf.mxu0
  %v381 = vadd.f32 %v301, %v380
  %v382 = vpop.f32.mrf.mxu0
  %383 = vmatprep.mubr.f32.mxu0 0.0
  %384 = vmatmul.mubr.f32.gmra.mxu0 %v180
  %v385 = vpop.f32.mrf.mxu0
  %v386 = vadd.f32 %v306, %v385
  %v387 = vpop.f32.mrf.mxu0
  %388 = vdwg.mxu0
  %v389 = vld [vmem:[#allocation2] sm:$0x1]
  %v390 = vadd.f32 %v376, %v381
  %v391 = vadd.f32 %v390, %v386
  %v392 = vrot.slane %v391, 4
  %v393 = vadd.f32 %v391, %v392
  %v394 = vrot.slane %v393, 2
  %v395 = vadd.f32 %v393, %v394
  %v396 = vrot.slane %v395, 1
  %v397 = vadd.f32 %v395, %v396
  %v398 = vadd.f32 %v389, %v397
  %399 = vst [vmem:[#allocation2] sm:$0x1] %v398
  // Predicated region
  $region18: #{hybrid_loss.18} parent=0 // pred_check
    %p400 = pneg %p14
  $region19: #{hybrid_loss.18} parent=0 // pred_check_branch
    %402 = sbr.rel (%p400) target = $region21
  $region20: #{hybrid_loss.18} parent=0 // pred_region
    %v403 = vld [vmem:[#allocation2] sm:$0x1]
    %404 = vst [vmem:[%s3] sm:$0x1] %v403
  $region21: #{hybrid_loss.18} parent=0 // pred_fallthru
    _
  // Predicated region
  $region22: #{hybrid_loss.18} parent=0 // pred_check
    _
  $region23: #{hybrid_loss.18} parent=0 // pred_check_branch
    %406 = sbr.rel (0) target = $region25
  $region24: #{hybrid_loss.18} parent=0 // pred_region
    _
  $region25: #{hybrid_loss.18} parent=0 // pred_fallthru
    _
  // Predicated region
  $region26: #{hybrid_loss.18} parent=0 // pred_check
    _
  $region27: #{hybrid_loss.18} parent=0 // pred_check_branch
    %408 = sbr.rel (0) target = $region29
  $region28: #{hybrid_loss.18} parent=0 // pred_region
    _
  $region29: #{hybrid_loss.18} parent=0 // pred_fallthru
    _

// kernel: hybrid_loss.17
$region0: #{hybrid_loss.17}
  #allocation0 [shape = 'u32[]', space=smem, size = 0x4, offset = 0x4, fixed_abs, tag = 'smem constant byte address 0x4 - core index']
  #allocation1 [shape = 'u32[144,128]{1,0:T(1,128)}', space=vmem, size = 0x12000, scoped, tag = 'internal scratch']
  #allocation2 [shape = 'f32[1,128]{1,0:T(1,128)}', space=vmem, size = 0x200, scoped, tag = 'scratch operand']
  %s0 = inlined_call_operand.vmem [shape: bf16[104,256], index: 0, kind: input, shape index: {}]
  %s1 = inlined_call_operand.vmem [shape: bf16[104,256], index: 1, kind: input, shape index: {}]
  %s2 = inlined_call_operand.vmem [shape: f32[256,128], index: 2, kind: input, shape index: {}]
  %s3 = inlined_call_operand.vmem [shape: f32[1,128], index: 3, kind: output, shape index: {}]
  %s4 = sld [smem:[#allocation0]]
  $region30: #{hybrid_loss.17} parent=0
    _
  %s6 = ssub.s32 1, %s4
  %s7 = scalar_select 0, %s6, %s4
  // Predicated region
  $region2: #{hybrid_loss.17} parent=0 // pred_check
    _
  $region3: #{hybrid_loss.17} parent=0 // pred_check_branch
    %9 = sbr.rel (0) target = $region5
  $region4: #{hybrid_loss.17} parent=0 // pred_region
    _
  $region5: #{hybrid_loss.17} parent=0 // pred_fallthru
    _
  // Predicated region
  $region6: #{hybrid_loss.17} parent=0 // pred_check
    _
  $region7: #{hybrid_loss.17} parent=0 // pred_check_branch
    %11 = sbr.rel (0) target = $region9
  $region8: #{hybrid_loss.17} parent=0 // pred_region
    _
  $region9: #{hybrid_loss.17} parent=0 // pred_fallthru
    _
  // Predicated region
  $region10: #{hybrid_loss.17} parent=0 // pred_check
    _
  $region11: #{hybrid_loss.17} parent=0 // pred_check_branch
    %13 = sbr.rel (0) target = $region13
  $region12: #{hybrid_loss.17} parent=0 // pred_region
    _
  $region13: #{hybrid_loss.17} parent=0 // pred_fallthru
    _
  %p14 = scmp.eq.s32.totalorder 0, 0
  // Predicated region
  $region14: #{hybrid_loss.17} parent=0 // pred_check
    %p15 = pneg %p14
  $region15: #{hybrid_loss.17} parent=0 // pred_check_branch
    %17 = sbr.rel (%p15) target = $region17
  $region16: #{hybrid_loss.17} parent=0 // pred_region
    %18 = vst [vmem:[#allocation2] sm:$0x1] 0.0
  $region17: #{hybrid_loss.17} parent=0 // pred_fallthru
    _
  %v19 = vld [vmem:[%s0] sm:$0xff]
  %v20 = vld [vmem:[%s0 + $0x8] sm:$0xff]
  %v21 = vld [vmem:[%s0 + $0x10] sm:$0xff]
  %v22 = vld [vmem:[%s0 + $0x18] sm:$0xff]
  %v23 = vld [vmem:[%s0 + $0x20] sm:$0xff]
  %v24 = vld [vmem:[%s0 + $0x28] sm:$0xff]
  %v25 = vld [vmem:[%s0 + $0x30] sm:$0xff]
  %v26 = vld [vmem:[%s0 + $0x38] sm:$0xff]
  %v27 = vld [vmem:[%s0 + $0x40] sm:$0xff]
  %v28 = vld [vmem:[%s0 + $0x48] sm:$0xff]
  %v29 = vld [vmem:[%s0 + $0x50] sm:$0xff]
  %v30 = vld [vmem:[%s0 + $0x58] sm:$0xff]
  %v31 = vld [vmem:[%s0 + $0x60] sm:$0xff]
  %v32 = vunpack.c.l.bf16 %v19
  %v33 = vunpack.c.h.bf16 %v19
  %v34 = vunpack.c.l.bf16 %v20
  %v35 = vunpack.c.h.bf16 %v20
  %v36 = vunpack.c.l.bf16 %v21
  %v37 = vunpack.c.h.bf16 %v21
  %v38 = vunpack.c.l.bf16 %v22
  %v39 = vunpack.c.h.bf16 %v22
  %v40 = vunpack.c.l.bf16 %v23
  %v41 = vunpack.c.h.bf16 %v23
  %v42 = vunpack.c.l.bf16 %v24
  %v43 = vunpack.c.h.bf16 %v24
  %v44 = vunpack.c.l.bf16 %v25
  %v45 = vunpack.c.h.bf16 %v25
  %v46 = vunpack.c.l.bf16 %v26
  %v47 = vunpack.c.h.bf16 %v26
  %v48 = vunpack.c.l.bf16 %v27
  %v49 = vunpack.c.h.bf16 %v27
  %v50 = vunpack.c.l.bf16 %v28
  %v51 = vunpack.c.h.bf16 %v28
  %v52 = vunpack.c.l.bf16 %v29
  %v53 = vunpack.c.h.bf16 %v29
  %v54 = vunpack.c.l.bf16 %v30
  %v55 = vunpack.c.h.bf16 %v30
  %v56 = vunpack.c.l.bf16 %v31
  %v57 = vunpack.c.h.bf16 %v31
  %v58 = vld [vmem:[%s1] sm:$0xff]
  %v59 = vld [vmem:[%s1 + $0x8] sm:$0xff]
  %v60 = vld [vmem:[%s1 + $0x10] sm:$0xff]
  %v61 = vld [vmem:[%s1 + $0x18] sm:$0xff]
  %v62 = vld [vmem:[%s1 + $0x20] sm:$0xff]
  %v63 = vld [vmem:[%s1 + $0x28] sm:$0xff]
  %v64 = vld [vmem:[%s1 + $0x30] sm:$0xff]
  %v65 = vld [vmem:[%s1 + $0x38] sm:$0xff]
  %v66 = vld [vmem:[%s1 + $0x40] sm:$0xff]
  %v67 = vld [vmem:[%s1 + $0x48] sm:$0xff]
  %v68 = vld [vmem:[%s1 + $0x50] sm:$0xff]
  %v69 = vld [vmem:[%s1 + $0x58] sm:$0xff]
  %v70 = vld [vmem:[%s1 + $0x60] sm:$0xff]
  %v71 = vunpack.c.l.bf16 %v58
  %v72 = vunpack.c.h.bf16 %v58
  %v73 = vunpack.c.l.bf16 %v59
  %v74 = vunpack.c.h.bf16 %v59
  %v75 = vunpack.c.l.bf16 %v60
  %v76 = vunpack.c.h.bf16 %v60
  %v77 = vunpack.c.l.bf16 %v61
  %v78 = vunpack.c.h.bf16 %v61
  %v79 = vunpack.c.l.bf16 %v62
  %v80 = vunpack.c.h.bf16 %v62
  %v81 = vunpack.c.l.bf16 %v63
  %v82 = vunpack.c.h.bf16 %v63
  %v83 = vunpack.c.l.bf16 %v64
  %v84 = vunpack.c.h.bf16 %v64
  %v85 = vunpack.c.l.bf16 %v65
  %v86 = vunpack.c.h.bf16 %v65
  %v87 = vunpack.c.l.bf16 %v66
  %v88 = vunpack.c.h.bf16 %v66
  %v89 = vunpack.c.l.bf16 %v67
  %v90 = vunpack.c.h.bf16 %v67
  %v91 = vunpack.c.l.bf16 %v68
  %v92 = vunpack.c.h.bf16 %v68
  %v93 = vunpack.c.l.bf16 %v69
  %v94 = vunpack.c.h.bf16 %v69
  %v95 = vunpack.c.l.bf16 %v70
  %v96 = vunpack.c.h.bf16 %v70
  %v97 = vmul.f32 %v32, %v32
  %v98 = vmul.f32 %v33, %v33
  %v99 = vmul.f32 %v34, %v34
  %v100 = vmul.f32 %v35, %v35
  %v101 = vmul.f32 %v36, %v36
  %v102 = vmul.f32 %v37, %v37
  %v103 = vmul.f32 %v38, %v38
  %v104 = vmul.f32 %v39, %v39
  %v105 = vmul.f32 %v40, %v40
  %v106 = vmul.f32 %v41, %v41
  %v107 = vmul.f32 %v42, %v42
  %v108 = vmul.f32 %v43, %v43
  %v109 = vmul.f32 %v44, %v44
  %v110 = vmul.f32 %v45, %v45
  %v111 = vmul.f32 %v46, %v46
  %v112 = vmul.f32 %v47, %v47
  %v113 = vmul.f32 %v48, %v48
  %v114 = vmul.f32 %v49, %v49
  %v115 = vmul.f32 %v50, %v50
  %v116 = vmul.f32 %v51, %v51
  %v117 = vmul.f32 %v52, %v52
  %v118 = vmul.f32 %v53, %v53
  %v119 = vmul.f32 %v54, %v54
  %v120 = vmul.f32 %v55, %v55
  %v121 = vmul.f32 %v56, %v56
  %v122 = vmul.f32 %v57, %v57
  %v123 = vadd.f32 %v97, %v98
  %124 = vadd.xlane.f32.xlu0 %v123
  %v125 = vpop.xlane.xlu0 %124
  %v126 = vadd.f32 %v99, %v100
  %127 = vadd.xlane.f32.xlu0 %v126
  %v128 = vpop.xlane.xlu0 %127
  %v129 = vadd.f32 %v101, %v102
  %130 = vadd.xlane.f32.xlu0 %v129
  %v131 = vpop.xlane.xlu0 %130
  %v132 = vadd.f32 %v103, %v104
  %133 = vadd.xlane.f32.xlu0 %v132
  %v134 = vpop.xlane.xlu0 %133
  %v135 = vadd.f32 %v105, %v106
  %136 = vadd.xlane.f32.xlu0 %v135
  %v137 = vpop.xlane.xlu0 %136
  %v138 = vadd.f32 %v107, %v108
  %139 = vadd.xlane.f32.xlu0 %v138
  %v140 = vpop.xlane.xlu0 %139
  %v141 = vadd.f32 %v109, %v110
  %142 = vadd.xlane.f32.xlu0 %v141
  %v143 = vpop.xlane.xlu0 %142
  %v144 = vadd.f32 %v111, %v112
  %145 = vadd.xlane.f32.xlu0 %v144
  %v146 = vpop.xlane.xlu0 %145
  %v147 = vadd.f32 %v113, %v114
  %148 = vadd.xlane.f32.xlu0 %v147
  %v149 = vpop.xlane.xlu0 %148
  %v150 = vadd.f32 %v115, %v116
  %151 = vadd.xlane.f32.xlu0 %v150
  %v152 = vpop.xlane.xlu0 %151
  %v153 = vadd.f32 %v117, %v118
  %154 = vadd.xlane.f32.xlu0 %v153
  %v155 = vpop.xlane.xlu0 %154
  %v156 = vadd.f32 %v119, %v120
  %157 = vadd.xlane.f32.xlu0 %v156
  %v158 = vpop.xlane.xlu0 %157
  %v159 = vadd.f32 %v121, %v122
  %160 = vadd.xlane.f32.xlu0 %v159
  %v161 = vpop.xlane.xlu0 %160
  %v162 = vrsqrt.pop %v125
  %v163 = vmul.f32 %v125, %v162
  %vm164 = vcmp.eq.f32.partialorder %v125, inf
  %v165 = vsel %vm164, %v125, %v163
  %vm166 = vcmp.eq.f32.partialorder %v125, 0.0
  %v167 = vand.u32 %v125, 2147483648
  %v168 = vsel %vm166, %v167, %v165
  %v169 = vrsqrt.pop %v128
  %v170 = vmul.f32 %v128, %v169
  %vm171 = vcmp.eq.f32.partialorder %v128, inf
  %v172 = vsel %vm171, %v128, %v170
  %vm173 = vcmp.eq.f32.partialorder %v128, 0.0
  %v174 = vand.u32 %v128, 2147483648
  %v175 = vsel %vm173, %v174, %v172
  %v176 = vrsqrt.pop %v131
  %v177 = vmul.f32 %v131, %v176
  %vm178 = vcmp.eq.f32.partialorder %v131, inf
  %v179 = vsel %vm178, %v131, %v177
  %vm180 = vcmp.eq.f32.partialorder %v131, 0.0
  %v181 = vand.u32 %v131, 2147483648
  %v182 = vsel %vm180, %v181, %v179
  %v183 = vrsqrt.pop %v134
  %v184 = vmul.f32 %v134, %v183
  %vm185 = vcmp.eq.f32.partialorder %v134, inf
  %v186 = vsel %vm185, %v134, %v184
  %vm187 = vcmp.eq.f32.partialorder %v134, 0.0
  %v188 = vand.u32 %v134, 2147483648
  %v189 = vsel %vm187, %v188, %v186
  %v190 = vrsqrt.pop %v137
  %v191 = vmul.f32 %v137, %v190
  %vm192 = vcmp.eq.f32.partialorder %v137, inf
  %v193 = vsel %vm192, %v137, %v191
  %vm194 = vcmp.eq.f32.partialorder %v137, 0.0
  %v195 = vand.u32 %v137, 2147483648
  %v196 = vsel %vm194, %v195, %v193
  %v197 = vrsqrt.pop %v140
  %v198 = vmul.f32 %v140, %v197
  %vm199 = vcmp.eq.f32.partialorder %v140, inf
  %v200 = vsel %vm199, %v140, %v198
  %vm201 = vcmp.eq.f32.partialorder %v140, 0.0
  %v202 = vand.u32 %v140, 2147483648
  %v203 = vsel %vm201, %v202, %v200
  %v204 = vrsqrt.pop %v143
  %v205 = vmul.f32 %v143, %v204
  %vm206 = vcmp.eq.f32.partialorder %v143, inf
  %v207 = vsel %vm206, %v143, %v205
  %vm208 = vcmp.eq.f32.partialorder %v143, 0.0
  %v209 = vand.u32 %v143, 2147483648
  %v210 = vsel %vm208, %v209, %v207
  %v211 = vrsqrt.pop %v146
  %v212 = vmul.f32 %v146, %v211
  %vm213 = vcmp.eq.f32.partialorder %v146, inf
  %v214 = vsel %vm213, %v146, %v212
  %vm215 = vcmp.eq.f32.partialorder %v146, 0.0
  %v216 = vand.u32 %v146, 2147483648
  %v217 = vsel %vm215, %v216, %v214
  %v218 = vrsqrt.pop %v149
  %v219 = vmul.f32 %v149, %v218
  %vm220 = vcmp.eq.f32.partialorder %v149, inf
  %v221 = vsel %vm220, %v149, %v219
  %vm222 = vcmp.eq.f32.partialorder %v149, 0.0
  %v223 = vand.u32 %v149, 2147483648
  %v224 = vsel %vm222, %v223, %v221
  %v225 = vrsqrt.pop %v152
  %v226 = vmul.f32 %v152, %v225
  %vm227 = vcmp.eq.f32.partialorder %v152, inf
  %v228 = vsel %vm227, %v152, %v226
  %vm229 = vcmp.eq.f32.partialorder %v152, 0.0
  %v230 = vand.u32 %v152, 2147483648
  %v231 = vsel %vm229, %v230, %v228
  %v232 = vrsqrt.pop %v155
  %v233 = vmul.f32 %v155, %v232
  %vm234 = vcmp.eq.f32.partialorder %v155, inf
  %v235 = vsel %vm234, %v155, %v233
  %vm236 = vcmp.eq.f32.partialorder %v155, 0.0
  %v237 = vand.u32 %v155, 2147483648
  %v238 = vsel %vm236, %v237, %v235
  %v239 = vrsqrt.pop %v158
  %v240 = vmul.f32 %v158, %v239
  %vm241 = vcmp.eq.f32.partialorder %v158, inf
  %v242 = vsel %vm241, %v158, %v240
  %vm243 = vcmp.eq.f32.partialorder %v158, 0.0
  %v244 = vand.u32 %v158, 2147483648
  %v245 = vsel %vm243, %v244, %v242
  %v246 = vrsqrt.pop %v161
  %v247 = vmul.f32 %v161, %v246
  %vm248 = vcmp.eq.f32.partialorder %v161, inf
  %v249 = vsel %vm248, %v161, %v247
  %vm250 = vcmp.eq.f32.partialorder %v161, 0.0
  %v251 = vand.u32 %v161, 2147483648
  %v252 = vsel %vm250, %v251, %v249
  %v253 = vadd.f32 %v168, 1e-10
  %v254 = vadd.f32 %v175, 1e-10
  %v255 = vadd.f32 %v182, 1e-10
  %v256 = vadd.f32 %v189, 1e-10
  %v257 = vadd.f32 %v196, 1e-10
  %v258 = vadd.f32 %v203, 1e-10
  %v259 = vadd.f32 %v210, 1e-10
  %v260 = vadd.f32 %v217, 1e-10
  %v261 = vadd.f32 %v224, 1e-10
  %v262 = vadd.f32 %v231, 1e-10
  %v263 = vadd.f32 %v238, 1e-10
  %v264 = vadd.f32 %v245, 1e-10
  %v265 = vadd.f32 %v252, 1e-10
  %v266 = vrcp.pop %v253
  %v267 = vrcp.pop %v254
  %v268 = vrcp.pop %v255
  %v269 = vrcp.pop %v256
  %v270 = vrcp.pop %v257
  %v271 = vrcp.pop %v258
  %v272 = vrcp.pop %v259
  %v273 = vrcp.pop %v260
  %v274 = vrcp.pop %v261
  %v275 = vrcp.pop %v262
  %v276 = vrcp.pop %v263
  %v277 = vrcp.pop %v264
  %v278 = vrcp.pop %v265
  %v279 = vmul.f32 %v71, %v71
  %v280 = vmul.f32 %v72, %v72
  %v281 = vmul.f32 %v73, %v73
  %v282 = vmul.f32 %v74, %v74
  %v283 = vmul.f32 %v75, %v75
  %v284 = vmul.f32 %v76, %v76
  %v285 = vmul.f32 %v77, %v77
  %v286 = vmul.f32 %v78, %v78
  %v287 = vmul.f32 %v79, %v79
  %v288 = vmul.f32 %v80, %v80
  %v289 = vmul.f32 %v81, %v81
  %v290 = vmul.f32 %v82, %v82
  %v291 = vmul.f32 %v83, %v83
  %v292 = vmul.f32 %v84, %v84
  %v293 = vmul.f32 %v85, %v85
  %v294 = vmul.f32 %v86, %v86
  %v295 = vmul.f32 %v87, %v87
  %v296 = vmul.f32 %v88, %v88
  %v297 = vmul.f32 %v89, %v89
  %v298 = vmul.f32 %v90, %v90
  %v299 = vmul.f32 %v91, %v91
  %v300 = vmul.f32 %v92, %v92
  %v301 = vmul.f32 %v93, %v93
  %v302 = vmul.f32 %v94, %v94
  %v303 = vmul.f32 %v95, %v95
  %v304 = vmul.f32 %v96, %v96
  %v305 = vadd.f32 %v279, %v280
  %306 = vadd.xlane.f32.xlu0 %v305
  %v307 = vpop.xlane.xlu0 %306
  %v308 = vadd.f32 %v281, %v282
  %309 = vadd.xlane.f32.xlu0 %v308
  %v310 = vpop.xlane.xlu0 %309
  %v311 = vadd.f32 %v283, %v284
  %312 = vadd.xlane.f32.xlu0 %v311
  %v313 = vpop.xlane.xlu0 %312
  %v314 = vadd.f32 %v285, %v286
  %315 = vadd.xlane.f32.xlu0 %v314
  %v316 = vpop.xlane.xlu0 %315
  %v317 = vadd.f32 %v287, %v288
  %318 = vadd.xlane.f32.xlu0 %v317
  %v319 = vpop.xlane.xlu0 %318
  %v320 = vadd.f32 %v289, %v290
  %321 = vadd.xlane.f32.xlu0 %v320
  %v322 = vpop.xlane.xlu0 %321
  %v323 = vadd.f32 %v291, %v292
  %324 = vadd.xlane.f32.xlu0 %v323
  %v325 = vpop.xlane.xlu0 %324
  %v326 = vadd.f32 %v293, %v294
  %327 = vadd.xlane.f32.xlu0 %v326
  %v328 = vpop.xlane.xlu0 %327
  %v329 = vadd.f32 %v295, %v296
  %330 = vadd.xlane.f32.xlu0 %v329
  %v331 = vpop.xlane.xlu0 %330
  %v332 = vadd.f32 %v297, %v298
  %333 = vadd.xlane.f32.xlu0 %v332
  %v334 = vpop.xlane.xlu0 %333
  %v335 = vadd.f32 %v299, %v300
  %336 = vadd.xlane.f32.xlu0 %v335
  %v337 = vpop.xlane.xlu0 %336
  %v338 = vadd.f32 %v301, %v302
  %339 = vadd.xlane.f32.xlu0 %v338
  %v340 = vpop.xlane.xlu0 %339
  %v341 = vadd.f32 %v303, %v304
  %342 = vadd.xlane.f32.xlu0 %v341
  %v343 = vpop.xlane.xlu0 %342
  %v344 = vrsqrt.pop %v307
  %v345 = vmul.f32 %v307, %v344
  %vm346 = vcmp.eq.f32.partialorder %v307, inf
  %v347 = vsel %vm346, %v307, %v345
  %vm348 = vcmp.eq.f32.partialorder %v307, 0.0
  %v349 = vand.u32 %v307, 2147483648
  %v350 = vsel %vm348, %v349, %v347
  %v351 = vrsqrt.pop %v310
  %v352 = vmul.f32 %v310, %v351
  %vm353 = vcmp.eq.f32.partialorder %v310, inf
  %v354 = vsel %vm353, %v310, %v352
  %vm355 = vcmp.eq.f32.partialorder %v310, 0.0
  %v356 = vand.u32 %v310, 2147483648
  %v357 = vsel %vm355, %v356, %v354
  %v358 = vrsqrt.pop %v313
  %v359 = vmul.f32 %v313, %v358
  %vm360 = vcmp.eq.f32.partialorder %v313, inf
  %v361 = vsel %vm360, %v313, %v359
  %vm362 = vcmp.eq.f32.partialorder %v313, 0.0
  %v363 = vand.u32 %v313, 2147483648
  %v364 = vsel %vm362, %v363, %v361
  %v365 = vrsqrt.pop %v316
  %v366 = vmul.f32 %v316, %v365
  %vm367 = vcmp.eq.f32.partialorder %v316, inf
  %v368 = vsel %vm367, %v316, %v366
  %vm369 = vcmp.eq.f32.partialorder %v316, 0.0
  %v370 = vand.u32 %v316, 2147483648
  %v371 = vsel %vm369, %v370, %v368
  %v372 = vrsqrt.pop %v319
  %v373 = vmul.f32 %v319, %v372
  %vm374 = vcmp.eq.f32.partialorder %v319, inf
  %v375 = vsel %vm374, %v319, %v373
  %vm376 = vcmp.eq.f32.partialorder %v319, 0.0
  %v377 = vand.u32 %v319, 2147483648
  %v378 = vsel %vm376, %v377, %v375
  %v379 = vrsqrt.pop %v322
  %v380 = vmul.f32 %v322, %v379
  %vm381 = vcmp.eq.f32.partialorder %v322, inf
  %v382 = vsel %vm381, %v322, %v380
  %vm383 = vcmp.eq.f32.partialorder %v322, 0.0
  %v384 = vand.u32 %v322, 2147483648
  %v385 = vsel %vm383, %v384, %v382
  %v386 = vrsqrt.pop %v325
  %v387 = vmul.f32 %v325, %v386
  %vm388 = vcmp.eq.f32.partialorder %v325, inf
  %v389 = vsel %vm388, %v325, %v387
  %vm390 = vcmp.eq.f32.partialorder %v325, 0.0
  %v391 = vand.u32 %v325, 2147483648
  %v392 = vsel %vm390, %v391, %v389
  %v393 = vrsqrt.pop %v328
  %v394 = vmul.f32 %v328, %v393
  %vm395 = vcmp.eq.f32.partialorder %v328, inf
  %v396 = vsel %vm395, %v328, %v394
  %vm397 = vcmp.eq.f32.partialorder %v328, 0.0
  %v398 = vand.u32 %v328, 2147483648
  %v399 = vsel %vm397, %v398, %v396
  %v400 = vrsqrt.pop %v331
  %v401 = vmul.f32 %v331, %v400
  %vm402 = vcmp.eq.f32.partialorder %v331, inf
  %v403 = vsel %vm402, %v331, %v401
  %vm404 = vcmp.eq.f32.partialorder %v331, 0.0
  %v405 = vand.u32 %v331, 2147483648
  %v406 = vsel %vm404, %v405, %v403
  %v407 = vrsqrt.pop %v334
  %v408 = vmul.f32 %v334, %v407
  %vm409 = vcmp.eq.f32.partialorder %v334, inf
  %v410 = vsel %vm409, %v334, %v408
  %vm411 = vcmp.eq.f32.partialorder %v334, 0.0
  %v412 = vand.u32 %v334, 2147483648
  %v413 = vsel %vm411, %v412, %v410
  %v414 = vrsqrt.pop %v337
  %v415 = vmul.f32 %v337, %v414
  %vm416 = vcmp.eq.f32.partialorder %v337, inf
  %v417 = vsel %vm416, %v337, %v415
  %vm418 = vcmp.eq.f32.partialorder %v337, 0.0
  %v419 = vand.u32 %v337, 2147483648
  %v420 = vsel %vm418, %v419, %v417
  %v421 = vrsqrt.pop %v340
  %v422 = vmul.f32 %v340, %v421
  %vm423 = vcmp.eq.f32.partialorder %v340, inf
  %v424 = vsel %vm423, %v340, %v422
  %vm425 = vcmp.eq.f32.partialorder %v340, 0.0
  %v426 = vand.u32 %v340, 2147483648
  %v427 = vsel %vm425, %v426, %v424
  %v428 = vrsqrt.pop %v343
  %v429 = vmul.f32 %v343, %v428
  %vm430 = vcmp.eq.f32.partialorder %v343, inf
  %v431 = vsel %vm430, %v343, %v429
  %vm432 = vcmp.eq.f32.partialorder %v343, 0.0
  %v433 = vand.u32 %v343, 2147483648
  %v434 = vsel %vm432, %v433, %v431
  %v435 = vadd.f32 %v350, 1e-10
  %v436 = vadd.f32 %v357, 1e-10
  %v437 = vadd.f32 %v364, 1e-10
  %v438 = vadd.f32 %v371, 1e-10
  %v439 = vadd.f32 %v378, 1e-10
  %v440 = vadd.f32 %v385, 1e-10
  %v441 = vadd.f32 %v392, 1e-10
  %v442 = vadd.f32 %v399, 1e-10
  %v443 = vadd.f32 %v406, 1e-10
  %v444 = vadd.f32 %v413, 1e-10
  %v445 = vadd.f32 %v420, 1e-10
  %v446 = vadd.f32 %v427, 1e-10
  %v447 = vadd.f32 %v434, 1e-10
  %v448 = vrcp.pop %v435
  %v449 = vrcp.pop %v436
  %v450 = vrcp.pop %v437
  %v451 = vrcp.pop %v438
  %v452 = vrcp.pop %v439
  %v453 = vrcp.pop %v440
  %v454 = vrcp.pop %v441
  %v455 = vrcp.pop %v442
  %v456 = vrcp.pop %v443
  %v457 = vrcp.pop %v444
  %v458 = vrcp.pop %v445
  %v459 = vrcp.pop %v446
  %v460 = vrcp.pop %v447
  %v461 = vmul.f32 %v32, %v266
  %v462 = vmul.f32 %v33, %v266
  %v463 = vmul.f32 %v34, %v267
  %v464 = vmul.f32 %v35, %v267
  %v465 = vmul.f32 %v36, %v268
  %v466 = vmul.f32 %v37, %v268
  %v467 = vmul.f32 %v38, %v269
  %v468 = vmul.f32 %v39, %v269
  %v469 = vmul.f32 %v40, %v270
  %v470 = vmul.f32 %v41, %v270
  %v471 = vmul.f32 %v42, %v271
  %v472 = vmul.f32 %v43, %v271
  %v473 = vmul.f32 %v44, %v272
  %v474 = vmul.f32 %v45, %v272
  %v475 = vmul.f32 %v46, %v273
  %v476 = vmul.f32 %v47, %v273
  %v477 = vmul.f32 %v48, %v274
  %v478 = vmul.f32 %v49, %v274
  %v479 = vmul.f32 %v50, %v275
  %v480 = vmul.f32 %v51, %v275
  %v481 = vmul.f32 %v52, %v276
  %v482 = vmul.f32 %v53, %v276
  %v483 = vmul.f32 %v54, %v277
  %v484 = vmul.f32 %v55, %v277
  %v485 = vmul.f32 %v56, %v278
  %v486 = vmul.f32 %v57, %v278
  %v487 = vmul.f32 %v71, %v448
  %v488 = vmul.f32 %v72, %v448
  %v489 = vmul.f32 %v73, %v449
  %v490 = vmul.f32 %v74, %v449
  %v491 = vmul.f32 %v75, %v450
  %v492 = vmul.f32 %v76, %v450
  %v493 = vmul.f32 %v77, %v451
  %v494 = vmul.f32 %v78, %v451
  %v495 = vmul.f32 %v79, %v452
  %v496 = vmul.f32 %v80, %v452
  %v497 = vmul.f32 %v81, %v453
  %v498 = vmul.f32 %v82, %v453
  %v499 = vmul.f32 %v83, %v454
  %v500 = vmul.f32 %v84, %v454
  %v501 = vmul.f32 %v85, %v455
  %v502 = vmul.f32 %v86, %v455
  %v503 = vmul.f32 %v87, %v456
  %v504 = vmul.f32 %v88, %v456
  %v505 = vmul.f32 %v89, %v457
  %v506 = vmul.f32 %v90, %v457
  %v507 = vmul.f32 %v91, %v458
  %v508 = vmul.f32 %v92, %v458
  %v509 = vmul.f32 %v93, %v459
  %v510 = vmul.f32 %v94, %v459
  %v511 = vmul.f32 %v95, %v460
  %v512 = vmul.f32 %v96, %v460
  %v513 = vsub.f32 %v461, %v487
  %v514 = vsub.f32 %v462, %v488
  %v515 = vsub.f32 %v463, %v489
  %v516 = vsub.f32 %v464, %v490
  %v517 = vsub.f32 %v465, %v491
  %v518 = vsub.f32 %v466, %v492
  %v519 = vsub.f32 %v467, %v493
  %v520 = vsub.f32 %v468, %v494
  %v521 = vsub.f32 %v469, %v495
  %v522 = vsub.f32 %v470, %v496
  %v523 = vsub.f32 %v471, %v497
  %v524 = vsub.f32 %v472, %v498
  %v525 = vsub.f32 %v473, %v499
  %v526 = vsub.f32 %v474, %v500
  %v527 = vsub.f32 %v475, %v501
  %v528 = vsub.f32 %v476, %v502
  %v529 = vsub.f32 %v477, %v503
  %v530 = vsub.f32 %v478, %v504
  %v531 = vsub.f32 %v479, %v505
  %v532 = vsub.f32 %v480, %v506
  %v533 = vsub.f32 %v481, %v507
  %v534 = vsub.f32 %v482, %v508
  %v535 = vsub.f32 %v483, %v509
  %v536 = vsub.f32 %v484, %v510
  %v537 = vsub.f32 %v485, %v511
  %v538 = vsub.f32 %v486, %v512
  %v539 = vmul.f32 %v513, %v513
  %v540 = vmul.f32 %v514, %v514
  %v541 = vmul.f32 %v515, %v515
  %v542 = vmul.f32 %v516, %v516
  %v543 = vmul.f32 %v517, %v517
  %v544 = vmul.f32 %v518, %v518
  %v545 = vmul.f32 %v519, %v519
  %v546 = vmul.f32 %v520, %v520
  %v547 = vmul.f32 %v521, %v521
  %v548 = vmul.f32 %v522, %v522
  %v549 = vmul.f32 %v523, %v523
  %v550 = vmul.f32 %v524, %v524
  %v551 = vmul.f32 %v525, %v525
  %v552 = vmul.f32 %v526, %v526
  %v553 = vmul.f32 %v527, %v527
  %v554 = vmul.f32 %v528, %v528
  %v555 = vmul.f32 %v529, %v529
  %v556 = vmul.f32 %v530, %v530
  %v557 = vmul.f32 %v531, %v531
  %v558 = vmul.f32 %v532, %v532
  %v559 = vmul.f32 %v533, %v533
  %v560 = vmul.f32 %v534, %v534
  %v561 = vmul.f32 %v535, %v535
  %v562 = vmul.f32 %v536, %v536
  %v563 = vmul.f32 %v537, %v537
  %v564 = vmul.f32 %v538, %v538
  %v565 = vld [vmem:[%s2] sm:$0xff]
  %v566 = vld [vmem:[%s2 + $0x8] sm:$0xff]
  %v567 = vld [vmem:[%s2 + $0x10] sm:$0xff]
  %v568 = vld [vmem:[%s2 + $0x18] sm:$0xff]
  %v569 = vld [vmem:[%s2 + $0x20] sm:$0xff]
  %v570 = vld [vmem:[%s2 + $0x28] sm:$0xff]
  %v571 = vld [vmem:[%s2 + $0x30] sm:$0xff]
  %v572 = vld [vmem:[%s2 + $0x38] sm:$0xff]
  %v573 = vld [vmem:[%s2 + $0x40] sm:$0xff]
  %v574 = vld [vmem:[%s2 + $0x48] sm:$0xff]
  %v575 = vld [vmem:[%s2 + $0x50] sm:$0xff]
  %v576 = vld [vmem:[%s2 + $0x58] sm:$0xff]
  %v577 = vld [vmem:[%s2 + $0x60] sm:$0xff]
  %v578 = vld [vmem:[%s2 + $0x68] sm:$0xff]
  %v579 = vld [vmem:[%s2 + $0x70] sm:$0xff]
  %v580 = vld [vmem:[%s2 + $0x78] sm:$0xff]
  %v581 = vld [vmem:[%s2 + $0x80] sm:$0xff]
  %v582 = vld [vmem:[%s2 + $0x88] sm:$0xff]
  %v583 = vld [vmem:[%s2 + $0x90] sm:$0xff]
  %v584 = vld [vmem:[%s2 + $0x98] sm:$0xff]
  %v585 = vld [vmem:[%s2 + $0xa0] sm:$0xff]
  %v586 = vld [vmem:[%s2 + $0xa8] sm:$0xff]
  %v587 = vld [vmem:[%s2 + $0xb0] sm:$0xff]
  %v588 = vld [vmem:[%s2 + $0xb8] sm:$0xff]
  %v589 = vld [vmem:[%s2 + $0xc0] sm:$0xff]
  %v590 = vld [vmem:[%s2 + $0xc8] sm:$0xff]
  %v591 = vld [vmem:[%s2 + $0xd0] sm:$0xff]
  %v592 = vld [vmem:[%s2 + $0xd8] sm:$0xff]
  %v593 = vld [vmem:[%s2 + $0xe0] sm:$0xff]
  %v594 = vld [vmem:[%s2 + $0xe8] sm:$0xff]
  %v595 = vld [vmem:[%s2 + $0xf0] sm:$0xff]
  %v596 = vld [vmem:[%s2 + $0xf8] sm:$0xff]
  %597 = vmatprep.subr.mxu0 0.0
  %598 = vmatpush1.msra.mxu0 %v580
  %599 = vmatprep.subr.mxu0 0.0
  %600 = vmatpush1.msra.mxu0 %v579
  %601 = vmatprep.subr.mxu0 0.0
  %602 = vmatpush1.msra.mxu0 %v578
  %603 = vmatprep.subr.mxu0 0.0
  %604 = vmatpush1.msra.mxu0 %v577
  %605 = vmatprep.subr.mxu0 0.0
  %606 = vmatpush1.msra.mxu0 %v576
  %607 = vmatprep.subr.mxu0 0.0
  %608 = vmatpush1.msra.mxu0 %v575
  %609 = vmatprep.subr.mxu0 0.0
  %610 = vmatpush1.msra.mxu0 %v574
  %611 = vmatprep.subr.mxu0 0.0
  %612 = vmatpush1.msra.mxu0 %v573
  %613 = vmatprep.subr.mxu0 0.0
  %614 = vmatpush1.msra.mxu0 %v572
  %615 = vmatprep.subr.mxu0 0.0
  %616 = vmatpush1.msra.mxu0 %v571
  %617 = vmatprep.subr.mxu0 0.0
  %618 = vmatpush1.msra.mxu0 %v570
  %619 = vmatprep.subr.mxu0 0.0
  %620 = vmatpush1.msra.mxu0 %v569
  %621 = vmatprep.subr.mxu0 0.0
  %622 = vmatpush1.msra.mxu0 %v568
  %623 = vmatprep.subr.mxu0 0.0
  %624 = vmatpush1.msra.mxu0 %v567
  %625 = vmatprep.subr.mxu0 0.0
  %626 = vmatpush1.msra.mxu0 %v566
  %627 = vmatprep.subr.mxu0 0.0
  %628 = vmatpush1.msra.mxu0 %v565
  %629 = vmatprep.subr.mxu0 0.0
  %630 = vmatpush2.msra.mxu0 %v596
  %631 = vmatprep.subr.mxu0 0.0
  %632 = vmatpush2.msra.mxu0 %v595
  %633 = vmatprep.subr.mxu0 0.0
  %634 = vmatpush2.msra.mxu0 %v594
  %635 = vmatprep.subr.mxu0 0.0
  %636 = vmatpush2.msra.mxu0 %v593
  %637 = vmatprep.subr.mxu0 0.0
  %638 = vmatpush2.msra.mxu0 %v592
  %639 = vmatprep.subr.mxu0 0.0
  %640 = vmatpush2.msra.mxu0 %v591
  %641 = vmatprep.subr.mxu0 0.0
  %642 = vmatpush2.msra.mxu0 %v590
  %643 = vmatprep.subr.mxu0 0.0
  %644 = vmatpush2.msra.mxu0 %v589
  %645 = vmatprep.subr.mxu0 0.0
  %646 = vmatpush2.msra.mxu0 %v588
  %647 = vmatprep.subr.mxu0 0.0
  %648 = vmatpush2.msra.mxu0 %v587
  %649 = vmatprep.subr.mxu0 0.0
  %650 = vmatpush2.msra.mxu0 %v586
  %651 = vmatprep.subr.mxu0 0.0
  %652 = vmatpush2.msra.mxu0 %v585
  %653 = vmatprep.subr.mxu0 0.0
  %654 = vmatpush2.msra.mxu0 %v584
  %655 = vmatprep.subr.mxu0 0.0
  %656 = vmatpush2.msra.mxu0 %v583
  %657 = vmatprep.subr.mxu0 0.0
  %658 = vmatpush2.msra.mxu0 %v582
  %659 = vmatprep.subr.mxu0 0.0
  %660 = vmatpush2.msra.mxu0 %v581
  %661 = vmatprep.mubr.f32.mxu0 %v540
  %662 = vmatmul.mubr.f32.gmra.mxu0 %v539
  %v663 = vpop.f32.mrf.mxu0
  %v664 = vadd.f32 0.0, %v663
  %v665 = vpop.f32.mrf.mxu0
  %666 = vmatprep.mubr.f32.mxu0 %v542
  %667 = vmatmul.mubr.f32.gmra.mxu0 %v541
  %v668 = vpop.f32.mrf.mxu0
  %v669 = vadd.f32 0.0, %v668
  %v670 = vpop.f32.mrf.mxu0
  %671 = vmatprep.mubr.f32.mxu0 %v544
  %672 = vmatmul.mubr.f32.gmra.mxu0 %v543
  %v673 = vpop.f32.mrf.mxu0
  %v674 = vadd.f32 0.0, %v673
  %v675 = vpop.f32.mrf.mxu0
  %676 = vmatprep.mubr.f32.mxu0 %v546
  %677 = vmatmul.mubr.f32.gmra.mxu0 %v545
  %v678 = vpop.f32.mrf.mxu0
  %v679 = vadd.f32 0.0, %v678
  %v680 = vpop.f32.mrf.mxu0
  %681 = vmatprep.mubr.f32.mxu0 %v548
  %682 = vmatmul.mubr.f32.gmra.mxu0 %v547
  %v683 = vpop.f32.mrf.mxu0
  %v684 = vadd.f32 0.0, %v683
  %v685 = vpop.f32.mrf.mxu0
  %686 = vmatprep.mubr.f32.mxu0 %v550
  %687 = vmatmul.mubr.f32.gmra.mxu0 %v549
  %v688 = vpop.f32.mrf.mxu0
  %v689 = vadd.f32 0.0, %v688
  %v690 = vpop.f32.mrf.mxu0
  %691 = vmatprep.mubr.f32.mxu0 %v552
  %692 = vmatmul.mubr.f32.gmra.mxu0 %v551
  %v693 = vpop.f32.mrf.mxu0
  %v694 = vadd.f32 0.0, %v693
  %v695 = vpop.f32.mrf.mxu0
  %696 = vmatprep.mubr.f32.mxu0 %v554
  %697 = vmatmul.mubr.f32.gmra.mxu0 %v553
  %v698 = vpop.f32.mrf.mxu0
  %v699 = vadd.f32 0.0, %v698
  %v700 = vpop.f32.mrf.mxu0
  %701 = vmatprep.mubr.f32.mxu0 %v556
  %702 = vmatmul.mubr.f32.gmra.mxu0 %v555
  %v703 = vpop.f32.mrf.mxu0
  %v704 = vadd.f32 0.0, %v703
  %v705 = vpop.f32.mrf.mxu0
  %706 = vmatprep.mubr.f32.mxu0 %v558
  %707 = vmatmul.mubr.f32.gmra.mxu0 %v557
  %v708 = vpop.f32.mrf.mxu0
  %v709 = vadd.f32 0.0, %v708
  %v710 = vpop.f32.mrf.mxu0
  %711 = vmatprep.mubr.f32.mxu0 %v560
  %712 = vmatmul.mubr.f32.gmra.mxu0 %v559
  %v713 = vpop.f32.mrf.mxu0
  %v714 = vadd.f32 0.0, %v713
  %v715 = vpop.f32.mrf.mxu0
  %716 = vmatprep.mubr.f32.mxu0 %v562
  %717 = vmatmul.mubr.f32.gmra.mxu0 %v561
  %v718 = vpop.f32.mrf.mxu0
  %v719 = vadd.f32 0.0, %v718
  %v720 = vpop.f32.mrf.mxu0
  %721 = vmatprep.mubr.f32.mxu0 %v564
  %722 = vmatmul.mubr.f32.gmra.mxu0 %v563
  %v723 = vpop.f32.mrf.mxu0
  %v724 = vadd.f32 0.0, %v723
  %v725 = vpop.f32.mrf.mxu0
  %726 = vdwg.mxu0
  %v727 = vld [vmem:[#allocation2] sm:$0x1]
  %v728 = vadd.f32 %v664, %v669
  %v729 = vadd.f32 %v728, %v674
  %v730 = vadd.f32 %v729, %v679
  %v731 = vadd.f32 %v730, %v684
  %v732 = vadd.f32 %v731, %v689
  %v733 = vadd.f32 %v732, %v694
  %v734 = vadd.f32 %v733, %v699
  %v735 = vadd.f32 %v734, %v704
  %v736 = vadd.f32 %v735, %v709
  %v737 = vadd.f32 %v736, %v714
  %v738 = vadd.f32 %v737, %v719
  %v739 = vadd.f32 %v738, %v724
  %v740 = vrot.slane %v739, 4
  %v741 = vadd.f32 %v739, %v740
  %v742 = vrot.slane %v741, 2
  %v743 = vadd.f32 %v741, %v742
  %v744 = vrot.slane %v743, 1
  %v745 = vadd.f32 %v743, %v744
  %v746 = vadd.f32 %v727, %v745
  %747 = vst [vmem:[#allocation2] sm:$0x1] %v746
  // Predicated region
  $region18: #{hybrid_loss.17} parent=0 // pred_check
    %p748 = pneg %p14
  $region19: #{hybrid_loss.17} parent=0 // pred_check_branch
    %750 = sbr.rel (%p748) target = $region21
  $region20: #{hybrid_loss.17} parent=0 // pred_region
    %v751 = vld [vmem:[#allocation2] sm:$0x1]
    %752 = vst [vmem:[%s3] sm:$0x1] %v751
  $region21: #{hybrid_loss.17} parent=0 // pred_fallthru
    _
  // Predicated region
  $region22: #{hybrid_loss.17} parent=0 // pred_check
    _
  $region23: #{hybrid_loss.17} parent=0 // pred_check_branch
    %754 = sbr.rel (0) target = $region25
  $region24: #{hybrid_loss.17} parent=0 // pred_region
    _
  $region25: #{hybrid_loss.17} parent=0 // pred_fallthru
    _
  // Predicated region
  $region26: #{hybrid_loss.17} parent=0 // pred_check
    _
  $region27: #{hybrid_loss.17} parent=0 // pred_check_branch
    %756 = sbr.rel (0) target = $region29
  $region28: #{hybrid_loss.17} parent=0 // pred_region
    _
  $region29: #{hybrid_loss.17} parent=0 // pred_fallthru
    _

// kernel: hybrid_loss.21
$region0: #{hybrid_loss.21}
  #allocation0 [shape = 'u32[]', space=smem, size = 0x4, offset = 0x4, fixed_abs, tag = 'smem constant byte address 0x4 - core index']
  #allocation1 [shape = 'u32[144,128]{1,0:T(1,128)}', space=vmem, size = 0x12000, scoped, tag = 'internal scratch']
  #allocation2 [shape = 'f32[1,512]{1,0:T(1,128)}', space=vmem, size = 0x800, scoped, tag = 'scratch operand']
  #allocation3 [shape = 'f32[1,512]{1,0:T(1,128)}', space=vmem, size = 0x800, scoped, tag = 'scratch operand']
  %s0 = inlined_call_operand.vmem [shape: f32[48,512], index: 0, kind: input, shape index: {}]
  %s1 = inlined_call_operand.vmem [shape: f32[48,512], index: 1, kind: input, shape index: {}]
  %s2 = inlined_call_operand.vmem [shape: f32[1,512], index: 2, kind: output, shape index: {0}]
  %s3 = inlined_call_operand.vmem [shape: f32[1,512], index: 3, kind: output, shape index: {1}]
  %4 = xla_tuple %s2, %s3
  %s5 = sld [smem:[#allocation0]]
  $region34: #{hybrid_loss.21} parent=0
    _
  %s7 = ssub.s32 1, %s5
  %s8 = scalar_select 0, %s7, %s5
  // Predicated region
  $region2: #{hybrid_loss.21} parent=0 // pred_check
    _
  $region3: #{hybrid_loss.21} parent=0 // pred_check_branch
    %10 = sbr.rel (0) target = $region5
  $region4: #{hybrid_loss.21} parent=0 // pred_region
    _
  $region5: #{hybrid_loss.21} parent=0 // pred_fallthru
    _
  // Predicated region
  $region6: #{hybrid_loss.21} parent=0 // pred_check
    _
  $region7: #{hybrid_loss.21} parent=0 // pred_check_branch
    %12 = sbr.rel (0) target = $region9
  $region8: #{hybrid_loss.21} parent=0 // pred_region
    _
  $region9: #{hybrid_loss.21} parent=0 // pred_fallthru
    _
  %p13 = scmp.eq.s32.totalorder 0, 0
  // Predicated region
  $region10: #{hybrid_loss.21} parent=0 // pred_check
    %p14 = pneg %p13
  $region11: #{hybrid_loss.21} parent=0 // pred_check_branch
    %16 = sbr.rel (%p14) target = $region13
  $region12: #{hybrid_loss.21} parent=0 // pred_region
    %v17 = vlaneseq
    %vm18 = vcmp.ge.s32.totalorder %v17, 0
    %vm19 = vcmp.lt.s32.totalorder %v17, 512
    %vm20 = vmand %vm18, %vm19
    %21 = vst.msk [vmem:[#allocation2] sm:$0xf] %vm20, 0.0
    %22 = vst.msk [vmem:[#allocation3] sm:$0xf] %vm20, 0.0
  $region13: #{hybrid_loss.21} parent=0 // pred_fallthru
    _
  %v23 = vld [vmem:[%s0] sm:$0xff]
  %v24 = vld [vmem:[%s0 + $0x8] sm:$0xff]
  %v25 = vld [vmem:[%s0 + $0x10] sm:$0xff]
  %v26 = vld [vmem:[%s0 + $0x18] sm:$0xff]
  %v27 = vld [vmem:[%s0 + $0x20] sm:$0xff]
  %v28 = vld [vmem:[%s0 + $0x28] sm:$0xff]
  %v29 = vld [vmem:[%s0 + $0x30] sm:$0xff]
  %v30 = vld [vmem:[%s0 + $0x38] sm:$0xff]
  %v31 = vld [vmem:[%s0 + $0x40] sm:$0xff]
  %v32 = vld [vmem:[%s0 + $0x48] sm:$0xff]
  %v33 = vld [vmem:[%s0 + $0x50] sm:$0xff]
  %v34 = vld [vmem:[%s0 + $0x58] sm:$0xff]
  %v35 = vld [vmem:[%s0 + $0x60] sm:$0xff]
  %v36 = vld [vmem:[%s0 + $0x68] sm:$0xff]
  %v37 = vld [vmem:[%s0 + $0x70] sm:$0xff]
  %v38 = vld [vmem:[%s0 + $0x78] sm:$0xff]
  %v39 = vld [vmem:[%s0 + $0x80] sm:$0xff]
  %v40 = vld [vmem:[%s0 + $0x88] sm:$0xff]
  %v41 = vld [vmem:[%s0 + $0x90] sm:$0xff]
  %v42 = vld [vmem:[%s0 + $0x98] sm:$0xff]
  %v43 = vld [vmem:[%s0 + $0xa0] sm:$0xff]
  %v44 = vld [vmem:[%s0 + $0xa8] sm:$0xff]
  %v45 = vld [vmem:[%s0 + $0xb0] sm:$0xff]
  %v46 = vld [vmem:[%s0 + $0xb8] sm:$0xff]
  %v47 = vld [vmem:[%s1] sm:$0xff]
  %v48 = vld [vmem:[%s1 + $0x8] sm:$0xff]
  %v49 = vld [vmem:[%s1 + $0x10] sm:$0xff]
  %v50 = vld [vmem:[%s1 + $0x18] sm:$0xff]
  %v51 = vld [vmem:[%s1 + $0x20] sm:$0xff]
  %v52 = vld [vmem:[%s1 + $0x28] sm:$0xff]
  %v53 = vld [vmem:[%s1 + $0x30] sm:$0xff]
  %v54 = vld [vmem:[%s1 + $0x38] sm:$0xff]
  %v55 = vld [vmem:[%s1 + $0x40] sm:$0xff]
  %v56 = vld [vmem:[%s1 + $0x48] sm:$0xff]
  %v57 = vld [vmem:[%s1 + $0x50] sm:$0xff]
  %v58 = vld [vmem:[%s1 + $0x58] sm:$0xff]
  %v59 = vld [vmem:[%s1 + $0x60] sm:$0xff]
  %v60 = vld [vmem:[%s1 + $0x68] sm:$0xff]
  %v61 = vld [vmem:[%s1 + $0x70] sm:$0xff]
  %v62 = vld [vmem:[%s1 + $0x78] sm:$0xff]
  %v63 = vld [vmem:[%s1 + $0x80] sm:$0xff]
  %v64 = vld [vmem:[%s1 + $0x88] sm:$0xff]
  %v65 = vld [vmem:[%s1 + $0x90] sm:$0xff]
  %v66 = vld [vmem:[%s1 + $0x98] sm:$0xff]
  %v67 = vld [vmem:[%s1 + $0xa0] sm:$0xff]
  %v68 = vld [vmem:[%s1 + $0xa8] sm:$0xff]
  %v69 = vld [vmem:[%s1 + $0xb0] sm:$0xff]
  %v70 = vld [vmem:[%s1 + $0xb8] sm:$0xff]
  %v71 = vsub.f32 %v23, %v47
  %v72 = vsub.f32 %v24, %v48
  %v73 = vsub.f32 %v25, %v49
  %v74 = vsub.f32 %v26, %v50
  %v75 = vsub.f32 %v27, %v51
  %v76 = vsub.f32 %v28, %v52
  %v77 = vsub.f32 %v29, %v53
  %v78 = vsub.f32 %v30, %v54
  %v79 = vsub.f32 %v31, %v55
  %v80 = vsub.f32 %v32, %v56
  %v81 = vsub.f32 %v33, %v57
  %v82 = vsub.f32 %v34, %v58
  %v83 = vsub.f32 %v35, %v59
  %v84 = vsub.f32 %v36, %v60
  %v85 = vsub.f32 %v37, %v61
  %v86 = vsub.f32 %v38, %v62
  %v87 = vsub.f32 %v39, %v63
  %v88 = vsub.f32 %v40, %v64
  %v89 = vsub.f32 %v41, %v65
  %v90 = vsub.f32 %v42, %v66
  %v91 = vsub.f32 %v43, %v67
  %v92 = vsub.f32 %v44, %v68
  %v93 = vsub.f32 %v45, %v69
  %v94 = vsub.f32 %v46, %v70
  %v95 = vld [vmem:[#allocation2] sm:$0xf]
  %v96 = vand.u32 2147483647, %v71
  %v97 = vand.u32 2147483647, %v72
  %v98 = vand.u32 2147483647, %v73
  %v99 = vand.u32 2147483647, %v74
  %v100 = vand.u32 2147483647, %v75
  %v101 = vand.u32 2147483647, %v76
  %v102 = vand.u32 2147483647, %v77
  %v103 = vand.u32 2147483647, %v78
  %v104 = vand.u32 2147483647, %v79
  %v105 = vand.u32 2147483647, %v80
  %v106 = vand.u32 2147483647, %v81
  %v107 = vand.u32 2147483647, %v82
  %v108 = vand.u32 2147483647, %v83
  %v109 = vand.u32 2147483647, %v84
  %v110 = vand.u32 2147483647, %v85
  %v111 = vand.u32 2147483647, %v86
  %v112 = vand.u32 2147483647, %v87
  %v113 = vand.u32 2147483647, %v88
  %v114 = vand.u32 2147483647, %v89
  %v115 = vand.u32 2147483647, %v90
  %v116 = vand.u32 2147483647, %v91
  %v117 = vand.u32 2147483647, %v92
  %v118 = vand.u32 2147483647, %v93
  %v119 = vand.u32 2147483647, %v94
  %v120 = vadd.f32 %v96, %v100
  %v121 = vadd.f32 %v120, %v104
  %v122 = vadd.f32 %v121, %v108
  %v123 = vadd.f32 %v122, %v112
  %v124 = vadd.f32 %v123, %v116
  %v125 = vrot.slane %v124, 4
  %v126 = vadd.f32 %v124, %v125
  %v127 = vrot.slane %v126, 2
  %v128 = vadd.f32 %v126, %v127
  %v129 = vrot.slane %v128, 1
  %v130 = vadd.f32 %v128, %v129
  %v131 = vadd.f32 %v97, %v101
  %v132 = vadd.f32 %v131, %v105
  %v133 = vadd.f32 %v132, %v109
  %v134 = vadd.f32 %v133, %v113
  %v135 = vadd.f32 %v134, %v117
  %v136 = vrot.slane %v135, 4
  %v137 = vadd.f32 %v135, %v136
  %v138 = vrot.slane %v137, 2
  %v139 = vadd.f32 %v137, %v138
  %v140 = vrot.slane %v139, 1
  %v141 = vadd.f32 %v139, %v140
  %v142 = vadd.f32 %v98, %v102
  %v143 = vadd.f32 %v142, %v106
  %v144 = vadd.f32 %v143, %v110
  %v145 = vadd.f32 %v144, %v114
  %v146 = vadd.f32 %v145, %v118
  %v147 = vrot.slane %v146, 4
  %v148 = vadd.f32 %v146, %v147
  %v149 = vrot.slane %v148, 2
  %v150 = vadd.f32 %v148, %v149
  %v151 = vrot.slane %v150, 1
  %v152 = vadd.f32 %v150, %v151
  %v153 = vadd.f32 %v99, %v103
  %v154 = vadd.f32 %v153, %v107
  %v155 = vadd.f32 %v154, %v111
  %v156 = vadd.f32 %v155, %v115
  %v157 = vadd.f32 %v156, %v119
  %v158 = vrot.slane %v157, 4
  %v159 = vadd.f32 %v157, %v158
  %v160 = vrot.slane %v159, 2
  %v161 = vadd.f32 %v159, %v160
  %v162 = vrot.slane %v161, 1
  %v163 = vadd.f32 %v161, %v162
  %v168 = vcombine.low %v130, %v141
  %v169 = vcombine.low %v152, %v163
  %v171 = vunpack.c.l.s4 1966171168
  %v172 = vunpack.c.0.s8 %v171
  %v173 = vlaneseq
  %v174 = vshrl.u32 %v173, 7
  %v175 = vsub.s32 %v172, %v174
  %v176 = vrot.slane %v168, %v175
  %v178 = vunpack.c.l.s4 1966171168
  %v179 = vunpack.c.0.s8 %v178
  %v180 = vlaneseq
  %v181 = vshrl.u32 %v180, 7
  %v182 = vsub.s32 %v179, %v181
  %v183 = vrot.slane %v169, %v182
  %v184 = vcombine.low %v176, %v183
  %v186 = vunpack.c.l.s4 1966171168
  %v187 = vunpack.c.0.s8 %v186
  %v188 = vlaneseq
  %v189 = vshrl.u32 %v188, 7
  %v190 = vsub.s32 %v187, %v189
  %v191 = vrot.slane %v184, %v190
  %v193 = vadd.f32 %v95, %v191
  %v194 = vlaneseq
  %vm195 = vcmp.ge.s32.totalorder %v194, 0
  %vm196 = vcmp.lt.s32.totalorder %v194, 512
  %vm197 = vmand %vm195, %vm196
  %198 = vst.msk [vmem:[#allocation2] sm:$0xf] %vm197, %v193
  %v199 = vld [vmem:[#allocation3] sm:$0xf]
  %v200 = vmul.f32 %v71, %v71
  %v201 = vmul.f32 %v72, %v72
  %v202 = vmul.f32 %v73, %v73
  %v203 = vmul.f32 %v74, %v74
  %v204 = vmul.f32 %v75, %v75
  %v205 = vmul.f32 %v76, %v76
  %v206 = vmul.f32 %v77, %v77
  %v207 = vmul.f32 %v78, %v78
  %v208 = vmul.f32 %v79, %v79
  %v209 = vmul.f32 %v80, %v80
  %v210 = vmul.f32 %v81, %v81
  %v211 = vmul.f32 %v82, %v82
  %v212 = vmul.f32 %v83, %v83
  %v213 = vmul.f32 %v84, %v84
  %v214 = vmul.f32 %v85, %v85
  %v215 = vmul.f32 %v86, %v86
  %v216 = vmul.f32 %v87, %v87
  %v217 = vmul.f32 %v88, %v88
  %v218 = vmul.f32 %v89, %v89
  %v219 = vmul.f32 %v90, %v90
  %v220 = vmul.f32 %v91, %v91
  %v221 = vmul.f32 %v92, %v92
  %v222 = vmul.f32 %v93, %v93
  %v223 = vmul.f32 %v94, %v94
  %v224 = vadd.f32 %v200, %v204
  %v225 = vadd.f32 %v224, %v208
  %v226 = vadd.f32 %v225, %v212
  %v227 = vadd.f32 %v226, %v216
  %v228 = vadd.f32 %v227, %v220
  %v229 = vrot.slane %v228, 4
  %v230 = vadd.f32 %v228, %v229
  %v231 = vrot.slane %v230, 2
  %v232 = vadd.f32 %v230, %v231
  %v233 = vrot.slane %v232, 1
  %v234 = vadd.f32 %v232, %v233
  %v235 = vadd.f32 %v201, %v205
  %v236 = vadd.f32 %v235, %v209
  %v237 = vadd.f32 %v236, %v213
  %v238 = vadd.f32 %v237, %v217
  %v239 = vadd.f32 %v238, %v221
  %v240 = vrot.slane %v239, 4
  %v241 = vadd.f32 %v239, %v240
  %v242 = vrot.slane %v241, 2
  %v243 = vadd.f32 %v241, %v242
  %v244 = vrot.slane %v243, 1
  %v245 = vadd.f32 %v243, %v244
  %v246 = vadd.f32 %v202, %v206
  %v247 = vadd.f32 %v246, %v210
  %v248 = vadd.f32 %v247, %v214
  %v249 = vadd.f32 %v248, %v218
  %v250 = vadd.f32 %v249, %v222
  %v251 = vrot.slane %v250, 4
  %v252 = vadd.f32 %v250, %v251
  %v253 = vrot.slane %v252, 2
  %v254 = vadd.f32 %v252, %v253
  %v255 = vrot.slane %v254, 1
  %v256 = vadd.f32 %v254, %v255
  %v257 = vadd.f32 %v203, %v207
  %v258 = vadd.f32 %v257, %v211
  %v259 = vadd.f32 %v258, %v215
  %v260 = vadd.f32 %v259, %v219
  %v261 = vadd.f32 %v260, %v223
  %v262 = vrot.slane %v261, 4
  %v263 = vadd.f32 %v261, %v262
  %v264 = vrot.slane %v263, 2
  %v265 = vadd.f32 %v263, %v264
  %v266 = vrot.slane %v265, 1
  %v267 = vadd.f32 %v265, %v266
  %v272 = vcombine.low %v234, %v245
  %v273 = vcombine.low %v256, %v267
  %v275 = vunpack.c.l.s4 1966171168
  %v276 = vunpack.c.0.s8 %v275
  %v277 = vlaneseq
  %v278 = vshrl.u32 %v277, 7
  %v279 = vsub.s32 %v276, %v278
  %v280 = vrot.slane %v272, %v279
  %v282 = vunpack.c.l.s4 1966171168
  %v283 = vunpack.c.0.s8 %v282
  %v284 = vlaneseq
  %v285 = vshrl.u32 %v284, 7
  %v286 = vsub.s32 %v283, %v285
  %v287 = vrot.slane %v273, %v286
  %v288 = vcombine.low %v280, %v287
  %v290 = vunpack.c.l.s4 1966171168
  %v291 = vunpack.c.0.s8 %v290
  %v292 = vlaneseq
  %v293 = vshrl.u32 %v292, 7
  %v294 = vsub.s32 %v291, %v293
  %v295 = vrot.slane %v288, %v294
  %v297 = vadd.f32 %v199, %v295
  %298 = vst.msk [vmem:[#allocation3] sm:$0xf] %vm197, %v297
  // Predicated region
  $region14: #{hybrid_loss.21} parent=0 // pred_check
    %p299 = pneg %p13
  $region15: #{hybrid_loss.21} parent=0 // pred_check_branch
    %301 = sbr.rel (%p299) target = $region17
  $region16: #{hybrid_loss.21} parent=0 // pred_region
    %v302 = vld [vmem:[#allocation2] sm:$0xf]
    %303 = vst.msk [vmem:[%s2] sm:$0xf] %vm197, %v302
    %v304 = vld [vmem:[#allocation3] sm:$0xf]
    %305 = vst.msk [vmem:[%s3] sm:$0xf] %vm197, %v304
  $region17: #{hybrid_loss.21} parent=0 // pred_fallthru
    _
  // Predicated region
  $region18: #{hybrid_loss.21} parent=0 // pred_check
    _
  $region19: #{hybrid_loss.21} parent=0 // pred_check_branch
    %307 = sbr.rel (0) target = $region21
  $region20: #{hybrid_loss.21} parent=0 // pred_region
    _
  $region21: #{hybrid_loss.21} parent=0 // pred_fallthru
    _
  // Predicated region
  $region22: #{hybrid_loss.21} parent=0 // pred_check
    _
  $region23: #{hybrid_loss.21} parent=0 // pred_check_branch
    %309 = sbr.rel (0) target = $region25
  $region24: #{hybrid_loss.21} parent=0 // pred_region
    _
  $region25: #{hybrid_loss.21} parent=0 // pred_fallthru
    _
  // Predicated region
  $region26: #{hybrid_loss.21} parent=0 // pred_check
    _
  $region27: #{hybrid_loss.21} parent=0 // pred_check_branch
    %311 = sbr.rel (0) target = $region29
  $region28: #{hybrid_loss.21} parent=0 // pred_region
    _
  $region29: #{hybrid_loss.21} parent=0 // pred_fallthru
    _
  // Predicated region
  $region30: #{hybrid_loss.21} parent=0 // pred_check
    _
  $region31: #{hybrid_loss.21} parent=0 // pred_check_branch
    %313 = sbr.rel (0) target = $region33
  $region32: #{hybrid_loss.21} parent=0 // pred_region
    _
  $region33: #{hybrid_loss.21} parent=0 // pred_fallthru
    _

// kernel: hybrid_loss.16
$region0: #{hybrid_loss.16}
  #allocation0 [shape = 'u32[]', space=smem, size = 0x4, offset = 0x4, fixed_abs, tag = 'smem constant byte address 0x4 - core index']
  #allocation1 [shape = 'u32[144,128]{1,0:T(1,128)}', space=vmem, size = 0x12000, scoped, tag = 'internal scratch']
  #allocation2 [shape = 'f32[1,128]{1,0:T(1,128)}', space=vmem, size = 0x200, scoped, tag = 'scratch operand']
  %s0 = inlined_call_operand.vmem [shape: bf16[456,128], index: 0, kind: input, shape index: {}]
  %s1 = inlined_call_operand.vmem [shape: bf16[456,128], index: 1, kind: input, shape index: {}]
  %s2 = inlined_call_operand.vmem [shape: f32[128,128], index: 2, kind: input, shape index: {}]
  %s3 = inlined_call_operand.vmem [shape: f32[1,128], index: 3, kind: output, shape index: {}]
  %s4 = sld [smem:[#allocation0]]
  $region30: #{hybrid_loss.16} parent=0
    _
  %s6 = ssub.s32 1, %s4
  %s7 = scalar_select 0, %s6, %s4
  // Predicated region
  $region2: #{hybrid_loss.16} parent=0 // pred_check
    _
  $region3: #{hybrid_loss.16} parent=0 // pred_check_branch
    %9 = sbr.rel (0) target = $region5
  $region4: #{hybrid_loss.16} parent=0 // pred_region
    _
  $region5: #{hybrid_loss.16} parent=0 // pred_fallthru
    _
  // Predicated region
  $region6: #{hybrid_loss.16} parent=0 // pred_check
    _
  $region7: #{hybrid_loss.16} parent=0 // pred_check_branch
    %11 = sbr.rel (0) target = $region9
  $region8: #{hybrid_loss.16} parent=0 // pred_region
    _
  $region9: #{hybrid_loss.16} parent=0 // pred_fallthru
    _
  // Predicated region
  $region10: #{hybrid_loss.16} parent=0 // pred_check
    _
  $region11: #{hybrid_loss.16} parent=0 // pred_check_branch
    %13 = sbr.rel (0) target = $region13
  $region12: #{hybrid_loss.16} parent=0 // pred_region
    _
  $region13: #{hybrid_loss.16} parent=0 // pred_fallthru
    _
  %p14 = scmp.eq.s32.totalorder 0, 0
  // Predicated region
  $region14: #{hybrid_loss.16} parent=0 // pred_check
    %p15 = pneg %p14
  $region15: #{hybrid_loss.16} parent=0 // pred_check_branch
    %17 = sbr.rel (%p15) target = $region17
  $region16: #{hybrid_loss.16} parent=0 // pred_region
    %18 = vst [vmem:[#allocation2] sm:$0x1] 0.0
  $region17: #{hybrid_loss.16} parent=0 // pred_fallthru
    _
  %v19 = vld [vmem:[%s0] sm:$0xf]
  %v20 = vld [vmem:[%s0 + $0x4] sm:$0xf]
  %v21 = vld [vmem:[%s0 + $0x8] sm:$0xf]
  %v22 = vld [vmem:[%s0 + $0xc] sm:$0xf]
  %v23 = vld [vmem:[%s0 + $0x10] sm:$0xf]
  %v24 = vld [vmem:[%s0 + $0x14] sm:$0xf]
  %v25 = vld [vmem:[%s0 + $0x18] sm:$0xf]
  %v26 = vld [vmem:[%s0 + $0x1c] sm:$0xf]
  %v27 = vld [vmem:[%s0 + $0x20] sm:$0xf]
  %v28 = vld [vmem:[%s0 + $0x24] sm:$0xf]
  %v29 = vld [vmem:[%s0 + $0x28] sm:$0xf]
  %v30 = vld [vmem:[%s0 + $0x2c] sm:$0xf]
  %v31 = vld [vmem:[%s0 + $0x30] sm:$0xf]
  %v32 = vld [vmem:[%s0 + $0x34] sm:$0xf]
  %v33 = vld [vmem:[%s0 + $0x38] sm:$0xf]
  %v34 = vld [vmem:[%s0 + $0x3c] sm:$0xf]
  %v35 = vld [vmem:[%s0 + $0x40] sm:$0xf]
  %v36 = vld [vmem:[%s0 + $0x44] sm:$0xf]
  %v37 = vld [vmem:[%s0 + $0x48] sm:$0xf]
  %v38 = vld [vmem:[%s0 + $0x4c] sm:$0xf]
  %v39 = vld [vmem:[%s0 + $0x50] sm:$0xf]
  %v40 = vld [vmem:[%s0 + $0x54] sm:$0xf]
  %v41 = vld [vmem:[%s0 + $0x58] sm:$0xf]
  %v42 = vld [vmem:[%s0 + $0x5c] sm:$0xf]
  %v43 = vld [vmem:[%s0 + $0x60] sm:$0xf]
  %v44 = vld [vmem:[%s0 + $0x64] sm:$0xf]
  %v45 = vld [vmem:[%s0 + $0x68] sm:$0xf]
  %v46 = vld [vmem:[%s0 + $0x6c] sm:$0xf]
  %v47 = vld [vmem:[%s0 + $0x70] sm:$0xf]
  %v48 = vld [vmem:[%s0 + $0x74] sm:$0xf]
  %v49 = vld [vmem:[%s0 + $0x78] sm:$0xf]
  %v50 = vld [vmem:[%s0 + $0x7c] sm:$0xf]
  %v51 = vld [vmem:[%s0 + $0x80] sm:$0xf]
  %v52 = vld [vmem:[%s0 + $0x84] sm:$0xf]
  %v53 = vld [vmem:[%s0 + $0x88] sm:$0xf]
  %v54 = vld [vmem:[%s0 + $0x8c] sm:$0xf]
  %v55 = vld [vmem:[%s0 + $0x90] sm:$0xf]
  %v56 = vld [vmem:[%s0 + $0x94] sm:$0xf]
  %v57 = vld [vmem:[%s0 + $0x98] sm:$0xf]
  %v58 = vld [vmem:[%s0 + $0x9c] sm:$0xf]
  %v59 = vld [vmem:[%s0 + $0xa0] sm:$0xf]
  %v60 = vld [vmem:[%s0 + $0xa4] sm:$0xf]
  %v61 = vld [vmem:[%s0 + $0xa8] sm:$0xf]
  %v62 = vld [vmem:[%s0 + $0xac] sm:$0xf]
  %v63 = vld [vmem:[%s0 + $0xb0] sm:$0xf]
  %v64 = vld [vmem:[%s0 + $0xb4] sm:$0xf]
  %v65 = vld [vmem:[%s0 + $0xb8] sm:$0xf]
  %v66 = vld [vmem:[%s0 + $0xbc] sm:$0xf]
  %v67 = vld [vmem:[%s0 + $0xc0] sm:$0xf]
  %v68 = vld [vmem:[%s0 + $0xc4] sm:$0xf]
  %v69 = vld [vmem:[%s0 + $0xc8] sm:$0xf]
  %v70 = vld [vmem:[%s0 + $0xcc] sm:$0xf]
  %v71 = vld [vmem:[%s0 + $0xd0] sm:$0xf]
  %v72 = vld [vmem:[%s0 + $0xd4] sm:$0xf]
  %v73 = vld [vmem:[%s0 + $0xd8] sm:$0xf]
  %v74 = vld [vmem:[%s0 + $0xdc] sm:$0xf]
  %v75 = vld [vmem:[%s0 + $0xe0] sm:$0xf]
  %v76 = vunpack.c.l.bf16 %v19
  %v77 = vunpack.c.l.bf16 %v20
  %v78 = vunpack.c.l.bf16 %v21
  %v79 = vunpack.c.l.bf16 %v22
  %v80 = vunpack.c.l.bf16 %v23
  %v81 = vunpack.c.l.bf16 %v24
  %v82 = vunpack.c.l.bf16 %v25
  %v83 = vunpack.c.l.bf16 %v26
  %v84 = vunpack.c.l.bf16 %v27
  %v85 = vunpack.c.l.bf16 %v28
  %v86 = vunpack.c.l.bf16 %v29
  %v87 = vunpack.c.l.bf16 %v30
  %v88 = vunpack.c.l.bf16 %v31
  %v89 = vunpack.c.l.bf16 %v32
  %v90 = vunpack.c.l.bf16 %v33
  %v91 = vunpack.c.l.bf16 %v34
  %v92 = vunpack.c.l.bf16 %v35
  %v93 = vunpack.c.l.bf16 %v36
  %v94 = vunpack.c.l.bf16 %v37
  %v95 = vunpack.c.l.bf16 %v38
  %v96 = vunpack.c.l.bf16 %v39
  %v97 = vunpack.c.l.bf16 %v40
  %v98 = vunpack.c.l.bf16 %v41
  %v99 = vunpack.c.l.bf16 %v42
  %v100 = vunpack.c.l.bf16 %v43
  %v101 = vunpack.c.l.bf16 %v44
  %v102 = vunpack.c.l.bf16 %v45
  %v103 = vunpack.c.l.bf16 %v46
  %v104 = vunpack.c.l.bf16 %v47
  %v105 = vunpack.c.l.bf16 %v48
  %v106 = vunpack.c.l.bf16 %v49
  %v107 = vunpack.c.l.bf16 %v50
  %v108 = vunpack.c.l.bf16 %v51
  %v109 = vunpack.c.l.bf16 %v52
  %v110 = vunpack.c.l.bf16 %v53
  %v111 = vunpack.c.l.bf16 %v54
  %v112 = vunpack.c.l.bf16 %v55
  %v113 = vunpack.c.l.bf16 %v56
  %v114 = vunpack.c.l.bf16 %v57
  %v115 = vunpack.c.l.bf16 %v58
  %v116 = vunpack.c.l.bf16 %v59
  %v117 = vunpack.c.l.bf16 %v60
  %v118 = vunpack.c.l.bf16 %v61
  %v119 = vunpack.c.l.bf16 %v62
  %v120 = vunpack.c.l.bf16 %v63
  %v121 = vunpack.c.l.bf16 %v64
  %v122 = vunpack.c.l.bf16 %v65
  %v123 = vunpack.c.l.bf16 %v66
  %v124 = vunpack.c.l.bf16 %v67
  %v125 = vunpack.c.l.bf16 %v68
  %v126 = vunpack.c.l.bf16 %v69
  %v127 = vunpack.c.l.bf16 %v70
  %v128 = vunpack.c.l.bf16 %v71
  %v129 = vunpack.c.l.bf16 %v72
  %v130 = vunpack.c.l.bf16 %v73
  %v131 = vunpack.c.l.bf16 %v74
  %v132 = vunpack.c.l.bf16 %v75
  %v133 = vld [vmem:[%s1] sm:$0xf]
  %v134 = vld [vmem:[%s1 + $0x4] sm:$0xf]
  %v135 = vld [vmem:[%s1 + $0x8] sm:$0xf]
  %v136 = vld [vmem:[%s1 + $0xc] sm:$0xf]
  %v137 = vld [vmem:[%s1 + $0x10] sm:$0xf]
  %v138 = vld [vmem:[%s1 + $0x14] sm:$0xf]
  %v139 = vld [vmem:[%s1 + $0x18] sm:$0xf]
  %v140 = vld [vmem:[%s1 + $0x1c] sm:$0xf]
  %v141 = vld [vmem:[%s1 + $0x20] sm:$0xf]
  %v142 = vld [vmem:[%s1 + $0x24] sm:$0xf]
  %v143 = vld [vmem:[%s1 + $0x28] sm:$0xf]
  %v144 = vld [vmem:[%s1 + $0x2c] sm:$0xf]
  %v145 = vld [vmem:[%s1 + $0x30] sm:$0xf]
  %v146 = vld [vmem:[%s1 + $0x34] sm:$0xf]
  %v147 = vld [vmem:[%s1 + $0x38] sm:$0xf]
  %v148 = vld [vmem:[%s1 + $0x3c] sm:$0xf]
  %v149 = vld [vmem:[%s1 + $0x40] sm:$0xf]
  %v150 = vld [vmem:[%s1 + $0x44] sm:$0xf]
  %v151 = vld [vmem:[%s1 + $0x48] sm:$0xf]
  %v152 = vld [vmem:[%s1 + $0x4c] sm:$0xf]
  %v153 = vld [vmem:[%s1 + $0x50] sm:$0xf]
  %v154 = vld [vmem:[%s1 + $0x54] sm:$0xf]
  %v155 = vld [vmem:[%s1 + $0x58] sm:$0xf]
  %v156 = vld [vmem:[%s1 + $0x5c] sm:$0xf]
  %v157 = vld [vmem:[%s1 + $0x60] sm:$0xf]
  %v158 = vld [vmem:[%s1 + $0x64] sm:$0xf]
  %v159 = vld [vmem:[%s1 + $0x68] sm:$0xf]
  %v160 = vld [vmem:[%s1 + $0x6c] sm:$0xf]
  %v161 = vld [vmem:[%s1 + $0x70] sm:$0xf]
  %v162 = vld [vmem:[%s1 + $0x74] sm:$0xf]
  %v163 = vld [vmem:[%s1 + $0x78] sm:$0xf]
  %v164 = vld [vmem:[%s1 + $0x7c] sm:$0xf]
  %v165 = vld [vmem:[%s1 + $0x80] sm:$0xf]
  %v166 = vld [vmem:[%s1 + $0x84] sm:$0xf]
  %v167 = vld [vmem:[%s1 + $0x88] sm:$0xf]
  %v168 = vld [vmem:[%s1 + $0x8c] sm:$0xf]
  %v169 = vld [vmem:[%s1 + $0x90] sm:$0xf]
  %v170 = vld [vmem:[%s1 + $0x94] sm:$0xf]
  %v171 = vld [vmem:[%s1 + $0x98] sm:$0xf]
  %v172 = vld [vmem:[%s1 + $0x9c] sm:$0xf]
  %v173 = vld [vmem:[%s1 + $0xa0] sm:$0xf]
  %v174 = vld [vmem:[%s1 + $0xa4] sm:$0xf]
  %v175 = vld [vmem:[%s1 + $0xa8] sm:$0xf]
  %v176 = vld [vmem:[%s1 + $0xac] sm:$0xf]
  %v177 = vld [vmem:[%s1 + $0xb0] sm:$0xf]
  %v178 = vld [vmem:[%s1 + $0xb4] sm:$0xf]
  %v179 = vld [vmem:[%s1 + $0xb8] sm:$0xf]
  %v180 = vld [vmem:[%s1 + $0xbc] sm:$0xf]
  %v181 = vld [vmem:[%s1 + $0xc0] sm:$0xf]
  %v182 = vld [vmem:[%s1 + $0xc4] sm:$0xf]
  %v183 = vld [vmem:[%s1 + $0xc8] sm:$0xf]
  %v184 = vld [vmem:[%s1 + $0xcc] sm:$0xf]
  %v185 = vld [vmem:[%s1 + $0xd0] sm:$0xf]
  %v186 = vld [vmem:[%s1 + $0xd4] sm:$0xf]
  %v187 = vld [vmem:[%s1 + $0xd8] sm:$0xf]
  %v188 = vld [vmem:[%s1 + $0xdc] sm:$0xf]
  %v189 = vld [vmem:[%s1 + $0xe0] sm:$0xf]
  %v190 = vunpack.c.l.bf16 %v133
  %v191 = vunpack.c.l.bf16 %v134
  %v192 = vunpack.c.l.bf16 %v135
  %v193 = vunpack.c.l.bf16 %v136
  %v194 = vunpack.c.l.bf16 %v137
  %v195 = vunpack.c.l.bf16 %v138
  %v196 = vunpack.c.l.bf16 %v139
  %v197 = vunpack.c.l.bf16 %v140
  %v198 = vunpack.c.l.bf16 %v141
  %v199 = vunpack.c.l.bf16 %v142
  %v200 = vunpack.c.l.bf16 %v143
  %v201 = vunpack.c.l.bf16 %v144
  %v202 = vunpack.c.l.bf16 %v145
  %v203 = vunpack.c.l.bf16 %v146
  %v204 = vunpack.c.l.bf16 %v147
  %v205 = vunpack.c.l.bf16 %v148
  %v206 = vunpack.c.l.bf16 %v149
  %v207 = vunpack.c.l.bf16 %v150
  %v208 = vunpack.c.l.bf16 %v151
  %v209 = vunpack.c.l.bf16 %v152
  %v210 = vunpack.c.l.bf16 %v153
  %v211 = vunpack.c.l.bf16 %v154
  %v212 = vunpack.c.l.bf16 %v155
  %v213 = vunpack.c.l.bf16 %v156
  %v214 = vunpack.c.l.bf16 %v157
  %v215 = vunpack.c.l.bf16 %v158
  %v216 = vunpack.c.l.bf16 %v159
  %v217 = vunpack.c.l.bf16 %v160
  %v218 = vunpack.c.l.bf16 %v161
  %v219 = vunpack.c.l.bf16 %v162
  %v220 = vunpack.c.l.bf16 %v163
  %v221 = vunpack.c.l.bf16 %v164
  %v222 = vunpack.c.l.bf16 %v165
  %v223 = vunpack.c.l.bf16 %v166
  %v224 = vunpack.c.l.bf16 %v167
  %v225 = vunpack.c.l.bf16 %v168
  %v226 = vunpack.c.l.bf16 %v169
  %v227 = vunpack.c.l.bf16 %v170
  %v228 = vunpack.c.l.bf16 %v171
  %v229 = vunpack.c.l.bf16 %v172
  %v230 = vunpack.c.l.bf16 %v173
  %v231 = vunpack.c.l.bf16 %v174
  %v232 = vunpack.c.l.bf16 %v175
  %v233 = vunpack.c.l.bf16 %v176
  %v234 = vunpack.c.l.bf16 %v177
  %v235 = vunpack.c.l.bf16 %v178
  %v236 = vunpack.c.l.bf16 %v179
  %v237 = vunpack.c.l.bf16 %v180
  %v238 = vunpack.c.l.bf16 %v181
  %v239 = vunpack.c.l.bf16 %v182
  %v240 = vunpack.c.l.bf16 %v183
  %v241 = vunpack.c.l.bf16 %v184
  %v242 = vunpack.c.l.bf16 %v185
  %v243 = vunpack.c.l.bf16 %v186
  %v244 = vunpack.c.l.bf16 %v187
  %v245 = vunpack.c.l.bf16 %v188
  %v246 = vunpack.c.l.bf16 %v189
  %v247 = vmul.f32 %v76, %v76
  %v248 = vmul.f32 %v77, %v77
  %v249 = vmul.f32 %v78, %v78
  %v250 = vmul.f32 %v79, %v79
  %v251 = vmul.f32 %v80, %v80
  %v252 = vmul.f32 %v81, %v81
  %v253 = vmul.f32 %v82, %v82
  %v254 = vmul.f32 %v83, %v83
  %v255 = vmul.f32 %v84, %v84
  %v256 = vmul.f32 %v85, %v85
  %v257 = vmul.f32 %v86, %v86
  %v258 = vmul.f32 %v87, %v87
  %v259 = vmul.f32 %v88, %v88
  %v260 = vmul.f32 %v89, %v89
  %v261 = vmul.f32 %v90, %v90
  %v262 = vmul.f32 %v91, %v91
  %v263 = vmul.f32 %v92, %v92
  %v264 = vmul.f32 %v93, %v93
  %v265 = vmul.f32 %v94, %v94
  %v266 = vmul.f32 %v95, %v95
  %v267 = vmul.f32 %v96, %v96
  %v268 = vmul.f32 %v97, %v97
  %v269 = vmul.f32 %v98, %v98
  %v270 = vmul.f32 %v99, %v99
  %v271 = vmul.f32 %v100, %v100
  %v272 = vmul.f32 %v101, %v101
  %v273 = vmul.f32 %v102, %v102
  %v274 = vmul.f32 %v103, %v103
  %v275 = vmul.f32 %v104, %v104
  %v276 = vmul.f32 %v105, %v105
  %v277 = vmul.f32 %v106, %v106
  %v278 = vmul.f32 %v107, %v107
  %v279 = vmul.f32 %v108, %v108
  %v280 = vmul.f32 %v109, %v109
  %v281 = vmul.f32 %v110, %v110
  %v282 = vmul.f32 %v111, %v111
  %v283 = vmul.f32 %v112, %v112
  %v284 = vmul.f32 %v113, %v113
  %v285 = vmul.f32 %v114, %v114
  %v286 = vmul.f32 %v115, %v115
  %v287 = vmul.f32 %v116, %v116
  %v288 = vmul.f32 %v117, %v117
  %v289 = vmul.f32 %v118, %v118
  %v290 = vmul.f32 %v119, %v119
  %v291 = vmul.f32 %v120, %v120
  %v292 = vmul.f32 %v121, %v121
  %v293 = vmul.f32 %v122, %v122
  %v294 = vmul.f32 %v123, %v123
  %v295 = vmul.f32 %v124, %v124
  %v296 = vmul.f32 %v125, %v125
  %v297 = vmul.f32 %v126, %v126
  %v298 = vmul.f32 %v127, %v127
  %v299 = vmul.f32 %v128, %v128
  %v300 = vmul.f32 %v129, %v129
  %v301 = vmul.f32 %v130, %v130
  %v302 = vmul.f32 %v131, %v131
  %v303 = vmul.f32 %v132, %v132
  %304 = vadd.xlane.f32.xlu0 %v247
  %v305 = vpop.xlane.xlu0 %304
  %306 = vadd.xlane.f32.xlu0 %v248
  %v307 = vpop.xlane.xlu0 %306
  %308 = vadd.xlane.f32.xlu0 %v249
  %v309 = vpop.xlane.xlu0 %308
  %310 = vadd.xlane.f32.xlu0 %v250
  %v311 = vpop.xlane.xlu0 %310
  %312 = vadd.xlane.f32.xlu0 %v251
  %v313 = vpop.xlane.xlu0 %312
  %314 = vadd.xlane.f32.xlu0 %v252
  %v315 = vpop.xlane.xlu0 %314
  %316 = vadd.xlane.f32.xlu0 %v253
  %v317 = vpop.xlane.xlu0 %316
  %318 = vadd.xlane.f32.xlu0 %v254
  %v319 = vpop.xlane.xlu0 %318
  %320 = vadd.xlane.f32.xlu0 %v255
  %v321 = vpop.xlane.xlu0 %320
  %322 = vadd.xlane.f32.xlu0 %v256
  %v323 = vpop.xlane.xlu0 %322
  %324 = vadd.xlane.f32.xlu0 %v257
  %v325 = vpop.xlane.xlu0 %324
  %326 = vadd.xlane.f32.xlu0 %v258
  %v327 = vpop.xlane.xlu0 %326
  %328 = vadd.xlane.f32.xlu0 %v259
  %v329 = vpop.xlane.xlu0 %328
  %330 = vadd.xlane.f32.xlu0 %v260
  %v331 = vpop.xlane.xlu0 %330
  %332 = vadd.xlane.f32.xlu0 %v261
  %v333 = vpop.xlane.xlu0 %332
  %334 = vadd.xlane.f32.xlu0 %v262
  %v335 = vpop.xlane.xlu0 %334
  %336 = vadd.xlane.f32.xlu0 %v263
  %v337 = vpop.xlane.xlu0 %336
  %338 = vadd.xlane.f32.xlu0 %v264
  %v339 = vpop.xlane.xlu0 %338
  %340 = vadd.xlane.f32.xlu0 %v265
  %v341 = vpop.xlane.xlu0 %340
  %342 = vadd.xlane.f32.xlu0 %v266
  %v343 = vpop.xlane.xlu0 %342
  %344 = vadd.xlane.f32.xlu0 %v267
  %v345 = vpop.xlane.xlu0 %344
  %346 = vadd.xlane.f32.xlu0 %v268
  %v347 = vpop.xlane.xlu0 %346
  %348 = vadd.xlane.f32.xlu0 %v269
  %v349 = vpop.xlane.xlu0 %348
  %350 = vadd.xlane.f32.xlu0 %v270
  %v351 = vpop.xlane.xlu0 %350
  %352 = vadd.xlane.f32.xlu0 %v271
  %v353 = vpop.xlane.xlu0 %352
  %354 = vadd.xlane.f32.xlu0 %v272
  %v355 = vpop.xlane.xlu0 %354
  %356 = vadd.xlane.f32.xlu0 %v273
  %v357 = vpop.xlane.xlu0 %356
  %358 = vadd.xlane.f32.xlu0 %v274
  %v359 = vpop.xlane.xlu0 %358
  %360 = vadd.xlane.f32.xlu0 %v275
  %v361 = vpop.xlane.xlu0 %360
  %362 = vadd.xlane.f32.xlu0 %v276
  %v363 = vpop.xlane.xlu0 %362
  %364 = vadd.xlane.f32.xlu0 %v277
  %v365 = vpop.xlane.xlu0 %364
  %366 = vadd.xlane.f32.xlu0 %v278
  %v367 = vpop.xlane.xlu0 %366
  %368 = vadd.xlane.f32.xlu0 %v279
  %v369 = vpop.xlane.xlu0 %368
  %370 = vadd.xlane.f32.xlu0 %v280
  %v371 = vpop.xlane.xlu0 %370
  %372 = vadd.xlane.f32.xlu0 %v281
  %v373 = vpop.xlane.xlu0 %372
  %374 = vadd.xlane.f32.xlu0 %v282
  %v375 = vpop.xlane.xlu0 %374
  %376 = vadd.xlane.f32.xlu0 %v283
  %v377 = vpop.xlane.xlu0 %376
  %378 = vadd.xlane.f32.xlu0 %v284
  %v379 = vpop.xlane.xlu0 %378
  %380 = vadd.xlane.f32.xlu0 %v285
  %v381 = vpop.xlane.xlu0 %380
  %382 = vadd.xlane.f32.xlu0 %v286
  %v383 = vpop.xlane.xlu0 %382
  %384 = vadd.xlane.f32.xlu0 %v287
  %v385 = vpop.xlane.xlu0 %384
  %386 = vadd.xlane.f32.xlu0 %v288
  %v387 = vpop.xlane.xlu0 %386
  %388 = vadd.xlane.f32.xlu0 %v289
  %v389 = vpop.xlane.xlu0 %388
  %390 = vadd.xlane.f32.xlu0 %v290
  %v391 = vpop.xlane.xlu0 %390
  %392 = vadd.xlane.f32.xlu0 %v291
  %v393 = vpop.xlane.xlu0 %392
  %394 = vadd.xlane.f32.xlu0 %v292
  %v395 = vpop.xlane.xlu0 %394
  %396 = vadd.xlane.f32.xlu0 %v293
  %v397 = vpop.xlane.xlu0 %396
  %398 = vadd.xlane.f32.xlu0 %v294
  %v399 = vpop.xlane.xlu0 %398
  %400 = vadd.xlane.f32.xlu0 %v295
  %v401 = vpop.xlane.xlu0 %400
  %402 = vadd.xlane.f32.xlu0 %v296
  %v403 = vpop.xlane.xlu0 %402
  %404 = vadd.xlane.f32.xlu0 %v297
  %v405 = vpop.xlane.xlu0 %404
  %406 = vadd.xlane.f32.xlu0 %v298
  %v407 = vpop.xlane.xlu0 %406
  %408 = vadd.xlane.f32.xlu0 %v299
  %v409 = vpop.xlane.xlu0 %408
  %410 = vadd.xlane.f32.xlu0 %v300
  %v411 = vpop.xlane.xlu0 %410
  %412 = vadd.xlane.f32.xlu0 %v301
  %v413 = vpop.xlane.xlu0 %412
  %414 = vadd.xlane.f32.xlu0 %v302
  %v415 = vpop.xlane.xlu0 %414
  %416 = vadd.xlane.f32.xlu0 %v303
  %v417 = vpop.xlane.xlu0 %416
  %v418 = vrsqrt.pop %v305
  %v419 = vmul.f32 %v305, %v418
  %vm420 = vcmp.eq.f32.partialorder %v305, inf
  %v421 = vsel %vm420, %v305, %v419
  %vm422 = vcmp.eq.f32.partialorder %v305, 0.0
  %v423 = vand.u32 %v305, 2147483648
  %v424 = vsel %vm422, %v423, %v421
  %v425 = vrsqrt.pop %v307
  %v426 = vmul.f32 %v307, %v425
  %vm427 = vcmp.eq.f32.partialorder %v307, inf
  %v428 = vsel %vm427, %v307, %v426
  %vm429 = vcmp.eq.f32.partialorder %v307, 0.0
  %v430 = vand.u32 %v307, 2147483648
  %v431 = vsel %vm429, %v430, %v428
  %v432 = vrsqrt.pop %v309
  %v433 = vmul.f32 %v309, %v432
  %vm434 = vcmp.eq.f32.partialorder %v309, inf
  %v435 = vsel %vm434, %v309, %v433
  %vm436 = vcmp.eq.f32.partialorder %v309, 0.0
  %v437 = vand.u32 %v309, 2147483648
  %v438 = vsel %vm436, %v437, %v435
  %v439 = vrsqrt.pop %v311
  %v440 = vmul.f32 %v311, %v439
  %vm441 = vcmp.eq.f32.partialorder %v311, inf
  %v442 = vsel %vm441, %v311, %v440
  %vm443 = vcmp.eq.f32.partialorder %v311, 0.0
  %v444 = vand.u32 %v311, 2147483648
  %v445 = vsel %vm443, %v444, %v442
  %v446 = vrsqrt.pop %v313
  %v447 = vmul.f32 %v313, %v446
  %vm448 = vcmp.eq.f32.partialorder %v313, inf
  %v449 = vsel %vm448, %v313, %v447
  %vm450 = vcmp.eq.f32.partialorder %v313, 0.0
  %v451 = vand.u32 %v313, 2147483648
  %v452 = vsel %vm450, %v451, %v449
  %v453 = vrsqrt.pop %v315
  %v454 = vmul.f32 %v315, %v453
  %vm455 = vcmp.eq.f32.partialorder %v315, inf
  %v456 = vsel %vm455, %v315, %v454
  %vm457 = vcmp.eq.f32.partialorder %v315, 0.0
  %v458 = vand.u32 %v315, 2147483648
  %v459 = vsel %vm457, %v458, %v456
  %v460 = vrsqrt.pop %v317
  %v461 = vmul.f32 %v317, %v460
  %vm462 = vcmp.eq.f32.partialorder %v317, inf
  %v463 = vsel %vm462, %v317, %v461
  %vm464 = vcmp.eq.f32.partialorder %v317, 0.0
  %v465 = vand.u32 %v317, 2147483648
  %v466 = vsel %vm464, %v465, %v463
  %v467 = vrsqrt.pop %v319
  %v468 = vmul.f32 %v319, %v467
  %vm469 = vcmp.eq.f32.partialorder %v319, inf
  %v470 = vsel %vm469, %v319, %v468
  %vm471 = vcmp.eq.f32.partialorder %v319, 0.0
  %v472 = vand.u32 %v319, 2147483648
  %v473 = vsel %vm471, %v472, %v470
  %v474 = vrsqrt.pop %v321
  %v475 = vmul.f32 %v321, %v474
  %vm476 = vcmp.eq.f32.partialorder %v321, inf
  %v477 = vsel %vm476, %v321, %v475
  %vm478 = vcmp.eq.f32.partialorder %v321, 0.0
  %v479 = vand.u32 %v321, 2147483648
  %v480 = vsel %vm478, %v479, %v477
  %v481 = vrsqrt.pop %v323
  %v482 = vmul.f32 %v323, %v481
  %vm483 = vcmp.eq.f32.partialorder %v323, inf
  %v484 = vsel %vm483, %v323, %v482
  %vm485 = vcmp.eq.f32.partialorder %v323, 0.0
  %v486 = vand.u32 %v323, 2147483648
  %v487 = vsel %vm485, %v486, %v484
  %v488 = vrsqrt.pop %v325
  %v489 = vmul.f32 %v325, %v488
  %vm490 = vcmp.eq.f32.partialorder %v325, inf
  %v491 = vsel %vm490, %v325, %v489
  %vm492 = vcmp.eq.f32.partialorder %v325, 0.0
  %v493 = vand.u32 %v325, 2147483648
  %v494 = vsel %vm492, %v493, %v491
  %v495 = vrsqrt.pop %v327
  %v496 = vmul.f32 %v327, %v495
  %vm497 = vcmp.eq.f32.partialorder %v327, inf
  %v498 = vsel %vm497, %v327, %v496
  %vm499 = vcmp.eq.f32.partialorder %v327, 0.0
  %v500 = vand.u32 %v327, 2147483648
  %v501 = vsel %vm499, %v500, %v498
  %v502 = vrsqrt.pop %v329
  %v503 = vmul.f32 %v329, %v502
  %vm504 = vcmp.eq.f32.partialorder %v329, inf
  %v505 = vsel %vm504, %v329, %v503
  %vm506 = vcmp.eq.f32.partialorder %v329, 0.0
  %v507 = vand.u32 %v329, 2147483648
  %v508 = vsel %vm506, %v507, %v505
  %v509 = vrsqrt.pop %v331
  %v510 = vmul.f32 %v331, %v509
  %vm511 = vcmp.eq.f32.partialorder %v331, inf
  %v512 = vsel %vm511, %v331, %v510
  %vm513 = vcmp.eq.f32.partialorder %v331, 0.0
  %v514 = vand.u32 %v331, 2147483648
  %v515 = vsel %vm513, %v514, %v512
  %v516 = vrsqrt.pop %v333
  %v517 = vmul.f32 %v333, %v516
  %vm518 = vcmp.eq.f32.partialorder %v333, inf
  %v519 = vsel %vm518, %v333, %v517
  %vm520 = vcmp.eq.f32.partialorder %v333, 0.0
  %v521 = vand.u32 %v333, 2147483648
  %v522 = vsel %vm520, %v521, %v519
  %v523 = vrsqrt.pop %v335
  %v524 = vmul.f32 %v335, %v523
  %vm525 = vcmp.eq.f32.partialorder %v335, inf
  %v526 = vsel %vm525, %v335, %v524
  %vm527 = vcmp.eq.f32.partialorder %v335, 0.0
  %v528 = vand.u32 %v335, 2147483648
  %v529 = vsel %vm527, %v528, %v526
  %v530 = vrsqrt.pop %v337
  %v531 = vmul.f32 %v337, %v530
  %vm532 = vcmp.eq.f32.partialorder %v337, inf
  %v533 = vsel %vm532, %v337, %v531
  %vm534 = vcmp.eq.f32.partialorder %v337, 0.0
  %v535 = vand.u32 %v337, 2147483648
  %v536 = vsel %vm534, %v535, %v533
  %v537 = vrsqrt.pop %v339
  %v538 = vmul.f32 %v339, %v537
  %vm539 = vcmp.eq.f32.partialorder %v339, inf
  %v540 = vsel %vm539, %v339, %v538
  %vm541 = vcmp.eq.f32.partialorder %v339, 0.0
  %v542 = vand.u32 %v339, 2147483648
  %v543 = vsel %vm541, %v542, %v540
  %v544 = vrsqrt.pop %v341
  %v545 = vmul.f32 %v341, %v544
  %vm546 = vcmp.eq.f32.partialorder %v341, inf
  %v547 = vsel %vm546, %v341, %v545
  %vm548 = vcmp.eq.f32.partialorder %v341, 0.0
  %v549 = vand.u32 %v341, 2147483648
  %v550 = vsel %vm548, %v549, %v547
  %v551 = vrsqrt.pop %v343
  %v552 = vmul.f32 %v343, %v551
  %vm553 = vcmp.eq.f32.partialorder %v343, inf
  %v554 = vsel %vm553, %v343, %v552
  %vm555 = vcmp.eq.f32.partialorder %v343, 0.0
  %v556 = vand.u32 %v343, 2147483648
  %v557 = vsel %vm555, %v556, %v554
  %v558 = vrsqrt.pop %v345
  %v559 = vmul.f32 %v345, %v558
  %vm560 = vcmp.eq.f32.partialorder %v345, inf
  %v561 = vsel %vm560, %v345, %v559
  %vm562 = vcmp.eq.f32.partialorder %v345, 0.0
  %v563 = vand.u32 %v345, 2147483648
  %v564 = vsel %vm562, %v563, %v561
  %v565 = vrsqrt.pop %v347
  %v566 = vmul.f32 %v347, %v565
  %vm567 = vcmp.eq.f32.partialorder %v347, inf
  %v568 = vsel %vm567, %v347, %v566
  %vm569 = vcmp.eq.f32.partialorder %v347, 0.0
  %v570 = vand.u32 %v347, 2147483648
  %v571 = vsel %vm569, %v570, %v568
  %v572 = vrsqrt.pop %v349
  %v573 = vmul.f32 %v349, %v572
  %vm574 = vcmp.eq.f32.partialorder %v349, inf
  %v575 = vsel %vm574, %v349, %v573
  %vm576 = vcmp.eq.f32.partialorder %v349, 0.0
  %v577 = vand.u32 %v349, 2147483648
  %v578 = vsel %vm576, %v577, %v575
  %v579 = vrsqrt.pop %v351
  %v580 = vmul.f32 %v351, %v579
  %vm581 = vcmp.eq.f32.partialorder %v351, inf
  %v582 = vsel %vm581, %v351, %v580
  %vm583 = vcmp.eq.f32.partialorder %v351, 0.0
  %v584 = vand.u32 %v351, 2147483648
  %v585 = vsel %vm583, %v584, %v582
  %v586 = vrsqrt.pop %v353
  %v587 = vmul.f32 %v353, %v586
  %vm588 = vcmp.eq.f32.partialorder %v353, inf
  %v589 = vsel %vm588, %v353, %v587
  %vm590 = vcmp.eq.f32.partialorder %v353, 0.0
  %v591 = vand.u32 %v353, 2147483648
  %v592 = vsel %vm590, %v591, %v589
  %v593 = vrsqrt.pop %v355
  %v594 = vmul.f32 %v355, %v593
  %vm595 = vcmp.eq.f32.partialorder %v355, inf
  %v596 = vsel %vm595, %v355, %v594
  %vm597 = vcmp.eq.f32.partialorder %v355, 0.0
  %v598 = vand.u32 %v355, 2147483648
  %v599 = vsel %vm597, %v598, %v596
  %v600 = vrsqrt.pop %v357
  %v601 = vmul.f32 %v357, %v600
  %vm602 = vcmp.eq.f32.partialorder %v357, inf
  %v603 = vsel %vm602, %v357, %v601
  %vm604 = vcmp.eq.f32.partialorder %v357, 0.0
  %v605 = vand.u32 %v357, 2147483648
  %v606 = vsel %vm604, %v605, %v603
  %v607 = vrsqrt.pop %v359
  %v608 = vmul.f32 %v359, %v607
  %vm609 = vcmp.eq.f32.partialorder %v359, inf
  %v610 = vsel %vm609, %v359, %v608
  %vm611 = vcmp.eq.f32.partialorder %v359, 0.0
  %v612 = vand.u32 %v359, 2147483648
  %v613 = vsel %vm611, %v612, %v610
  %v614 = vrsqrt.pop %v361
  %v615 = vmul.f32 %v361, %v614
  %vm616 = vcmp.eq.f32.partialorder %v361, inf
  %v617 = vsel %vm616, %v361, %v615
  %vm618 = vcmp.eq.f32.partialorder %v361, 0.0
  %v619 = vand.u32 %v361, 2147483648
  %v620 = vsel %vm618, %v619, %v617
  %v621 = vrsqrt.pop %v363
  %v622 = vmul.f32 %v363, %v621
  %vm623 = vcmp.eq.f32.partialorder %v363, inf
  %v624 = vsel %vm623, %v363, %v622
  %vm625 = vcmp.eq.f32.partialorder %v363, 0.0
  %v626 = vand.u32 %v363, 2147483648
  %v627 = vsel %vm625, %v626, %v624
  %v628 = vrsqrt.pop %v365
  %v629 = vmul.f32 %v365, %v628
  %vm630 = vcmp.eq.f32.partialorder %v365, inf
  %v631 = vsel %vm630, %v365, %v629
  %vm632 = vcmp.eq.f32.partialorder %v365, 0.0
  %v633 = vand.u32 %v365, 2147483648
  %v634 = vsel %vm632, %v633, %v631
  %v635 = vrsqrt.pop %v367
  %v636 = vmul.f32 %v367, %v635
  %vm637 = vcmp.eq.f32.partialorder %v367, inf
  %v638 = vsel %vm637, %v367, %v636
  %vm639 = vcmp.eq.f32.partialorder %v367, 0.0
  %v640 = vand.u32 %v367, 2147483648
  %v641 = vsel %vm639, %v640, %v638
  %v642 = vrsqrt.pop %v369
  %v643 = vmul.f32 %v369, %v642
  %vm644 = vcmp.eq.f32.partialorder %v369, inf
  %v645 = vsel %vm644, %v369, %v643
  %vm646 = vcmp.eq.f32.partialorder %v369, 0.0
  %v647 = vand.u32 %v369, 2147483648
  %v648 = vsel %vm646, %v647, %v645
  %v649 = vrsqrt.pop %v371
  %v650 = vmul.f32 %v371, %v649
  %vm651 = vcmp.eq.f32.partialorder %v371, inf
  %v652 = vsel %vm651, %v371, %v650
  %vm653 = vcmp.eq.f32.partialorder %v371, 0.0
  %v654 = vand.u32 %v371, 2147483648
  %v655 = vsel %vm653, %v654, %v652
  %v656 = vrsqrt.pop %v373
  %v657 = vmul.f32 %v373, %v656
  %vm658 = vcmp.eq.f32.partialorder %v373, inf
  %v659 = vsel %vm658, %v373, %v657
  %vm660 = vcmp.eq.f32.partialorder %v373, 0.0
  %v661 = vand.u32 %v373, 2147483648
  %v662 = vsel %vm660, %v661, %v659
  %v663 = vrsqrt.pop %v375
  %v664 = vmul.f32 %v375, %v663
  %vm665 = vcmp.eq.f32.partialorder %v375, inf
  %v666 = vsel %vm665, %v375, %v664
  %vm667 = vcmp.eq.f32.partialorder %v375, 0.0
  %v668 = vand.u32 %v375, 2147483648
  %v669 = vsel %vm667, %v668, %v666
  %v670 = vrsqrt.pop %v377
  %v671 = vmul.f32 %v377, %v670
  %vm672 = vcmp.eq.f32.partialorder %v377, inf
  %v673 = vsel %vm672, %v377, %v671
  %vm674 = vcmp.eq.f32.partialorder %v377, 0.0
  %v675 = vand.u32 %v377, 2147483648
  %v676 = vsel %vm674, %v675, %v673
  %v677 = vrsqrt.pop %v379
  %v678 = vmul.f32 %v379, %v677
  %vm679 = vcmp.eq.f32.partialorder %v379, inf
  %v680 = vsel %vm679, %v379, %v678
  %vm681 = vcmp.eq.f32.partialorder %v379, 0.0
  %v682 = vand.u32 %v379, 2147483648
  %v683 = vsel %vm681, %v682, %v680
  %v684 = vrsqrt.pop %v381
  %v685 = vmul.f32 %v381, %v684
  %vm686 = vcmp.eq.f32.partialorder %v381, inf
  %v687 = vsel %vm686, %v381, %v685
  %vm688 = vcmp.eq.f32.partialorder %v381, 0.0
  %v689 = vand.u32 %v381, 2147483648
  %v690 = vsel %vm688, %v689, %v687
  %v691 = vrsqrt.pop %v383
  %v692 = vmul.f32 %v383, %v691
  %vm693 = vcmp.eq.f32.partialorder %v383, inf
  %v694 = vsel %vm693, %v383, %v692
  %vm695 = vcmp.eq.f32.partialorder %v383, 0.0
  %v696 = vand.u32 %v383, 2147483648
  %v697 = vsel %vm695, %v696, %v694
  %v698 = vrsqrt.pop %v385
  %v699 = vmul.f32 %v385, %v698
  %vm700 = vcmp.eq.f32.partialorder %v385, inf
  %v701 = vsel %vm700, %v385, %v699
  %vm702 = vcmp.eq.f32.partialorder %v385, 0.0
  %v703 = vand.u32 %v385, 2147483648
  %v704 = vsel %vm702, %v703, %v701
  %v705 = vrsqrt.pop %v387
  %v706 = vmul.f32 %v387, %v705
  %vm707 = vcmp.eq.f32.partialorder %v387, inf
  %v708 = vsel %vm707, %v387, %v706
  %vm709 = vcmp.eq.f32.partialorder %v387, 0.0
  %v710 = vand.u32 %v387, 2147483648
  %v711 = vsel %vm709, %v710, %v708
  %v712 = vrsqrt.pop %v389
  %v713 = vmul.f32 %v389, %v712
  %vm714 = vcmp.eq.f32.partialorder %v389, inf
  %v715 = vsel %vm714, %v389, %v713
  %vm716 = vcmp.eq.f32.partialorder %v389, 0.0
  %v717 = vand.u32 %v389, 2147483648
  %v718 = vsel %vm716, %v717, %v715
  %v719 = vrsqrt.pop %v391
  %v720 = vmul.f32 %v391, %v719
  %vm721 = vcmp.eq.f32.partialorder %v391, inf
  %v722 = vsel %vm721, %v391, %v720
  %vm723 = vcmp.eq.f32.partialorder %v391, 0.0
  %v724 = vand.u32 %v391, 2147483648
  %v725 = vsel %vm723, %v724, %v722
  %v726 = vrsqrt.pop %v393
  %v727 = vmul.f32 %v393, %v726
  %vm728 = vcmp.eq.f32.partialorder %v393, inf
  %v729 = vsel %vm728, %v393, %v727
  %vm730 = vcmp.eq.f32.partialorder %v393, 0.0
  %v731 = vand.u32 %v393, 2147483648
  %v732 = vsel %vm730, %v731, %v729
  %v733 = vrsqrt.pop %v395
  %v734 = vmul.f32 %v395, %v733
  %vm735 = vcmp.eq.f32.partialorder %v395, inf
  %v736 = vsel %vm735, %v395, %v734
  %vm737 = vcmp.eq.f32.partialorder %v395, 0.0
  %v738 = vand.u32 %v395, 2147483648
  %v739 = vsel %vm737, %v738, %v736
  %v740 = vrsqrt.pop %v397
  %v741 = vmul.f32 %v397, %v740
  %vm742 = vcmp.eq.f32.partialorder %v397, inf
  %v743 = vsel %vm742, %v397, %v741
  %vm744 = vcmp.eq.f32.partialorder %v397, 0.0
  %v745 = vand.u32 %v397, 2147483648
  %v746 = vsel %vm744, %v745, %v743
  %v747 = vrsqrt.pop %v399
  %v748 = vmul.f32 %v399, %v747
  %vm749 = vcmp.eq.f32.partialorder %v399, inf
  %v750 = vsel %vm749, %v399, %v748
  %vm751 = vcmp.eq.f32.partialorder %v399, 0.0
  %v752 = vand.u32 %v399, 2147483648
  %v753 = vsel %vm751, %v752, %v750
  %v754 = vrsqrt.pop %v401
  %v755 = vmul.f32 %v401, %v754
  %vm756 = vcmp.eq.f32.partialorder %v401, inf
  %v757 = vsel %vm756, %v401, %v755
  %vm758 = vcmp.eq.f32.partialorder %v401, 0.0
  %v759 = vand.u32 %v401, 2147483648
  %v760 = vsel %vm758, %v759, %v757
  %v761 = vrsqrt.pop %v403
  %v762 = vmul.f32 %v403, %v761
  %vm763 = vcmp.eq.f32.partialorder %v403, inf
  %v764 = vsel %vm763, %v403, %v762
  %vm765 = vcmp.eq.f32.partialorder %v403, 0.0
  %v766 = vand.u32 %v403, 2147483648
  %v767 = vsel %vm765, %v766, %v764
  %v768 = vrsqrt.pop %v405
  %v769 = vmul.f32 %v405, %v768
  %vm770 = vcmp.eq.f32.partialorder %v405, inf
  %v771 = vsel %vm770, %v405, %v769
  %vm772 = vcmp.eq.f32.partialorder %v405, 0.0
  %v773 = vand.u32 %v405, 2147483648
  %v774 = vsel %vm772, %v773, %v771
  %v775 = vrsqrt.pop %v407
  %v776 = vmul.f32 %v407, %v775
  %vm777 = vcmp.eq.f32.partialorder %v407, inf
  %v778 = vsel %vm777, %v407, %v776
  %vm779 = vcmp.eq.f32.partialorder %v407, 0.0
  %v780 = vand.u32 %v407, 2147483648
  %v781 = vsel %vm779, %v780, %v778
  %v782 = vrsqrt.pop %v409
  %v783 = vmul.f32 %v409, %v782
  %vm784 = vcmp.eq.f32.partialorder %v409, inf
  %v785 = vsel %vm784, %v409, %v783
  %vm786 = vcmp.eq.f32.partialorder %v409, 0.0
  %v787 = vand.u32 %v409, 2147483648
  %v788 = vsel %vm786, %v787, %v785
  %v789 = vrsqrt.pop %v411
  %v790 = vmul.f32 %v411, %v789
  %vm791 = vcmp.eq.f32.partialorder %v411, inf
  %v792 = vsel %vm791, %v411, %v790
  %vm793 = vcmp.eq.f32.partialorder %v411, 0.0
  %v794 = vand.u32 %v411, 2147483648
  %v795 = vsel %vm793, %v794, %v792
  %v796 = vrsqrt.pop %v413
  %v797 = vmul.f32 %v413, %v796
  %vm798 = vcmp.eq.f32.partialorder %v413, inf
  %v799 = vsel %vm798, %v413, %v797
  %vm800 = vcmp.eq.f32.partialorder %v413, 0.0
  %v801 = vand.u32 %v413, 2147483648
  %v802 = vsel %vm800, %v801, %v799
  %v803 = vrsqrt.pop %v415
  %v804 = vmul.f32 %v415, %v803
  %vm805 = vcmp.eq.f32.partialorder %v415, inf
  %v806 = vsel %vm805, %v415, %v804
  %vm807 = vcmp.eq.f32.partialorder %v415, 0.0
  %v808 = vand.u32 %v415, 2147483648
  %v809 = vsel %vm807, %v808, %v806
  %v810 = vrsqrt.pop %v417
  %v811 = vmul.f32 %v417, %v810
  %vm812 = vcmp.eq.f32.partialorder %v417, inf
  %v813 = vsel %vm812, %v417, %v811
  %vm814 = vcmp.eq.f32.partialorder %v417, 0.0
  %v815 = vand.u32 %v417, 2147483648
  %v816 = vsel %vm814, %v815, %v813
  %v817 = vadd.f32 %v424, 1e-10
  %v818 = vadd.f32 %v431, 1e-10
  %v819 = vadd.f32 %v438, 1e-10
  %v820 = vadd.f32 %v445, 1e-10
  %v821 = vadd.f32 %v452, 1e-10
  %v822 = vadd.f32 %v459, 1e-10
  %v823 = vadd.f32 %v466, 1e-10
  %v824 = vadd.f32 %v473, 1e-10
  %v825 = vadd.f32 %v480, 1e-10
  %v826 = vadd.f32 %v487, 1e-10
  %v827 = vadd.f32 %v494, 1e-10
  %v828 = vadd.f32 %v501, 1e-10
  %v829 = vadd.f32 %v508, 1e-10
  %v830 = vadd.f32 %v515, 1e-10
  %v831 = vadd.f32 %v522, 1e-10
  %v832 = vadd.f32 %v529, 1e-10
  %v833 = vadd.f32 %v536, 1e-10
  %v834 = vadd.f32 %v543, 1e-10
  %v835 = vadd.f32 %v550, 1e-10
  %v836 = vadd.f32 %v557, 1e-10
  %v837 = vadd.f32 %v564, 1e-10
  %v838 = vadd.f32 %v571, 1e-10
  %v839 = vadd.f32 %v578, 1e-10
  %v840 = vadd.f32 %v585, 1e-10
  %v841 = vadd.f32 %v592, 1e-10
  %v842 = vadd.f32 %v599, 1e-10
  %v843 = vadd.f32 %v606, 1e-10
  %v844 = vadd.f32 %v613, 1e-10
  %v845 = vadd.f32 %v620, 1e-10
  %v846 = vadd.f32 %v627, 1e-10
  %v847 = vadd.f32 %v634, 1e-10
  %v848 = vadd.f32 %v641, 1e-10
  %v849 = vadd.f32 %v648, 1e-10
  %v850 = vadd.f32 %v655, 1e-10
  %v851 = vadd.f32 %v662, 1e-10
  %v852 = vadd.f32 %v669, 1e-10
  %v853 = vadd.f32 %v676, 1e-10
  %v854 = vadd.f32 %v683, 1e-10
  %v855 = vadd.f32 %v690, 1e-10
  %v856 = vadd.f32 %v697, 1e-10
  %v857 = vadd.f32 %v704, 1e-10
  %v858 = vadd.f32 %v711, 1e-10
  %v859 = vadd.f32 %v718, 1e-10
  %v860 = vadd.f32 %v725, 1e-10
  %v861 = vadd.f32 %v732, 1e-10
  %v862 = vadd.f32 %v739, 1e-10
  %v863 = vadd.f32 %v746, 1e-10
  %v864 = vadd.f32 %v753, 1e-10
  %v865 = vadd.f32 %v760, 1e-10
  %v866 = vadd.f32 %v767, 1e-10
  %v867 = vadd.f32 %v774, 1e-10
  %v868 = vadd.f32 %v781, 1e-10
  %v869 = vadd.f32 %v788, 1e-10
  %v870 = vadd.f32 %v795, 1e-10
  %v871 = vadd.f32 %v802, 1e-10
  %v872 = vadd.f32 %v809, 1e-10
  %v873 = vadd.f32 %v816, 1e-10
  %v874 = vrcp.pop %v817
  %v875 = vrcp.pop %v818
  %v876 = vrcp.pop %v819
  %v877 = vrcp.pop %v820
  %v878 = vrcp.pop %v821
  %v879 = vrcp.pop %v822
  %v880 = vrcp.pop %v823
  %v881 = vrcp.pop %v824
  %v882 = vrcp.pop %v825
  %v883 = vrcp.pop %v826
  %v884 = vrcp.pop %v827
  %v885 = vrcp.pop %v828
  %v886 = vrcp.pop %v829
  %v887 = vrcp.pop %v830
  %v888 = vrcp.pop %v831
  %v889 = vrcp.pop %v832
  %v890 = vrcp.pop %v833
  %v891 = vrcp.pop %v834
  %v892 = vrcp.pop %v835
  %v893 = vrcp.pop %v836
  %v894 = vrcp.pop %v837
  %v895 = vrcp.pop %v838
  %v896 = vrcp.pop %v839
  %v897 = vrcp.pop %v840
  %v898 = vrcp.pop %v841
  %v899 = vrcp.pop %v842
  %v900 = vrcp.pop %v843
  %v901 = vrcp.pop %v844
  %v902 = vrcp.pop %v845
  %v903 = vrcp.pop %v846
  %v904 = vrcp.pop %v847
  %v905 = vrcp.pop %v848
  %v906 = vrcp.pop %v849
  %v907 = vrcp.pop %v850
  %v908 = vrcp.pop %v851
  %v909 = vrcp.pop %v852
  %v910 = vrcp.pop %v853
  %v911 = vrcp.pop %v854
  %v912 = vrcp.pop %v855
  %v913 = vrcp.pop %v856
  %v914 = vrcp.pop %v857
  %v915 = vrcp.pop %v858
  %v916 = vrcp.pop %v859
  %v917 = vrcp.pop %v860
  %v918 = vrcp.pop %v861
  %v919 = vrcp.pop %v862
  %v920 = vrcp.pop %v863
  %v921 = vrcp.pop %v864
  %v922 = vrcp.pop %v865
  %v923 = vrcp.pop %v866
  %v924 = vrcp.pop %v867
  %v925 = vrcp.pop %v868
  %v926 = vrcp.pop %v869
  %v927 = vrcp.pop %v870
  %v928 = vrcp.pop %v871
  %v929 = vrcp.pop %v872
  %v930 = vrcp.pop %v873
  %v931 = vmul.f32 %v190, %v190
  %v932 = vmul.f32 %v191, %v191
  %v933 = vmul.f32 %v192, %v192
  %v934 = vmul.f32 %v193, %v193
  %v935 = vmul.f32 %v194, %v194
  %v936 = vmul.f32 %v195, %v195
  %v937 = vmul.f32 %v196, %v196
  %v938 = vmul.f32 %v197, %v197
  %v939 = vmul.f32 %v198, %v198
  %v940 = vmul.f32 %v199, %v199
  %v941 = vmul.f32 %v200, %v200
  %v942 = vmul.f32 %v201, %v201
  %v943 = vmul.f32 %v202, %v202
  %v944 = vmul.f32 %v203, %v203
  %v945 = vmul.f32 %v204, %v204
  %v946 = vmul.f32 %v205, %v205
  %v947 = vmul.f32 %v206, %v206
  %v948 = vmul.f32 %v207, %v207
  %v949 = vmul.f32 %v208, %v208
  %v950 = vmul.f32 %v209, %v209
  %v951 = vmul.f32 %v210, %v210
  %v952 = vmul.f32 %v211, %v211
  %v953 = vmul.f32 %v212, %v212
  %v954 = vmul.f32 %v213, %v213
  %v955 = vmul.f32 %v214, %v214
  %v956 = vmul.f32 %v215, %v215
  %v957 = vmul.f32 %v216, %v216
  %v958 = vmul.f32 %v217, %v217
  %v959 = vmul.f32 %v218, %v218
  %v960 = vmul.f32 %v219, %v219
  %v961 = vmul.f32 %v220, %v220
  %v962 = vmul.f32 %v221, %v221
  %v963 = vmul.f32 %v222, %v222
  %v964 = vmul.f32 %v223, %v223
  %v965 = vmul.f32 %v224, %v224
  %v966 = vmul.f32 %v225, %v225
  %v967 = vmul.f32 %v226, %v226
  %v968 = vmul.f32 %v227, %v227
  %v969 = vmul.f32 %v228, %v228
  %v970 = vmul.f32 %v229, %v229
  %v971 = vmul.f32 %v230, %v230
  %v972 = vmul.f32 %v231, %v231
  %v973 = vmul.f32 %v232, %v232
  %v974 = vmul.f32 %v233, %v233
  %v975 = vmul.f32 %v234, %v234
  %v976 = vmul.f32 %v235, %v235
  %v977 = vmul.f32 %v236, %v236
  %v978 = vmul.f32 %v237, %v237
  %v979 = vmul.f32 %v238, %v238
  %v980 = vmul.f32 %v239, %v239
  %v981 = vmul.f32 %v240, %v240
  %v982 = vmul.f32 %v241, %v241
  %v983 = vmul.f32 %v242, %v242
  %v984 = vmul.f32 %v243, %v243
  %v985 = vmul.f32 %v244, %v244
  %v986 = vmul.f32 %v245, %v245
  %v987 = vmul.f32 %v246, %v246
  %988 = vadd.xlane.f32.xlu0 %v931
  %v989 = vpop.xlane.xlu0 %988
  %990 = vadd.xlane.f32.xlu0 %v932
  %v991 = vpop.xlane.xlu0 %990
  %992 = vadd.xlane.f32.xlu0 %v933
  %v993 = vpop.xlane.xlu0 %992
  %994 = vadd.xlane.f32.xlu0 %v934
  %v995 = vpop.xlane.xlu0 %994
  %996 = vadd.xlane.f32.xlu0 %v935
  %v997 = vpop.xlane.xlu0 %996
  %998 = vadd.xlane.f32.xlu0 %v936
  %v999 = vpop.xlane.xlu0 %998
  %1000 = vadd.xlane.f32.xlu0 %v937
  %v1001 = vpop.xlane.xlu0 %1000
  %1002 = vadd.xlane.f32.xlu0 %v938
  %v1003 = vpop.xlane.xlu0 %1002
  %1004 = vadd.xlane.f32.xlu0 %v939
  %v1005 = vpop.xlane.xlu0 %1004
  %1006 = vadd.xlane.f32.xlu0 %v940
  %v1007 = vpop.xlane.xlu0 %1006
  %1008 = vadd.xlane.f32.xlu0 %v941
  %v1009 = vpop.xlane.xlu0 %1008
  %1010 = vadd.xlane.f32.xlu0 %v942
  %v1011 = vpop.xlane.xlu0 %1010
  %1012 = vadd.xlane.f32.xlu0 %v943
  %v1013 = vpop.xlane.xlu0 %1012
  %1014 = vadd.xlane.f32.xlu0 %v944
  %v1015 = vpop.xlane.xlu0 %1014
  %1016 = vadd.xlane.f32.xlu0 %v945
  %v1017 = vpop.xlane.xlu0 %1016
  %1018 = vadd.xlane.f32.xlu0 %v946
  %v1019 = vpop.xlane.xlu0 %1018
  %1020 = vadd.xlane.f32.xlu0 %v947
  %v1021 = vpop.xlane.xlu0 %1020
  %1022 = vadd.xlane.f32.xlu0 %v948
  %v1023 = vpop.xlane.xlu0 %1022
  %1024 = vadd.xlane.f32.xlu0 %v949
  %v1025 = vpop.xlane.xlu0 %1024
  %1026 = vadd.xlane.f32.xlu0 %v950
  %v1027 = vpop.xlane.xlu0 %1026
  %1028 = vadd.xlane.f32.xlu0 %v951
  %v1029 = vpop.xlane.xlu0 %1028
  %1030 = vadd.xlane.f32.xlu0 %v952
  %v1031 = vpop.xlane.xlu0 %1030
  %1032 = vadd.xlane.f32.xlu0 %v953
  %v1033 = vpop.xlane.xlu0 %1032
  %1034 = vadd.xlane.f32.xlu0 %v954
  %v1035 = vpop.xlane.xlu0 %1034
  %1036 = vadd.xlane.f32.xlu0 %v955
  %v1037 = vpop.xlane.xlu0 %1036
  %1038 = vadd.xlane.f32.xlu0 %v956
  %v1039 = vpop.xlane.xlu0 %1038
  %1040 = vadd.xlane.f32.xlu0 %v957
  %v1041 = vpop.xlane.xlu0 %1040
  %1042 = vadd.xlane.f32.xlu0 %v958
  %v1043 = vpop.xlane.xlu0 %1042
  %1044 = vadd.xlane.f32.xlu0 %v959
  %v1045 = vpop.xlane.xlu0 %1044
  %1046 = vadd.xlane.f32.xlu0 %v960
  %v1047 = vpop.xlane.xlu0 %1046
  %1048 = vadd.xlane.f32.xlu0 %v961
  %v1049 = vpop.xlane.xlu0 %1048
  %1050 = vadd.xlane.f32.xlu0 %v962
  %v1051 = vpop.xlane.xlu0 %1050
  %1052 = vadd.xlane.f32.xlu0 %v963
  %v1053 = vpop.xlane.xlu0 %1052
  %1054 = vadd.xlane.f32.xlu0 %v964
  %v1055 = vpop.xlane.xlu0 %1054
  %1056 = vadd.xlane.f32.xlu0 %v965
  %v1057 = vpop.xlane.xlu0 %1056
  %1058 = vadd.xlane.f32.xlu0 %v966
  %v1059 = vpop.xlane.xlu0 %1058
  %1060 = vadd.xlane.f32.xlu0 %v967
  %v1061 = vpop.xlane.xlu0 %1060
  %1062 = vadd.xlane.f32.xlu0 %v968
  %v1063 = vpop.xlane.xlu0 %1062
  %1064 = vadd.xlane.f32.xlu0 %v969
  %v1065 = vpop.xlane.xlu0 %1064
  %1066 = vadd.xlane.f32.xlu0 %v970
  %v1067 = vpop.xlane.xlu0 %1066
  %1068 = vadd.xlane.f32.xlu0 %v971
  %v1069 = vpop.xlane.xlu0 %1068
  %1070 = vadd.xlane.f32.xlu0 %v972
  %v1071 = vpop.xlane.xlu0 %1070
  %1072 = vadd.xlane.f32.xlu0 %v973
  %v1073 = vpop.xlane.xlu0 %1072
  %1074 = vadd.xlane.f32.xlu0 %v974
  %v1075 = vpop.xlane.xlu0 %1074
  %1076 = vadd.xlane.f32.xlu0 %v975
  %v1077 = vpop.xlane.xlu0 %1076
  %1078 = vadd.xlane.f32.xlu0 %v976
  %v1079 = vpop.xlane.xlu0 %1078
  %1080 = vadd.xlane.f32.xlu0 %v977
  %v1081 = vpop.xlane.xlu0 %1080
  %1082 = vadd.xlane.f32.xlu0 %v978
  %v1083 = vpop.xlane.xlu0 %1082
  %1084 = vadd.xlane.f32.xlu0 %v979
  %v1085 = vpop.xlane.xlu0 %1084
  %1086 = vadd.xlane.f32.xlu0 %v980
  %v1087 = vpop.xlane.xlu0 %1086
  %1088 = vadd.xlane.f32.xlu0 %v981
  %v1089 = vpop.xlane.xlu0 %1088
  %1090 = vadd.xlane.f32.xlu0 %v982
  %v1091 = vpop.xlane.xlu0 %1090
  %1092 = vadd.xlane.f32.xlu0 %v983
  %v1093 = vpop.xlane.xlu0 %1092
  %1094 = vadd.xlane.f32.xlu0 %v984
  %v1095 = vpop.xlane.xlu0 %1094
  %1096 = vadd.xlane.f32.xlu0 %v985
  %v1097 = vpop.xlane.xlu0 %1096
  %1098 = vadd.xlane.f32.xlu0 %v986
  %v1099 = vpop.xlane.xlu0 %1098
  %1100 = vadd.xlane.f32.xlu0 %v987
  %v1101 = vpop.xlane.xlu0 %1100
  %v1102 = vrsqrt.pop %v989
  %v1103 = vmul.f32 %v989, %v1102
  %vm1104 = vcmp.eq.f32.partialorder %v989, inf
  %v1105 = vsel %vm1104, %v989, %v1103
  %vm1106 = vcmp.eq.f32.partialorder %v989, 0.0
  %v1107 = vand.u32 %v989, 2147483648
  %v1108 = vsel %vm1106, %v1107, %v1105
  %v1109 = vrsqrt.pop %v991
  %v1110 = vmul.f32 %v991, %v1109
  %vm1111 = vcmp.eq.f32.partialorder %v991, inf
  %v1112 = vsel %vm1111, %v991, %v1110
  %vm1113 = vcmp.eq.f32.partialorder %v991, 0.0
  %v1114 = vand.u32 %v991, 2147483648
  %v1115 = vsel %vm1113, %v1114, %v1112
  %v1116 = vrsqrt.pop %v993
  %v1117 = vmul.f32 %v993, %v1116
  %vm1118 = vcmp.eq.f32.partialorder %v993, inf
  %v1119 = vsel %vm1118, %v993, %v1117
  %vm1120 = vcmp.eq.f32.partialorder %v993, 0.0
  %v1121 = vand.u32 %v993, 2147483648
  %v1122 = vsel %vm1120, %v1121, %v1119
  %v1123 = vrsqrt.pop %v995
  %v1124 = vmul.f32 %v995, %v1123
  %vm1125 = vcmp.eq.f32.partialorder %v995, inf
  %v1126 = vsel %vm1125, %v995, %v1124
  %vm1127 = vcmp.eq.f32.partialorder %v995, 0.0
  %v1128 = vand.u32 %v995, 2147483648
  %v1129 = vsel %vm1127, %v1128, %v1126
  %v1130 = vrsqrt.pop %v997
  %v1131 = vmul.f32 %v997, %v1130
  %vm1132 = vcmp.eq.f32.partialorder %v997, inf
  %v1133 = vsel %vm1132, %v997, %v1131
  %vm1134 = vcmp.eq.f32.partialorder %v997, 0.0
  %v1135 = vand.u32 %v997, 2147483648
  %v1136 = vsel %vm1134, %v1135, %v1133
  %v1137 = vrsqrt.pop %v999
  %v1138 = vmul.f32 %v999, %v1137
  %vm1139 = vcmp.eq.f32.partialorder %v999, inf
  %v1140 = vsel %vm1139, %v999, %v1138
  %vm1141 = vcmp.eq.f32.partialorder %v999, 0.0
  %v1142 = vand.u32 %v999, 2147483648
  %v1143 = vsel %vm1141, %v1142, %v1140
  %v1144 = vrsqrt.pop %v1001
  %v1145 = vmul.f32 %v1001, %v1144
  %vm1146 = vcmp.eq.f32.partialorder %v1001, inf
  %v1147 = vsel %vm1146, %v1001, %v1145
  %vm1148 = vcmp.eq.f32.partialorder %v1001, 0.0
  %v1149 = vand.u32 %v1001, 2147483648
  %v1150 = vsel %vm1148, %v1149, %v1147
  %v1151 = vrsqrt.pop %v1003
  %v1152 = vmul.f32 %v1003, %v1151
  %vm1153 = vcmp.eq.f32.partialorder %v1003, inf
  %v1154 = vsel %vm1153, %v1003, %v1152
  %vm1155 = vcmp.eq.f32.partialorder %v1003, 0.0
  %v1156 = vand.u32 %v1003, 2147483648
  %v1157 = vsel %vm1155, %v1156, %v1154
  %v1158 = vrsqrt.pop %v1005
  %v1159 = vmul.f32 %v1005, %v1158
  %vm1160 = vcmp.eq.f32.partialorder %v1005, inf
  %v1161 = vsel %vm1160, %v1005, %v1159
  %vm1162 = vcmp.eq.f32.partialorder %v1005, 0.0
  %v1163 = vand.u32 %v1005, 2147483648
  %v1164 = vsel %vm1162, %v1163, %v1161
  %v1165 = vrsqrt.pop %v1007
  %v1166 = vmul.f32 %v1007, %v1165
  %vm1167 = vcmp.eq.f32.partialorder %v1007, inf
  %v1168 = vsel %vm1167, %v1007, %v1166
  %vm1169 = vcmp.eq.f32.partialorder %v1007, 0.0
  %v1170 = vand.u32 %v1007, 2147483648
  %v1171 = vsel %vm1169, %v1170, %v1168
  %v1172 = vrsqrt.pop %v1009
  %v1173 = vmul.f32 %v1009, %v1172
  %vm1174 = vcmp.eq.f32.partialorder %v1009, inf
  %v1175 = vsel %vm1174, %v1009, %v1173
  %vm1176 = vcmp.eq.f32.partialorder %v1009, 0.0
  %v1177 = vand.u32 %v1009, 2147483648
  %v1178 = vsel %vm1176, %v1177, %v1175
  %v1179 = vrsqrt.pop %v1011
  %v1180 = vmul.f32 %v1011, %v1179
  %vm1181 = vcmp.eq.f32.partialorder %v1011, inf
  %v1182 = vsel %vm1181, %v1011, %v1180
  %vm1183 = vcmp.eq.f32.partialorder %v1011, 0.0
  %v1184 = vand.u32 %v1011, 2147483648
  %v1185 = vsel %vm1183, %v1184, %v1182
  %v1186 = vrsqrt.pop %v1013
  %v1187 = vmul.f32 %v1013, %v1186
  %vm1188 = vcmp.eq.f32.partialorder %v1013, inf
  %v1189 = vsel %vm1188, %v1013, %v1187
  %vm1190 = vcmp.eq.f32.partialorder %v1013, 0.0
  %v1191 = vand.u32 %v1013, 2147483648
  %v1192 = vsel %vm1190, %v1191, %v1189
  %v1193 = vrsqrt.pop %v1015
  %v1194 = vmul.f32 %v1015, %v1193
  %vm1195 = vcmp.eq.f32.partialorder %v1015, inf
  %v1196 = vsel %vm1195, %v1015, %v1194
  %vm1197 = vcmp.eq.f32.partialorder %v1015, 0.0
  %v1198 = vand.u32 %v1015, 2147483648
  %v1199 = vsel %vm1197, %v1198, %v1196
  %v1200 = vrsqrt.pop %v1017
  %v1201 = vmul.f32 %v1017, %v1200
  %vm1202 = vcmp.eq.f32.partialorder %v1017, inf
  %v1203 = vsel %vm1202, %v1017, %v1201
  %vm1204 = vcmp.eq.f32.partialorder %v1017, 0.0
  %v1205 = vand.u32 %v1017, 2147483648
  %v1206 = vsel %vm1204, %v1205, %v1203
  %v1207 = vrsqrt.pop %v1019
  %v1208 = vmul.f32 %v1019, %v1207
  %vm1209 = vcmp.eq.f32.partialorder %v1019, inf
  %v1210 = vsel %vm1209, %v1019, %v1208
  %vm1211 = vcmp.eq.f32.partialorder %v1019, 0.0
  %v1212 = vand.u32 %v1019, 2147483648
  %v1213 = vsel %vm1211, %v1212, %v1210
  %v1214 = vrsqrt.pop %v1021
  %v1215 = vmul.f32 %v1021, %v1214
  %vm1216 = vcmp.eq.f32.partialorder %v1021, inf
  %v1217 = vsel %vm1216, %v1021, %v1215
  %vm1218 = vcmp.eq.f32.partialorder %v1021, 0.0
  %v1219 = vand.u32 %v1021, 2147483648
  %v1220 = vsel %vm1218, %v1219, %v1217
  %v1221 = vrsqrt.pop %v1023
  %v1222 = vmul.f32 %v1023, %v1221
  %vm1223 = vcmp.eq.f32.partialorder %v1023, inf
  %v1224 = vsel %vm1223, %v1023, %v1222
  %vm1225 = vcmp.eq.f32.partialorder %v1023, 0.0
  %v1226 = vand.u32 %v1023, 2147483648
  %v1227 = vsel %vm1225, %v1226, %v1224
  %v1228 = vrsqrt.pop %v1025
  %v1229 = vmul.f32 %v1025, %v1228
  %vm1230 = vcmp.eq.f32.partialorder %v1025, inf
  %v1231 = vsel %vm1230, %v1025, %v1229
  %vm1232 = vcmp.eq.f32.partialorder %v1025, 0.0
  %v1233 = vand.u32 %v1025, 2147483648
  %v1234 = vsel %vm1232, %v1233, %v1231
  %v1235 = vrsqrt.pop %v1027
  %v1236 = vmul.f32 %v1027, %v1235
  %vm1237 = vcmp.eq.f32.partialorder %v1027, inf
  %v1238 = vsel %vm1237, %v1027, %v1236
  %vm1239 = vcmp.eq.f32.partialorder %v1027, 0.0
  %v1240 = vand.u32 %v1027, 2147483648
  %v1241 = vsel %vm1239, %v1240, %v1238
  %v1242 = vrsqrt.pop %v1029
  %v1243 = vmul.f32 %v1029, %v1242
  %vm1244 = vcmp.eq.f32.partialorder %v1029, inf
  %v1245 = vsel %vm1244, %v1029, %v1243
  %vm1246 = vcmp.eq.f32.partialorder %v1029, 0.0
  %v1247 = vand.u32 %v1029, 2147483648
  %v1248 = vsel %vm1246, %v1247, %v1245
  %v1249 = vrsqrt.pop %v1031
  %v1250 = vmul.f32 %v1031, %v1249
  %vm1251 = vcmp.eq.f32.partialorder %v1031, inf
  %v1252 = vsel %vm1251, %v1031, %v1250
  %vm1253 = vcmp.eq.f32.partialorder %v1031, 0.0
  %v1254 = vand.u32 %v1031, 2147483648
  %v1255 = vsel %vm1253, %v1254, %v1252
  %v1256 = vrsqrt.pop %v1033
  %v1257 = vmul.f32 %v1033, %v1256
  %vm1258 = vcmp.eq.f32.partialorder %v1033, inf
  %v1259 = vsel %vm1258, %v1033, %v1257
  %vm1260 = vcmp.eq.f32.partialorder %v1033, 0.0
  %v1261 = vand.u32 %v1033, 2147483648
  %v1262 = vsel %vm1260, %v1261, %v1259
  %v1263 = vrsqrt.pop %v1035
  %v1264 = vmul.f32 %v1035, %v1263
  %vm1265 = vcmp.eq.f32.partialorder %v1035, inf
  %v1266 = vsel %vm1265, %v1035, %v1264
  %vm1267 = vcmp.eq.f32.partialorder %v1035, 0.0
  %v1268 = vand.u32 %v1035, 2147483648
  %v1269 = vsel %vm1267, %v1268, %v1266
  %v1270 = vrsqrt.pop %v1037
  %v1271 = vmul.f32 %v1037, %v1270
  %vm1272 = vcmp.eq.f32.partialorder %v1037, inf
  %v1273 = vsel %vm1272, %v1037, %v1271
  %vm1274 = vcmp.eq.f32.partialorder %v1037, 0.0
  %v1275 = vand.u32 %v1037, 2147483648
  %v1276 = vsel %vm1274, %v1275, %v1273
  %v1277 = vrsqrt.pop %v1039
  %v1278 = vmul.f32 %v1039, %v1277
  %vm1279 = vcmp.eq.f32.partialorder %v1039, inf
  %v1280 = vsel %vm1279, %v1039, %v1278
  %vm1281 = vcmp.eq.f32.partialorder %v1039, 0.0
  %v1282 = vand.u32 %v1039, 2147483648
  %v1283 = vsel %vm1281, %v1282, %v1280
  %v1284 = vrsqrt.pop %v1041
  %v1285 = vmul.f32 %v1041, %v1284
  %vm1286 = vcmp.eq.f32.partialorder %v1041, inf
  %v1287 = vsel %vm1286, %v1041, %v1285
  %vm1288 = vcmp.eq.f32.partialorder %v1041, 0.0
  %v1289 = vand.u32 %v1041, 2147483648
  %v1290 = vsel %vm1288, %v1289, %v1287
  %v1291 = vrsqrt.pop %v1043
  %v1292 = vmul.f32 %v1043, %v1291
  %vm1293 = vcmp.eq.f32.partialorder %v1043, inf
  %v1294 = vsel %vm1293, %v1043, %v1292
  %vm1295 = vcmp.eq.f32.partialorder %v1043, 0.0
  %v1296 = vand.u32 %v1043, 2147483648
  %v1297 = vsel %vm1295, %v1296, %v1294
  %v1298 = vrsqrt.pop %v1045
  %v1299 = vmul.f32 %v1045, %v1298
  %vm1300 = vcmp.eq.f32.partialorder %v1045, inf
  %v1301 = vsel %vm1300, %v1045, %v1299
  %vm1302 = vcmp.eq.f32.partialorder %v1045, 0.0
  %v1303 = vand.u32 %v1045, 2147483648
  %v1304 = vsel %vm1302, %v1303, %v1301
  %v1305 = vrsqrt.pop %v1047
  %v1306 = vmul.f32 %v1047, %v1305
  %vm1307 = vcmp.eq.f32.partialorder %v1047, inf
  %v1308 = vsel %vm1307, %v1047, %v1306
  %vm1309 = vcmp.eq.f32.partialorder %v1047, 0.0
  %v1310 = vand.u32 %v1047, 2147483648
  %v1311 = vsel %vm1309, %v1310, %v1308
  %v1312 = vrsqrt.pop %v1049
  %v1313 = vmul.f32 %v1049, %v1312
  %vm1314 = vcmp.eq.f32.partialorder %v1049, inf
  %v1315 = vsel %vm1314, %v1049, %v1313
  %vm1316 = vcmp.eq.f32.partialorder %v1049, 0.0
  %v1317 = vand.u32 %v1049, 2147483648
  %v1318 = vsel %vm1316, %v1317, %v1315
  %v1319 = vrsqrt.pop %v1051
  %v1320 = vmul.f32 %v1051, %v1319
  %vm1321 = vcmp.eq.f32.partialorder %v1051, inf
  %v1322 = vsel %vm1321, %v1051, %v1320
  %vm1323 = vcmp.eq.f32.partialorder %v1051, 0.0
  %v1324 = vand.u32 %v1051, 2147483648
  %v1325 = vsel %vm1323, %v1324, %v1322
  %v1326 = vrsqrt.pop %v1053
  %v1327 = vmul.f32 %v1053, %v1326
  %vm1328 = vcmp.eq.f32.partialorder %v1053, inf
  %v1329 = vsel %vm1328, %v1053, %v1327
  %vm1330 = vcmp.eq.f32.partialorder %v1053, 0.0
  %v1331 = vand.u32 %v1053, 2147483648
  %v1332 = vsel %vm1330, %v1331, %v1329
  %v1333 = vrsqrt.pop %v1055
  %v1334 = vmul.f32 %v1055, %v1333
  %vm1335 = vcmp.eq.f32.partialorder %v1055, inf
  %v1336 = vsel %vm1335, %v1055, %v1334
  %vm1337 = vcmp.eq.f32.partialorder %v1055, 0.0
  %v1338 = vand.u32 %v1055, 2147483648
  %v1339 = vsel %vm1337, %v1338, %v1336
  %v1340 = vrsqrt.pop %v1057
  %v1341 = vmul.f32 %v1057, %v1340
  %vm1342 = vcmp.eq.f32.partialorder %v1057, inf
  %v1343 = vsel %vm1342, %v1057, %v1341
  %vm1344 = vcmp.eq.f32.partialorder %v1057, 0.0
  %v1345 = vand.u32 %v1057, 2147483648
  %v1346 = vsel %vm1344, %v1345, %v1343
  %v1347 = vrsqrt.pop %v1059
  %v1348 = vmul.f32 %v1059, %v1347
  %vm1349 = vcmp.eq.f32.partialorder %v1059, inf
  %v1350 = vsel %vm1349, %v1059, %v1348
  %vm1351 = vcmp.eq.f32.partialorder %v1059, 0.0
  %v1352 = vand.u32 %v1059, 2147483648
  %v1353 = vsel %vm1351, %v1352, %v1350
  %v1354 = vrsqrt.pop %v1061
  %v1355 = vmul.f32 %v1061, %v1354
  %vm1356 = vcmp.eq.f32.partialorder %v1061, inf
  %v1357 = vsel %vm1356, %v1061, %v1355
  %vm1358 = vcmp.eq.f32.partialorder %v1061, 0.0
  %v1359 = vand.u32 %v1061, 2147483648
  %v1360 = vsel %vm1358, %v1359, %v1357
  %v1361 = vrsqrt.pop %v1063
  %v1362 = vmul.f32 %v1063, %v1361
  %vm1363 = vcmp.eq.f32.partialorder %v1063, inf
  %v1364 = vsel %vm1363, %v1063, %v1362
  %vm1365 = vcmp.eq.f32.partialorder %v1063, 0.0
  %v1366 = vand.u32 %v1063, 2147483648
  %v1367 = vsel %vm1365, %v1366, %v1364
  %v1368 = vrsqrt.pop %v1065
  %v1369 = vmul.f32 %v1065, %v1368
  %vm1370 = vcmp.eq.f32.partialorder %v1065, inf
  %v1371 = vsel %vm1370, %v1065, %v1369
  %vm1372 = vcmp.eq.f32.partialorder %v1065, 0.0
  %v1373 = vand.u32 %v1065, 2147483648
  %v1374 = vsel %vm1372, %v1373, %v1371
  %v1375 = vrsqrt.pop %v1067
  %v1376 = vmul.f32 %v1067, %v1375
  %vm1377 = vcmp.eq.f32.partialorder %v1067, inf
  %v1378 = vsel %vm1377, %v1067, %v1376
  %vm1379 = vcmp.eq.f32.partialorder %v1067, 0.0
  %v1380 = vand.u32 %v1067, 2147483648
  %v1381 = vsel %vm1379, %v1380, %v1378
  %v1382 = vrsqrt.pop %v1069
  %v1383 = vmul.f32 %v1069, %v1382
  %vm1384 = vcmp.eq.f32.partialorder %v1069, inf
  %v1385 = vsel %vm1384, %v1069, %v1383
  %vm1386 = vcmp.eq.f32.partialorder %v1069, 0.0
  %v1387 = vand.u32 %v1069, 2147483648
  %v1388 = vsel %vm1386, %v1387, %v1385
  %v1389 = vrsqrt.pop %v1071
  %v1390 = vmul.f32 %v1071, %v1389
  %vm1391 = vcmp.eq.f32.partialorder %v1071, inf
  %v1392 = vsel %vm1391, %v1071, %v1390
  %vm1393 = vcmp.eq.f32.partialorder %v1071, 0.0
  %v1394 = vand.u32 %v1071, 2147483648
  %v1395 = vsel %vm1393, %v1394, %v1392
  %v1396 = vrsqrt.pop %v1073
  %v1397 = vmul.f32 %v1073, %v1396
  %vm1398 = vcmp.eq.f32.partialorder %v1073, inf
  %v1399 = vsel %vm1398, %v1073, %v1397
  %vm1400 = vcmp.eq.f32.partialorder %v1073, 0.0
  %v1401 = vand.u32 %v1073, 2147483648
  %v1402 = vsel %vm1400, %v1401, %v1399
  %v1403 = vrsqrt.pop %v1075
  %v1404 = vmul.f32 %v1075, %v1403
  %vm1405 = vcmp.eq.f32.partialorder %v1075, inf
  %v1406 = vsel %vm1405, %v1075, %v1404
  %vm1407 = vcmp.eq.f32.partialorder %v1075, 0.0
  %v1408 = vand.u32 %v1075, 2147483648
  %v1409 = vsel %vm1407, %v1408, %v1406
  %v1410 = vrsqrt.pop %v1077
  %v1411 = vmul.f32 %v1077, %v1410
  %vm1412 = vcmp.eq.f32.partialorder %v1077, inf
  %v1413 = vsel %vm1412, %v1077, %v1411
  %vm1414 = vcmp.eq.f32.partialorder %v1077, 0.0
  %v1415 = vand.u32 %v1077, 2147483648
  %v1416 = vsel %vm1414, %v1415, %v1413
  %v1417 = vrsqrt.pop %v1079
  %v1418 = vmul.f32 %v1079, %v1417
  %vm1419 = vcmp.eq.f32.partialorder %v1079, inf
  %v1420 = vsel %vm1419, %v1079, %v1418
  %vm1421 = vcmp.eq.f32.partialorder %v1079, 0.0
  %v1422 = vand.u32 %v1079, 2147483648
  %v1423 = vsel %vm1421, %v1422, %v1420
  %v1424 = vrsqrt.pop %v1081
  %v1425 = vmul.f32 %v1081, %v1424
  %vm1426 = vcmp.eq.f32.partialorder %v1081, inf
  %v1427 = vsel %vm1426, %v1081, %v1425
  %vm1428 = vcmp.eq.f32.partialorder %v1081, 0.0
  %v1429 = vand.u32 %v1081, 2147483648
  %v1430 = vsel %vm1428, %v1429, %v1427
  %v1431 = vrsqrt.pop %v1083
  %v1432 = vmul.f32 %v1083, %v1431
  %vm1433 = vcmp.eq.f32.partialorder %v1083, inf
  %v1434 = vsel %vm1433, %v1083, %v1432
  %vm1435 = vcmp.eq.f32.partialorder %v1083, 0.0
  %v1436 = vand.u32 %v1083, 2147483648
  %v1437 = vsel %vm1435, %v1436, %v1434
  %v1438 = vrsqrt.pop %v1085
  %v1439 = vmul.f32 %v1085, %v1438
  %vm1440 = vcmp.eq.f32.partialorder %v1085, inf
  %v1441 = vsel %vm1440, %v1085, %v1439
  %vm1442 = vcmp.eq.f32.partialorder %v1085, 0.0
  %v1443 = vand.u32 %v1085, 2147483648
  %v1444 = vsel %vm1442, %v1443, %v1441
  %v1445 = vrsqrt.pop %v1087
  %v1446 = vmul.f32 %v1087, %v1445
  %vm1447 = vcmp.eq.f32.partialorder %v1087, inf
  %v1448 = vsel %vm1447, %v1087, %v1446
  %vm1449 = vcmp.eq.f32.partialorder %v1087, 0.0
  %v1450 = vand.u32 %v1087, 2147483648
  %v1451 = vsel %vm1449, %v1450, %v1448
  %v1452 = vrsqrt.pop %v1089
  %v1453 = vmul.f32 %v1089, %v1452
  %vm1454 = vcmp.eq.f32.partialorder %v1089, inf
  %v1455 = vsel %vm1454, %v1089, %v1453
  %vm1456 = vcmp.eq.f32.partialorder %v1089, 0.0
  %v1457 = vand.u32 %v1089, 2147483648
  %v1458 = vsel %vm1456, %v1457, %v1455
  %v1459 = vrsqrt.pop %v1091
  %v1460 = vmul.f32 %v1091, %v1459
  %vm1461 = vcmp.eq.f32.partialorder %v1091, inf
  %v1462 = vsel %vm1461, %v1091, %v1460
  %vm1463 = vcmp.eq.f32.partialorder %v1091, 0.0
  %v1464 = vand.u32 %v1091, 2147483648
  %v1465 = vsel %vm1463, %v1464, %v1462
  %v1466 = vrsqrt.pop %v1093
  %v1467 = vmul.f32 %v1093, %v1466
  %vm1468 = vcmp.eq.f32.partialorder %v1093, inf
  %v1469 = vsel %vm1468, %v1093, %v1467
  %vm1470 = vcmp.eq.f32.partialorder %v1093, 0.0
  %v1471 = vand.u32 %v1093, 2147483648
  %v1472 = vsel %vm1470, %v1471, %v1469
  %v1473 = vrsqrt.pop %v1095
  %v1474 = vmul.f32 %v1095, %v1473
  %vm1475 = vcmp.eq.f32.partialorder %v1095, inf
  %v1476 = vsel %vm1475, %v1095, %v1474
  %vm1477 = vcmp.eq.f32.partialorder %v1095, 0.0
  %v1478 = vand.u32 %v1095, 2147483648
  %v1479 = vsel %vm1477, %v1478, %v1476
  %v1480 = vrsqrt.pop %v1097
  %v1481 = vmul.f32 %v1097, %v1480
  %vm1482 = vcmp.eq.f32.partialorder %v1097, inf
  %v1483 = vsel %vm1482, %v1097, %v1481
  %vm1484 = vcmp.eq.f32.partialorder %v1097, 0.0
  %v1485 = vand.u32 %v1097, 2147483648
  %v1486 = vsel %vm1484, %v1485, %v1483
  %v1487 = vrsqrt.pop %v1099
  %v1488 = vmul.f32 %v1099, %v1487
  %vm1489 = vcmp.eq.f32.partialorder %v1099, inf
  %v1490 = vsel %vm1489, %v1099, %v1488
  %vm1491 = vcmp.eq.f32.partialorder %v1099, 0.0
  %v1492 = vand.u32 %v1099, 2147483648
  %v1493 = vsel %vm1491, %v1492, %v1490
  %v1494 = vrsqrt.pop %v1101
  %v1495 = vmul.f32 %v1101, %v1494
  %vm1496 = vcmp.eq.f32.partialorder %v1101, inf
  %v1497 = vsel %vm1496, %v1101, %v1495
  %vm1498 = vcmp.eq.f32.partialorder %v1101, 0.0
  %v1499 = vand.u32 %v1101, 2147483648
  %v1500 = vsel %vm1498, %v1499, %v1497
  %v1501 = vadd.f32 %v1108, 1e-10
  %v1502 = vadd.f32 %v1115, 1e-10
  %v1503 = vadd.f32 %v1122, 1e-10
  %v1504 = vadd.f32 %v1129, 1e-10
  %v1505 = vadd.f32 %v1136, 1e-10
  %v1506 = vadd.f32 %v1143, 1e-10
  %v1507 = vadd.f32 %v1150, 1e-10
  %v1508 = vadd.f32 %v1157, 1e-10
  %v1509 = vadd.f32 %v1164, 1e-10
  %v1510 = vadd.f32 %v1171, 1e-10
  %v1511 = vadd.f32 %v1178, 1e-10
  %v1512 = vadd.f32 %v1185, 1e-10
  %v1513 = vadd.f32 %v1192, 1e-10
  %v1514 = vadd.f32 %v1199, 1e-10
  %v1515 = vadd.f32 %v1206, 1e-10
  %v1516 = vadd.f32 %v1213, 1e-10
  %v1517 = vadd.f32 %v1220, 1e-10
  %v1518 = vadd.f32 %v1227, 1e-10
  %v1519 = vadd.f32 %v1234, 1e-10
  %v1520 = vadd.f32 %v1241, 1e-10
  %v1521 = vadd.f32 %v1248, 1e-10
  %v1522 = vadd.f32 %v1255, 1e-10
  %v1523 = vadd.f32 %v1262, 1e-10
  %v1524 = vadd.f32 %v1269, 1e-10
  %v1525 = vadd.f32 %v1276, 1e-10
  %v1526 = vadd.f32 %v1283, 1e-10
  %v1527 = vadd.f32 %v1290, 1e-10
  %v1528 = vadd.f32 %v1297, 1e-10
  %v1529 = vadd.f32 %v1304, 1e-10
  %v1530 = vadd.f32 %v1311, 1e-10
  %v1531 = vadd.f32 %v1318, 1e-10
  %v1532 = vadd.f32 %v1325, 1e-10
  %v1533 = vadd.f32 %v1332, 1e-10
  %v1534 = vadd.f32 %v1339, 1e-10
  %v1535 = vadd.f32 %v1346, 1e-10
  %v1536 = vadd.f32 %v1353, 1e-10
  %v1537 = vadd.f32 %v1360, 1e-10
  %v1538 = vadd.f32 %v1367, 1e-10
  %v1539 = vadd.f32 %v1374, 1e-10
  %v1540 = vadd.f32 %v1381, 1e-10
  %v1541 = vadd.f32 %v1388, 1e-10
  %v1542 = vadd.f32 %v1395, 1e-10
  %v1543 = vadd.f32 %v1402, 1e-10
  %v1544 = vadd.f32 %v1409, 1e-10
  %v1545 = vadd.f32 %v1416, 1e-10
  %v1546 = vadd.f32 %v1423, 1e-10
  %v1547 = vadd.f32 %v1430, 1e-10
  %v1548 = vadd.f32 %v1437, 1e-10
  %v1549 = vadd.f32 %v1444, 1e-10
  %v1550 = vadd.f32 %v1451, 1e-10
  %v1551 = vadd.f32 %v1458, 1e-10
  %v1552 = vadd.f32 %v1465, 1e-10
  %v1553 = vadd.f32 %v1472, 1e-10
  %v1554 = vadd.f32 %v1479, 1e-10
  %v1555 = vadd.f32 %v1486, 1e-10
  %v1556 = vadd.f32 %v1493, 1e-10
  %v1557 = vadd.f32 %v1500, 1e-10
  %v1558 = vrcp.pop %v1501
  %v1559 = vrcp.pop %v1502
  %v1560 = vrcp.pop %v1503
  %v1561 = vrcp.pop %v1504
  %v1562 = vrcp.pop %v1505
  %v1563 = vrcp.pop %v1506
  %v1564 = vrcp.pop %v1507
  %v1565 = vrcp.pop %v1508
  %v1566 = vrcp.pop %v1509
  %v1567 = vrcp.pop %v1510
  %v1568 = vrcp.pop %v1511
  %v1569 = vrcp.pop %v1512
  %v1570 = vrcp.pop %v1513
  %v1571 = vrcp.pop %v1514
  %v1572 = vrcp.pop %v1515
  %v1573 = vrcp.pop %v1516
  %v1574 = vrcp.pop %v1517
  %v1575 = vrcp.pop %v1518
  %v1576 = vrcp.pop %v1519
  %v1577 = vrcp.pop %v1520
  %v1578 = vrcp.pop %v1521
  %v1579 = vrcp.pop %v1522
  %v1580 = vrcp.pop %v1523
  %v1581 = vrcp.pop %v1524
  %v1582 = vrcp.pop %v1525
  %v1583 = vrcp.pop %v1526
  %v1584 = vrcp.pop %v1527
  %v1585 = vrcp.pop %v1528
  %v1586 = vrcp.pop %v1529
  %v1587 = vrcp.pop %v1530
  %v1588 = vrcp.pop %v1531
  %v1589 = vrcp.pop %v1532
  %v1590 = vrcp.pop %v1533
  %v1591 = vrcp.pop %v1534
  %v1592 = vrcp.pop %v1535
  %v1593 = vrcp.pop %v1536
  %v1594 = vrcp.pop %v1537
  %v1595 = vrcp.pop %v1538
  %v1596 = vrcp.pop %v1539
  %v1597 = vrcp.pop %v1540
  %v1598 = vrcp.pop %v1541
  %v1599 = vrcp.pop %v1542
  %v1600 = vrcp.pop %v1543
  %v1601 = vrcp.pop %v1544
  %v1602 = vrcp.pop %v1545
  %v1603 = vrcp.pop %v1546
  %v1604 = vrcp.pop %v1547
  %v1605 = vrcp.pop %v1548
  %v1606 = vrcp.pop %v1549
  %v1607 = vrcp.pop %v1550
  %v1608 = vrcp.pop %v1551
  %v1609 = vrcp.pop %v1552
  %v1610 = vrcp.pop %v1553
  %v1611 = vrcp.pop %v1554
  %v1612 = vrcp.pop %v1555
  %v1613 = vrcp.pop %v1556
  %v1614 = vrcp.pop %v1557
  %v1615 = vmul.f32 %v76, %v874
  %v1616 = vmul.f32 %v77, %v875
  %v1617 = vmul.f32 %v78, %v876
  %v1618 = vmul.f32 %v79, %v877
  %v1619 = vmul.f32 %v80, %v878
  %v1620 = vmul.f32 %v81, %v879
  %v1621 = vmul.f32 %v82, %v880
  %v1622 = vmul.f32 %v83, %v881
  %v1623 = vmul.f32 %v84, %v882
  %v1624 = vmul.f32 %v85, %v883
  %v1625 = vmul.f32 %v86, %v884
  %v1626 = vmul.f32 %v87, %v885
  %v1627 = vmul.f32 %v88, %v886
  %v1628 = vmul.f32 %v89, %v887
  %v1629 = vmul.f32 %v90, %v888
  %v1630 = vmul.f32 %v91, %v889
  %v1631 = vmul.f32 %v92, %v890
  %v1632 = vmul.f32 %v93, %v891
  %v1633 = vmul.f32 %v94, %v892
  %v1634 = vmul.f32 %v95, %v893
  %v1635 = vmul.f32 %v96, %v894
  %v1636 = vmul.f32 %v97, %v895
  %v1637 = vmul.f32 %v98, %v896
  %v1638 = vmul.f32 %v99, %v897
  %v1639 = vmul.f32 %v100, %v898
  %v1640 = vmul.f32 %v101, %v899
  %v1641 = vmul.f32 %v102, %v900
  %v1642 = vmul.f32 %v103, %v901
  %v1643 = vmul.f32 %v104, %v902
  %v1644 = vmul.f32 %v105, %v903
  %v1645 = vmul.f32 %v106, %v904
  %v1646 = vmul.f32 %v107, %v905
  %v1647 = vmul.f32 %v108, %v906
  %v1648 = vmul.f32 %v109, %v907
  %v1649 = vmul.f32 %v110, %v908
  %v1650 = vmul.f32 %v111, %v909
  %v1651 = vmul.f32 %v112, %v910
  %v1652 = vmul.f32 %v113, %v911
  %v1653 = vmul.f32 %v114, %v912
  %v1654 = vmul.f32 %v115, %v913
  %v1655 = vmul.f32 %v116, %v914
  %v1656 = vmul.f32 %v117, %v915
  %v1657 = vmul.f32 %v118, %v916
  %v1658 = vmul.f32 %v119, %v917
  %v1659 = vmul.f32 %v120, %v918
  %v1660 = vmul.f32 %v121, %v919
  %v1661 = vmul.f32 %v122, %v920
  %v1662 = vmul.f32 %v123, %v921
  %v1663 = vmul.f32 %v124, %v922
  %v1664 = vmul.f32 %v125, %v923
  %v1665 = vmul.f32 %v126, %v924
  %v1666 = vmul.f32 %v127, %v925
  %v1667 = vmul.f32 %v128, %v926
  %v1668 = vmul.f32 %v129, %v927
  %v1669 = vmul.f32 %v130, %v928
  %v1670 = vmul.f32 %v131, %v929
  %v1671 = vmul.f32 %v132, %v930
  %v1672 = vmul.f32 %v190, %v1558
  %v1673 = vmul.f32 %v191, %v1559
  %v1674 = vmul.f32 %v192, %v1560
  %v1675 = vmul.f32 %v193, %v1561
  %v1676 = vmul.f32 %v194, %v1562
  %v1677 = vmul.f32 %v195, %v1563
  %v1678 = vmul.f32 %v196, %v1564
  %v1679 = vmul.f32 %v197, %v1565
  %v1680 = vmul.f32 %v198, %v1566
  %v1681 = vmul.f32 %v199, %v1567
  %v1682 = vmul.f32 %v200, %v1568
  %v1683 = vmul.f32 %v201, %v1569
  %v1684 = vmul.f32 %v202, %v1570
  %v1685 = vmul.f32 %v203, %v1571
  %v1686 = vmul.f32 %v204, %v1572
  %v1687 = vmul.f32 %v205, %v1573
  %v1688 = vmul.f32 %v206, %v1574
  %v1689 = vmul.f32 %v207, %v1575
  %v1690 = vmul.f32 %v208, %v1576
  %v1691 = vmul.f32 %v209, %v1577
  %v1692 = vmul.f32 %v210, %v1578
  %v1693 = vmul.f32 %v211, %v1579
  %v1694 = vmul.f32 %v212, %v1580
  %v1695 = vmul.f32 %v213, %v1581
  %v1696 = vmul.f32 %v214, %v1582
  %v1697 = vmul.f32 %v215, %v1583
  %v1698 = vmul.f32 %v216, %v1584
  %v1699 = vmul.f32 %v217, %v1585
  %v1700 = vmul.f32 %v218, %v1586
  %v1701 = vmul.f32 %v219, %v1587
  %v1702 = vmul.f32 %v220, %v1588
  %v1703 = vmul.f32 %v221, %v1589
  %v1704 = vmul.f32 %v222, %v1590
  %v1705 = vmul.f32 %v223, %v1591
  %v1706 = vmul.f32 %v224, %v1592
  %v1707 = vmul.f32 %v225, %v1593
  %v1708 = vmul.f32 %v226, %v1594
  %v1709 = vmul.f32 %v227, %v1595
  %v1710 = vmul.f32 %v228, %v1596
  %v1711 = vmul.f32 %v229, %v1597
  %v1712 = vmul.f32 %v230, %v1598
  %v1713 = vmul.f32 %v231, %v1599
  %v1714 = vmul.f32 %v232, %v1600
  %v1715 = vmul.f32 %v233, %v1601
  %v1716 = vmul.f32 %v234, %v1602
  %v1717 = vmul.f32 %v235, %v1603
  %v1718 = vmul.f32 %v236, %v1604
  %v1719 = vmul.f32 %v237, %v1605
  %v1720 = vmul.f32 %v238, %v1606
  %v1721 = vmul.f32 %v239, %v1607
  %v1722 = vmul.f32 %v240, %v1608
  %v1723 = vmul.f32 %v241, %v1609
  %v1724 = vmul.f32 %v242, %v1610
  %v1725 = vmul.f32 %v243, %v1611
  %v1726 = vmul.f32 %v244, %v1612
  %v1727 = vmul.f32 %v245, %v1613
  %v1728 = vmul.f32 %v246, %v1614
  %v1729 = vsub.f32 %v1615, %v1672
  %v1730 = vsub.f32 %v1616, %v1673
  %v1731 = vsub.f32 %v1617, %v1674
  %v1732 = vsub.f32 %v1618, %v1675
  %v1733 = vsub.f32 %v1619, %v1676
  %v1734 = vsub.f32 %v1620, %v1677
  %v1735 = vsub.f32 %v1621, %v1678
  %v1736 = vsub.f32 %v1622, %v1679
  %v1737 = vsub.f32 %v1623, %v1680
  %v1738 = vsub.f32 %v1624, %v1681
  %v1739 = vsub.f32 %v1625, %v1682
  %v1740 = vsub.f32 %v1626, %v1683
  %v1741 = vsub.f32 %v1627, %v1684
  %v1742 = vsub.f32 %v1628, %v1685
  %v1743 = vsub.f32 %v1629, %v1686
  %v1744 = vsub.f32 %v1630, %v1687
  %v1745 = vsub.f32 %v1631, %v1688
  %v1746 = vsub.f32 %v1632, %v1689
  %v1747 = vsub.f32 %v1633, %v1690
  %v1748 = vsub.f32 %v1634, %v1691
  %v1749 = vsub.f32 %v1635, %v1692
  %v1750 = vsub.f32 %v1636, %v1693
  %v1751 = vsub.f32 %v1637, %v1694
  %v1752 = vsub.f32 %v1638, %v1695
  %v1753 = vsub.f32 %v1639, %v1696
  %v1754 = vsub.f32 %v1640, %v1697
  %v1755 = vsub.f32 %v1641, %v1698
  %v1756 = vsub.f32 %v1642, %v1699
  %v1757 = vsub.f32 %v1643, %v1700
  %v1758 = vsub.f32 %v1644, %v1701
  %v1759 = vsub.f32 %v1645, %v1702
  %v1760 = vsub.f32 %v1646, %v1703
  %v1761 = vsub.f32 %v1647, %v1704
  %v1762 = vsub.f32 %v1648, %v1705
  %v1763 = vsub.f32 %v1649, %v1706
  %v1764 = vsub.f32 %v1650, %v1707
  %v1765 = vsub.f32 %v1651, %v1708
  %v1766 = vsub.f32 %v1652, %v1709
  %v1767 = vsub.f32 %v1653, %v1710
  %v1768 = vsub.f32 %v1654, %v1711
  %v1769 = vsub.f32 %v1655, %v1712
  %v1770 = vsub.f32 %v1656, %v1713
  %v1771 = vsub.f32 %v1657, %v1714
  %v1772 = vsub.f32 %v1658, %v1715
  %v1773 = vsub.f32 %v1659, %v1716
  %v1774 = vsub.f32 %v1660, %v1717
  %v1775 = vsub.f32 %v1661, %v1718
  %v1776 = vsub.f32 %v1662, %v1719
  %v1777 = vsub.f32 %v1663, %v1720
  %v1778 = vsub.f32 %v1664, %v1721
  %v1779 = vsub.f32 %v1665, %v1722
  %v1780 = vsub.f32 %v1666, %v1723
  %v1781 = vsub.f32 %v1667, %v1724
  %v1782 = vsub.f32 %v1668, %v1725
  %v1783 = vsub.f32 %v1669, %v1726
  %v1784 = vsub.f32 %v1670, %v1727
  %v1785 = vsub.f32 %v1671, %v1728
  %v1786 = vmul.f32 %v1729, %v1729
  %v1787 = vmul.f32 %v1730, %v1730
  %v1788 = vmul.f32 %v1731, %v1731
  %v1789 = vmul.f32 %v1732, %v1732
  %v1790 = vmul.f32 %v1733, %v1733
  %v1791 = vmul.f32 %v1734, %v1734
  %v1792 = vmul.f32 %v1735, %v1735
  %v1793 = vmul.f32 %v1736, %v1736
  %v1794 = vmul.f32 %v1737, %v1737
  %v1795 = vmul.f32 %v1738, %v1738
  %v1796 = vmul.f32 %v1739, %v1739
  %v1797 = vmul.f32 %v1740, %v1740
  %v1798 = vmul.f32 %v1741, %v1741
  %v1799 = vmul.f32 %v1742, %v1742
  %v1800 = vmul.f32 %v1743, %v1743
  %v1801 = vmul.f32 %v1744, %v1744
  %v1802 = vmul.f32 %v1745, %v1745
  %v1803 = vmul.f32 %v1746, %v1746
  %v1804 = vmul.f32 %v1747, %v1747
  %v1805 = vmul.f32 %v1748, %v1748
  %v1806 = vmul.f32 %v1749, %v1749
  %v1807 = vmul.f32 %v1750, %v1750
  %v1808 = vmul.f32 %v1751, %v1751
  %v1809 = vmul.f32 %v1752, %v1752
  %v1810 = vmul.f32 %v1753, %v1753
  %v1811 = vmul.f32 %v1754, %v1754
  %v1812 = vmul.f32 %v1755, %v1755
  %v1813 = vmul.f32 %v1756, %v1756
  %v1814 = vmul.f32 %v1757, %v1757
  %v1815 = vmul.f32 %v1758, %v1758
  %v1816 = vmul.f32 %v1759, %v1759
  %v1817 = vmul.f32 %v1760, %v1760
  %v1818 = vmul.f32 %v1761, %v1761
  %v1819 = vmul.f32 %v1762, %v1762
  %v1820 = vmul.f32 %v1763, %v1763
  %v1821 = vmul.f32 %v1764, %v1764
  %v1822 = vmul.f32 %v1765, %v1765
  %v1823 = vmul.f32 %v1766, %v1766
  %v1824 = vmul.f32 %v1767, %v1767
  %v1825 = vmul.f32 %v1768, %v1768
  %v1826 = vmul.f32 %v1769, %v1769
  %v1827 = vmul.f32 %v1770, %v1770
  %v1828 = vmul.f32 %v1771, %v1771
  %v1829 = vmul.f32 %v1772, %v1772
  %v1830 = vmul.f32 %v1773, %v1773
  %v1831 = vmul.f32 %v1774, %v1774
  %v1832 = vmul.f32 %v1775, %v1775
  %v1833 = vmul.f32 %v1776, %v1776
  %v1834 = vmul.f32 %v1777, %v1777
  %v1835 = vmul.f32 %v1778, %v1778
  %v1836 = vmul.f32 %v1779, %v1779
  %v1837 = vmul.f32 %v1780, %v1780
  %v1838 = vmul.f32 %v1781, %v1781
  %v1839 = vmul.f32 %v1782, %v1782
  %v1840 = vmul.f32 %v1783, %v1783
  %v1841 = vmul.f32 %v1784, %v1784
  %v1842 = vmul.f32 %v1785, %v1785
  %v1843 = vld [vmem:[%s2] sm:$0xff]
  %v1844 = vld [vmem:[%s2 + $0x8] sm:$0xff]
  %v1845 = vld [vmem:[%s2 + $0x10] sm:$0xff]
  %v1846 = vld [vmem:[%s2 + $0x18] sm:$0xff]
  %v1847 = vld [vmem:[%s2 + $0x20] sm:$0xff]
  %v1848 = vld [vmem:[%s2 + $0x28] sm:$0xff]
  %v1849 = vld [vmem:[%s2 + $0x30] sm:$0xff]
  %v1850 = vld [vmem:[%s2 + $0x38] sm:$0xff]
  %v1851 = vld [vmem:[%s2 + $0x40] sm:$0xff]
  %v1852 = vld [vmem:[%s2 + $0x48] sm:$0xff]
  %v1853 = vld [vmem:[%s2 + $0x50] sm:$0xff]
  %v1854 = vld [vmem:[%s2 + $0x58] sm:$0xff]
  %v1855 = vld [vmem:[%s2 + $0x60] sm:$0xff]
  %v1856 = vld [vmem:[%s2 + $0x68] sm:$0xff]
  %v1857 = vld [vmem:[%s2 + $0x70] sm:$0xff]
  %v1858 = vld [vmem:[%s2 + $0x78] sm:$0xff]
  %1859 = vmatprep.subr.mxu0 0.0
  %1860 = vmatpush1.msra.mxu0 %v1858
  %1861 = vmatprep.subr.mxu0 0.0
  %1862 = vmatpush1.msra.mxu0 %v1857
  %1863 = vmatprep.subr.mxu0 0.0
  %1864 = vmatpush1.msra.mxu0 %v1856
  %1865 = vmatprep.subr.mxu0 0.0
  %1866 = vmatpush1.msra.mxu0 %v1855
  %1867 = vmatprep.subr.mxu0 0.0
  %1868 = vmatpush1.msra.mxu0 %v1854
  %1869 = vmatprep.subr.mxu0 0.0
  %1870 = vmatpush1.msra.mxu0 %v1853
  %1871 = vmatprep.subr.mxu0 0.0
  %1872 = vmatpush1.msra.mxu0 %v1852
  %1873 = vmatprep.subr.mxu0 0.0
  %1874 = vmatpush1.msra.mxu0 %v1851
  %1875 = vmatprep.subr.mxu0 0.0
  %1876 = vmatpush1.msra.mxu0 %v1850
  %1877 = vmatprep.subr.mxu0 0.0
  %1878 = vmatpush1.msra.mxu0 %v1849
  %1879 = vmatprep.subr.mxu0 0.0
  %1880 = vmatpush1.msra.mxu0 %v1848
  %1881 = vmatprep.subr.mxu0 0.0
  %1882 = vmatpush1.msra.mxu0 %v1847
  %1883 = vmatprep.subr.mxu0 0.0
  %1884 = vmatpush1.msra.mxu0 %v1846
  %1885 = vmatprep.subr.mxu0 0.0
  %1886 = vmatpush1.msra.mxu0 %v1845
  %1887 = vmatprep.subr.mxu0 0.0
  %1888 = vmatpush1.msra.mxu0 %v1844
  %1889 = vmatprep.subr.mxu0 0.0
  %1890 = vmatpush1.msra.mxu0 %v1843
  %1891 = vmatprep.subr.mxu0 0.0
  %1892 = vmatpush2.msra.mxu0 0.0
  %1893 = vmatprep.subr.mxu0 0.0
  %1894 = vmatpush2.msra.mxu0 0.0
  %1895 = vmatprep.subr.mxu0 0.0
  %1896 = vmatpush2.msra.mxu0 0.0
  %1897 = vmatprep.subr.mxu0 0.0
  %1898 = vmatpush2.msra.mxu0 0.0
  %1899 = vmatprep.subr.mxu0 0.0
  %1900 = vmatpush2.msra.mxu0 0.0
  %1901 = vmatprep.subr.mxu0 0.0
  %1902 = vmatpush2.msra.mxu0 0.0
  %1903 = vmatprep.subr.mxu0 0.0
  %1904 = vmatpush2.msra.mxu0 0.0
  %1905 = vmatprep.subr.mxu0 0.0
  %1906 = vmatpush2.msra.mxu0 0.0
  %1907 = vmatprep.subr.mxu0 0.0
  %1908 = vmatpush2.msra.mxu0 0.0
  %1909 = vmatprep.subr.mxu0 0.0
  %1910 = vmatpush2.msra.mxu0 0.0
  %1911 = vmatprep.subr.mxu0 0.0
  %1912 = vmatpush2.msra.mxu0 0.0
  %1913 = vmatprep.subr.mxu0 0.0
  %1914 = vmatpush2.msra.mxu0 0.0
  %1915 = vmatprep.subr.mxu0 0.0
  %1916 = vmatpush2.msra.mxu0 0.0
  %1917 = vmatprep.subr.mxu0 0.0
  %1918 = vmatpush2.msra.mxu0 0.0
  %1919 = vmatprep.subr.mxu0 0.0
  %1920 = vmatpush2.msra.mxu0 0.0
  %1921 = vmatprep.subr.mxu0 0.0
  %1922 = vmatpush2.msra.mxu0 0.0
  %1923 = vmatprep.mubr.f32.mxu0 0.0
  %1924 = vmatmul.mubr.f32.gmra.mxu0 %v1786
  %v1925 = vpop.f32.mrf.mxu0
  %v1926 = vadd.f32 0.0, %v1925
  %v1927 = vpop.f32.mrf.mxu0
  %1928 = vmatprep.mubr.f32.mxu0 0.0
  %1929 = vmatmul.mubr.f32.gmra.mxu0 %v1787
  %v1930 = vpop.f32.mrf.mxu0
  %v1931 = vadd.f32 0.0, %v1930
  %v1932 = vpop.f32.mrf.mxu0
  %1933 = vmatprep.mubr.f32.mxu0 0.0
  %1934 = vmatmul.mubr.f32.gmra.mxu0 %v1788
  %v1935 = vpop.f32.mrf.mxu0
  %v1936 = vadd.f32 0.0, %v1935
  %v1937 = vpop.f32.mrf.mxu0
  %1938 = vmatprep.mubr.f32.mxu0 0.0
  %1939 = vmatmul.mubr.f32.gmra.mxu0 %v1789
  %v1940 = vpop.f32.mrf.mxu0
  %v1941 = vadd.f32 0.0, %v1940
  %v1942 = vpop.f32.mrf.mxu0
  %1943 = vmatprep.mubr.f32.mxu0 0.0
  %1944 = vmatmul.mubr.f32.gmra.mxu0 %v1790
  %v1945 = vpop.f32.mrf.mxu0
  %v1946 = vadd.f32 0.0, %v1945
  %v1947 = vpop.f32.mrf.mxu0
  %1948 = vmatprep.mubr.f32.mxu0 0.0
  %1949 = vmatmul.mubr.f32.gmra.mxu0 %v1791
  %v1950 = vpop.f32.mrf.mxu0
  %v1951 = vadd.f32 0.0, %v1950
  %v1952 = vpop.f32.mrf.mxu0
  %1953 = vmatprep.mubr.f32.mxu0 0.0
  %1954 = vmatmul.mubr.f32.gmra.mxu0 %v1792
  %v1955 = vpop.f32.mrf.mxu0
  %v1956 = vadd.f32 0.0, %v1955
  %v1957 = vpop.f32.mrf.mxu0
  %1958 = vmatprep.mubr.f32.mxu0 0.0
  %1959 = vmatmul.mubr.f32.gmra.mxu0 %v1793
  %v1960 = vpop.f32.mrf.mxu0
  %v1961 = vadd.f32 0.0, %v1960
  %v1962 = vpop.f32.mrf.mxu0
  %1963 = vmatprep.mubr.f32.mxu0 0.0
  %1964 = vmatmul.mubr.f32.gmra.mxu0 %v1794
  %v1965 = vpop.f32.mrf.mxu0
  %v1966 = vadd.f32 0.0, %v1965
  %v1967 = vpop.f32.mrf.mxu0
  %1968 = vmatprep.mubr.f32.mxu0 0.0
  %1969 = vmatmul.mubr.f32.gmra.mxu0 %v1795
  %v1970 = vpop.f32.mrf.mxu0
  %v1971 = vadd.f32 0.0, %v1970
  %v1972 = vpop.f32.mrf.mxu0
  %1973 = vmatprep.mubr.f32.mxu0 0.0
  %1974 = vmatmul.mubr.f32.gmra.mxu0 %v1796
  %v1975 = vpop.f32.mrf.mxu0
  %v1976 = vadd.f32 0.0, %v1975
  %v1977 = vpop.f32.mrf.mxu0
  %1978 = vmatprep.mubr.f32.mxu0 0.0
  %1979 = vmatmul.mubr.f32.gmra.mxu0 %v1797
  %v1980 = vpop.f32.mrf.mxu0
  %v1981 = vadd.f32 0.0, %v1980
  %v1982 = vpop.f32.mrf.mxu0
  %1983 = vmatprep.mubr.f32.mxu0 0.0
  %1984 = vmatmul.mubr.f32.gmra.mxu0 %v1798
  %v1985 = vpop.f32.mrf.mxu0
  %v1986 = vadd.f32 0.0, %v1985
  %v1987 = vpop.f32.mrf.mxu0
  %1988 = vmatprep.mubr.f32.mxu0 0.0
  %1989 = vmatmul.mubr.f32.gmra.mxu0 %v1799
  %v1990 = vpop.f32.mrf.mxu0
  %v1991 = vadd.f32 0.0, %v1990
  %v1992 = vpop.f32.mrf.mxu0
  %1993 = vmatprep.mubr.f32.mxu0 0.0
  %1994 = vmatmul.mubr.f32.gmra.mxu0 %v1800
  %v1995 = vpop.f32.mrf.mxu0
  %v1996 = vadd.f32 0.0, %v1995
  %v1997 = vpop.f32.mrf.mxu0
  %1998 = vmatprep.mubr.f32.mxu0 0.0
  %1999 = vmatmul.mubr.f32.gmra.mxu0 %v1801
  %v2000 = vpop.f32.mrf.mxu0
  %v2001 = vadd.f32 0.0, %v2000
  %v2002 = vpop.f32.mrf.mxu0
  %2003 = vmatprep.mubr.f32.mxu0 0.0
  %2004 = vmatmul.mubr.f32.gmra.mxu0 %v1802
  %v2005 = vpop.f32.mrf.mxu0
  %v2006 = vadd.f32 0.0, %v2005
  %v2007 = vpop.f32.mrf.mxu0
  %2008 = vmatprep.mubr.f32.mxu0 0.0
  %2009 = vmatmul.mubr.f32.gmra.mxu0 %v1803
  %v2010 = vpop.f32.mrf.mxu0
  %v2011 = vadd.f32 0.0, %v2010
  %v2012 = vpop.f32.mrf.mxu0
  %2013 = vmatprep.mubr.f32.mxu0 0.0
  %2014 = vmatmul.mubr.f32.gmra.mxu0 %v1804
  %v2015 = vpop.f32.mrf.mxu0
  %v2016 = vadd.f32 0.0, %v2015
  %v2017 = vpop.f32.mrf.mxu0
  %2018 = vmatprep.mubr.f32.mxu0 0.0
  %2019 = vmatmul.mubr.f32.gmra.mxu0 %v1805
  %v2020 = vpop.f32.mrf.mxu0
  %v2021 = vadd.f32 0.0, %v2020
  %v2022 = vpop.f32.mrf.mxu0
  %2023 = vmatprep.mubr.f32.mxu0 0.0
  %2024 = vmatmul.mubr.f32.gmra.mxu0 %v1806
  %v2025 = vpop.f32.mrf.mxu0
  %v2026 = vadd.f32 0.0, %v2025
  %v2027 = vpop.f32.mrf.mxu0
  %2028 = vmatprep.mubr.f32.mxu0 0.0
  %2029 = vmatmul.mubr.f32.gmra.mxu0 %v1807
  %v2030 = vpop.f32.mrf.mxu0
  %v2031 = vadd.f32 0.0, %v2030
  %v2032 = vpop.f32.mrf.mxu0
  %2033 = vmatprep.mubr.f32.mxu0 0.0
  %2034 = vmatmul.mubr.f32.gmra.mxu0 %v1808
  %v2035 = vpop.f32.mrf.mxu0
  %v2036 = vadd.f32 0.0, %v2035
  %v2037 = vpop.f32.mrf.mxu0
  %2038 = vmatprep.mubr.f32.mxu0 0.0
  %2039 = vmatmul.mubr.f32.gmra.mxu0 %v1809
  %v2040 = vpop.f32.mrf.mxu0
  %v2041 = vadd.f32 0.0, %v2040
  %v2042 = vpop.f32.mrf.mxu0
  %2043 = vmatprep.mubr.f32.mxu0 0.0
  %2044 = vmatmul.mubr.f32.gmra.mxu0 %v1810
  %v2045 = vpop.f32.mrf.mxu0
  %v2046 = vadd.f32 0.0, %v2045
  %v2047 = vpop.f32.mrf.mxu0
  %2048 = vmatprep.mubr.f32.mxu0 0.0
  %2049 = vmatmul.mubr.f32.gmra.mxu0 %v1811
  %v2050 = vpop.f32.mrf.mxu0
  %v2051 = vadd.f32 0.0, %v2050
  %v2052 = vpop.f32.mrf.mxu0
  %2053 = vmatprep.mubr.f32.mxu0 0.0
  %2054 = vmatmul.mubr.f32.gmra.mxu0 %v1812
  %v2055 = vpop.f32.mrf.mxu0
  %v2056 = vadd.f32 0.0, %v2055
  %v2057 = vpop.f32.mrf.mxu0
  %2058 = vmatprep.mubr.f32.mxu0 0.0
  %2059 = vmatmul.mubr.f32.gmra.mxu0 %v1813
  %v2060 = vpop.f32.mrf.mxu0
  %v2061 = vadd.f32 0.0, %v2060
  %v2062 = vpop.f32.mrf.mxu0
  %2063 = vmatprep.mubr.f32.mxu0 0.0
  %2064 = vmatmul.mubr.f32.gmra.mxu0 %v1814
  %v2065 = vpop.f32.mrf.mxu0
  %v2066 = vadd.f32 0.0, %v2065
  %v2067 = vpop.f32.mrf.mxu0
  %2068 = vmatprep.mubr.f32.mxu0 0.0
  %2069 = vmatmul.mubr.f32.gmra.mxu0 %v1815
  %v2070 = vpop.f32.mrf.mxu0
  %v2071 = vadd.f32 0.0, %v2070
  %v2072 = vpop.f32.mrf.mxu0
  %2073 = vmatprep.mubr.f32.mxu0 0.0
  %2074 = vmatmul.mubr.f32.gmra.mxu0 %v1816
  %v2075 = vpop.f32.mrf.mxu0
  %v2076 = vadd.f32 0.0, %v2075
  %v2077 = vpop.f32.mrf.mxu0
  %2078 = vmatprep.mubr.f32.mxu0 0.0
  %2079 = vmatmul.mubr.f32.gmra.mxu0 %v1817
  %v2080 = vpop.f32.mrf.mxu0
  %v2081 = vadd.f32 0.0, %v2080
  %v2082 = vpop.f32.mrf.mxu0
  %2083 = vmatprep.mubr.f32.mxu0 0.0
  %2084 = vmatmul.mubr.f32.gmra.mxu0 %v1818
  %v2085 = vpop.f32.mrf.mxu0
  %v2086 = vadd.f32 0.0, %v2085
  %v2087 = vpop.f32.mrf.mxu0
  %2088 = vmatprep.mubr.f32.mxu0 0.0
  %2089 = vmatmul.mubr.f32.gmra.mxu0 %v1819
  %v2090 = vpop.f32.mrf.mxu0
  %v2091 = vadd.f32 0.0, %v2090
  %v2092 = vpop.f32.mrf.mxu0
  %2093 = vmatprep.mubr.f32.mxu0 0.0
  %2094 = vmatmul.mubr.f32.gmra.mxu0 %v1820
  %v2095 = vpop.f32.mrf.mxu0
  %v2096 = vadd.f32 0.0, %v2095
  %v2097 = vpop.f32.mrf.mxu0
  %2098 = vmatprep.mubr.f32.mxu0 0.0
  %2099 = vmatmul.mubr.f32.gmra.mxu0 %v1821
  %v2100 = vpop.f32.mrf.mxu0
  %v2101 = vadd.f32 0.0, %v2100
  %v2102 = vpop.f32.mrf.mxu0
  %2103 = vmatprep.mubr.f32.mxu0 0.0
  %2104 = vmatmul.mubr.f32.gmra.mxu0 %v1822
  %v2105 = vpop.f32.mrf.mxu0
  %v2106 = vadd.f32 0.0, %v2105
  %v2107 = vpop.f32.mrf.mxu0
  %2108 = vmatprep.mubr.f32.mxu0 0.0
  %2109 = vmatmul.mubr.f32.gmra.mxu0 %v1823
  %v2110 = vpop.f32.mrf.mxu0
  %v2111 = vadd.f32 0.0, %v2110
  %v2112 = vpop.f32.mrf.mxu0
  %2113 = vmatprep.mubr.f32.mxu0 0.0
  %2114 = vmatmul.mubr.f32.gmra.mxu0 %v1824
  %v2115 = vpop.f32.mrf.mxu0
  %v2116 = vadd.f32 0.0, %v2115
  %v2117 = vpop.f32.mrf.mxu0
  %2118 = vmatprep.mubr.f32.mxu0 0.0
  %2119 = vmatmul.mubr.f32.gmra.mxu0 %v1825
  %v2120 = vpop.f32.mrf.mxu0
  %v2121 = vadd.f32 0.0, %v2120
  %v2122 = vpop.f32.mrf.mxu0
  %2123 = vmatprep.mubr.f32.mxu0 0.0
  %2124 = vmatmul.mubr.f32.gmra.mxu0 %v1826
  %v2125 = vpop.f32.mrf.mxu0
  %v2126 = vadd.f32 0.0, %v2125
  %v2127 = vpop.f32.mrf.mxu0
  %2128 = vmatprep.mubr.f32.mxu0 0.0
  %2129 = vmatmul.mubr.f32.gmra.mxu0 %v1827
  %v2130 = vpop.f32.mrf.mxu0
  %v2131 = vadd.f32 0.0, %v2130
  %v2132 = vpop.f32.mrf.mxu0
  %2133 = vmatprep.mubr.f32.mxu0 0.0
  %2134 = vmatmul.mubr.f32.gmra.mxu0 %v1828
  %v2135 = vpop.f32.mrf.mxu0
  %v2136 = vadd.f32 0.0, %v2135
  %v2137 = vpop.f32.mrf.mxu0
  %2138 = vmatprep.mubr.f32.mxu0 0.0
  %2139 = vmatmul.mubr.f32.gmra.mxu0 %v1829
  %v2140 = vpop.f32.mrf.mxu0
  %v2141 = vadd.f32 0.0, %v2140
  %v2142 = vpop.f32.mrf.mxu0
  %2143 = vmatprep.mubr.f32.mxu0 0.0
  %2144 = vmatmul.mubr.f32.gmra.mxu0 %v1830
  %v2145 = vpop.f32.mrf.mxu0
  %v2146 = vadd.f32 0.0, %v2145
  %v2147 = vpop.f32.mrf.mxu0
  %2148 = vmatprep.mubr.f32.mxu0 0.0
  %2149 = vmatmul.mubr.f32.gmra.mxu0 %v1831
  %v2150 = vpop.f32.mrf.mxu0
  %v2151 = vadd.f32 0.0, %v2150
  %v2152 = vpop.f32.mrf.mxu0
  %2153 = vmatprep.mubr.f32.mxu0 0.0
  %2154 = vmatmul.mubr.f32.gmra.mxu0 %v1832
  %v2155 = vpop.f32.mrf.mxu0
  %v2156 = vadd.f32 0.0, %v2155
  %v2157 = vpop.f32.mrf.mxu0
  %2158 = vmatprep.mubr.f32.mxu0 0.0
  %2159 = vmatmul.mubr.f32.gmra.mxu0 %v1833
  %v2160 = vpop.f32.mrf.mxu0
  %v2161 = vadd.f32 0.0, %v2160
  %v2162 = vpop.f32.mrf.mxu0
  %2163 = vmatprep.mubr.f32.mxu0 0.0
  %2164 = vmatmul.mubr.f32.gmra.mxu0 %v1834
  %v2165 = vpop.f32.mrf.mxu0
  %v2166 = vadd.f32 0.0, %v2165
  %v2167 = vpop.f32.mrf.mxu0
  %2168 = vmatprep.mubr.f32.mxu0 0.0
  %2169 = vmatmul.mubr.f32.gmra.mxu0 %v1835
  %v2170 = vpop.f32.mrf.mxu0
  %v2171 = vadd.f32 0.0, %v2170
  %v2172 = vpop.f32.mrf.mxu0
  %2173 = vmatprep.mubr.f32.mxu0 0.0
  %2174 = vmatmul.mubr.f32.gmra.mxu0 %v1836
  %v2175 = vpop.f32.mrf.mxu0
  %v2176 = vadd.f32 0.0, %v2175
  %v2177 = vpop.f32.mrf.mxu0
  %2178 = vmatprep.mubr.f32.mxu0 0.0
  %2179 = vmatmul.mubr.f32.gmra.mxu0 %v1837
  %v2180 = vpop.f32.mrf.mxu0
  %v2181 = vadd.f32 0.0, %v2180
  %v2182 = vpop.f32.mrf.mxu0
  %2183 = vmatprep.mubr.f32.mxu0 0.0
  %2184 = vmatmul.mubr.f32.gmra.mxu0 %v1838
  %v2185 = vpop.f32.mrf.mxu0
  %v2186 = vadd.f32 0.0, %v2185
  %v2187 = vpop.f32.mrf.mxu0
  %2188 = vmatprep.mubr.f32.mxu0 0.0
  %2189 = vmatmul.mubr.f32.gmra.mxu0 %v1839
  %v2190 = vpop.f32.mrf.mxu0
  %v2191 = vadd.f32 0.0, %v2190
  %v2192 = vpop.f32.mrf.mxu0
  %2193 = vmatprep.mubr.f32.mxu0 0.0
  %2194 = vmatmul.mubr.f32.gmra.mxu0 %v1840
  %v2195 = vpop.f32.mrf.mxu0
  %v2196 = vadd.f32 0.0, %v2195
  %v2197 = vpop.f32.mrf.mxu0
  %2198 = vmatprep.mubr.f32.mxu0 0.0
  %2199 = vmatmul.mubr.f32.gmra.mxu0 %v1841
  %v2200 = vpop.f32.mrf.mxu0
  %v2201 = vadd.f32 0.0, %v2200
  %v2202 = vpop.f32.mrf.mxu0
  %2203 = vmatprep.mubr.f32.mxu0 0.0
  %2204 = vmatmul.mubr.f32.gmra.mxu0 %v1842
  %v2205 = vpop.f32.mrf.mxu0
  %v2206 = vadd.f32 0.0, %v2205
  %v2207 = vpop.f32.mrf.mxu0
  %2208 = vdwg.mxu0
  %v2209 = vld [vmem:[#allocation2] sm:$0x1]
  %v2210 = vadd.f32 %v1926, %v1931
  %v2211 = vadd.f32 %v2210, %v1936
  %v2212 = vadd.f32 %v2211, %v1941
  %v2213 = vadd.f32 %v2212, %v1946
  %v2214 = vadd.f32 %v2213, %v1951
  %v2215 = vadd.f32 %v2214, %v1956
  %v2216 = vadd.f32 %v2215, %v1961
  %v2217 = vadd.f32 %v2216, %v1966
  %v2218 = vadd.f32 %v2217, %v1971
  %v2219 = vadd.f32 %v2218, %v1976
  %v2220 = vadd.f32 %v2219, %v1981
  %v2221 = vadd.f32 %v2220, %v1986
  %v2222 = vadd.f32 %v2221, %v1991
  %v2223 = vadd.f32 %v2222, %v1996
  %v2224 = vadd.f32 %v2223, %v2001
  %v2225 = vadd.f32 %v2224, %v2006
  %v2226 = vadd.f32 %v2225, %v2011
  %v2227 = vadd.f32 %v2226, %v2016
  %v2228 = vadd.f32 %v2227, %v2021
  %v2229 = vadd.f32 %v2228, %v2026
  %v2230 = vadd.f32 %v2229, %v2031
  %v2231 = vadd.f32 %v2230, %v2036
  %v2232 = vadd.f32 %v2231, %v2041
  %v2233 = vadd.f32 %v2232, %v2046
  %v2234 = vadd.f32 %v2233, %v2051
  %v2235 = vadd.f32 %v2234, %v2056
  %v2236 = vadd.f32 %v2235, %v2061
  %v2237 = vadd.f32 %v2236, %v2066
  %v2238 = vadd.f32 %v2237, %v2071
  %v2239 = vadd.f32 %v2238, %v2076
  %v2240 = vadd.f32 %v2239, %v2081
  %v2241 = vadd.f32 %v2240, %v2086
  %v2242 = vadd.f32 %v2241, %v2091
  %v2243 = vadd.f32 %v2242, %v2096
  %v2244 = vadd.f32 %v2243, %v2101
  %v2245 = vadd.f32 %v2244, %v2106
  %v2246 = vadd.f32 %v2245, %v2111
  %v2247 = vadd.f32 %v2246, %v2116
  %v2248 = vadd.f32 %v2247, %v2121
  %v2249 = vadd.f32 %v2248, %v2126
  %v2250 = vadd.f32 %v2249, %v2131
  %v2251 = vadd.f32 %v2250, %v2136
  %v2252 = vadd.f32 %v2251, %v2141
  %v2253 = vadd.f32 %v2252, %v2146
  %v2254 = vadd.f32 %v2253, %v2151
  %v2255 = vadd.f32 %v2254, %v2156
  %v2256 = vadd.f32 %v2255, %v2161
  %v2257 = vadd.f32 %v2256, %v2166
  %v2258 = vadd.f32 %v2257, %v2171
  %v2259 = vadd.f32 %v2258, %v2176
  %v2260 = vadd.f32 %v2259, %v2181
  %v2261 = vadd.f32 %v2260, %v2186
  %v2262 = vadd.f32 %v2261, %v2191
  %v2263 = vadd.f32 %v2262, %v2196
  %v2264 = vadd.f32 %v2263, %v2201
  %v2265 = vadd.f32 %v2264, %v2206
  %v2266 = vrot.slane %v2265, 4
  %v2267 = vadd.f32 %v2265, %v2266
  %v2268 = vrot.slane %v2267, 2
  %v2269 = vadd.f32 %v2267, %v2268
  %v2270 = vrot.slane %v2269, 1
  %v2271 = vadd.f32 %v2269, %v2270
  %v2272 = vadd.f32 %v2209, %v2271
  %2273 = vst [vmem:[#allocation2] sm:$0x1] %v2272
  // Predicated region
  $region18: #{hybrid_loss.16} parent=0 // pred_check
    %p2274 = pneg %p14
  $region19: #{hybrid_loss.16} parent=0 // pred_check_branch
    %2276 = sbr.rel (%p2274) target = $region21
  $region20: #{hybrid_loss.16} parent=0 // pred_region
    %v2277 = vld [vmem:[#allocation2] sm:$0x1]
    %2278 = vst [vmem:[%s3] sm:$0x1] %v2277
  $region21: #{hybrid_loss.16} parent=0 // pred_fallthru
    _
  // Predicated region
  $region22: #{hybrid_loss.16} parent=0 // pred_check
    _
  $region23: #{hybrid_loss.16} parent=0 // pred_check_branch
    %2280 = sbr.rel (0) target = $region25
  $region24: #{hybrid_loss.16} parent=0 // pred_region
    _
  $region25: #{hybrid_loss.16} parent=0 // pred_fallthru
    _
  // Predicated region
  $region26: #{hybrid_loss.16} parent=0 // pred_check
    _
  $region27: #{hybrid_loss.16} parent=0 // pred_check_branch
    %2282 = sbr.rel (0) target = $region29
  $region28: #{hybrid_loss.16} parent=0 // pred_region
    _
  $region29: #{hybrid_loss.16} parent=0 // pred_fallthru
    _

</llo_original>
